<compile_context>
chip_gen: v7x
topology: tpu7x:2x2x1
jax: 0.10.0
libtpu: 0.0.40
codegen_flags: <defaults>
</compile_context>

<pallas_src>
import functools

import jax
import jax.numpy as jnp
from jax import lax
from jax.experimental import pallas as pl
from jax.experimental.pallas import tpu as pltpu


# ----------------------------------------------------------------------------
# Shared math helpers (used inside the Pallas kernel AND in the pure-JAX
# reference, so the mixed-precision policy is identical by construction).
# ----------------------------------------------------------------------------

def _mm_bf16(a_f32, w_bf16):
    """Matmul: cast the activation to bf16 once, weight already bf16, f32 accumulation."""
    return jnp.dot(a_f32.astype(jnp.bfloat16), w_bf16,
                   preferred_element_type=jnp.float32)


def _ln(x, g, eps=1e-5):
    """Gamma-only LayerNorm over the last axis (biased variance, centered, f32)."""
    mean = jnp.mean(x, axis=-1, keepdims=True)
    xc = x - mean
    var = jnp.mean(xc * xc, axis=-1, keepdims=True)
    return xc * lax.rsqrt(var + eps) * g


# ----------------------------------------------------------------------------
# Fused Pallas kernel: grid = (batch, depth); one layer per grid step, residual
# stream resident in VMEM scratch across the whole depth loop.
# ----------------------------------------------------------------------------

def _transformer_block_kernel(x_ref, ng_ref, wqkv_ref, wo_ref, fg_ref, w1_ref,
                              w2_ref, o_ref, res_ref, *, heads, dim_head, eps):
    d = pl.program_id(1)
    hd = heads * dim_head

    # First layer of this batch item: bring the (C, N) channel-major block into
    # token-major (N, C) f32 ONCE; it stays in VMEM for all subsequent layers.
    @pl.when(d == 0)
    def _():
        res_ref[...] = x_ref[0].T.astype(jnp.float32)

    x = res_ref[...]                                     # (N, C) f32 residual stream
    n_tok = x.shape[0]

    # ---- attention branch: shared LayerNorm -> fused QKV -> batched MHA -> out proj ----
    xn = _ln(x, ng_ref[...].astype(jnp.float32), eps)    # (N, C) f32
    qkv = _mm_bf16(xn, wqkv_ref[0])                      # (N, 3*hd) f32, one MXU matmul
    q = qkv[:, :hd]                                      # lane-aligned slices
    kv = qkv[:, hd:]

    # Two clean full-lane 2-D transposes; the head split afterwards is a free
    # sublane regroup (Dh is a multiple of 8). No per-head 16-lane slices, no concat.
    qT = q.T                                             # (hd, N)
    kvT = kv.T                                           # (2*hd, N)
    kT = kvT[:hd, :]
    vT = kvT[hd:, :]
    qTh = qT.reshape(heads, dim_head, n_tok).astype(jnp.bfloat16)
    kTh = kT.reshape(heads, dim_head, n_tok).astype(jnp.bfloat16)
    vTh = vT.reshape(heads, dim_head, n_tok).astype(jnp.bfloat16)

    # sim[h, n, m] = sum_d qT[h, d, n] * kT[h, d, m]  (softmax scale baked into Wq)
    sim = lax.dot_general(qTh, kTh, (((1,), (1,)), ((0,), (0,))),
                          preferred_element_type=jnp.float32)        # (heads, N, N)
    sim = sim - jnp.max(sim, axis=-1, keepdims=True)
    p = jnp.exp(sim)
    inv_l = pl.reciprocal(jnp.sum(p, axis=-1, keepdims=True), approx=True)
    attn = p * inv_l                                                  # (heads, N, N)

    # outT[h, d, n] = sum_m vT[h, d, m] * attn[h, n, m]
    outT = lax.dot_general(vTh, attn.astype(jnp.bfloat16),
                           (((2,), (2,)), ((0,), (0,))),
                           preferred_element_type=jnp.float32)        # (heads, Dh, N)
    attn_out = outT.reshape(hd, n_tok).T                              # (N, hd)
    x = x + _mm_bf16(attn_out, wo_ref[0])                             # residual 1

    # ---- feed-forward branch: LayerNorm -> Linear -> GELU -> Linear ----
    hn = _ln(x, fg_ref[0].astype(jnp.float32), eps)
    hmid = jax.nn.gelu(_mm_bf16(hn, w1_ref[0]))           # (N, ff_mult*C)
    y = x + _mm_bf16(hmid, w2_ref[0])                     # residual 2

    res_ref[...] = y                                      # carry to the next layer

    # Last layer: transpose back to channel-major and write the output block.
    @pl.when(d == pl.num_programs(1) - 1)
    def _():
        o_ref[0] = y.T.astype(o_ref.dtype)


# ----------------------------------------------------------------------------
# Wrapper
# ----------------------------------------------------------------------------

def transformer_block_forward(params, x_nchw, *, heads, dim_head, eps=1e-5):
    """TransformerBlock.forward: (B, C, H, W) -> (B, C, H, W)."""
    B, C, H, W = x_nchw.shape
    N = H * W
    hd = heads * dim_head
    depth, _, cff = params["w1"].shape
    x = x_nchw.reshape(B, C, N)        # free trailing-dim collapse 'b c h w' -> 'b c (h w)'

    kernel = functools.partial(_transformer_block_kernel,
                               heads=heads, dim_head=dim_head, eps=eps)
    out = pl.pallas_call(
        kernel,
        out_shape=jax.ShapeDtypeStruct((B, C, N), x_nchw.dtype),
        grid=(B, depth),
        in_specs=[
            pl.BlockSpec((1, C, N), lambda b, d: (b, 0, 0)),        # activation (per batch)
            pl.BlockSpec((1, C), lambda b, d: (0, 0)),              # shared attn LN gamma
            pl.BlockSpec((1, C, 3 * hd), lambda b, d: (d, 0, 0)),   # packed (Wq*scale)|Wk|Wv
            pl.BlockSpec((1, hd, C), lambda b, d: (d, 0, 0)),       # Wo
            pl.BlockSpec((1, 1, C), lambda b, d: (d, 0, 0)),        # FF LN gamma
            pl.BlockSpec((1, C, cff), lambda b, d: (d, 0, 0)),      # FF W1
            pl.BlockSpec((1, cff, C), lambda b, d: (d, 0, 0)),      # FF W2
        ],
        out_specs=pl.BlockSpec((1, C, N), lambda b, d: (b, 0, 0)),
        scratch_shapes=[pltpu.VMEM((N, C), jnp.float32)],           # resident residual stream
        compiler_params=pltpu.CompilerParams(
            dimension_semantics=("parallel", "arbitrary"),
            vmem_limit_bytes=32 * 1024 * 1024),
    )(x, params["norm_g"], params["wqkv"], params["wo"], params["ff_g"],
      params["w1"], params["w2"])
    return out.reshape(B, C, H, W)


# ----------------------------------------------------------------------------
# Pure-JAX reference (same mixed-precision policy) for validation
# ----------------------------------------------------------------------------

def ref_forward(params, x_nchw, *, heads, dim_head, eps=1e-5):
    B, C, H, W = x_nchw.shape
    hd = heads * dim_head
    depth = params["wqkv"].shape[0]
    x = jnp.transpose(x_nchw, (0, 2, 3, 1)).reshape(B, H * W, C).astype(jnp.float32)
    for d in range(depth):
        xn = _ln(x, params["norm_g"].astype(jnp.float32), eps)
        qkv = _mm_bf16(xn, params["wqkv"][d])
        q, k, v = qkv[..., :hd], qkv[..., hd:2 * hd], qkv[..., 2 * hd:]
        qh = q.reshape(B, -1, heads, dim_head)
        kh = k.reshape(B, -1, heads, dim_head)
        vh = v.reshape(B, -1, heads, dim_head)
        sim = jnp.einsum("bnhd,bmhd->bhnm",
                         qh.astype(jnp.bfloat16), kh.astype(jnp.bfloat16),
                         preferred_element_type=jnp.float32)   # scale baked into Wq
        sim = sim - sim.max(-1, keepdims=True)
        p = jnp.exp(sim)
        attn = p / p.sum(-1, keepdims=True)
        out = jnp.einsum("bhnm,bmhd->bnhd",
                         attn.astype(jnp.bfloat16), vh.astype(jnp.bfloat16),
                         preferred_element_type=jnp.float32).reshape(B, -1, hd)
        x = x + _mm_bf16(out, params["wo"][d])
        hn = _ln(x, params["ff_g"][d].astype(jnp.float32), eps)
        x = x + _mm_bf16(jax.nn.gelu(_mm_bf16(hn, params["w1"][d])), params["w2"][d])
    x = x.reshape(B, H, W, C).transpose(0, 3, 1, 2)
    return x.astype(x_nchw.dtype)


# ----------------------------------------------------------------------------
# Deterministic parameter construction (packing hoisted out of the forward path)
# ----------------------------------------------------------------------------

def make_params(key, dim, depth, heads, dim_head, ff_mult):
    """Pre-packed, depth-stacked parameters.

    Packing happens ONCE outside the forward path: nn.Linear weights (out, in) are
    transposed to (in, out); Wq|Wk|Wv are concatenated column-wise; the softmax scale
    dim_head**-0.5 is baked into the Wq columns; weights stored bf16 (MXU input dtype),
    LayerNorm gammas stay f32. The shared block LayerNorm gamma (self.norm) is one
    vector; the per-layer FF LayerNorm gammas are stacked along depth.
    """
    hd = heads * dim_head
    cff = dim * ff_mult
    scale = dim_head ** -0.5
    keys = jax.random.split(key, depth * 6 + 1)
    norm_g = (1.0 + 0.1 * jax.random.normal(keys[0], (1, dim))).astype(jnp.float32)
    wqkv, wo, ff_g, w1, w2 = [], [], [], [], []
    for i in range(depth):
        kq, kkv, ko, kg, kf1, kf2 = keys[1 + 6 * i: 7 + 6 * i]
        wq = jax.random.normal(kq, (dim, hd)) * (dim ** -0.5) * scale   # scale baked in
        wkv = jax.random.normal(kkv, (dim, 2 * hd)) * (dim ** -0.5)
        wqkv.append(jnp.concatenate([wq, wkv], axis=1).astype(jnp.bfloat16))
        wo.append((jax.random.normal(ko, (hd, dim)) * hd ** -0.5).astype(jnp.bfloat16))
        ff_g.append((1.0 + 0.1 * jax.random.normal(kg, (1, dim))).astype(jnp.float32))
        w1.append((jax.random.normal(kf1, (dim, cff)) * dim ** -0.5).astype(jnp.bfloat16))
        w2.append((jax.random.normal(kf2, (cff, dim)) * cff ** -0.5).astype(jnp.bfloat16))
    return {
        "norm_g": norm_g,                 # (1, C)         shared pre-attention LN gamma
        "wqkv": jnp.stack(wqkv),          # (depth, C, 3*hd)
        "wo": jnp.stack(wo),              # (depth, hd, C)
        "ff_g": jnp.stack(ff_g),          # (depth, 1, C)
        "w1": jnp.stack(w1),              # (depth, C, ff_mult*C)
        "w2": jnp.stack(w2),              # (depth, ff_mult*C, C)
    }


if __name__ == "__main__":
    key = jax.random.PRNGKey(0)
    # Small but lane-dense shapes: dim and H*W are multiples of 128 so every kernel
    # block keeps all 128 vreg lanes busy and all stores are unmasked full-lane vst.
    B, dim, H, W = 2, 128, 16, 16
    heads, ff_mult, depth = 8, 2, 2
    dim_head = dim // heads

    k_params, k_x = jax.random.split(key)
    params = make_params(k_params, dim, depth, heads, dim_head, ff_mult)
    x = jax.random.normal(k_x, (B, dim, H, W), jnp.float32)

    out = jax.block_until_ready(
        transformer_block_forward(params, x, heads=heads, dim_head=dim_head))
    ref = jax.block_until_ready(
        ref_forward(params, x, heads=heads, dim_head=dim_head))

    assert out.shape == (B, dim, H, W)
    max_err = float(jnp.max(jnp.abs(out - ref)))
    # Tolerance covers the approx EUP reciprocal used for softmax normalization in the
    # kernel (the reference uses an exact divide); bf16/f32 policy is otherwise shared.
    assert jnp.allclose(out, ref, atol=1e-2, rtol=1e-2), f"max abs err = {max_err}"

    print("KERNEL_OK")
</pallas_src>

<mosaic_0001>
module attributes {stable_mosaic.version = 11 : i64} {
  func.func @_transformer_block_kernel(%arg0: i32, %arg1: i32, %arg2: memref<1x128x256xf32, #tpu.memory_space<vmem>>, %arg3: memref<1x128xf32, #tpu.memory_space<vmem>>, %arg4: memref<1x128x384xbf16, #tpu.memory_space<vmem>>, %arg5: memref<1x128x128xbf16, #tpu.memory_space<vmem>>, %arg6: memref<1x1x128xf32, #tpu.memory_space<vmem>>, %arg7: memref<1x128x256xbf16, #tpu.memory_space<vmem>>, %arg8: memref<1x256x128xbf16, #tpu.memory_space<vmem>>, %arg9: memref<1x128x256xf32, #tpu.memory_space<vmem>>, %arg10: memref<256x128xf32, #tpu.memory_space<vmem>>) attributes {dimension_semantics = [#tpu.dimension_semantics<parallel>, #tpu.dimension_semantics<arbitrary>], iteration_bounds = array<i64: 2, 2>, scalar_prefetch = 0 : i64, scratch_operands = 1 : i64, tpu.core_type = #tpu.core_type<tc>, window_params = [{transform_indices = @transform_0, window_bounds = array<i64: 1, 128, 256>}, {pipeline_mode = #tpu.pipeline_mode<synchronous>, transform_indices = @transform_1, window_bounds = array<i64: 1, 128>}, {transform_indices = @transform_2, window_bounds = array<i64: 1, 128, 384>}, {transform_indices = @transform_3, window_bounds = array<i64: 1, 128, 128>}, {transform_indices = @transform_4, window_bounds = array<i64: 1, 1, 128>}, {transform_indices = @transform_5, window_bounds = array<i64: 1, 128, 256>}, {transform_indices = @transform_6, window_bounds = array<i64: 1, 256, 128>}, {transform_indices = @transform_7, window_bounds = array<i64: 1, 128, 256>}]} {
    %c0_i32 = arith.constant 0 : i32
    %0 = arith.cmpi eq, %arg1, %c0_i32 : i32
    %1 = arith.extui %0 : i1 to i32
    %c0_i32_0 = arith.constant 0 : i32
    %2 = arith.cmpi ne, %1, %c0_i32_0 : i32
    scf.if %2 {
      %c0_43 = arith.constant 0 : index
      %c0_44 = arith.constant 0 : index
      %c0_45 = arith.constant 0 : index
      %105 = vector.load %arg2[%c0_43, %c0_44, %c0_45] : memref<1x128x256xf32, #tpu.memory_space<vmem>>, vector<1x128x256xf32>
      %106 = vector.shape_cast %105 : vector<1x128x256xf32> to vector<128x256xf32>
      %107 = tpu.transpose %106, [1, 0] : vector<128x256xf32> -> vector<256x128xf32>
      %c0_46 = arith.constant 0 : index
      %c0_47 = arith.constant 0 : index
      %108 = vector.load %arg10[%c0_46, %c0_47] : memref<256x128xf32, #tpu.memory_space<vmem>>, vector<256x128xf32>
      tpu.vector_store %arg10[%c0_46, %c0_47], %107 {strides = array<i32>} : memref<256x128xf32, #tpu.memory_space<vmem>>, vector<256x128xf32>,
    } else {
    }
    %c0 = arith.constant 0 : index
    %c0_1 = arith.constant 0 : index
    %3 = vector.load %arg10[%c0, %c0_1] : memref<256x128xf32, #tpu.memory_space<vmem>>, vector<256x128xf32>
    %c0_2 = arith.constant 0 : index
    %c0_3 = arith.constant 0 : index
    %4 = vector.load %arg3[%c0_2, %c0_3] : memref<1x128xf32, #tpu.memory_space<vmem>>, vector<1x128xf32>
    %cst = arith.constant dense<0.000000e+00> : vector<256xf32>
    %5 = vector.multi_reduction <add>, %3, %cst [1] : vector<256x128xf32> to vector<256xf32>
    %6 = vector.shape_cast %5 : vector<256xf32> to vector<256x1xf32>
    %cst_4 = arith.constant 1.280000e+02 : f32
    %7 = vector.broadcast %cst_4 : f32 to vector<256x1xf32>
    %8 = arith.divf %6, %7 : vector<256x1xf32>
    %9 = vector.broadcast %8 : vector<256x1xf32> to vector<256x128xf32>
    %10 = arith.subf %3, %9 : vector<256x128xf32>
    %11 = arith.mulf %10, %10 : vector<256x128xf32>
    %cst_5 = arith.constant dense<0.000000e+00> : vector<256xf32>
    %12 = vector.multi_reduction <add>, %11, %cst_5 [1] : vector<256x128xf32> to vector<256xf32>
    %13 = vector.shape_cast %12 : vector<256xf32> to vector<256x1xf32>
    %cst_6 = arith.constant 1.280000e+02 : f32
    %14 = vector.broadcast %cst_6 : f32 to vector<256x1xf32>
    %15 = arith.divf %13, %14 : vector<256x1xf32>
    %cst_7 = arith.constant 9.99999974E-6 : f32
    %16 = vector.broadcast %cst_7 : f32 to vector<256x1xf32>
    %17 = arith.addf %15, %16 : vector<256x1xf32>
    %18 = math.rsqrt %17 : vector<256x1xf32>
    %19 = vector.broadcast %18 : vector<256x1xf32> to vector<256x128xf32>
    %20 = arith.mulf %10, %19 : vector<256x128xf32>
    %21 = vector.broadcast %4 : vector<1x128xf32> to vector<256x128xf32>
    %22 = arith.mulf %20, %21 : vector<256x128xf32>
    %c0_8 = arith.constant 0 : index
    %c0_9 = arith.constant 0 : index
    %c0_10 = arith.constant 0 : index
    %23 = vector.load %arg4[%c0_8, %c0_9, %c0_10] : memref<1x128x384xbf16, #tpu.memory_space<vmem>>, vector<1x128x384xbf16>
    %24 = vector.shape_cast %23 : vector<1x128x384xbf16> to vector<128x384xbf16>
    %25 = arith.truncf %22 : vector<256x128xf32> to vector<256x128xbf16>
    %cst_11 = arith.constant dense<0.000000e+00> : vector<256x384xf32>
    %26 = tpu.matmul %25, %24, %cst_11 {dimension_numbers = #tpu.dot_dimension_numbers<[1], [0], [0], [1], [0, 0, 1, 1], [], []>} : vector<256x128xbf16>, vector<128x384xbf16>, vector<256x384xf32> -> vector<256x384xf32>
    %27 = vector.extract_strided_slice %26 {offsets = [0, 0], sizes = [256, 128], strides = [1, 1]} : vector<256x384xf32> to vector<256x128xf32>
    %28 = vector.extract_strided_slice %26 {offsets = [0, 128], sizes = [256, 256], strides = [1, 1]} : vector<256x384xf32> to vector<256x256xf32>
    %29 = tpu.transpose %27, [1, 0] : vector<256x128xf32> -> vector<128x256xf32>
    %30 = tpu.transpose %28, [1, 0] : vector<256x256xf32> -> vector<256x256xf32>
    %31 = vector.extract_strided_slice %30 {offsets = [0, 0], sizes = [128, 256], strides = [1, 1]} : vector<256x256xf32> to vector<128x256xf32>
    %32 = vector.extract_strided_slice %30 {offsets = [128, 0], sizes = [128, 256], strides = [1, 1]} : vector<256x256xf32> to vector<128x256xf32>
    %33 = vector.shape_cast %29 : vector<128x256xf32> to vector<8x16x256xf32>
    %34 = arith.truncf %33 : vector<8x16x256xf32> to vector<8x16x256xbf16>
    %35 = vector.shape_cast %31 : vector<128x256xf32> to vector<8x16x256xf32>
    %36 = arith.truncf %35 : vector<8x16x256xf32> to vector<8x16x256xbf16>
    %37 = vector.shape_cast %32 : vector<128x256xf32> to vector<8x16x256xf32>
    %38 = arith.truncf %37 : vector<8x16x256xf32> to vector<8x16x256xbf16>
    %cst_12 = arith.constant dense<0.000000e+00> : vector<8x256x256xf32>
    %39 = tpu.matmul %34, %36, %cst_12 {dimension_numbers = #tpu.dot_dimension_numbers<[1], [1], [2], [2], [0, 0, 0, 2, 1, 2], [0], [0]>} : vector<8x16x256xbf16>, vector<8x16x256xbf16>, vector<8x256x256xf32> -> vector<8x256x256xf32>
    %cst_13 = arith.constant dense<0xFF800000> : vector<8x256xf32>
    %40 = vector.multi_reduction <maximumf>, %39, %cst_13 [2] : vector<8x256x256xf32> to vector<8x256xf32>
    %41 = vector.shape_cast %40 : vector<8x256xf32> to vector<8x256x1xf32>
    %42 = vector.broadcast %41 : vector<8x256x1xf32> to vector<8x256x256xf32>
    %43 = arith.subf %39, %42 : vector<8x256x256xf32>
    %44 = math.exp %43 : vector<8x256x256xf32>
    %cst_14 = arith.constant dense<0.000000e+00> : vector<8x256xf32>
    %45 = vector.multi_reduction <add>, %44, %cst_14 [2] : vector<8x256x256xf32> to vector<8x256xf32>
    %46 = vector.shape_cast %45 : vector<8x256xf32> to vector<8x256x1xf32>
    %47 = tpu.reciprocal %46 {approx = true} : vector<8x256x1xf32> -> vector<8x256x1xf32>
    %48 = vector.broadcast %47 : vector<8x256x1xf32> to vector<8x256x256xf32>
    %49 = arith.mulf %44, %48 : vector<8x256x256xf32>
    %50 = arith.truncf %49 : vector<8x256x256xf32> to vector<8x256x256xbf16>
    %cst_15 = arith.constant dense<0.000000e+00> : vector<8x16x256xf32>
    %51 = tpu.matmul %38, %50, %cst_15 {dimension_numbers = #tpu.dot_dimension_numbers<[2], [2], [1], [1], [0, 0, 0, 1, 1, 1], [0], [0]>} : vector<8x16x256xbf16>, vector<8x256x256xbf16>, vector<8x16x256xf32> -> vector<8x16x256xf32>
    %52 = vector.shape_cast %51 : vector<8x16x256xf32> to vector<128x256xf32>
    %53 = tpu.transpose %52, [1, 0] : vector<128x256xf32> -> vector<256x128xf32>
    %c0_16 = arith.constant 0 : index
    %c0_17 = arith.constant 0 : index
    %c0_18 = arith.constant 0 : index
    %54 = vector.load %arg5[%c0_16, %c0_17, %c0_18] : memref<1x128x128xbf16, #tpu.memory_space<vmem>>, vector<1x128x128xbf16>
    %55 = vector.shape_cast %54 : vector<1x128x128xbf16> to vector<128x128xbf16>
    %56 = arith.truncf %53 : vector<256x128xf32> to vector<256x128xbf16>
    %cst_19 = arith.constant dense<0.000000e+00> : vector<256x128xf32>
    %57 = tpu.matmul %56, %55, %cst_19 {dimension_numbers = #tpu.dot_dimension_numbers<[1], [0], [0], [1], [0, 0, 1, 1], [], []>} : vector<256x128xbf16>, vector<128x128xbf16>, vector<256x128xf32> -> vector<256x128xf32>
    %58 = arith.addf %3, %57 : vector<256x128xf32>
    %c0_20 = arith.constant 0 : index
    %c0_21 = arith.constant 0 : index
    %c0_22 = arith.constant 0 : index
    %59 = vector.load %arg6[%c0_20, %c0_21, %c0_22] : memref<1x1x128xf32, #tpu.memory_space<vmem>>, vector<1x1x128xf32>
    %60 = vector.shape_cast %59 : vector<1x1x128xf32> to vector<1x128xf32>
    %cst_23 = arith.constant dense<0.000000e+00> : vector<256xf32>
    %61 = vector.multi_reduction <add>, %58, %cst_23 [1] : vector<256x128xf32> to vector<256xf32>
    %62 = vector.shape_cast %61 : vector<256xf32> to vector<256x1xf32>
    %cst_24 = arith.constant 1.280000e+02 : f32
    %63 = vector.broadcast %cst_24 : f32 to vector<256x1xf32>
    %64 = arith.divf %62, %63 : vector<256x1xf32>
    %65 = vector.broadcast %64 : vector<256x1xf32> to vector<256x128xf32>
    %66 = arith.subf %58, %65 : vector<256x128xf32>
    %67 = arith.mulf %66, %66 : vector<256x128xf32>
    %cst_25 = arith.constant dense<0.000000e+00> : vector<256xf32>
    %68 = vector.multi_reduction <add>, %67, %cst_25 [1] : vector<256x128xf32> to vector<256xf32>
    %69 = vector.shape_cast %68 : vector<256xf32> to vector<256x1xf32>
    %cst_26 = arith.constant 1.280000e+02 : f32
    %70 = vector.broadcast %cst_26 : f32 to vector<256x1xf32>
    %71 = arith.divf %69, %70 : vector<256x1xf32>
    %cst_27 = arith.constant 9.99999974E-6 : f32
    %72 = vector.broadcast %cst_27 : f32 to vector<256x1xf32>
    %73 = arith.addf %71, %72 : vector<256x1xf32>
    %74 = math.rsqrt %73 : vector<256x1xf32>
    %75 = vector.broadcast %74 : vector<256x1xf32> to vector<256x128xf32>
    %76 = arith.mulf %66, %75 : vector<256x128xf32>
    %77 = vector.broadcast %60 : vector<1x128xf32> to vector<256x128xf32>
    %78 = arith.mulf %76, %77 : vector<256x128xf32>
    %c0_28 = arith.constant 0 : index
    %c0_29 = arith.constant 0 : index
    %c0_30 = arith.constant 0 : index
    %79 = vector.load %arg7[%c0_28, %c0_29, %c0_30] : memref<1x128x256xbf16, #tpu.memory_space<vmem>>, vector<1x128x256xbf16>
    %80 = vector.shape_cast %79 : vector<1x128x256xbf16> to vector<128x256xbf16>
    %81 = arith.truncf %78 : vector<256x128xf32> to vector<256x128xbf16>
    %cst_31 = arith.constant dense<0.000000e+00> : vector<256x256xf32>
    %82 = tpu.matmul %81, %80, %cst_31 {dimension_numbers = #tpu.dot_dimension_numbers<[1], [0], [0], [1], [0, 0, 1, 1], [], []>} : vector<256x128xbf16>, vector<128x256xbf16>, vector<256x256xf32> -> vector<256x256xf32>
    %83 = arith.mulf %82, %82 : vector<256x256xf32>
    %84 = arith.mulf %82, %83 : vector<256x256xf32>
    %cst_32 = arith.constant 4.471500e-02 : f32
    %85 = vector.broadcast %cst_32 : f32 to vector<256x256xf32>
    %86 = arith.mulf %85, %84 : vector<256x256xf32>
    %87 = arith.addf %82, %86 : vector<256x256xf32>
    %cst_33 = arith.constant 0.797884583 : f32
    %88 = vector.broadcast %cst_33 : f32 to vector<256x256xf32>
    %89 = arith.mulf %88, %87 : vector<256x256xf32>
    %90 = math.tanh %89 : vector<256x256xf32>
    %cst_34 = arith.constant 1.000000e+00 : f32
    %91 = vector.broadcast %cst_34 : f32 to vector<256x256xf32>
    %92 = arith.addf %91, %90 : vector<256x256xf32>
    %cst_35 = arith.constant 5.000000e-01 : f32
    %93 = vector.broadcast %cst_35 : f32 to vector<256x256xf32>
    %94 = arith.mulf %93, %92 : vector<256x256xf32>
    %95 = arith.mulf %82, %94 : vector<256x256xf32>
    %c0_36 = arith.constant 0 : index
    %c0_37 = arith.constant 0 : index
    %c0_38 = arith.constant 0 : index
    %96 = vector.load %arg8[%c0_36, %c0_37, %c0_38] : memref<1x256x128xbf16, #tpu.memory_space<vmem>>, vector<1x256x128xbf16>
    %97 = vector.shape_cast %96 : vector<1x256x128xbf16> to vector<256x128xbf16>
    %98 = arith.truncf %95 : vector<256x256xf32> to vector<256x256xbf16>
    %cst_39 = arith.constant dense<0.000000e+00> : vector<256x128xf32>
    %99 = tpu.matmul %98, %97, %cst_39 {dimension_numbers = #tpu.dot_dimension_numbers<[1], [0], [0], [1], [0, 0, 1, 1], [], []>} : vector<256x256xbf16>, vector<256x128xbf16>, vector<256x128xf32> -> vector<256x128xf32>
    %100 = arith.addf %58, %99 : vector<256x128xf32>
    %c0_40 = arith.constant 0 : index
    %c0_41 = arith.constant 0 : index
    %101 = vector.load %arg10[%c0_40, %c0_41] : memref<256x128xf32, #tpu.memory_space<vmem>>, vector<256x128xf32>
    tpu.vector_store %arg10[%c0_40, %c0_41], %100 {strides = array<i32>} : memref<256x128xf32, #tpu.memory_space<vmem>>, vector<256x128xf32>,
    %c1_i32 = arith.constant 1 : i32
    %102 = arith.cmpi eq, %arg1, %c1_i32 : i32
    %103 = arith.extui %102 : i1 to i32
    %c0_i32_42 = arith.constant 0 : i32
    %104 = arith.cmpi ne, %103, %c0_i32_42 : i32
    scf.if %104 {
      %105 = tpu.transpose %100, [1, 0] : vector<256x128xf32> -> vector<128x256xf32>
      %c0_43 = arith.constant 0 : index
      %c0_44 = arith.constant 0 : index
      %c0_45 = arith.constant 0 : index
      %106 = vector.load %arg9[%c0_43, %c0_44, %c0_45] : memref<1x128x256xf32, #tpu.memory_space<vmem>>, vector<1x128x256xf32>
      %107 = vector.shape_cast %106 : vector<1x128x256xf32> to vector<128x256xf32>
      %108 = vector.shape_cast %105 : vector<128x256xf32> to vector<1x128x256xf32>
      tpu.vector_store %arg9[%c0_43, %c0_44, %c0_45], %108 {strides = array<i32>} : memref<1x128x256xf32, #tpu.memory_space<vmem>>, vector<1x128x256xf32>,
    } else {
    }
    return
  }
  func.func @transform_0(%arg0: i32, %arg1: i32) -> (i32, i32, i32) {
    %c0_i32 = arith.constant 0 : i32
    %c0_i32_0 = arith.constant 0 : i32
    %c0_i32_1 = arith.constant 0 : i32
    return %arg0, %c0_i32, %c0_i32_0 : i32, i32, i32
  }
  func.func @transform_1(%arg0: i32, %arg1: i32) -> (i32, i32) {
    %c0_i32 = arith.constant 0 : i32
    %c0_i32_0 = arith.constant 0 : i32
    %c0_i32_1 = arith.constant 0 : i32
    return %c0_i32, %c0_i32_0 : i32, i32
  }
  func.func @transform_2(%arg0: i32, %arg1: i32) -> (i32, i32, i32) {
    %c0_i32 = arith.constant 0 : i32
    %c0_i32_0 = arith.constant 0 : i32
    %c0_i32_1 = arith.constant 0 : i32
    return %arg1, %c0_i32, %c0_i32_0 : i32, i32, i32
  }
  func.func @transform_3(%arg0: i32, %arg1: i32) -> (i32, i32, i32) {
    %c0_i32 = arith.constant 0 : i32
    %c0_i32_0 = arith.constant 0 : i32
    %c0_i32_1 = arith.constant 0 : i32
    return %arg1, %c0_i32, %c0_i32_0 : i32, i32, i32
  }
  func.func @transform_4(%arg0: i32, %arg1: i32) -> (i32, i32, i32) {
    %c0_i32 = arith.constant 0 : i32
    %c0_i32_0 = arith.constant 0 : i32
    %c0_i32_1 = arith.constant 0 : i32
    return %arg1, %c0_i32, %c0_i32_0 : i32, i32, i32
  }
  func.func @transform_5(%arg0: i32, %arg1: i32) -> (i32, i32, i32) {
    %c0_i32 = arith.constant 0 : i32
    %c0_i32_0 = arith.constant 0 : i32
    %c0_i32_1 = arith.constant 0 : i32
    return %arg1, %c0_i32, %c0_i32_0 : i32, i32, i32
  }
  func.func @transform_6(%arg0: i32, %arg1: i32) -> (i32, i32, i32) {
    %c0_i32 = arith.constant 0 : i32
    %c0_i32_0 = arith.constant 0 : i32
    %c0_i32_1 = arith.constant 0 : i32
    return %arg1, %c0_i32, %c0_i32_0 : i32, i32, i32
  }
  func.func @transform_7(%arg0: i32, %arg1: i32) -> (i32, i32, i32) {
    %c0_i32 = arith.constant 0 : i32
    %c0_i32_0 = arith.constant 0 : i32
    %c0_i32_1 = arith.constant 0 : i32
    return %arg0, %c0_i32, %c0_i32_0 : i32, i32, i32
  }
}

</mosaic_0001>

<llo_original>
// kernel: tpu_custom_call.1
$region0: #{tpu_custom_call.1}
  #allocation0 [shape = 'u32[]', space=smem, size = 0x4, offset = 0x4, fixed_abs, tag = 'smem constant byte address 0x4 - core index']
  #allocation1 [shape = 'u32[144,128]{1,0:T(1,128)}', space=vmem, size = 0x12000, scoped, tag = 'internal scratch']
  #allocation2 [shape = 'f32[256,128]{1,0:T(8,128)}', space=vmem, size = 0x20000, scoped, tag = 'scratch operand']
  %s0 = inlined_call_operand.hbm [shape: f32[2,128,256], index: 0, kind: input, shape index: {}]
  %s1 = inlined_call_operand.vmem [shape: f32[1,128], index: 1, kind: input, shape index: {}]
  %s2 = inlined_call_operand.hbm [shape: bf16[2,128,384], index: 2, kind: input, shape index: {}]
  %s3 = inlined_call_operand.hbm [shape: bf16[2,128,128], index: 3, kind: input, shape index: {}]
  %s4 = inlined_call_operand.vmem [shape: f32[2,1,128], index: 4, kind: input, shape index: {}]
  %s5 = inlined_call_operand.hbm [shape: bf16[2,128,256], index: 5, kind: input, shape index: {}]
  %s6 = inlined_call_operand.hbm [shape: bf16[2,256,128], index: 6, kind: input, shape index: {}]
  %s7 = inlined_call_operand.hbm [shape: f32[2,128,256], index: 7, kind: output, shape index: {}]
  %s8 = sld [smem:[#allocation0]]
  $region89: #{tpu_custom_call.1} parent=0
    _
  %s10 = ssub.s32 1, %s8
  %s11 = scalar_select 0, %s10, %s8
  $region1: #{tpu_custom_call.1} parent=0
    #allocation3 [shape = 'u8[262144]{0}', space=vmem, size = 0x40000, scoped, tag = 'input window, operand 0']
    #allocation4 [shape = 's32[2]{0}', space=sflag, size = 0x8, scoped, tag = 'scoped memory for tpu_custom_call.1']
    #allocation5 [shape = 's32[2]{0}', space=sflag, size = 0x8, scoped, tag = 'scoped memory for tpu_custom_call.1']
    #allocation6 [shape = 'u8[196608]{0}', space=vmem, size = 0x30000, scoped, tag = 'input window, operand 2']
    #allocation7 [shape = 's32[2]{0}', space=sflag, size = 0x8, scoped, tag = 'scoped memory for tpu_custom_call.1']
    #allocation8 [shape = 'u8[65536]{0}', space=vmem, size = 0x10000, scoped, tag = 'input window, operand 3']
    #allocation9 [shape = 'u8[131072]{0}', space=vmem, size = 0x20000, scoped, tag = 'input window, operand 5']
    #allocation10 [shape = 's32[2]{0}', space=sflag, size = 0x8, scoped, tag = 'scoped memory for tpu_custom_call.1']
    #allocation11 [shape = 'u8[131072]{0}', space=vmem, size = 0x20000, scoped, tag = 'input window, operand 6']
    #allocation12 [shape = 'u8[262144]{0}', space=vmem, size = 0x40000, scoped, tag = 'output window, operand 0']
    %12 = vsyncpa [#allocation4], 0
    %s13 = scalar_lea.sflag [#allocation4], 1
    %14 = vsyncpa %s13, 0
    %15 = vsyncpa [#allocation7], 0
    %s16 = scalar_lea.sflag [#allocation7], 1
    %17 = vsyncpa %s16, 0
    %18 = vsyncpa [#allocation10], 0
    %s19 = scalar_lea.sflag [#allocation10], 1
    %20 = vsyncpa %s19, 0
    %21 = vsyncpa [#allocation5], 0
    %s22 = scalar_lea.sflag [#allocation5], 1
    %23 = vsyncpa %s22, 0
    loop: start=0, step=1, limit=6
    $region2: #{tpu_custom_call.1} parent=1 // loop_pre_header
      _
    $region3: #{tpu_custom_call.1} parent=1 // loop_header
      %s25 = sphi 0, %s29
      %p26 = scmp.ge.s32.totalorder %s25, 6
      %s32 = sphi 0, %s44
      %s33 = sphi 0, %s40
      %s34 = sphi 0, %s32
      %s35 = sphi 0, %s33
      %s36 = sphi 0, %s34
      %s37 = sphi 0, %s35
      %s47 = sphi 0, %s49
      %s50 = sphi 0, %s47
      %s51 = sphi 0, %s50
      %s67 = sphi 0, %s51
      %s71 = sphi 0, %s71
      %s73 = sphi 0, %s71
      %s74 = sphi 0, %s73
      %s88 = sphi 0, %s74
      %s94 = sphi 0, %s96
      %s97 = sphi 0, %s94
      %s98 = sphi 0, %s97
      %s114 = sphi 0, %s98
      %s120 = sphi 0, %s122
      %s123 = sphi 0, %s120
      %s124 = sphi 0, %s123
      %s140 = sphi 0, %s124
      %s146 = sphi 0, %s148
      %s149 = sphi 0, %s146
      %s150 = sphi 0, %s149
      %s166 = sphi 0, %s150
      %s172 = sphi 0, %s174
      %s175 = sphi 0, %s172
      %s176 = sphi 0, %s175
      %s192 = sphi 0, %s176
      %s198 = sphi 0, %s200
      %s201 = sphi 0, %s198
      %s202 = sphi 0, %s201
      %s218 = sphi 0, %s202
      %s224 = sphi 0, %s226
      %s227 = sphi 0, %s224
      %s228 = sphi 0, %s227
      %s244 = sphi 0, %s228
    $region4: #{tpu_custom_call.1} parent=1 // loop_header_branch
      %28 = sbr.rel (%p26) target = $region8
    $region5: #{tpu_custom_call.1} parent=1 // loop_body
      %s30 = ssub.s32 %s25, 1
      %s31 = ssub.s32 %s25, 2
      %s38 = sadd.s32 1, %s33
      %p39 = scmp.ge.s32.totalorder %s38, 2
      %s40 = scalar_select %p39, 0, %s38
      %s41 = sadd.s32 1, %s32
      %s42 = scalar_select %p39, %s41, %s32
      %p43 = scmp.ge.s32.totalorder %s42, 2
      %s44 = scalar_select %p43, 0, %s42
      %s45 = ssub.s32 %s32, %s44
      %p46 = scmp.eq.s32.totalorder %s45, 0
      %s48 = sadd.s32 %s47, 1
      %s49 = scalar_select %p46, %s47, %s48
      %p52 = pneg %p46
      %p53 = scmp.eq.s32.totalorder %s25, 3
      %p54 = por %p52, %p53
      %p55 = scmp.ne.s32.totalorder %s47, %s50
      %p56 = scmp.eq.s32.totalorder %s25, 0
      %p57 = por %p55, %p56
      %p58 = scmp.ne.s32.totalorder %s47, %s50
      %p59 = scmp.eq.s32.totalorder %s30, 3
      %p60 = por %p58, %p59
      %p61 = scmp.ne.s32.totalorder %s50, %s51
      %p62 = scmp.eq.s32.totalorder %s30, 0
      %p63 = por %p61, %p62
      %p64 = scmp.ne.s32.totalorder %s50, %s51
      %p65 = scmp.eq.s32.totalorder %s31, 3
      %p66 = por %p64, %p65
      %p68 = scmp.ne.s32.totalorder %s51, %s67
      %p69 = scmp.eq.s32.totalorder %s31, 0
      %p70 = por %p68, %p69
      %s72 = sadd.s32 %s71, 1
      %p75 = scmp.eq.s32.totalorder %s25, 3
      %p76 = scmp.ne.s32.totalorder %s71, %s73
      %p77 = scmp.eq.s32.totalorder %s25, 0
      %p78 = por %p76, %p77
      %p79 = scmp.ne.s32.totalorder %s71, %s73
      %p80 = scmp.eq.s32.totalorder %s30, 3
      %p81 = por %p79, %p80
      %p82 = scmp.ne.s32.totalorder %s73, %s74
      %p83 = scmp.eq.s32.totalorder %s30, 0
      %p84 = por %p82, %p83
      %p85 = scmp.ne.s32.totalorder %s73, %s74
      %p86 = scmp.eq.s32.totalorder %s31, 3
      %p87 = por %p85, %p86
      %p89 = scmp.ne.s32.totalorder %s74, %s88
      %p90 = scmp.eq.s32.totalorder %s31, 0
      %p91 = por %p89, %p90
      %s92 = ssub.s32 %s33, %s40
      %p93 = scmp.eq.s32.totalorder %s92, 0
      %s95 = sadd.s32 %s94, 1
      %s96 = scalar_select %p93, %s94, %s95
      %p99 = pneg %p93
      %p100 = scmp.eq.s32.totalorder %s25, 3
      %p101 = por %p99, %p100
      %p102 = scmp.ne.s32.totalorder %s94, %s97
      %p103 = scmp.eq.s32.totalorder %s25, 0
      %p104 = por %p102, %p103
      %p105 = scmp.ne.s32.totalorder %s94, %s97
      %p106 = scmp.eq.s32.totalorder %s30, 3
      %p107 = por %p105, %p106
      %p108 = scmp.ne.s32.totalorder %s97, %s98
      %p109 = scmp.eq.s32.totalorder %s30, 0
      %p110 = por %p108, %p109
      %p111 = scmp.ne.s32.totalorder %s97, %s98
      %p112 = scmp.eq.s32.totalorder %s31, 3
      %p113 = por %p111, %p112
      %p115 = scmp.ne.s32.totalorder %s98, %s114
      %p116 = scmp.eq.s32.totalorder %s31, 0
      %p117 = por %p115, %p116
      %s118 = ssub.s32 %s33, %s40
      %p119 = scmp.eq.s32.totalorder %s118, 0
      %s121 = sadd.s32 %s120, 1
      %s122 = scalar_select %p119, %s120, %s121
      %p125 = pneg %p119
      %p126 = scmp.eq.s32.totalorder %s25, 3
      %p127 = por %p125, %p126
      %p128 = scmp.ne.s32.totalorder %s120, %s123
      %p129 = scmp.eq.s32.totalorder %s25, 0
      %p130 = por %p128, %p129
      %p131 = scmp.ne.s32.totalorder %s120, %s123
      %p132 = scmp.eq.s32.totalorder %s30, 3
      %p133 = por %p131, %p132
      %p134 = scmp.ne.s32.totalorder %s123, %s124
      %p135 = scmp.eq.s32.totalorder %s30, 0
      %p136 = por %p134, %p135
      %p137 = scmp.ne.s32.totalorder %s123, %s124
      %p138 = scmp.eq.s32.totalorder %s31, 3
      %p139 = por %p137, %p138
      %p141 = scmp.ne.s32.totalorder %s124, %s140
      %p142 = scmp.eq.s32.totalorder %s31, 0
      %p143 = por %p141, %p142
      %s144 = ssub.s32 %s33, %s40
      %p145 = scmp.eq.s32.totalorder %s144, 0
      %s147 = sadd.s32 %s146, 1
      %s148 = scalar_select %p145, %s146, %s147
      %p151 = pneg %p145
      %p152 = scmp.eq.s32.totalorder %s25, 3
      %p153 = por %p151, %p152
      %p154 = scmp.ne.s32.totalorder %s146, %s149
      %p155 = scmp.eq.s32.totalorder %s25, 0
      %p156 = por %p154, %p155
      %p157 = scmp.ne.s32.totalorder %s146, %s149
      %p158 = scmp.eq.s32.totalorder %s30, 3
      %p159 = por %p157, %p158
      %p160 = scmp.ne.s32.totalorder %s149, %s150
      %p161 = scmp.eq.s32.totalorder %s30, 0
      %p162 = por %p160, %p161
      %p163 = scmp.ne.s32.totalorder %s149, %s150
      %p164 = scmp.eq.s32.totalorder %s31, 3
      %p165 = por %p163, %p164
      %p167 = scmp.ne.s32.totalorder %s150, %s166
      %p168 = scmp.eq.s32.totalorder %s31, 0
      %p169 = por %p167, %p168
      %s170 = ssub.s32 %s33, %s40
      %p171 = scmp.eq.s32.totalorder %s170, 0
      %s173 = sadd.s32 %s172, 1
      %s174 = scalar_select %p171, %s172, %s173
      %p177 = pneg %p171
      %p178 = scmp.eq.s32.totalorder %s25, 3
      %p179 = por %p177, %p178
      %p180 = scmp.ne.s32.totalorder %s172, %s175
      %p181 = scmp.eq.s32.totalorder %s25, 0
      %p182 = por %p180, %p181
      %p183 = scmp.ne.s32.totalorder %s172, %s175
      %p184 = scmp.eq.s32.totalorder %s30, 3
      %p185 = por %p183, %p184
      %p186 = scmp.ne.s32.totalorder %s175, %s176
      %p187 = scmp.eq.s32.totalorder %s30, 0
      %p188 = por %p186, %p187
      %p189 = scmp.ne.s32.totalorder %s175, %s176
      %p190 = scmp.eq.s32.totalorder %s31, 3
      %p191 = por %p189, %p190
      %p193 = scmp.ne.s32.totalorder %s176, %s192
      %p194 = scmp.eq.s32.totalorder %s31, 0
      %p195 = por %p193, %p194
      %s196 = ssub.s32 %s33, %s40
      %p197 = scmp.eq.s32.totalorder %s196, 0
      %s199 = sadd.s32 %s198, 1
      %s200 = scalar_select %p197, %s198, %s199
      %p203 = pneg %p197
      %p204 = scmp.eq.s32.totalorder %s25, 3
      %p205 = por %p203, %p204
      %p206 = scmp.ne.s32.totalorder %s198, %s201
      %p207 = scmp.eq.s32.totalorder %s25, 0
      %p208 = por %p206, %p207
      %p209 = scmp.ne.s32.totalorder %s198, %s201
      %p210 = scmp.eq.s32.totalorder %s30, 3
      %p211 = por %p209, %p210
      %p212 = scmp.ne.s32.totalorder %s201, %s202
      %p213 = scmp.eq.s32.totalorder %s30, 0
      %p214 = por %p212, %p213
      %p215 = scmp.ne.s32.totalorder %s201, %s202
      %p216 = scmp.eq.s32.totalorder %s31, 3
      %p217 = por %p215, %p216
      %p219 = scmp.ne.s32.totalorder %s202, %s218
      %p220 = scmp.eq.s32.totalorder %s31, 0
      %p221 = por %p219, %p220
      %s222 = ssub.s32 %s32, %s44
      %p223 = scmp.eq.s32.totalorder %s222, 0
      %s225 = sadd.s32 %s224, 1
      %s226 = scalar_select %p223, %s224, %s225
      %p229 = pneg %p223
      %p230 = scmp.eq.s32.totalorder %s25, 3
      %p231 = por %p229, %p230
      %p232 = scmp.ne.s32.totalorder %s224, %s227
      %p233 = scmp.eq.s32.totalorder %s25, 0
      %p234 = por %p232, %p233
      %p235 = scmp.ne.s32.totalorder %s224, %s227
      %p236 = scmp.eq.s32.totalorder %s30, 3
      %p237 = por %p235, %p236
      %p238 = scmp.ne.s32.totalorder %s227, %s228
      %p239 = scmp.eq.s32.totalorder %s30, 0
      %p240 = por %p238, %p239
      %p241 = scmp.ne.s32.totalorder %s227, %s228
      %p242 = scmp.eq.s32.totalorder %s31, 3
      %p243 = por %p241, %p242
      %p245 = scmp.ne.s32.totalorder %s228, %s244
      %p246 = scmp.eq.s32.totalorder %s31, 0
      %p247 = por %p245, %p246
      %p248 = scmp.le.s32.totalorder 1, %s25
      %p249 = scmp.lt.s32.totalorder %s25, 5
      %p250 = pnand %p248, %p249
      %p251 = pneg %p250
      // Predicated region
      $region9: #{tpu_custom_call.1} parent=5 // pred_check
        _
      $region10: #{tpu_custom_call.1} parent=5 // pred_check_branch
        %253 = sbr.rel (%p250) target = $region12
      $region11: #{tpu_custom_call.1} parent=5 // pred_region
        %s254 = ssub.s32 %s25, 1
        // Predicated region
        $region13: #{tpu_custom_call.1} parent=11 // pred_check
          %p255 = pneg %p84
        $region14: #{tpu_custom_call.1} parent=11 // pred_check_branch
          %257 = sbr.rel (%p255) target = $region16
        $region15: #{tpu_custom_call.1} parent=11 // pred_region
          _
        $region16: #{tpu_custom_call.1} parent=11 // pred_fallthru
          _
      $region12: #{tpu_custom_call.1} parent=5 // pred_fallthru
        _
      %p258 = scmp.lt.s32.totalorder %s25, 4
      // Predicated region
      $region17: #{tpu_custom_call.1} parent=5 // pred_check
        %p259 = pneg %p258
      $region18: #{tpu_custom_call.1} parent=5 // pred_check_branch
        %261 = sbr.rel (%p259) target = $region20
      $region19: #{tpu_custom_call.1} parent=5 // pred_region
        // Predicated region
        $region21: #{tpu_custom_call.1} parent=19 // pred_check
          %p262 = pneg %p57
        $region22: #{tpu_custom_call.1} parent=19 // pred_check_branch
          %264 = sbr.rel (%p262) target = $region24
        $region23: #{tpu_custom_call.1} parent=19 // pred_region
          %s265 = sand.u32 %s47, 1
          %s266 = scalar_lea.sflag [#allocation4], %s265
          %s267 = sand.u32 %s47, 1
          %s268 = smul.addr %s267, 256
          %s269 = scalar_lea.vmem [#allocation3], %s268
          %s271 = ssub.s32 4096, 4096
          %272 = vsyncadd %s266, %s271
          %s273 = smul.addr %s32, 32
          %s274 = smul.addr %s273, 128
          %s275 = scalar_lea.hbm %s0, %s274
          %s276 = sshll.u32 %s269, 4
          %s277 = int_to_ptr.vmem [resolvable:$true] %s276
          %282 = dma.hbm_to_vmem [thread:$0]  %s275, 4096, %s277, %s266, 256, 256, 16
        $region24: #{tpu_custom_call.1} parent=19 // pred_fallthru
          _
        // Predicated region
        $region25: #{tpu_custom_call.1} parent=19 // pred_check
          %p283 = pneg %p104
        $region26: #{tpu_custom_call.1} parent=19 // pred_check_branch
          %285 = sbr.rel (%p283) target = $region28
        $region27: #{tpu_custom_call.1} parent=19 // pred_region
          %s286 = sand.u32 %s25, 1
          %s287 = scalar_lea.sflag [#allocation7], %s286
          %s288 = sand.u32 %s94, 1
          %s289 = smul.addr %s288, 192
          %s290 = scalar_lea.vmem [#allocation6], %s289
          %s292 = ssub.s32 3072, 3072
          %293 = vsyncadd %s287, %s292
          %s294 = smul.addr %s33, 48
          %s295 = smul.addr %s294, 64
          %s296 = scalar_lea.hbm %s2, %s295
          %s297 = sshll.u32 %s290, 4
          %s298 = int_to_ptr.vmem [resolvable:$true] %s297
          %303 = dma.hbm_to_vmem [thread:$0]  %s296, 3072, %s298, %s287, 192, 192, 12
        $region28: #{tpu_custom_call.1} parent=19 // pred_fallthru
          _
        // Predicated region
        $region29: #{tpu_custom_call.1} parent=19 // pred_check
          %p304 = pneg %p130
        $region30: #{tpu_custom_call.1} parent=19 // pred_check_branch
          %306 = sbr.rel (%p304) target = $region32
        $region31: #{tpu_custom_call.1} parent=19 // pred_region
          %s307 = sand.u32 %s25, 1
          %s308 = scalar_lea.sflag [#allocation7], %s307
          %s309 = sand.u32 %s120, 1
          %s310 = smul.addr %s309, 64
          %s311 = scalar_lea.vmem [#allocation8], %s310
          %s313 = ssub.s32 1024, 1024
          %314 = vsyncadd %s308, %s313
          %s315 = smul.addr %s33, 16
          %s316 = smul.addr %s315, 64
          %s317 = scalar_lea.hbm %s3, %s316
          %s318 = sshll.u32 %s311, 4
          %s319 = int_to_ptr.vmem [resolvable:$true] %s318
          %324 = dma.hbm_to_vmem [thread:$0]  %s317, 1024, %s319, %s308, 64, 64, 4
        $region32: #{tpu_custom_call.1} parent=19 // pred_fallthru
          _
        // Predicated region
        $region33: #{tpu_custom_call.1} parent=19 // pred_check
          %p325 = pneg %p156
        $region34: #{tpu_custom_call.1} parent=19 // pred_check_branch
          %327 = sbr.rel (%p325) target = $region36
        $region35: #{tpu_custom_call.1} parent=19 // pred_region
          %p328 = scmp.lt.s32.totalorder %s33, 1
          %s329 = scalar_select %p328, %s33, 1
          %s330 = scalar_lea.vmem %s4, %s329
        $region36: #{tpu_custom_call.1} parent=19 // pred_fallthru
          _
        // Predicated region
        $region37: #{tpu_custom_call.1} parent=19 // pred_check
          %p331 = pneg %p182
        $region38: #{tpu_custom_call.1} parent=19 // pred_check_branch
          %333 = sbr.rel (%p331) target = $region40
        $region39: #{tpu_custom_call.1} parent=19 // pred_region
          %s334 = sand.u32 %s25, 1
          %s335 = scalar_lea.sflag [#allocation10], %s334
          %s336 = sand.u32 %s172, 1
          %s337 = smul.addr %s336, 128
          %s338 = scalar_lea.vmem [#allocation9], %s337
          %s340 = ssub.s32 2048, 2048
          %341 = vsyncadd %s335, %s340
          %s342 = smul.addr %s33, 32
          %s343 = smul.addr %s342, 64
          %s344 = scalar_lea.hbm %s5, %s343
          %s345 = sshll.u32 %s338, 4
          %s346 = int_to_ptr.vmem [resolvable:$true] %s345
          %351 = dma.hbm_to_vmem [thread:$0]  %s344, 2048, %s346, %s335, 128, 128, 8
        $region40: #{tpu_custom_call.1} parent=19 // pred_fallthru
          _
        // Predicated region
        $region41: #{tpu_custom_call.1} parent=19 // pred_check
          %p352 = pneg %p208
        $region42: #{tpu_custom_call.1} parent=19 // pred_check_branch
          %354 = sbr.rel (%p352) target = $region44
        $region43: #{tpu_custom_call.1} parent=19 // pred_region
          %s355 = sand.u32 %s25, 1
          %s356 = scalar_lea.sflag [#allocation10], %s355
          %s357 = sand.u32 %s198, 1
          %s358 = smul.addr %s357, 128
          %s359 = scalar_lea.vmem [#allocation11], %s358
          %s361 = ssub.s32 2048, 2048
          %362 = vsyncadd %s356, %s361
          %s363 = smul.addr %s33, 32
          %s364 = smul.addr %s363, 64
          %s365 = scalar_lea.hbm %s6, %s364
          %s366 = sshll.u32 %s359, 4
          %s367 = int_to_ptr.vmem [resolvable:$true] %s366
          %372 = dma.hbm_to_vmem [thread:$0]  %s365, 2048, %s367, %s356, 64, 64, 4
        $region44: #{tpu_custom_call.1} parent=19 // pred_fallthru
          _
      $region20: #{tpu_custom_call.1} parent=5 // pred_fallthru
        _
      %p373 = scmp.le.s32.totalorder 1, %s25
      %p374 = scmp.lt.s32.totalorder %s25, 5
      %p375 = pnand %p373, %p374
      %p376 = pneg %p375
      // Predicated region
      $region45: #{tpu_custom_call.1} parent=5 // pred_check
        _
      $region46: #{tpu_custom_call.1} parent=5 // pred_check_branch
        %378 = sbr.rel (%p375) target = $region48
      $region47: #{tpu_custom_call.1} parent=5 // pred_region
        %s379 = ssub.s32 %s25, 1
        %s380 = sand.u32 %s50, 1
        %s381 = scalar_lea.sflag [#allocation4], %s380
        %s382 = sand.u32 %s50, 1
        %s383 = smul.addr %s382, 256
        %s384 = scalar_lea.vmem [#allocation3], %s383
        // Predicated region
        $region49: #{tpu_custom_call.1} parent=47 // pred_check
          %p385 = pneg %p63
        $region50: #{tpu_custom_call.1} parent=47 // pred_check_branch
          %387 = sbr.rel (%p385) target = $region52
        $region51: #{tpu_custom_call.1} parent=47 // pred_region
          %388 = dma.done %s381, 4096
        $region52: #{tpu_custom_call.1} parent=47 // pred_fallthru
          _
        %s389 = sand.u32 %s30, 1
        %s390 = scalar_lea.sflag [#allocation7], %s389
        %s391 = sand.u32 %s97, 1
        %s392 = smul.addr %s391, 192
        %s393 = scalar_lea.vmem [#allocation6], %s392
        // Predicated region
        $region53: #{tpu_custom_call.1} parent=47 // pred_check
          %p394 = pneg %p110
        $region54: #{tpu_custom_call.1} parent=47 // pred_check_branch
          %396 = sbr.rel (%p394) target = $region56
        $region55: #{tpu_custom_call.1} parent=47 // pred_region
          %397 = dma.done %s390, 3072
        $region56: #{tpu_custom_call.1} parent=47 // pred_fallthru
          _
        %s398 = sand.u32 %s30, 1
        %s399 = scalar_lea.sflag [#allocation7], %s398
        %s400 = sand.u32 %s123, 1
        %s401 = smul.addr %s400, 64
        %s402 = scalar_lea.vmem [#allocation8], %s401
        // Predicated region
        $region57: #{tpu_custom_call.1} parent=47 // pred_check
          %p403 = pneg %p136
        $region58: #{tpu_custom_call.1} parent=47 // pred_check_branch
          %405 = sbr.rel (%p403) target = $region60
        $region59: #{tpu_custom_call.1} parent=47 // pred_region
          %406 = dma.done %s399, 1024
        $region60: #{tpu_custom_call.1} parent=47 // pred_fallthru
          _
        %s407 = sand.u32 %s30, 1
        %s408 = scalar_lea.sflag [#allocation10], %s407
        %s409 = sand.u32 %s175, 1
        %s410 = smul.addr %s409, 128
        %s411 = scalar_lea.vmem [#allocation9], %s410
        // Predicated region
        $region61: #{tpu_custom_call.1} parent=47 // pred_check
          %p412 = pneg %p188
        $region62: #{tpu_custom_call.1} parent=47 // pred_check_branch
          %414 = sbr.rel (%p412) target = $region64
        $region63: #{tpu_custom_call.1} parent=47 // pred_region
          %415 = dma.done %s408, 2048
        $region64: #{tpu_custom_call.1} parent=47 // pred_fallthru
          _
        %s416 = sand.u32 %s30, 1
        %s417 = scalar_lea.sflag [#allocation10], %s416
        %s418 = sand.u32 %s201, 1
        %s419 = smul.addr %s418, 128
        %s420 = scalar_lea.vmem [#allocation11], %s419
        // Predicated region
        $region65: #{tpu_custom_call.1} parent=47 // pred_check
          %p421 = pneg %p214
        $region66: #{tpu_custom_call.1} parent=47 // pred_check_branch
          %423 = sbr.rel (%p421) target = $region68
        $region67: #{tpu_custom_call.1} parent=47 // pred_region
          %424 = dma.done %s417, 2048
        $region68: #{tpu_custom_call.1} parent=47 // pred_fallthru
          _
        %s425 = sand.u32 %s50, 1
        %s426 = scalar_lea.sflag [#allocation4], %s425
        %s427 = sand.u32 %s50, 1
        %s428 = smul.addr %s427, 256
        %s429 = scalar_lea.vmem [#allocation3], %s428
        %p430 = pneg %p63
        %p431 = pneg %p60
        %p432 = pneg %p84
        %p433 = pneg %p81
        %s434 = sand.u32 %s30, 1
        %s435 = scalar_lea.sflag [#allocation7], %s434
        %s436 = sand.u32 %s97, 1
        %s437 = smul.addr %s436, 192
        %s438 = scalar_lea.vmem [#allocation6], %s437
        %p439 = pneg %p110
        %p440 = pneg %p107
        %s441 = sand.u32 %s30, 1
        %s442 = scalar_lea.sflag [#allocation7], %s441
        %s443 = sand.u32 %s123, 1
        %s444 = smul.addr %s443, 64
        %s445 = scalar_lea.vmem [#allocation8], %s444
        %p446 = pneg %p136
        %p447 = pneg %p133
        %p448 = scmp.lt.s32.totalorder %s35, 1
        %s449 = scalar_select %p448, %s35, 1
        %s450 = scalar_lea.vmem %s4, %s449
        %p451 = pneg %p162
        %p452 = pneg %p159
        %s453 = sand.u32 %s30, 1
        %s454 = scalar_lea.sflag [#allocation10], %s453
        %s455 = sand.u32 %s175, 1
        %s456 = smul.addr %s455, 128
        %s457 = scalar_lea.vmem [#allocation9], %s456
        %p458 = pneg %p188
        %p459 = pneg %p185
        %s460 = sand.u32 %s30, 1
        %s461 = scalar_lea.sflag [#allocation10], %s460
        %s462 = sand.u32 %s201, 1
        %s463 = smul.addr %s462, 128
        %s464 = scalar_lea.vmem [#allocation11], %s463
        %p465 = pneg %p214
        %p466 = pneg %p211
        %p467 = pneg %p240
        %p468 = pneg %p237
        %s469 = sand.u32 %s227, 1
        %s470 = scalar_lea.sflag [#allocation5], %s469
        %s471 = sand.u32 %s227, 1
        %s472 = smul.addr %s471, 256
        %s473 = scalar_lea.vmem [#allocation12], %s472
        %p474 = scmp.lt.s32.totalorder %s35, 1
        %s475 = scalar_select %p474, %s35, 1
        %s476 = scalar_lea.vmem %s4, %s475
        %p478 = scmp.eq.s32.totalorder %s35, 0
        // Predicated region
        $region69: #{tpu_custom_call.1} parent=47 // pred_check
          %p479 = pneg %p478
        $region70: #{tpu_custom_call.1} parent=47 // pred_check_branch
          %481 = sbr.rel (%p479) target = $region72
        $region71: #{tpu_custom_call.1} parent=47 // pred_region
          %v482 = vld [vmem:[%s384] sm:$0xff]
          %v483 = vld [vmem:[%s384 + $0x8] sm:$0xff]
          %v484 = vld [vmem:[%s384 + $0x10] sm:$0xff]
          %v485 = vld [vmem:[%s384 + $0x18] sm:$0xff]
          %v486 = vld [vmem:[%s384 + $0x20] sm:$0xff]
          %v487 = vld [vmem:[%s384 + $0x28] sm:$0xff]
          %v488 = vld [vmem:[%s384 + $0x30] sm:$0xff]
          %v489 = vld [vmem:[%s384 + $0x38] sm:$0xff]
          %v490 = vld [vmem:[%s384 + $0x40] sm:$0xff]
          %v491 = vld [vmem:[%s384 + $0x48] sm:$0xff]
          %v492 = vld [vmem:[%s384 + $0x50] sm:$0xff]
          %v493 = vld [vmem:[%s384 + $0x58] sm:$0xff]
          %v494 = vld [vmem:[%s384 + $0x60] sm:$0xff]
          %v495 = vld [vmem:[%s384 + $0x68] sm:$0xff]
          %v496 = vld [vmem:[%s384 + $0x70] sm:$0xff]
          %v497 = vld [vmem:[%s384 + $0x78] sm:$0xff]
          %v498 = vld [vmem:[%s384 + $0x80] sm:$0xff]
          %v499 = vld [vmem:[%s384 + $0x88] sm:$0xff]
          %v500 = vld [vmem:[%s384 + $0x90] sm:$0xff]
          %v501 = vld [vmem:[%s384 + $0x98] sm:$0xff]
          %v502 = vld [vmem:[%s384 + $0xa0] sm:$0xff]
          %v503 = vld [vmem:[%s384 + $0xa8] sm:$0xff]
          %v504 = vld [vmem:[%s384 + $0xb0] sm:$0xff]
          %v505 = vld [vmem:[%s384 + $0xb8] sm:$0xff]
          %v506 = vld [vmem:[%s384 + $0xc0] sm:$0xff]
          %v507 = vld [vmem:[%s384 + $0xc8] sm:$0xff]
          %v508 = vld [vmem:[%s384 + $0xd0] sm:$0xff]
          %v509 = vld [vmem:[%s384 + $0xd8] sm:$0xff]
          %v510 = vld [vmem:[%s384 + $0xe0] sm:$0xff]
          %v511 = vld [vmem:[%s384 + $0xe8] sm:$0xff]
          %v512 = vld [vmem:[%s384 + $0xf0] sm:$0xff]
          %v513 = vld [vmem:[%s384 + $0xf8] sm:$0xff]
          %514 = vxpose.xlu0.b32.start [1/16] %v482, 128
          %515 = vxpose.xlu0.b32.cont [2/16] %v484, 128
          %516 = vxpose.xlu0.b32.cont [3/16] %v486, 128
          %517 = vxpose.xlu0.b32.cont [4/16] %v488, 128
          %518 = vxpose.xlu0.b32.cont [5/16] %v490, 128
          %519 = vxpose.xlu0.b32.cont [6/16] %v492, 128
          %520 = vxpose.xlu0.b32.cont [7/16] %v494, 128
          %521 = vxpose.xlu0.b32.cont [8/16] %v496, 128
          %522 = vxpose.xlu0.b32.cont [9/16] %v498, 128
          %523 = vxpose.xlu0.b32.cont [10/16] %v500, 128
          %524 = vxpose.xlu0.b32.cont [11/16] %v502, 128
          %525 = vxpose.xlu0.b32.cont [12/16] %v504, 128
          %526 = vxpose.xlu0.b32.cont [13/16] %v506, 128
          %527 = vxpose.xlu0.b32.cont [14/16] %v508, 128
          %528 = vxpose.xlu0.b32.cont [15/16] %v510, 128
          %529 = vxpose.xlu0.b32.end [16/16] %v512, 128
          %v530 = vpop.trf.xlu0
          %v531 = vpop.trf.xlu0
          %v532 = vpop.trf.xlu0
          %v533 = vpop.trf.xlu0
          %v534 = vpop.trf.xlu0
          %v535 = vpop.trf.xlu0
          %v536 = vpop.trf.xlu0
          %v537 = vpop.trf.xlu0
          %v538 = vpop.trf.xlu0
          %v539 = vpop.trf.xlu0
          %v540 = vpop.trf.xlu0
          %v541 = vpop.trf.xlu0
          %v542 = vpop.trf.xlu0
          %v543 = vpop.trf.xlu0
          %v544 = vpop.trf.xlu0
          %v545 = vpop.trf.xlu0
          %546 = vxpose.xlu0.b32.start [1/16] %v483, 128
          %547 = vxpose.xlu0.b32.cont [2/16] %v485, 128
          %548 = vxpose.xlu0.b32.cont [3/16] %v487, 128
          %549 = vxpose.xlu0.b32.cont [4/16] %v489, 128
          %550 = vxpose.xlu0.b32.cont [5/16] %v491, 128
          %551 = vxpose.xlu0.b32.cont [6/16] %v493, 128
          %552 = vxpose.xlu0.b32.cont [7/16] %v495, 128
          %553 = vxpose.xlu0.b32.cont [8/16] %v497, 128
          %554 = vxpose.xlu0.b32.cont [9/16] %v499, 128
          %555 = vxpose.xlu0.b32.cont [10/16] %v501, 128
          %556 = vxpose.xlu0.b32.cont [11/16] %v503, 128
          %557 = vxpose.xlu0.b32.cont [12/16] %v505, 128
          %558 = vxpose.xlu0.b32.cont [13/16] %v507, 128
          %559 = vxpose.xlu0.b32.cont [14/16] %v509, 128
          %560 = vxpose.xlu0.b32.cont [15/16] %v511, 128
          %561 = vxpose.xlu0.b32.end [16/16] %v513, 128
          %v562 = vpop.trf.xlu0
          %v563 = vpop.trf.xlu0
          %v564 = vpop.trf.xlu0
          %v565 = vpop.trf.xlu0
          %v566 = vpop.trf.xlu0
          %v567 = vpop.trf.xlu0
          %v568 = vpop.trf.xlu0
          %v569 = vpop.trf.xlu0
          %v570 = vpop.trf.xlu0
          %v571 = vpop.trf.xlu0
          %v572 = vpop.trf.xlu0
          %v573 = vpop.trf.xlu0
          %v574 = vpop.trf.xlu0
          %v575 = vpop.trf.xlu0
          %v576 = vpop.trf.xlu0
          %v577 = vpop.trf.xlu0
          %578 = vst [vmem:[#allocation2] sm:$0xff] %v530
          %579 = vst [vmem:[#allocation2 + $0x8] sm:$0xff] %v531
          %580 = vst [vmem:[#allocation2 + $0x10] sm:$0xff] %v532
          %581 = vst [vmem:[#allocation2 + $0x18] sm:$0xff] %v533
          %582 = vst [vmem:[#allocation2 + $0x20] sm:$0xff] %v534
          %583 = vst [vmem:[#allocation2 + $0x28] sm:$0xff] %v535
          %584 = vst [vmem:[#allocation2 + $0x30] sm:$0xff] %v536
          %585 = vst [vmem:[#allocation2 + $0x38] sm:$0xff] %v537
          %586 = vst [vmem:[#allocation2 + $0x40] sm:$0xff] %v538
          %587 = vst [vmem:[#allocation2 + $0x48] sm:$0xff] %v539
          %588 = vst [vmem:[#allocation2 + $0x50] sm:$0xff] %v540
          %589 = vst [vmem:[#allocation2 + $0x58] sm:$0xff] %v541
          %590 = vst [vmem:[#allocation2 + $0x60] sm:$0xff] %v542
          %591 = vst [vmem:[#allocation2 + $0x68] sm:$0xff] %v543
          %592 = vst [vmem:[#allocation2 + $0x70] sm:$0xff] %v544
          %593 = vst [vmem:[#allocation2 + $0x78] sm:$0xff] %v545
          %594 = vst [vmem:[#allocation2 + $0x80] sm:$0xff] %v562
          %595 = vst [vmem:[#allocation2 + $0x88] sm:$0xff] %v563
          %596 = vst [vmem:[#allocation2 + $0x90] sm:$0xff] %v564
          %597 = vst [vmem:[#allocation2 + $0x98] sm:$0xff] %v565
          %598 = vst [vmem:[#allocation2 + $0xa0] sm:$0xff] %v566
          %599 = vst [vmem:[#allocation2 + $0xa8] sm:$0xff] %v567
          %600 = vst [vmem:[#allocation2 + $0xb0] sm:$0xff] %v568
          %601 = vst [vmem:[#allocation2 + $0xb8] sm:$0xff] %v569
          %602 = vst [vmem:[#allocation2 + $0xc0] sm:$0xff] %v570
          %603 = vst [vmem:[#allocation2 + $0xc8] sm:$0xff] %v571
          %604 = vst [vmem:[#allocation2 + $0xd0] sm:$0xff] %v572
          %605 = vst [vmem:[#allocation2 + $0xd8] sm:$0xff] %v573
          %606 = vst [vmem:[#allocation2 + $0xe0] sm:$0xff] %v574
          %607 = vst [vmem:[#allocation2 + $0xe8] sm:$0xff] %v575
          %608 = vst [vmem:[#allocation2 + $0xf0] sm:$0xff] %v576
          %609 = vst [vmem:[#allocation2 + $0xf8] sm:$0xff] %v577
        $region72: #{tpu_custom_call.1} parent=47 // pred_fallthru
          _
        %v610 = vld [vmem:[#allocation2] sm:$0xff]
        %v611 = vld [vmem:[#allocation2 + $0x8] sm:$0xff]
        %v612 = vld [vmem:[#allocation2 + $0x10] sm:$0xff]
        %v613 = vld [vmem:[#allocation2 + $0x18] sm:$0xff]
        %v614 = vld [vmem:[#allocation2 + $0x20] sm:$0xff]
        %v615 = vld [vmem:[#allocation2 + $0x28] sm:$0xff]
        %v616 = vld [vmem:[#allocation2 + $0x30] sm:$0xff]
        %v617 = vld [vmem:[#allocation2 + $0x38] sm:$0xff]
        %v618 = vld [vmem:[#allocation2 + $0x40] sm:$0xff]
        %v619 = vld [vmem:[#allocation2 + $0x48] sm:$0xff]
        %v620 = vld [vmem:[#allocation2 + $0x50] sm:$0xff]
        %v621 = vld [vmem:[#allocation2 + $0x58] sm:$0xff]
        %v622 = vld [vmem:[#allocation2 + $0x60] sm:$0xff]
        %v623 = vld [vmem:[#allocation2 + $0x68] sm:$0xff]
        %v624 = vld [vmem:[#allocation2 + $0x70] sm:$0xff]
        %v625 = vld [vmem:[#allocation2 + $0x78] sm:$0xff]
        %v626 = vld [vmem:[#allocation2 + $0x80] sm:$0xff]
        %v627 = vld [vmem:[#allocation2 + $0x88] sm:$0xff]
        %v628 = vld [vmem:[#allocation2 + $0x90] sm:$0xff]
        %v629 = vld [vmem:[#allocation2 + $0x98] sm:$0xff]
        %v630 = vld [vmem:[#allocation2 + $0xa0] sm:$0xff]
        %v631 = vld [vmem:[#allocation2 + $0xa8] sm:$0xff]
        %v632 = vld [vmem:[#allocation2 + $0xb0] sm:$0xff]
        %v633 = vld [vmem:[#allocation2 + $0xb8] sm:$0xff]
        %v634 = vld [vmem:[#allocation2 + $0xc0] sm:$0xff]
        %v635 = vld [vmem:[#allocation2 + $0xc8] sm:$0xff]
        %v636 = vld [vmem:[#allocation2 + $0xd0] sm:$0xff]
        %v637 = vld [vmem:[#allocation2 + $0xd8] sm:$0xff]
        %v638 = vld [vmem:[#allocation2 + $0xe0] sm:$0xff]
        %v639 = vld [vmem:[#allocation2 + $0xe8] sm:$0xff]
        %v640 = vld [vmem:[#allocation2 + $0xf0] sm:$0xff]
        %v641 = vld [vmem:[#allocation2 + $0xf8] sm:$0xff]
        %v642 = vld [vmem:[%s1] sm:$0x1]
        %643 = vadd.xlane.f32.xlu0 %v610
        %v644 = vpop.xlane.xlu0 %643
        %645 = vadd.xlane.f32.xlu0 %v611
        %v646 = vpop.xlane.xlu0 %645
        %647 = vadd.xlane.f32.xlu0 %v612
        %v648 = vpop.xlane.xlu0 %647
        %649 = vadd.xlane.f32.xlu0 %v613
        %v650 = vpop.xlane.xlu0 %649
        %651 = vadd.xlane.f32.xlu0 %v614
        %v652 = vpop.xlane.xlu0 %651
        %653 = vadd.xlane.f32.xlu0 %v615
        %v654 = vpop.xlane.xlu0 %653
        %655 = vadd.xlane.f32.xlu0 %v616
        %v656 = vpop.xlane.xlu0 %655
        %657 = vadd.xlane.f32.xlu0 %v617
        %v658 = vpop.xlane.xlu0 %657
        %659 = vadd.xlane.f32.xlu0 %v618
        %v660 = vpop.xlane.xlu0 %659
        %661 = vadd.xlane.f32.xlu0 %v619
        %v662 = vpop.xlane.xlu0 %661
        %663 = vadd.xlane.f32.xlu0 %v620
        %v664 = vpop.xlane.xlu0 %663
        %665 = vadd.xlane.f32.xlu0 %v621
        %v666 = vpop.xlane.xlu0 %665
        %667 = vadd.xlane.f32.xlu0 %v622
        %v668 = vpop.xlane.xlu0 %667
        %669 = vadd.xlane.f32.xlu0 %v623
        %v670 = vpop.xlane.xlu0 %669
        %671 = vadd.xlane.f32.xlu0 %v624
        %v672 = vpop.xlane.xlu0 %671
        %673 = vadd.xlane.f32.xlu0 %v625
        %v674 = vpop.xlane.xlu0 %673
        %675 = vadd.xlane.f32.xlu0 %v626
        %v676 = vpop.xlane.xlu0 %675
        %677 = vadd.xlane.f32.xlu0 %v627
        %v678 = vpop.xlane.xlu0 %677
        %679 = vadd.xlane.f32.xlu0 %v628
        %v680 = vpop.xlane.xlu0 %679
        %681 = vadd.xlane.f32.xlu0 %v629
        %v682 = vpop.xlane.xlu0 %681
        %683 = vadd.xlane.f32.xlu0 %v630
        %v684 = vpop.xlane.xlu0 %683
        %685 = vadd.xlane.f32.xlu0 %v631
        %v686 = vpop.xlane.xlu0 %685
        %687 = vadd.xlane.f32.xlu0 %v632
        %v688 = vpop.xlane.xlu0 %687
        %689 = vadd.xlane.f32.xlu0 %v633
        %v690 = vpop.xlane.xlu0 %689
        %691 = vadd.xlane.f32.xlu0 %v634
        %v692 = vpop.xlane.xlu0 %691
        %693 = vadd.xlane.f32.xlu0 %v635
        %v694 = vpop.xlane.xlu0 %693
        %695 = vadd.xlane.f32.xlu0 %v636
        %v696 = vpop.xlane.xlu0 %695
        %697 = vadd.xlane.f32.xlu0 %v637
        %v698 = vpop.xlane.xlu0 %697
        %699 = vadd.xlane.f32.xlu0 %v638
        %v700 = vpop.xlane.xlu0 %699
        %701 = vadd.xlane.f32.xlu0 %v639
        %v702 = vpop.xlane.xlu0 %701
        %703 = vadd.xlane.f32.xlu0 %v640
        %v704 = vpop.xlane.xlu0 %703
        %705 = vadd.xlane.f32.xlu0 %v641
        %v706 = vpop.xlane.xlu0 %705
        %v707 = vrcp.pop 128.0
        %v708 = vmul.f32 %v644, %v707
        %v709 = vmul.f32 %v646, %v707
        %v710 = vmul.f32 %v648, %v707
        %v711 = vmul.f32 %v650, %v707
        %v712 = vmul.f32 %v652, %v707
        %v713 = vmul.f32 %v654, %v707
        %v714 = vmul.f32 %v656, %v707
        %v715 = vmul.f32 %v658, %v707
        %v716 = vmul.f32 %v660, %v707
        %v717 = vmul.f32 %v662, %v707
        %v718 = vmul.f32 %v664, %v707
        %v719 = vmul.f32 %v666, %v707
        %v720 = vmul.f32 %v668, %v707
        %v721 = vmul.f32 %v670, %v707
        %v722 = vmul.f32 %v672, %v707
        %v723 = vmul.f32 %v674, %v707
        %v724 = vmul.f32 %v676, %v707
        %v725 = vmul.f32 %v678, %v707
        %v726 = vmul.f32 %v680, %v707
        %v727 = vmul.f32 %v682, %v707
        %v728 = vmul.f32 %v684, %v707
        %v729 = vmul.f32 %v686, %v707
        %v730 = vmul.f32 %v688, %v707
        %v731 = vmul.f32 %v690, %v707
        %v732 = vmul.f32 %v692, %v707
        %v733 = vmul.f32 %v694, %v707
        %v734 = vmul.f32 %v696, %v707
        %v735 = vmul.f32 %v698, %v707
        %v736 = vmul.f32 %v700, %v707
        %v737 = vmul.f32 %v702, %v707
        %v738 = vmul.f32 %v704, %v707
        %v739 = vmul.f32 %v706, %v707
        %v740 = vsub.f32 %v610, %v708
        %v741 = vsub.f32 %v611, %v709
        %v742 = vsub.f32 %v612, %v710
        %v743 = vsub.f32 %v613, %v711
        %v744 = vsub.f32 %v614, %v712
        %v745 = vsub.f32 %v615, %v713
        %v746 = vsub.f32 %v616, %v714
        %v747 = vsub.f32 %v617, %v715
        %v748 = vsub.f32 %v618, %v716
        %v749 = vsub.f32 %v619, %v717
        %v750 = vsub.f32 %v620, %v718
        %v751 = vsub.f32 %v621, %v719
        %v752 = vsub.f32 %v622, %v720
        %v753 = vsub.f32 %v623, %v721
        %v754 = vsub.f32 %v624, %v722
        %v755 = vsub.f32 %v625, %v723
        %v756 = vsub.f32 %v626, %v724
        %v757 = vsub.f32 %v627, %v725
        %v758 = vsub.f32 %v628, %v726
        %v759 = vsub.f32 %v629, %v727
        %v760 = vsub.f32 %v630, %v728
        %v761 = vsub.f32 %v631, %v729
        %v762 = vsub.f32 %v632, %v730
        %v763 = vsub.f32 %v633, %v731
        %v764 = vsub.f32 %v634, %v732
        %v765 = vsub.f32 %v635, %v733
        %v766 = vsub.f32 %v636, %v734
        %v767 = vsub.f32 %v637, %v735
        %v768 = vsub.f32 %v638, %v736
        %v769 = vsub.f32 %v639, %v737
        %v770 = vsub.f32 %v640, %v738
        %v771 = vsub.f32 %v641, %v739
        %v772 = vmul.f32 %v740, %v740
        %v773 = vmul.f32 %v741, %v741
        %v774 = vmul.f32 %v742, %v742
        %v775 = vmul.f32 %v743, %v743
        %v776 = vmul.f32 %v744, %v744
        %v777 = vmul.f32 %v745, %v745
        %v778 = vmul.f32 %v746, %v746
        %v779 = vmul.f32 %v747, %v747
        %v780 = vmul.f32 %v748, %v748
        %v781 = vmul.f32 %v749, %v749
        %v782 = vmul.f32 %v750, %v750
        %v783 = vmul.f32 %v751, %v751
        %v784 = vmul.f32 %v752, %v752
        %v785 = vmul.f32 %v753, %v753
        %v786 = vmul.f32 %v754, %v754
        %v787 = vmul.f32 %v755, %v755
        %v788 = vmul.f32 %v756, %v756
        %v789 = vmul.f32 %v757, %v757
        %v790 = vmul.f32 %v758, %v758
        %v791 = vmul.f32 %v759, %v759
        %v792 = vmul.f32 %v760, %v760
        %v793 = vmul.f32 %v761, %v761
        %v794 = vmul.f32 %v762, %v762
        %v795 = vmul.f32 %v763, %v763
        %v796 = vmul.f32 %v764, %v764
        %v797 = vmul.f32 %v765, %v765
        %v798 = vmul.f32 %v766, %v766
        %v799 = vmul.f32 %v767, %v767
        %v800 = vmul.f32 %v768, %v768
        %v801 = vmul.f32 %v769, %v769
        %v802 = vmul.f32 %v770, %v770
        %v803 = vmul.f32 %v771, %v771
        %804 = vadd.xlane.f32.xlu0 %v772
        %v805 = vpop.xlane.xlu0 %804
        %806 = vadd.xlane.f32.xlu0 %v773
        %v807 = vpop.xlane.xlu0 %806
        %808 = vadd.xlane.f32.xlu0 %v774
        %v809 = vpop.xlane.xlu0 %808
        %810 = vadd.xlane.f32.xlu0 %v775
        %v811 = vpop.xlane.xlu0 %810
        %812 = vadd.xlane.f32.xlu0 %v776
        %v813 = vpop.xlane.xlu0 %812
        %814 = vadd.xlane.f32.xlu0 %v777
        %v815 = vpop.xlane.xlu0 %814
        %816 = vadd.xlane.f32.xlu0 %v778
        %v817 = vpop.xlane.xlu0 %816
        %818 = vadd.xlane.f32.xlu0 %v779
        %v819 = vpop.xlane.xlu0 %818
        %820 = vadd.xlane.f32.xlu0 %v780
        %v821 = vpop.xlane.xlu0 %820
        %822 = vadd.xlane.f32.xlu0 %v781
        %v823 = vpop.xlane.xlu0 %822
        %824 = vadd.xlane.f32.xlu0 %v782
        %v825 = vpop.xlane.xlu0 %824
        %826 = vadd.xlane.f32.xlu0 %v783
        %v827 = vpop.xlane.xlu0 %826
        %828 = vadd.xlane.f32.xlu0 %v784
        %v829 = vpop.xlane.xlu0 %828
        %830 = vadd.xlane.f32.xlu0 %v785
        %v831 = vpop.xlane.xlu0 %830
        %832 = vadd.xlane.f32.xlu0 %v786
        %v833 = vpop.xlane.xlu0 %832
        %834 = vadd.xlane.f32.xlu0 %v787
        %v835 = vpop.xlane.xlu0 %834
        %836 = vadd.xlane.f32.xlu0 %v788
        %v837 = vpop.xlane.xlu0 %836
        %838 = vadd.xlane.f32.xlu0 %v789
        %v839 = vpop.xlane.xlu0 %838
        %840 = vadd.xlane.f32.xlu0 %v790
        %v841 = vpop.xlane.xlu0 %840
        %842 = vadd.xlane.f32.xlu0 %v791
        %v843 = vpop.xlane.xlu0 %842
        %844 = vadd.xlane.f32.xlu0 %v792
        %v845 = vpop.xlane.xlu0 %844
        %846 = vadd.xlane.f32.xlu0 %v793
        %v847 = vpop.xlane.xlu0 %846
        %848 = vadd.xlane.f32.xlu0 %v794
        %v849 = vpop.xlane.xlu0 %848
        %850 = vadd.xlane.f32.xlu0 %v795
        %v851 = vpop.xlane.xlu0 %850
        %852 = vadd.xlane.f32.xlu0 %v796
        %v853 = vpop.xlane.xlu0 %852
        %854 = vadd.xlane.f32.xlu0 %v797
        %v855 = vpop.xlane.xlu0 %854
        %856 = vadd.xlane.f32.xlu0 %v798
        %v857 = vpop.xlane.xlu0 %856
        %858 = vadd.xlane.f32.xlu0 %v799
        %v859 = vpop.xlane.xlu0 %858
        %860 = vadd.xlane.f32.xlu0 %v800
        %v861 = vpop.xlane.xlu0 %860
        %862 = vadd.xlane.f32.xlu0 %v801
        %v863 = vpop.xlane.xlu0 %862
        %864 = vadd.xlane.f32.xlu0 %v802
        %v865 = vpop.xlane.xlu0 %864
        %866 = vadd.xlane.f32.xlu0 %v803
        %v867 = vpop.xlane.xlu0 %866
        %v868 = vmul.f32 %v805, %v707
        %v869 = vmul.f32 %v807, %v707
        %v870 = vmul.f32 %v809, %v707
        %v871 = vmul.f32 %v811, %v707
        %v872 = vmul.f32 %v813, %v707
        %v873 = vmul.f32 %v815, %v707
        %v874 = vmul.f32 %v817, %v707
        %v875 = vmul.f32 %v819, %v707
        %v876 = vmul.f32 %v821, %v707
        %v877 = vmul.f32 %v823, %v707
        %v878 = vmul.f32 %v825, %v707
        %v879 = vmul.f32 %v827, %v707
        %v880 = vmul.f32 %v829, %v707
        %v881 = vmul.f32 %v831, %v707
        %v882 = vmul.f32 %v833, %v707
        %v883 = vmul.f32 %v835, %v707
        %v884 = vmul.f32 %v837, %v707
        %v885 = vmul.f32 %v839, %v707
        %v886 = vmul.f32 %v841, %v707
        %v887 = vmul.f32 %v843, %v707
        %v888 = vmul.f32 %v845, %v707
        %v889 = vmul.f32 %v847, %v707
        %v890 = vmul.f32 %v849, %v707
        %v891 = vmul.f32 %v851, %v707
        %v892 = vmul.f32 %v853, %v707
        %v893 = vmul.f32 %v855, %v707
        %v894 = vmul.f32 %v857, %v707
        %v895 = vmul.f32 %v859, %v707
        %v896 = vmul.f32 %v861, %v707
        %v897 = vmul.f32 %v863, %v707
        %v898 = vmul.f32 %v865, %v707
        %v899 = vmul.f32 %v867, %v707
        %v900 = vadd.f32 %v868, 1e-05
        %v901 = vadd.f32 %v869, 1e-05
        %v902 = vadd.f32 %v870, 1e-05
        %v903 = vadd.f32 %v871, 1e-05
        %v904 = vadd.f32 %v872, 1e-05
        %v905 = vadd.f32 %v873, 1e-05
        %v906 = vadd.f32 %v874, 1e-05
        %v907 = vadd.f32 %v875, 1e-05
        %v908 = vadd.f32 %v876, 1e-05
        %v909 = vadd.f32 %v877, 1e-05
        %v910 = vadd.f32 %v878, 1e-05
        %v911 = vadd.f32 %v879, 1e-05
        %v912 = vadd.f32 %v880, 1e-05
        %v913 = vadd.f32 %v881, 1e-05
        %v914 = vadd.f32 %v882, 1e-05
        %v915 = vadd.f32 %v883, 1e-05
        %v916 = vadd.f32 %v884, 1e-05
        %v917 = vadd.f32 %v885, 1e-05
        %v918 = vadd.f32 %v886, 1e-05
        %v919 = vadd.f32 %v887, 1e-05
        %v920 = vadd.f32 %v888, 1e-05
        %v921 = vadd.f32 %v889, 1e-05
        %v922 = vadd.f32 %v890, 1e-05
        %v923 = vadd.f32 %v891, 1e-05
        %v924 = vadd.f32 %v892, 1e-05
        %v925 = vadd.f32 %v893, 1e-05
        %v926 = vadd.f32 %v894, 1e-05
        %v927 = vadd.f32 %v895, 1e-05
        %v928 = vadd.f32 %v896, 1e-05
        %v929 = vadd.f32 %v897, 1e-05
        %v930 = vadd.f32 %v898, 1e-05
        %v931 = vadd.f32 %v899, 1e-05
        %v932 = vrsqrt.pop %v900
        %v933 = vrsqrt.pop %v901
        %v934 = vrsqrt.pop %v902
        %v935 = vrsqrt.pop %v903
        %v936 = vrsqrt.pop %v904
        %v937 = vrsqrt.pop %v905
        %v938 = vrsqrt.pop %v906
        %v939 = vrsqrt.pop %v907
        %v940 = vrsqrt.pop %v908
        %v941 = vrsqrt.pop %v909
        %v942 = vrsqrt.pop %v910
        %v943 = vrsqrt.pop %v911
        %v944 = vrsqrt.pop %v912
        %v945 = vrsqrt.pop %v913
        %v946 = vrsqrt.pop %v914
        %v947 = vrsqrt.pop %v915
        %v948 = vrsqrt.pop %v916
        %v949 = vrsqrt.pop %v917
        %v950 = vrsqrt.pop %v918
        %v951 = vrsqrt.pop %v919
        %v952 = vrsqrt.pop %v920
        %v953 = vrsqrt.pop %v921
        %v954 = vrsqrt.pop %v922
        %v955 = vrsqrt.pop %v923
        %v956 = vrsqrt.pop %v924
        %v957 = vrsqrt.pop %v925
        %v958 = vrsqrt.pop %v926
        %v959 = vrsqrt.pop %v927
        %v960 = vrsqrt.pop %v928
        %v961 = vrsqrt.pop %v929
        %v962 = vrsqrt.pop %v930
        %v963 = vrsqrt.pop %v931
        %v964 = vmul.f32 %v740, %v932
        %v965 = vmul.f32 %v741, %v933
        %v966 = vmul.f32 %v742, %v934
        %v967 = vmul.f32 %v743, %v935
        %v968 = vmul.f32 %v744, %v936
        %v969 = vmul.f32 %v745, %v937
        %v970 = vmul.f32 %v746, %v938
        %v971 = vmul.f32 %v747, %v939
        %v972 = vmul.f32 %v748, %v940
        %v973 = vmul.f32 %v749, %v941
        %v974 = vmul.f32 %v750, %v942
        %v975 = vmul.f32 %v751, %v943
        %v976 = vmul.f32 %v752, %v944
        %v977 = vmul.f32 %v753, %v945
        %v978 = vmul.f32 %v754, %v946
        %v979 = vmul.f32 %v755, %v947
        %v980 = vmul.f32 %v756, %v948
        %v981 = vmul.f32 %v757, %v949
        %v982 = vmul.f32 %v758, %v950
        %v983 = vmul.f32 %v759, %v951
        %v984 = vmul.f32 %v760, %v952
        %v985 = vmul.f32 %v761, %v953
        %v986 = vmul.f32 %v762, %v954
        %v987 = vmul.f32 %v763, %v955
        %v988 = vmul.f32 %v764, %v956
        %v989 = vmul.f32 %v765, %v957
        %v990 = vmul.f32 %v766, %v958
        %v991 = vmul.f32 %v767, %v959
        %v992 = vmul.f32 %v768, %v960
        %v993 = vmul.f32 %v769, %v961
        %v994 = vmul.f32 %v770, %v962
        %v995 = vmul.f32 %v771, %v963
        %v997 = vlaneseq
        %v998 = vshrl.u32 %v997, 7
        %v999 = vsub.s32 0, %v998
        %v1000 = vrot.slane %v642, %v999
        %v1002 = vmul.f32 %v964, %v1000
        %v1003 = vmul.f32 %v965, %v1000
        %v1004 = vmul.f32 %v966, %v1000
        %v1005 = vmul.f32 %v967, %v1000
        %v1006 = vmul.f32 %v968, %v1000
        %v1007 = vmul.f32 %v969, %v1000
        %v1008 = vmul.f32 %v970, %v1000
        %v1009 = vmul.f32 %v971, %v1000
        %v1010 = vmul.f32 %v972, %v1000
        %v1011 = vmul.f32 %v973, %v1000
        %v1012 = vmul.f32 %v974, %v1000
        %v1013 = vmul.f32 %v975, %v1000
        %v1014 = vmul.f32 %v976, %v1000
        %v1015 = vmul.f32 %v977, %v1000
        %v1016 = vmul.f32 %v978, %v1000
        %v1017 = vmul.f32 %v979, %v1000
        %v1018 = vmul.f32 %v980, %v1000
        %v1019 = vmul.f32 %v981, %v1000
        %v1020 = vmul.f32 %v982, %v1000
        %v1021 = vmul.f32 %v983, %v1000
        %v1022 = vmul.f32 %v984, %v1000
        %v1023 = vmul.f32 %v985, %v1000
        %v1024 = vmul.f32 %v986, %v1000
        %v1025 = vmul.f32 %v987, %v1000
        %v1026 = vmul.f32 %v988, %v1000
        %v1027 = vmul.f32 %v989, %v1000
        %v1028 = vmul.f32 %v990, %v1000
        %v1029 = vmul.f32 %v991, %v1000
        %v1030 = vmul.f32 %v992, %v1000
        %v1031 = vmul.f32 %v993, %v1000
        %v1032 = vmul.f32 %v994, %v1000
        %v1033 = vmul.f32 %v995, %v1000
        %v1034 = vld [vmem:[%s393] sm:$0xff]
        %v1035 = vld [vmem:[%s393 + $0x8] sm:$0xf]
        %v1036 = vld [vmem:[%s393 + $0xc] sm:$0xff]
        %v1037 = vld [vmem:[%s393 + $0x14] sm:$0xf]
        %v1038 = vld [vmem:[%s393 + $0x18] sm:$0xff]
        %v1039 = vld [vmem:[%s393 + $0x20] sm:$0xf]
        %v1040 = vld [vmem:[%s393 + $0x24] sm:$0xff]
        %v1041 = vld [vmem:[%s393 + $0x2c] sm:$0xf]
        %v1042 = vld [vmem:[%s393 + $0x30] sm:$0xff]
        %v1043 = vld [vmem:[%s393 + $0x38] sm:$0xf]
        %v1044 = vld [vmem:[%s393 + $0x3c] sm:$0xff]
        %v1045 = vld [vmem:[%s393 + $0x44] sm:$0xf]
        %v1046 = vld [vmem:[%s393 + $0x48] sm:$0xff]
        %v1047 = vld [vmem:[%s393 + $0x50] sm:$0xf]
        %v1048 = vld [vmem:[%s393 + $0x54] sm:$0xff]
        %v1049 = vld [vmem:[%s393 + $0x5c] sm:$0xf]
        %v1050 = vld [vmem:[%s393 + $0x60] sm:$0xff]
        %v1051 = vld [vmem:[%s393 + $0x68] sm:$0xf]
        %v1052 = vld [vmem:[%s393 + $0x6c] sm:$0xff]
        %v1053 = vld [vmem:[%s393 + $0x74] sm:$0xf]
        %v1054 = vld [vmem:[%s393 + $0x78] sm:$0xff]
        %v1055 = vld [vmem:[%s393 + $0x80] sm:$0xf]
        %v1056 = vld [vmem:[%s393 + $0x84] sm:$0xff]
        %v1057 = vld [vmem:[%s393 + $0x8c] sm:$0xf]
        %v1058 = vld [vmem:[%s393 + $0x90] sm:$0xff]
        %v1059 = vld [vmem:[%s393 + $0x98] sm:$0xf]
        %v1060 = vld [vmem:[%s393 + $0x9c] sm:$0xff]
        %v1061 = vld [vmem:[%s393 + $0xa4] sm:$0xf]
        %v1062 = vld [vmem:[%s393 + $0xa8] sm:$0xff]
        %v1063 = vld [vmem:[%s393 + $0xb0] sm:$0xf]
        %v1064 = vld [vmem:[%s393 + $0xb4] sm:$0xff]
        %v1065 = vld [vmem:[%s393 + $0xbc] sm:$0xf]
        %v1066 = vpack.c.bf16 %v1003, %v1002
        %v1067 = vpack.c.bf16 %v1005, %v1004
        %v1068 = vpack.c.bf16 %v1007, %v1006
        %v1069 = vpack.c.bf16 %v1009, %v1008
        %v1070 = vpack.c.bf16 %v1011, %v1010
        %v1071 = vpack.c.bf16 %v1013, %v1012
        %v1072 = vpack.c.bf16 %v1015, %v1014
        %v1073 = vpack.c.bf16 %v1017, %v1016
        %v1074 = vpack.c.bf16 %v1019, %v1018
        %v1075 = vpack.c.bf16 %v1021, %v1020
        %v1076 = vpack.c.bf16 %v1023, %v1022
        %v1077 = vpack.c.bf16 %v1025, %v1024
        %v1078 = vpack.c.bf16 %v1027, %v1026
        %v1079 = vpack.c.bf16 %v1029, %v1028
        %v1080 = vpack.c.bf16 %v1031, %v1030
        %v1081 = vpack.c.bf16 %v1033, %v1032
        %v1114 = vunpack.c.l.b16 %v1034
        %v1115 = vunpack.c.h.b16 %v1034
        %v1116 = vunpack.c.l.b16 %v1035
        %v1117 = vunpack.c.l.b16 %v1036
        %v1118 = vunpack.c.h.b16 %v1036
        %v1119 = vunpack.c.l.b16 %v1037
        %v1120 = vunpack.c.l.b16 %v1038
        %v1121 = vunpack.c.h.b16 %v1038
        %v1122 = vunpack.c.l.b16 %v1039
        %v1123 = vunpack.c.l.b16 %v1040
        %v1124 = vunpack.c.h.b16 %v1040
        %v1125 = vunpack.c.l.b16 %v1041
        %v1126 = vunpack.c.l.b16 %v1042
        %v1127 = vunpack.c.h.b16 %v1042
        %v1128 = vunpack.c.l.b16 %v1043
        %v1129 = vunpack.c.l.b16 %v1044
        %v1130 = vunpack.c.h.b16 %v1044
        %v1131 = vunpack.c.l.b16 %v1045
        %v1132 = vunpack.c.l.b16 %v1046
        %v1133 = vunpack.c.h.b16 %v1046
        %v1134 = vunpack.c.l.b16 %v1047
        %v1135 = vunpack.c.l.b16 %v1048
        %v1136 = vunpack.c.h.b16 %v1048
        %v1137 = vunpack.c.l.b16 %v1049
        %v1138 = vunpack.c.l.b16 %v1050
        %v1139 = vunpack.c.h.b16 %v1050
        %v1140 = vunpack.c.l.b16 %v1051
        %v1141 = vunpack.c.l.b16 %v1052
        %v1142 = vunpack.c.h.b16 %v1052
        %v1143 = vunpack.c.l.b16 %v1053
        %v1144 = vunpack.c.l.b16 %v1054
        %v1145 = vunpack.c.h.b16 %v1054
        %v1146 = vunpack.c.l.b16 %v1055
        %v1147 = vunpack.c.l.b16 %v1056
        %v1148 = vunpack.c.h.b16 %v1056
        %v1149 = vunpack.c.l.b16 %v1057
        %v1150 = vunpack.c.l.b16 %v1058
        %v1151 = vunpack.c.h.b16 %v1058
        %v1152 = vunpack.c.l.b16 %v1059
        %v1153 = vunpack.c.l.b16 %v1060
        %v1154 = vunpack.c.h.b16 %v1060
        %v1155 = vunpack.c.l.b16 %v1061
        %v1156 = vunpack.c.l.b16 %v1062
        %v1157 = vunpack.c.h.b16 %v1062
        %v1158 = vunpack.c.l.b16 %v1063
        %v1159 = vunpack.c.l.b16 %v1064
        %v1160 = vunpack.c.h.b16 %v1064
        %v1161 = vunpack.c.l.b16 %v1065
        %v1162 = vpack.c.b16 %v1117, %v1114
        %v1163 = vpack.c.b16 %v1118, %v1115
        %v1164 = vpack.c.b16 %v1119, %v1116
        %v1165 = vpack.c.b16 %v1123, %v1120
        %v1166 = vpack.c.b16 %v1124, %v1121
        %v1167 = vpack.c.b16 %v1125, %v1122
        %v1168 = vpack.c.b16 %v1129, %v1126
        %v1169 = vpack.c.b16 %v1130, %v1127
        %v1170 = vpack.c.b16 %v1131, %v1128
        %v1171 = vpack.c.b16 %v1135, %v1132
        %v1172 = vpack.c.b16 %v1136, %v1133
        %v1173 = vpack.c.b16 %v1137, %v1134
        %v1174 = vpack.c.b16 %v1141, %v1138
        %v1175 = vpack.c.b16 %v1142, %v1139
        %v1176 = vpack.c.b16 %v1143, %v1140
        %v1177 = vpack.c.b16 %v1147, %v1144
        %v1178 = vpack.c.b16 %v1148, %v1145
        %v1179 = vpack.c.b16 %v1149, %v1146
        %v1180 = vpack.c.b16 %v1153, %v1150
        %v1181 = vpack.c.b16 %v1154, %v1151
        %v1182 = vpack.c.b16 %v1155, %v1152
        %v1183 = vpack.c.b16 %v1159, %v1156
        %v1184 = vpack.c.b16 %v1160, %v1157
        %v1185 = vpack.c.b16 %v1161, %v1158
        %1210 = vmatprep.subr.bf16.mxu0 %v1163
        %1211 = vmatpush1.bf16.msra.mxu0 %v1162
        %1212 = vmatprep.subr.bf16.mxu0 %v1166
        %1213 = vmatpush1.bf16.msra.mxu0 %v1165
        %1214 = vmatprep.subr.bf16.mxu0 %v1169
        %1215 = vmatpush1.bf16.msra.mxu0 %v1168
        %1216 = vmatprep.subr.bf16.mxu0 %v1172
        %1217 = vmatpush1.bf16.msra.mxu0 %v1171
        %1218 = vmatprep.subr.bf16.mxu0 %v1175
        %1219 = vmatpush1.bf16.msra.mxu0 %v1174
        %1220 = vmatprep.subr.bf16.mxu0 %v1178
        %1221 = vmatpush1.bf16.msra.mxu0 %v1177
        %1222 = vmatprep.subr.bf16.mxu0 %v1181
        %1223 = vmatpush1.bf16.msra.mxu0 %v1180
        %1224 = vmatprep.subr.bf16.mxu0 %v1184
        %1225 = vmatpush1.bf16.msra.mxu0 %v1183
        %1226 = vmatprep.subr.bf16.mxu0 0
        %1227 = vmatpush1.bf16.msra.mxu0 0
        %1228 = vmatprep.subr.bf16.mxu0 0
        %1229 = vmatpush1.bf16.msra.mxu0 0
        %1230 = vmatprep.subr.bf16.mxu0 0
        %1231 = vmatpush1.bf16.msra.mxu0 0
        %1232 = vmatprep.subr.bf16.mxu0 0
        %1233 = vmatpush1.bf16.msra.mxu0 0
        %1234 = vmatprep.subr.bf16.mxu0 0
        %1235 = vmatpush1.bf16.msra.mxu0 0
        %1236 = vmatprep.subr.bf16.mxu0 0
        %1237 = vmatpush1.bf16.msra.mxu0 0
        %1238 = vmatprep.subr.bf16.mxu0 0
        %1239 = vmatpush1.bf16.msra.mxu0 0
        %1240 = vmatprep.subr.bf16.mxu0 0
        %1241 = vmatpush1.bf16.msra.mxu0 0
        %1242 = vmatprep.mubr.bf16.mxu0 0
        %1243 = vmatmul.mubr.bf16.gmra.mrb[0].mxu0 %v1066
        %v1244 = vpop.f32.mrb[0].mxu0
        %v1245 = vadd.f32 0.0, %v1244
        %v1246 = vpop.f32.mrb[0].mxu0
        %v1247 = vadd.f32 0.0, %v1246
        %v1248 = vpop.f32.mrb[0].mxu0
        %v1249 = vadd.f32 0.0, %v1248
        %v1250 = vpop.f32.mrb[0].mxu0
        %v1251 = vadd.f32 0.0, %v1250
        %1252 = vmatprep.mubr.bf16.mxu0 0
        %1253 = vmatmul.mubr.bf16.gmra.mrb[0].mxu0 %v1067
        %v1254 = vpop.f32.mrb[0].mxu0
        %v1255 = vadd.f32 0.0, %v1254
        %v1256 = vpop.f32.mrb[0].mxu0
        %v1257 = vadd.f32 0.0, %v1256
        %v1258 = vpop.f32.mrb[0].mxu0
        %v1259 = vadd.f32 0.0, %v1258
        %v1260 = vpop.f32.mrb[0].mxu0
        %v1261 = vadd.f32 0.0, %v1260
        %1262 = vmatprep.mubr.bf16.mxu0 0
        %1263 = vmatmul.mubr.bf16.gmra.mrb[0].mxu0 %v1068
        %v1264 = vpop.f32.mrb[0].mxu0
        %v1265 = vadd.f32 0.0, %v1264
        %v1266 = vpop.f32.mrb[0].mxu0
        %v1267 = vadd.f32 0.0, %v1266
        %v1268 = vpop.f32.mrb[0].mxu0
        %v1269 = vadd.f32 0.0, %v1268
        %v1270 = vpop.f32.mrb[0].mxu0
        %v1271 = vadd.f32 0.0, %v1270
        %1272 = vmatprep.mubr.bf16.mxu0 0
        %1273 = vmatmul.mubr.bf16.gmra.mrb[0].mxu0 %v1069
        %v1274 = vpop.f32.mrb[0].mxu0
        %v1275 = vadd.f32 0.0, %v1274
        %v1276 = vpop.f32.mrb[0].mxu0
        %v1277 = vadd.f32 0.0, %v1276
        %v1278 = vpop.f32.mrb[0].mxu0
        %v1279 = vadd.f32 0.0, %v1278
        %v1280 = vpop.f32.mrb[0].mxu0
        %v1281 = vadd.f32 0.0, %v1280
        %1282 = vmatprep.mubr.bf16.mxu0 0
        %1283 = vmatmul.mubr.bf16.gmra.mrb[0].mxu0 %v1070
        %v1284 = vpop.f32.mrb[0].mxu0
        %v1285 = vadd.f32 0.0, %v1284
        %v1286 = vpop.f32.mrb[0].mxu0
        %v1287 = vadd.f32 0.0, %v1286
        %v1288 = vpop.f32.mrb[0].mxu0
        %v1289 = vadd.f32 0.0, %v1288
        %v1290 = vpop.f32.mrb[0].mxu0
        %v1291 = vadd.f32 0.0, %v1290
        %1292 = vmatprep.mubr.bf16.mxu0 0
        %1293 = vmatmul.mubr.bf16.gmra.mrb[0].mxu0 %v1071
        %v1294 = vpop.f32.mrb[0].mxu0
        %v1295 = vadd.f32 0.0, %v1294
        %v1296 = vpop.f32.mrb[0].mxu0
        %v1297 = vadd.f32 0.0, %v1296
        %v1298 = vpop.f32.mrb[0].mxu0
        %v1299 = vadd.f32 0.0, %v1298
        %v1300 = vpop.f32.mrb[0].mxu0
        %v1301 = vadd.f32 0.0, %v1300
        %1302 = vmatprep.mubr.bf16.mxu0 0
        %1303 = vmatmul.mubr.bf16.gmra.mrb[0].mxu0 %v1072
        %v1304 = vpop.f32.mrb[0].mxu0
        %v1305 = vadd.f32 0.0, %v1304
        %v1306 = vpop.f32.mrb[0].mxu0
        %v1307 = vadd.f32 0.0, %v1306
        %v1308 = vpop.f32.mrb[0].mxu0
        %v1309 = vadd.f32 0.0, %v1308
        %v1310 = vpop.f32.mrb[0].mxu0
        %v1311 = vadd.f32 0.0, %v1310
        %1312 = vmatprep.mubr.bf16.mxu0 0
        %1313 = vmatmul.mubr.bf16.gmra.mrb[0].mxu0 %v1073
        %v1314 = vpop.f32.mrb[0].mxu0
        %v1315 = vadd.f32 0.0, %v1314
        %v1316 = vpop.f32.mrb[0].mxu0
        %v1317 = vadd.f32 0.0, %v1316
        %v1318 = vpop.f32.mrb[0].mxu0
        %v1319 = vadd.f32 0.0, %v1318
        %v1320 = vpop.f32.mrb[0].mxu0
        %v1321 = vadd.f32 0.0, %v1320
        %1322 = vmatprep.mubr.bf16.mxu0 0
        %1323 = vmatmul.mubr.bf16.gmra.mrb[0].mxu0 %v1074
        %v1324 = vpop.f32.mrb[0].mxu0
        %v1325 = vadd.f32 0.0, %v1324
        %v1326 = vpop.f32.mrb[0].mxu0
        %v1327 = vadd.f32 0.0, %v1326
        %v1328 = vpop.f32.mrb[0].mxu0
        %v1329 = vadd.f32 0.0, %v1328
        %v1330 = vpop.f32.mrb[0].mxu0
        %v1331 = vadd.f32 0.0, %v1330
        %1332 = vmatprep.mubr.bf16.mxu0 0
        %1333 = vmatmul.mubr.bf16.gmra.mrb[0].mxu0 %v1075
        %v1334 = vpop.f32.mrb[0].mxu0
        %v1335 = vadd.f32 0.0, %v1334
        %v1336 = vpop.f32.mrb[0].mxu0
        %v1337 = vadd.f32 0.0, %v1336
        %v1338 = vpop.f32.mrb[0].mxu0
        %v1339 = vadd.f32 0.0, %v1338
        %v1340 = vpop.f32.mrb[0].mxu0
        %v1341 = vadd.f32 0.0, %v1340
        %1342 = vmatprep.mubr.bf16.mxu0 0
        %1343 = vmatmul.mubr.bf16.gmra.mrb[0].mxu0 %v1076
        %v1344 = vpop.f32.mrb[0].mxu0
        %v1345 = vadd.f32 0.0, %v1344
        %v1346 = vpop.f32.mrb[0].mxu0
        %v1347 = vadd.f32 0.0, %v1346
        %v1348 = vpop.f32.mrb[0].mxu0
        %v1349 = vadd.f32 0.0, %v1348
        %v1350 = vpop.f32.mrb[0].mxu0
        %v1351 = vadd.f32 0.0, %v1350
        %1352 = vmatprep.mubr.bf16.mxu0 0
        %1353 = vmatmul.mubr.bf16.gmra.mrb[0].mxu0 %v1077
        %v1354 = vpop.f32.mrb[0].mxu0
        %v1355 = vadd.f32 0.0, %v1354
        %v1356 = vpop.f32.mrb[0].mxu0
        %v1357 = vadd.f32 0.0, %v1356
        %v1358 = vpop.f32.mrb[0].mxu0
        %v1359 = vadd.f32 0.0, %v1358
        %v1360 = vpop.f32.mrb[0].mxu0
        %v1361 = vadd.f32 0.0, %v1360
        %1362 = vmatprep.mubr.bf16.mxu0 0
        %1363 = vmatmul.mubr.bf16.gmra.mrb[0].mxu0 %v1078
        %v1364 = vpop.f32.mrb[0].mxu0
        %v1365 = vadd.f32 0.0, %v1364
        %v1366 = vpop.f32.mrb[0].mxu0
        %v1367 = vadd.f32 0.0, %v1366
        %v1368 = vpop.f32.mrb[0].mxu0
        %v1369 = vadd.f32 0.0, %v1368
        %v1370 = vpop.f32.mrb[0].mxu0
        %v1371 = vadd.f32 0.0, %v1370
        %1372 = vmatprep.mubr.bf16.mxu0 0
        %1373 = vmatmul.mubr.bf16.gmra.mrb[0].mxu0 %v1079
        %v1374 = vpop.f32.mrb[0].mxu0
        %v1375 = vadd.f32 0.0, %v1374
        %v1376 = vpop.f32.mrb[0].mxu0
        %v1377 = vadd.f32 0.0, %v1376
        %v1378 = vpop.f32.mrb[0].mxu0
        %v1379 = vadd.f32 0.0, %v1378
        %v1380 = vpop.f32.mrb[0].mxu0
        %v1381 = vadd.f32 0.0, %v1380
        %1382 = vmatprep.mubr.bf16.mxu0 0
        %1383 = vmatmul.mubr.bf16.gmra.mrb[0].mxu0 %v1080
        %v1384 = vpop.f32.mrb[0].mxu0
        %v1385 = vadd.f32 0.0, %v1384
        %v1386 = vpop.f32.mrb[0].mxu0
        %v1387 = vadd.f32 0.0, %v1386
        %v1388 = vpop.f32.mrb[0].mxu0
        %v1389 = vadd.f32 0.0, %v1388
        %v1390 = vpop.f32.mrb[0].mxu0
        %v1391 = vadd.f32 0.0, %v1390
        %1392 = vmatprep.mubr.bf16.mxu0 0
        %1393 = vmatmul.mubr.bf16.gmra.mrb[0].mxu0 %v1081
        %v1394 = vpop.f32.mrb[0].mxu0
        %v1395 = vadd.f32 0.0, %v1394
        %v1396 = vpop.f32.mrb[0].mxu0
        %v1397 = vadd.f32 0.0, %v1396
        %v1398 = vpop.f32.mrb[0].mxu0
        %v1399 = vadd.f32 0.0, %v1398
        %v1400 = vpop.f32.mrb[0].mxu0
        %v1401 = vadd.f32 0.0, %v1400
        %1402 = vdwg.mxu0
        %1403 = vmatprep.subr.bf16.mxu0 0
        %1404 = vmatpush1.bf16.msra.mxu0 %v1164
        %1405 = vmatprep.subr.bf16.mxu0 0
        %1406 = vmatpush1.bf16.msra.mxu0 %v1167
        %1407 = vmatprep.subr.bf16.mxu0 0
        %1408 = vmatpush1.bf16.msra.mxu0 %v1170
        %1409 = vmatprep.subr.bf16.mxu0 0
        %1410 = vmatpush1.bf16.msra.mxu0 %v1173
        %1411 = vmatprep.subr.bf16.mxu0 0
        %1412 = vmatpush1.bf16.msra.mxu0 %v1176
        %1413 = vmatprep.subr.bf16.mxu0 0
        %1414 = vmatpush1.bf16.msra.mxu0 %v1179
        %1415 = vmatprep.subr.bf16.mxu0 0
        %1416 = vmatpush1.bf16.msra.mxu0 %v1182
        %1417 = vmatprep.subr.bf16.mxu0 0
        %1418 = vmatpush1.bf16.msra.mxu0 %v1185
        %1419 = vmatprep.subr.bf16.mxu0 0
        %1420 = vmatpush1.bf16.msra.mxu0 0
        %1421 = vmatprep.subr.bf16.mxu0 0
        %1422 = vmatpush1.bf16.msra.mxu0 0
        %1423 = vmatprep.subr.bf16.mxu0 0
        %1424 = vmatpush1.bf16.msra.mxu0 0
        %1425 = vmatprep.subr.bf16.mxu0 0
        %1426 = vmatpush1.bf16.msra.mxu0 0
        %1427 = vmatprep.subr.bf16.mxu0 0
        %1428 = vmatpush1.bf16.msra.mxu0 0
        %1429 = vmatprep.subr.bf16.mxu0 0
        %1430 = vmatpush1.bf16.msra.mxu0 0
        %1431 = vmatprep.subr.bf16.mxu0 0
        %1432 = vmatpush1.bf16.msra.mxu0 0
        %1433 = vmatprep.subr.bf16.mxu0 0
        %1434 = vmatpush1.bf16.msra.mxu0 0
        %1435 = vmatprep.mubr.bf16.mxu0 0
        %1436 = vmatmul.mubr.bf16.gmra.mrb[0].mxu0 %v1066
        %v1437 = vpop.f32.mrb[0].mxu0
        %v1438 = vadd.f32 0.0, %v1437
        %v1439 = vpop.f32.mrb[0].mxu0
        %v1440 = vpop.f32.mrb[0].mxu0
        %v1441 = vadd.f32 0.0, %v1440
        %v1442 = vpop.f32.mrb[0].mxu0
        %1443 = vmatprep.mubr.bf16.mxu0 0
        %1444 = vmatmul.mubr.bf16.gmra.mrb[0].mxu0 %v1067
        %v1445 = vpop.f32.mrb[0].mxu0
        %v1446 = vadd.f32 0.0, %v1445
        %v1447 = vpop.f32.mrb[0].mxu0
        %v1448 = vpop.f32.mrb[0].mxu0
        %v1449 = vadd.f32 0.0, %v1448
        %v1450 = vpop.f32.mrb[0].mxu0
        %1451 = vmatprep.mubr.bf16.mxu0 0
        %1452 = vmatmul.mubr.bf16.gmra.mrb[0].mxu0 %v1068
        %v1453 = vpop.f32.mrb[0].mxu0
        %v1454 = vadd.f32 0.0, %v1453
        %v1455 = vpop.f32.mrb[0].mxu0
        %v1456 = vpop.f32.mrb[0].mxu0
        %v1457 = vadd.f32 0.0, %v1456
        %v1458 = vpop.f32.mrb[0].mxu0
        %1459 = vmatprep.mubr.bf16.mxu0 0
        %1460 = vmatmul.mubr.bf16.gmra.mrb[0].mxu0 %v1069
        %v1461 = vpop.f32.mrb[0].mxu0
        %v1462 = vadd.f32 0.0, %v1461
        %v1463 = vpop.f32.mrb[0].mxu0
        %v1464 = vpop.f32.mrb[0].mxu0
        %v1465 = vadd.f32 0.0, %v1464
        %v1466 = vpop.f32.mrb[0].mxu0
        %1467 = vmatprep.mubr.bf16.mxu0 0
        %1468 = vmatmul.mubr.bf16.gmra.mrb[0].mxu0 %v1070
        %v1469 = vpop.f32.mrb[0].mxu0
        %v1470 = vadd.f32 0.0, %v1469
        %v1471 = vpop.f32.mrb[0].mxu0
        %v1472 = vpop.f32.mrb[0].mxu0
        %v1473 = vadd.f32 0.0, %v1472
        %v1474 = vpop.f32.mrb[0].mxu0
        %1475 = vmatprep.mubr.bf16.mxu0 0
        %1476 = vmatmul.mubr.bf16.gmra.mrb[0].mxu0 %v1071
        %v1477 = vpop.f32.mrb[0].mxu0
        %v1478 = vadd.f32 0.0, %v1477
        %v1479 = vpop.f32.mrb[0].mxu0
        %v1480 = vpop.f32.mrb[0].mxu0
        %v1481 = vadd.f32 0.0, %v1480
        %v1482 = vpop.f32.mrb[0].mxu0
        %1483 = vmatprep.mubr.bf16.mxu0 0
        %1484 = vmatmul.mubr.bf16.gmra.mrb[0].mxu0 %v1072
        %v1485 = vpop.f32.mrb[0].mxu0
        %v1486 = vadd.f32 0.0, %v1485
        %v1487 = vpop.f32.mrb[0].mxu0
        %v1488 = vpop.f32.mrb[0].mxu0
        %v1489 = vadd.f32 0.0, %v1488
        %v1490 = vpop.f32.mrb[0].mxu0
        %1491 = vmatprep.mubr.bf16.mxu0 0
        %1492 = vmatmul.mubr.bf16.gmra.mrb[0].mxu0 %v1073
        %v1493 = vpop.f32.mrb[0].mxu0
        %v1494 = vadd.f32 0.0, %v1493
        %v1495 = vpop.f32.mrb[0].mxu0
        %v1496 = vpop.f32.mrb[0].mxu0
        %v1497 = vadd.f32 0.0, %v1496
        %v1498 = vpop.f32.mrb[0].mxu0
        %1499 = vmatprep.mubr.bf16.mxu0 0
        %1500 = vmatmul.mubr.bf16.gmra.mrb[0].mxu0 %v1074
        %v1501 = vpop.f32.mrb[0].mxu0
        %v1502 = vadd.f32 0.0, %v1501
        %v1503 = vpop.f32.mrb[0].mxu0
        %v1504 = vpop.f32.mrb[0].mxu0
        %v1505 = vadd.f32 0.0, %v1504
        %v1506 = vpop.f32.mrb[0].mxu0
        %1507 = vmatprep.mubr.bf16.mxu0 0
        %1508 = vmatmul.mubr.bf16.gmra.mrb[0].mxu0 %v1075
        %v1509 = vpop.f32.mrb[0].mxu0
        %v1510 = vadd.f32 0.0, %v1509
        %v1511 = vpop.f32.mrb[0].mxu0
        %v1512 = vpop.f32.mrb[0].mxu0
        %v1513 = vadd.f32 0.0, %v1512
        %v1514 = vpop.f32.mrb[0].mxu0
        %1515 = vmatprep.mubr.bf16.mxu0 0
        %1516 = vmatmul.mubr.bf16.gmra.mrb[0].mxu0 %v1076
        %v1517 = vpop.f32.mrb[0].mxu0
        %v1518 = vadd.f32 0.0, %v1517
        %v1519 = vpop.f32.mrb[0].mxu0
        %v1520 = vpop.f32.mrb[0].mxu0
        %v1521 = vadd.f32 0.0, %v1520
        %v1522 = vpop.f32.mrb[0].mxu0
        %1523 = vmatprep.mubr.bf16.mxu0 0
        %1524 = vmatmul.mubr.bf16.gmra.mrb[0].mxu0 %v1077
        %v1525 = vpop.f32.mrb[0].mxu0
        %v1526 = vadd.f32 0.0, %v1525
        %v1527 = vpop.f32.mrb[0].mxu0
        %v1528 = vpop.f32.mrb[0].mxu0
        %v1529 = vadd.f32 0.0, %v1528
        %v1530 = vpop.f32.mrb[0].mxu0
        %1531 = vmatprep.mubr.bf16.mxu0 0
        %1532 = vmatmul.mubr.bf16.gmra.mrb[0].mxu0 %v1078
        %v1533 = vpop.f32.mrb[0].mxu0
        %v1534 = vadd.f32 0.0, %v1533
        %v1535 = vpop.f32.mrb[0].mxu0
        %v1536 = vpop.f32.mrb[0].mxu0
        %v1537 = vadd.f32 0.0, %v1536
        %v1538 = vpop.f32.mrb[0].mxu0
        %1539 = vmatprep.mubr.bf16.mxu0 0
        %1540 = vmatmul.mubr.bf16.gmra.mrb[0].mxu0 %v1079
        %v1541 = vpop.f32.mrb[0].mxu0
        %v1542 = vadd.f32 0.0, %v1541
        %v1543 = vpop.f32.mrb[0].mxu0
        %v1544 = vpop.f32.mrb[0].mxu0
        %v1545 = vadd.f32 0.0, %v1544
        %v1546 = vpop.f32.mrb[0].mxu0
        %1547 = vmatprep.mubr.bf16.mxu0 0
        %1548 = vmatmul.mubr.bf16.gmra.mrb[0].mxu0 %v1080
        %v1549 = vpop.f32.mrb[0].mxu0
        %v1550 = vadd.f32 0.0, %v1549
        %v1551 = vpop.f32.mrb[0].mxu0
        %v1552 = vpop.f32.mrb[0].mxu0
        %v1553 = vadd.f32 0.0, %v1552
        %v1554 = vpop.f32.mrb[0].mxu0
        %1555 = vmatprep.mubr.bf16.mxu0 0
        %1556 = vmatmul.mubr.bf16.gmra.mrb[0].mxu0 %v1081
        %v1557 = vpop.f32.mrb[0].mxu0
        %v1558 = vadd.f32 0.0, %v1557
        %v1559 = vpop.f32.mrb[0].mxu0
        %v1560 = vpop.f32.mrb[0].mxu0
        %v1561 = vadd.f32 0.0, %v1560
        %v1562 = vpop.f32.mrb[0].mxu0
        %1563 = vdwg.mxu0
        %1564 = vxpose.xlu0.b32.start [1/16] %v1245, 128
        %1565 = vxpose.xlu0.b32.cont [2/16] %v1249, 128
        %1566 = vxpose.xlu0.b32.cont [3/16] %v1255, 128
        %1567 = vxpose.xlu0.b32.cont [4/16] %v1259, 128
        %1568 = vxpose.xlu0.b32.cont [5/16] %v1265, 128
        %1569 = vxpose.xlu0.b32.cont [6/16] %v1269, 128
        %1570 = vxpose.xlu0.b32.cont [7/16] %v1275, 128
        %1571 = vxpose.xlu0.b32.cont [8/16] %v1279, 128
        %1572 = vxpose.xlu0.b32.cont [9/16] %v1285, 128
        %1573 = vxpose.xlu0.b32.cont [10/16] %v1289, 128
        %1574 = vxpose.xlu0.b32.cont [11/16] %v1295, 128
        %1575 = vxpose.xlu0.b32.cont [12/16] %v1299, 128
        %1576 = vxpose.xlu0.b32.cont [13/16] %v1305, 128
        %1577 = vxpose.xlu0.b32.cont [14/16] %v1309, 128
        %1578 = vxpose.xlu0.b32.cont [15/16] %v1315, 128
        %1579 = vxpose.xlu0.b32.end [16/16] %v1319, 128
        %v1580 = vpop.trf.xlu0
        %v1581 = vpop.trf.xlu0
        %v1582 = vpop.trf.xlu0
        %v1583 = vpop.trf.xlu0
        %v1584 = vpop.trf.xlu0
        %v1585 = vpop.trf.xlu0
        %v1586 = vpop.trf.xlu0
        %v1587 = vpop.trf.xlu0
        %v1588 = vpop.trf.xlu0
        %v1589 = vpop.trf.xlu0
        %v1590 = vpop.trf.xlu0
        %v1591 = vpop.trf.xlu0
        %v1592 = vpop.trf.xlu0
        %v1593 = vpop.trf.xlu0
        %v1594 = vpop.trf.xlu0
        %v1595 = vpop.trf.xlu0
        %1596 = vxpose.xlu0.b32.start [1/16] %v1325, 128
        %1597 = vxpose.xlu0.b32.cont [2/16] %v1329, 128
        %1598 = vxpose.xlu0.b32.cont [3/16] %v1335, 128
        %1599 = vxpose.xlu0.b32.cont [4/16] %v1339, 128
        %1600 = vxpose.xlu0.b32.cont [5/16] %v1345, 128
        %1601 = vxpose.xlu0.b32.cont [6/16] %v1349, 128
        %1602 = vxpose.xlu0.b32.cont [7/16] %v1355, 128
        %1603 = vxpose.xlu0.b32.cont [8/16] %v1359, 128
        %1604 = vxpose.xlu0.b32.cont [9/16] %v1365, 128
        %1605 = vxpose.xlu0.b32.cont [10/16] %v1369, 128
        %1606 = vxpose.xlu0.b32.cont [11/16] %v1375, 128
        %1607 = vxpose.xlu0.b32.cont [12/16] %v1379, 128
        %1608 = vxpose.xlu0.b32.cont [13/16] %v1385, 128
        %1609 = vxpose.xlu0.b32.cont [14/16] %v1389, 128
        %1610 = vxpose.xlu0.b32.cont [15/16] %v1395, 128
        %1611 = vxpose.xlu0.b32.end [16/16] %v1399, 128
        %v1612 = vpop.trf.xlu0
        %v1613 = vpop.trf.xlu0
        %v1614 = vpop.trf.xlu0
        %v1615 = vpop.trf.xlu0
        %v1616 = vpop.trf.xlu0
        %v1617 = vpop.trf.xlu0
        %v1618 = vpop.trf.xlu0
        %v1619 = vpop.trf.xlu0
        %v1620 = vpop.trf.xlu0
        %v1621 = vpop.trf.xlu0
        %v1622 = vpop.trf.xlu0
        %v1623 = vpop.trf.xlu0
        %v1624 = vpop.trf.xlu0
        %v1625 = vpop.trf.xlu0
        %v1626 = vpop.trf.xlu0
        %v1627 = vpop.trf.xlu0
        %1628 = vxpose.xlu0.b32.start [1/16] %v1247, 128
        %1629 = vxpose.xlu0.b32.cont [2/16] %v1251, 128
        %1630 = vxpose.xlu0.b32.cont [3/16] %v1257, 128
        %1631 = vxpose.xlu0.b32.cont [4/16] %v1261, 128
        %1632 = vxpose.xlu0.b32.cont [5/16] %v1267, 128
        %1633 = vxpose.xlu0.b32.cont [6/16] %v1271, 128
        %1634 = vxpose.xlu0.b32.cont [7/16] %v1277, 128
        %1635 = vxpose.xlu0.b32.cont [8/16] %v1281, 128
        %1636 = vxpose.xlu0.b32.cont [9/16] %v1287, 128
        %1637 = vxpose.xlu0.b32.cont [10/16] %v1291, 128
        %1638 = vxpose.xlu0.b32.cont [11/16] %v1297, 128
        %1639 = vxpose.xlu0.b32.cont [12/16] %v1301, 128
        %1640 = vxpose.xlu0.b32.cont [13/16] %v1307, 128
        %1641 = vxpose.xlu0.b32.cont [14/16] %v1311, 128
        %1642 = vxpose.xlu0.b32.cont [15/16] %v1317, 128
        %1643 = vxpose.xlu0.b32.end [16/16] %v1321, 128
        %v1644 = vpop.trf.xlu0
        %v1645 = vpop.trf.xlu0
        %v1646 = vpop.trf.xlu0
        %v1647 = vpop.trf.xlu0
        %v1648 = vpop.trf.xlu0
        %v1649 = vpop.trf.xlu0
        %v1650 = vpop.trf.xlu0
        %v1651 = vpop.trf.xlu0
        %v1652 = vpop.trf.xlu0
        %v1653 = vpop.trf.xlu0
        %v1654 = vpop.trf.xlu0
        %v1655 = vpop.trf.xlu0
        %v1656 = vpop.trf.xlu0
        %v1657 = vpop.trf.xlu0
        %v1658 = vpop.trf.xlu0
        %v1659 = vpop.trf.xlu0
        %1660 = vxpose.xlu0.b32.start [1/16] %v1438, 128
        %1661 = vxpose.xlu0.b32.cont [2/16] %v1441, 128
        %1662 = vxpose.xlu0.b32.cont [3/16] %v1446, 128
        %1663 = vxpose.xlu0.b32.cont [4/16] %v1449, 128
        %1664 = vxpose.xlu0.b32.cont [5/16] %v1454, 128
        %1665 = vxpose.xlu0.b32.cont [6/16] %v1457, 128
        %1666 = vxpose.xlu0.b32.cont [7/16] %v1462, 128
        %1667 = vxpose.xlu0.b32.cont [8/16] %v1465, 128
        %1668 = vxpose.xlu0.b32.cont [9/16] %v1470, 128
        %1669 = vxpose.xlu0.b32.cont [10/16] %v1473, 128
        %1670 = vxpose.xlu0.b32.cont [11/16] %v1478, 128
        %1671 = vxpose.xlu0.b32.cont [12/16] %v1481, 128
        %1672 = vxpose.xlu0.b32.cont [13/16] %v1486, 128
        %1673 = vxpose.xlu0.b32.cont [14/16] %v1489, 128
        %1674 = vxpose.xlu0.b32.cont [15/16] %v1494, 128
        %1675 = vxpose.xlu0.b32.end [16/16] %v1497, 128
        %v1676 = vpop.trf.xlu0
        %v1677 = vpop.trf.xlu0
        %v1678 = vpop.trf.xlu0
        %v1679 = vpop.trf.xlu0
        %v1680 = vpop.trf.xlu0
        %v1681 = vpop.trf.xlu0
        %v1682 = vpop.trf.xlu0
        %v1683 = vpop.trf.xlu0
        %v1684 = vpop.trf.xlu0
        %v1685 = vpop.trf.xlu0
        %v1686 = vpop.trf.xlu0
        %v1687 = vpop.trf.xlu0
        %v1688 = vpop.trf.xlu0
        %v1689 = vpop.trf.xlu0
        %v1690 = vpop.trf.xlu0
        %v1691 = vpop.trf.xlu0
        %1692 = vxpose.xlu0.b32.start [1/16] %v1327, 128
        %1693 = vxpose.xlu0.b32.cont [2/16] %v1331, 128
        %1694 = vxpose.xlu0.b32.cont [3/16] %v1337, 128
        %1695 = vxpose.xlu0.b32.cont [4/16] %v1341, 128
        %1696 = vxpose.xlu0.b32.cont [5/16] %v1347, 128
        %1697 = vxpose.xlu0.b32.cont [6/16] %v1351, 128
        %1698 = vxpose.xlu0.b32.cont [7/16] %v1357, 128
        %1699 = vxpose.xlu0.b32.cont [8/16] %v1361, 128
        %1700 = vxpose.xlu0.b32.cont [9/16] %v1367, 128
        %1701 = vxpose.xlu0.b32.cont [10/16] %v1371, 128
        %1702 = vxpose.xlu0.b32.cont [11/16] %v1377, 128
        %1703 = vxpose.xlu0.b32.cont [12/16] %v1381, 128
        %1704 = vxpose.xlu0.b32.cont [13/16] %v1387, 128
        %1705 = vxpose.xlu0.b32.cont [14/16] %v1391, 128
        %1706 = vxpose.xlu0.b32.cont [15/16] %v1397, 128
        %1707 = vxpose.xlu0.b32.end [16/16] %v1401, 128
        %v1708 = vpop.trf.xlu0
        %v1709 = vpop.trf.xlu0
        %v1710 = vpop.trf.xlu0
        %v1711 = vpop.trf.xlu0
        %v1712 = vpop.trf.xlu0
        %v1713 = vpop.trf.xlu0
        %v1714 = vpop.trf.xlu0
        %v1715 = vpop.trf.xlu0
        %v1716 = vpop.trf.xlu0
        %v1717 = vpop.trf.xlu0
        %v1718 = vpop.trf.xlu0
        %v1719 = vpop.trf.xlu0
        %v1720 = vpop.trf.xlu0
        %v1721 = vpop.trf.xlu0
        %v1722 = vpop.trf.xlu0
        %v1723 = vpop.trf.xlu0
        %1724 = vxpose.xlu0.b32.start [1/16] %v1502, 128
        %1725 = vxpose.xlu0.b32.cont [2/16] %v1505, 128
        %1726 = vxpose.xlu0.b32.cont [3/16] %v1510, 128
        %1727 = vxpose.xlu0.b32.cont [4/16] %v1513, 128
        %1728 = vxpose.xlu0.b32.cont [5/16] %v1518, 128
        %1729 = vxpose.xlu0.b32.cont [6/16] %v1521, 128
        %1730 = vxpose.xlu0.b32.cont [7/16] %v1526, 128
        %1731 = vxpose.xlu0.b32.cont [8/16] %v1529, 128
        %1732 = vxpose.xlu0.b32.cont [9/16] %v1534, 128
        %1733 = vxpose.xlu0.b32.cont [10/16] %v1537, 128
        %1734 = vxpose.xlu0.b32.cont [11/16] %v1542, 128
        %1735 = vxpose.xlu0.b32.cont [12/16] %v1545, 128
        %1736 = vxpose.xlu0.b32.cont [13/16] %v1550, 128
        %1737 = vxpose.xlu0.b32.cont [14/16] %v1553, 128
        %1738 = vxpose.xlu0.b32.cont [15/16] %v1558, 128
        %1739 = vxpose.xlu0.b32.end [16/16] %v1561, 128
        %v1740 = vpop.trf.xlu0
        %v1741 = vpop.trf.xlu0
        %v1742 = vpop.trf.xlu0
        %v1743 = vpop.trf.xlu0
        %v1744 = vpop.trf.xlu0
        %v1745 = vpop.trf.xlu0
        %v1746 = vpop.trf.xlu0
        %v1747 = vpop.trf.xlu0
        %v1748 = vpop.trf.xlu0
        %v1749 = vpop.trf.xlu0
        %v1750 = vpop.trf.xlu0
        %v1751 = vpop.trf.xlu0
        %v1752 = vpop.trf.xlu0
        %v1753 = vpop.trf.xlu0
        %v1754 = vpop.trf.xlu0
        %v1755 = vpop.trf.xlu0
        %v1756 = vpack.c.bf16 %v1581, %v1580
        %v1757 = vpack.c.bf16 %v1613, %v1612
        %v1758 = vpack.c.bf16 %v1583, %v1582
        %v1759 = vpack.c.bf16 %v1615, %v1614
        %v1760 = vpack.c.bf16 %v1585, %v1584
        %v1761 = vpack.c.bf16 %v1617, %v1616
        %v1762 = vpack.c.bf16 %v1587, %v1586
        %v1763 = vpack.c.bf16 %v1619, %v1618
        %v1764 = vpack.c.bf16 %v1589, %v1588
        %v1765 = vpack.c.bf16 %v1621, %v1620
        %v1766 = vpack.c.bf16 %v1591, %v1590
        %v1767 = vpack.c.bf16 %v1623, %v1622
        %v1768 = vpack.c.bf16 %v1593, %v1592
        %v1769 = vpack.c.bf16 %v1625, %v1624
        %v1770 = vpack.c.bf16 %v1595, %v1594
        %v1771 = vpack.c.bf16 %v1627, %v1626
        %v1772 = vpack.c.bf16 %v1645, %v1644
        %v1773 = vpack.c.bf16 %v1709, %v1708
        %v1774 = vpack.c.bf16 %v1647, %v1646
        %v1775 = vpack.c.bf16 %v1711, %v1710
        %v1776 = vpack.c.bf16 %v1649, %v1648
        %v1777 = vpack.c.bf16 %v1713, %v1712
        %v1778 = vpack.c.bf16 %v1651, %v1650
        %v1779 = vpack.c.bf16 %v1715, %v1714
        %v1780 = vpack.c.bf16 %v1653, %v1652
        %v1781 = vpack.c.bf16 %v1717, %v1716
        %v1782 = vpack.c.bf16 %v1655, %v1654
        %v1783 = vpack.c.bf16 %v1719, %v1718
        %v1784 = vpack.c.bf16 %v1657, %v1656
        %v1785 = vpack.c.bf16 %v1721, %v1720
        %v1786 = vpack.c.bf16 %v1659, %v1658
        %v1787 = vpack.c.bf16 %v1723, %v1722
        %v1788 = vpack.c.bf16 %v1677, %v1676
        %v1789 = vpack.c.bf16 %v1741, %v1740
        %v1790 = vpack.c.bf16 %v1679, %v1678
        %v1791 = vpack.c.bf16 %v1743, %v1742
        %v1792 = vpack.c.bf16 %v1681, %v1680
        %v1793 = vpack.c.bf16 %v1745, %v1744
        %v1794 = vpack.c.bf16 %v1683, %v1682
        %v1795 = vpack.c.bf16 %v1747, %v1746
        %v1796 = vpack.c.bf16 %v1685, %v1684
        %v1797 = vpack.c.bf16 %v1749, %v1748
        %v1798 = vpack.c.bf16 %v1687, %v1686
        %v1799 = vpack.c.bf16 %v1751, %v1750
        %v1800 = vpack.c.bf16 %v1689, %v1688
        %v1801 = vpack.c.bf16 %v1753, %v1752
        %v1802 = vpack.c.bf16 %v1691, %v1690
        %v1803 = vpack.c.bf16 %v1755, %v1754
        %1804 = vxpose.xlu0.c.b16.start [1/8] %v1756, 128
        %1805 = vxpose.xlu0.c.b16.cont [2/8] 0, 128
        %1806 = vxpose.xlu0.c.b16.cont [3/8] 0, 128
        %1807 = vxpose.xlu0.c.b16.cont [4/8] 0, 128
        %1808 = vxpose.xlu0.c.b16.cont [5/8] 0, 128
        %1809 = vxpose.xlu0.c.b16.cont [6/8] 0, 128
        %1810 = vxpose.xlu0.c.b16.cont [7/8] 0, 128
        %1811 = vxpose.xlu0.c.b16.end [8/8] 0, 128
        %v1812 = vpop.trf.xlu0
        %v1813 = vpop.trf.xlu0
        %v1814 = vpop.trf.xlu0
        %v1815 = vpop.trf.xlu0
        %v1816 = vpop.trf.xlu0
        %v1817 = vpop.trf.xlu0
        %v1818 = vpop.trf.xlu0
        %v1819 = vpop.trf.xlu0
        %1820 = vxpose.xlu0.c.b16.start [1/8] %v1757, 128
        %1821 = vxpose.xlu0.c.b16.cont [2/8] 0, 128
        %1822 = vxpose.xlu0.c.b16.cont [3/8] 0, 128
        %1823 = vxpose.xlu0.c.b16.cont [4/8] 0, 128
        %1824 = vxpose.xlu0.c.b16.cont [5/8] 0, 128
        %1825 = vxpose.xlu0.c.b16.cont [6/8] 0, 128
        %1826 = vxpose.xlu0.c.b16.cont [7/8] 0, 128
        %1827 = vxpose.xlu0.c.b16.end [8/8] 0, 128
        %v1828 = vpop.trf.xlu0
        %v1829 = vpop.trf.xlu0
        %v1830 = vpop.trf.xlu0
        %v1831 = vpop.trf.xlu0
        %v1832 = vpop.trf.xlu0
        %v1833 = vpop.trf.xlu0
        %v1834 = vpop.trf.xlu0
        %v1835 = vpop.trf.xlu0
        %vm1836 = vcmask 130048
        %v1838 = vsel %vm1836, %v1812, 0
        %v1841 = vsel %vm1836, %v1813, 0
        %v1844 = vsel %vm1836, %v1814, 0
        %v1847 = vsel %vm1836, %v1815, 0
        %v1850 = vsel %vm1836, %v1816, 0
        %v1853 = vsel %vm1836, %v1817, 0
        %v1856 = vsel %vm1836, %v1818, 0
        %v1859 = vsel %vm1836, %v1819, 0
        %v1862 = vsel %vm1836, %v1828, 0
        %v1865 = vsel %vm1836, %v1829, 0
        %v1868 = vsel %vm1836, %v1830, 0
        %v1871 = vsel %vm1836, %v1831, 0
        %v1874 = vsel %vm1836, %v1832, 0
        %v1877 = vsel %vm1836, %v1833, 0
        %v1880 = vsel %vm1836, %v1834, 0
        %v1883 = vsel %vm1836, %v1835, 0
        %1885 = vmatprep.subr.bf16.mxu0 %v1773
        %1886 = vmatpush1.bf16.msra.mxu0 %v1772
        %1887 = vmatprep.subr.bf16.mxu0 0
        %1888 = vmatpush1.bf16.msra.mxu0 0
        %1889 = vmatprep.subr.bf16.mxu0 0
        %1890 = vmatpush1.bf16.msra.mxu0 0
        %1891 = vmatprep.subr.bf16.mxu0 0
        %1892 = vmatpush1.bf16.msra.mxu0 0
        %1893 = vmatprep.subr.bf16.mxu0 0
        %1894 = vmatpush1.bf16.msra.mxu0 0
        %1895 = vmatprep.subr.bf16.mxu0 0
        %1896 = vmatpush1.bf16.msra.mxu0 0
        %1897 = vmatprep.subr.bf16.mxu0 0
        %1898 = vmatpush1.bf16.msra.mxu0 0
        %1899 = vmatprep.subr.bf16.mxu0 0
        %1900 = vmatpush1.bf16.msra.mxu0 0
        %1901 = vmatprep.subr.bf16.mxu0 0
        %1902 = vmatpush1.bf16.msra.mxu0 0
        %1903 = vmatprep.subr.bf16.mxu0 0
        %1904 = vmatpush1.bf16.msra.mxu0 0
        %1905 = vmatprep.subr.bf16.mxu0 0
        %1906 = vmatpush1.bf16.msra.mxu0 0
        %1907 = vmatprep.subr.bf16.mxu0 0
        %1908 = vmatpush1.bf16.msra.mxu0 0
        %1909 = vmatprep.subr.bf16.mxu0 0
        %1910 = vmatpush1.bf16.msra.mxu0 0
        %1911 = vmatprep.subr.bf16.mxu0 0
        %1912 = vmatpush1.bf16.msra.mxu0 0
        %1913 = vmatprep.subr.bf16.mxu0 0
        %1914 = vmatpush1.bf16.msra.mxu0 0
        %1915 = vmatprep.subr.bf16.mxu0 0
        %1916 = vmatpush1.bf16.msra.mxu0 0
        %1917 = vmatprep.mubr.bf16.mxu0 0
        %1918 = vmatmul.mubr.bf16.gmra.mrb[0].mxu0 %v1838
        %v1919 = vpop.f32.mrb[0].mxu0
        %v1920 = vadd.f32 0.0, %v1919
        %v1921 = vpop.f32.mrb[0].mxu0
        %v1922 = vadd.f32 0.0, %v1921
        %v1923 = vpop.f32.mrb[0].mxu0
        %v1924 = vadd.f32 0.0, %v1923
        %v1925 = vpop.f32.mrb[0].mxu0
        %v1926 = vadd.f32 0.0, %v1925
        %1927 = vmatprep.mubr.bf16.mxu0 0
        %1928 = vmatmul.mubr.bf16.gmra.mrb[0].mxu0 %v1841
        %v1929 = vpop.f32.mrb[0].mxu0
        %v1930 = vadd.f32 0.0, %v1929
        %v1931 = vpop.f32.mrb[0].mxu0
        %v1932 = vadd.f32 0.0, %v1931
        %v1933 = vpop.f32.mrb[0].mxu0
        %v1934 = vadd.f32 0.0, %v1933
        %v1935 = vpop.f32.mrb[0].mxu0
        %v1936 = vadd.f32 0.0, %v1935
        %1937 = vmatprep.mubr.bf16.mxu0 0
        %1938 = vmatmul.mubr.bf16.gmra.mrb[0].mxu0 %v1844
        %v1939 = vpop.f32.mrb[0].mxu0
        %v1940 = vadd.f32 0.0, %v1939
        %v1941 = vpop.f32.mrb[0].mxu0
        %v1942 = vadd.f32 0.0, %v1941
        %v1943 = vpop.f32.mrb[0].mxu0
        %v1944 = vadd.f32 0.0, %v1943
        %v1945 = vpop.f32.mrb[0].mxu0
        %v1946 = vadd.f32 0.0, %v1945
        %1947 = vmatprep.mubr.bf16.mxu0 0
        %1948 = vmatmul.mubr.bf16.gmra.mrb[0].mxu0 %v1847
        %v1949 = vpop.f32.mrb[0].mxu0
        %v1950 = vadd.f32 0.0, %v1949
        %v1951 = vpop.f32.mrb[0].mxu0
        %v1952 = vadd.f32 0.0, %v1951
        %v1953 = vpop.f32.mrb[0].mxu0
        %v1954 = vadd.f32 0.0, %v1953
        %v1955 = vpop.f32.mrb[0].mxu0
        %v1956 = vadd.f32 0.0, %v1955
        %1957 = vmatprep.mubr.bf16.mxu0 0
        %1958 = vmatmul.mubr.bf16.gmra.mrb[0].mxu0 %v1850
        %v1959 = vpop.f32.mrb[0].mxu0
        %v1960 = vadd.f32 0.0, %v1959
        %v1961 = vpop.f32.mrb[0].mxu0
        %v1962 = vadd.f32 0.0, %v1961
        %v1963 = vpop.f32.mrb[0].mxu0
        %v1964 = vadd.f32 0.0, %v1963
        %v1965 = vpop.f32.mrb[0].mxu0
        %v1966 = vadd.f32 0.0, %v1965
        %1967 = vmatprep.mubr.bf16.mxu0 0
        %1968 = vmatmul.mubr.bf16.gmra.mrb[0].mxu0 %v1853
        %v1969 = vpop.f32.mrb[0].mxu0
        %v1970 = vadd.f32 0.0, %v1969
        %v1971 = vpop.f32.mrb[0].mxu0
        %v1972 = vadd.f32 0.0, %v1971
        %v1973 = vpop.f32.mrb[0].mxu0
        %v1974 = vadd.f32 0.0, %v1973
        %v1975 = vpop.f32.mrb[0].mxu0
        %v1976 = vadd.f32 0.0, %v1975
        %1977 = vmatprep.mubr.bf16.mxu0 0
        %1978 = vmatmul.mubr.bf16.gmra.mrb[0].mxu0 %v1856
        %v1979 = vpop.f32.mrb[0].mxu0
        %v1980 = vadd.f32 0.0, %v1979
        %v1981 = vpop.f32.mrb[0].mxu0
        %v1982 = vadd.f32 0.0, %v1981
        %v1983 = vpop.f32.mrb[0].mxu0
        %v1984 = vadd.f32 0.0, %v1983
        %v1985 = vpop.f32.mrb[0].mxu0
        %v1986 = vadd.f32 0.0, %v1985
        %1987 = vmatprep.mubr.bf16.mxu0 0
        %1988 = vmatmul.mubr.bf16.gmra.mrb[0].mxu0 %v1859
        %v1989 = vpop.f32.mrb[0].mxu0
        %v1990 = vadd.f32 0.0, %v1989
        %v1991 = vpop.f32.mrb[0].mxu0
        %v1992 = vadd.f32 0.0, %v1991
        %v1993 = vpop.f32.mrb[0].mxu0
        %v1994 = vadd.f32 0.0, %v1993
        %v1995 = vpop.f32.mrb[0].mxu0
        %v1996 = vadd.f32 0.0, %v1995
        %1997 = vmatprep.mubr.bf16.mxu0 0
        %1998 = vmatmul.mubr.bf16.gmra.mrb[0].mxu0 %v1862
        %v1999 = vpop.f32.mrb[0].mxu0
        %v2000 = vadd.f32 0.0, %v1999
        %v2001 = vpop.f32.mrb[0].mxu0
        %v2002 = vadd.f32 0.0, %v2001
        %v2003 = vpop.f32.mrb[0].mxu0
        %v2004 = vadd.f32 0.0, %v2003
        %v2005 = vpop.f32.mrb[0].mxu0
        %v2006 = vadd.f32 0.0, %v2005
        %2007 = vmatprep.mubr.bf16.mxu0 0
        %2008 = vmatmul.mubr.bf16.gmra.mrb[0].mxu0 %v1865
        %v2009 = vpop.f32.mrb[0].mxu0
        %v2010 = vadd.f32 0.0, %v2009
        %v2011 = vpop.f32.mrb[0].mxu0
        %v2012 = vadd.f32 0.0, %v2011
        %v2013 = vpop.f32.mrb[0].mxu0
        %v2014 = vadd.f32 0.0, %v2013
        %v2015 = vpop.f32.mrb[0].mxu0
        %v2016 = vadd.f32 0.0, %v2015
        %2017 = vmatprep.mubr.bf16.mxu0 0
        %2018 = vmatmul.mubr.bf16.gmra.mrb[0].mxu0 %v1868
        %v2019 = vpop.f32.mrb[0].mxu0
        %v2020 = vadd.f32 0.0, %v2019
        %v2021 = vpop.f32.mrb[0].mxu0
        %v2022 = vadd.f32 0.0, %v2021
        %v2023 = vpop.f32.mrb[0].mxu0
        %v2024 = vadd.f32 0.0, %v2023
        %v2025 = vpop.f32.mrb[0].mxu0
        %v2026 = vadd.f32 0.0, %v2025
        %2027 = vmatprep.mubr.bf16.mxu0 0
        %2028 = vmatmul.mubr.bf16.gmra.mrb[0].mxu0 %v1871
        %v2029 = vpop.f32.mrb[0].mxu0
        %v2030 = vadd.f32 0.0, %v2029
        %v2031 = vpop.f32.mrb[0].mxu0
        %v2032 = vadd.f32 0.0, %v2031
        %v2033 = vpop.f32.mrb[0].mxu0
        %v2034 = vadd.f32 0.0, %v2033
        %v2035 = vpop.f32.mrb[0].mxu0
        %v2036 = vadd.f32 0.0, %v2035
        %2037 = vmatprep.mubr.bf16.mxu0 0
        %2038 = vmatmul.mubr.bf16.gmra.mrb[0].mxu0 %v1874
        %v2039 = vpop.f32.mrb[0].mxu0
        %v2040 = vadd.f32 0.0, %v2039
        %v2041 = vpop.f32.mrb[0].mxu0
        %v2042 = vadd.f32 0.0, %v2041
        %v2043 = vpop.f32.mrb[0].mxu0
        %v2044 = vadd.f32 0.0, %v2043
        %v2045 = vpop.f32.mrb[0].mxu0
        %v2046 = vadd.f32 0.0, %v2045
        %2047 = vmatprep.mubr.bf16.mxu0 0
        %2048 = vmatmul.mubr.bf16.gmra.mrb[0].mxu0 %v1877
        %v2049 = vpop.f32.mrb[0].mxu0
        %v2050 = vadd.f32 0.0, %v2049
        %v2051 = vpop.f32.mrb[0].mxu0
        %v2052 = vadd.f32 0.0, %v2051
        %v2053 = vpop.f32.mrb[0].mxu0
        %v2054 = vadd.f32 0.0, %v2053
        %v2055 = vpop.f32.mrb[0].mxu0
        %v2056 = vadd.f32 0.0, %v2055
        %2057 = vmatprep.mubr.bf16.mxu0 0
        %2058 = vmatmul.mubr.bf16.gmra.mrb[0].mxu0 %v1880
        %v2059 = vpop.f32.mrb[0].mxu0
        %v2060 = vadd.f32 0.0, %v2059
        %v2061 = vpop.f32.mrb[0].mxu0
        %v2062 = vadd.f32 0.0, %v2061
        %v2063 = vpop.f32.mrb[0].mxu0
        %v2064 = vadd.f32 0.0, %v2063
        %v2065 = vpop.f32.mrb[0].mxu0
        %v2066 = vadd.f32 0.0, %v2065
        %2067 = vmatprep.mubr.bf16.mxu0 0
        %2068 = vmatmul.mubr.bf16.gmra.mrb[0].mxu0 %v1883
        %v2069 = vpop.f32.mrb[0].mxu0
        %v2070 = vadd.f32 0.0, %v2069
        %v2071 = vpop.f32.mrb[0].mxu0
        %v2072 = vadd.f32 0.0, %v2071
        %v2073 = vpop.f32.mrb[0].mxu0
        %v2074 = vadd.f32 0.0, %v2073
        %v2075 = vpop.f32.mrb[0].mxu0
        %v2076 = vadd.f32 0.0, %v2075
        %2077 = vdwg.mxu0
        %2078 = vxpose.xlu0.c.b16.start [1/8] %v1758, 128
        %2079 = vxpose.xlu0.c.b16.cont [2/8] 0, 128
        %2080 = vxpose.xlu0.c.b16.cont [3/8] 0, 128
        %2081 = vxpose.xlu0.c.b16.cont [4/8] 0, 128
        %2082 = vxpose.xlu0.c.b16.cont [5/8] 0, 128
        %2083 = vxpose.xlu0.c.b16.cont [6/8] 0, 128
        %2084 = vxpose.xlu0.c.b16.cont [7/8] 0, 128
        %2085 = vxpose.xlu0.c.b16.end [8/8] 0, 128
        %v2086 = vpop.trf.xlu0
        %v2087 = vpop.trf.xlu0
        %v2088 = vpop.trf.xlu0
        %v2089 = vpop.trf.xlu0
        %v2090 = vpop.trf.xlu0
        %v2091 = vpop.trf.xlu0
        %v2092 = vpop.trf.xlu0
        %v2093 = vpop.trf.xlu0
        %2094 = vxpose.xlu0.c.b16.start [1/8] %v1759, 128
        %2095 = vxpose.xlu0.c.b16.cont [2/8] 0, 128
        %2096 = vxpose.xlu0.c.b16.cont [3/8] 0, 128
        %2097 = vxpose.xlu0.c.b16.cont [4/8] 0, 128
        %2098 = vxpose.xlu0.c.b16.cont [5/8] 0, 128
        %2099 = vxpose.xlu0.c.b16.cont [6/8] 0, 128
        %2100 = vxpose.xlu0.c.b16.cont [7/8] 0, 128
        %2101 = vxpose.xlu0.c.b16.end [8/8] 0, 128
        %v2102 = vpop.trf.xlu0
        %v2103 = vpop.trf.xlu0
        %v2104 = vpop.trf.xlu0
        %v2105 = vpop.trf.xlu0
        %v2106 = vpop.trf.xlu0
        %v2107 = vpop.trf.xlu0
        %v2108 = vpop.trf.xlu0
        %v2109 = vpop.trf.xlu0
        %v2111 = vsel %vm1836, %v2086, 0
        %v2114 = vsel %vm1836, %v2087, 0
        %v2117 = vsel %vm1836, %v2088, 0
        %v2120 = vsel %vm1836, %v2089, 0
        %v2123 = vsel %vm1836, %v2090, 0
        %v2126 = vsel %vm1836, %v2091, 0
        %v2129 = vsel %vm1836, %v2092, 0
        %v2132 = vsel %vm1836, %v2093, 0
        %v2135 = vsel %vm1836, %v2102, 0
        %v2138 = vsel %vm1836, %v2103, 0
        %v2141 = vsel %vm1836, %v2104, 0
        %v2144 = vsel %vm1836, %v2105, 0
        %v2147 = vsel %vm1836, %v2106, 0
        %v2150 = vsel %vm1836, %v2107, 0
        %v2153 = vsel %vm1836, %v2108, 0
        %v2156 = vsel %vm1836, %v2109, 0
        %2158 = vmatprep.subr.bf16.mxu0 %v1775
        %2159 = vmatpush1.bf16.msra.mxu0 %v1774
        %2160 = vmatprep.subr.bf16.mxu0 0
        %2161 = vmatpush1.bf16.msra.mxu0 0
        %2162 = vmatprep.subr.bf16.mxu0 0
        %2163 = vmatpush1.bf16.msra.mxu0 0
        %2164 = vmatprep.subr.bf16.mxu0 0
        %2165 = vmatpush1.bf16.msra.mxu0 0
        %2166 = vmatprep.subr.bf16.mxu0 0
        %2167 = vmatpush1.bf16.msra.mxu0 0
        %2168 = vmatprep.subr.bf16.mxu0 0
        %2169 = vmatpush1.bf16.msra.mxu0 0
        %2170 = vmatprep.subr.bf16.mxu0 0
        %2171 = vmatpush1.bf16.msra.mxu0 0
        %2172 = vmatprep.subr.bf16.mxu0 0
        %2173 = vmatpush1.bf16.msra.mxu0 0
        %2174 = vmatprep.subr.bf16.mxu0 0
        %2175 = vmatpush1.bf16.msra.mxu0 0
        %2176 = vmatprep.subr.bf16.mxu0 0
        %2177 = vmatpush1.bf16.msra.mxu0 0
        %2178 = vmatprep.subr.bf16.mxu0 0
        %2179 = vmatpush1.bf16.msra.mxu0 0
        %2180 = vmatprep.subr.bf16.mxu0 0
        %2181 = vmatpush1.bf16.msra.mxu0 0
        %2182 = vmatprep.subr.bf16.mxu0 0
        %2183 = vmatpush1.bf16.msra.mxu0 0
        %2184 = vmatprep.subr.bf16.mxu0 0
        %2185 = vmatpush1.bf16.msra.mxu0 0
        %2186 = vmatprep.subr.bf16.mxu0 0
        %2187 = vmatpush1.bf16.msra.mxu0 0
        %2188 = vmatprep.subr.bf16.mxu0 0
        %2189 = vmatpush1.bf16.msra.mxu0 0
        %2190 = vmatprep.mubr.bf16.mxu0 0
        %2191 = vmatmul.mubr.bf16.gmra.mrb[0].mxu0 %v2111
        %v2192 = vpop.f32.mrb[0].mxu0
        %v2193 = vadd.f32 0.0, %v2192
        %v2194 = vpop.f32.mrb[0].mxu0
        %v2195 = vadd.f32 0.0, %v2194
        %v2196 = vpop.f32.mrb[0].mxu0
        %v2197 = vadd.f32 0.0, %v2196
        %v2198 = vpop.f32.mrb[0].mxu0
        %v2199 = vadd.f32 0.0, %v2198
        %2200 = vmatprep.mubr.bf16.mxu0 0
        %2201 = vmatmul.mubr.bf16.gmra.mrb[0].mxu0 %v2114
        %v2202 = vpop.f32.mrb[0].mxu0
        %v2203 = vadd.f32 0.0, %v2202
        %v2204 = vpop.f32.mrb[0].mxu0
        %v2205 = vadd.f32 0.0, %v2204
        %v2206 = vpop.f32.mrb[0].mxu0
        %v2207 = vadd.f32 0.0, %v2206
        %v2208 = vpop.f32.mrb[0].mxu0
        %v2209 = vadd.f32 0.0, %v2208
        %2210 = vmatprep.mubr.bf16.mxu0 0
        %2211 = vmatmul.mubr.bf16.gmra.mrb[0].mxu0 %v2117
        %v2212 = vpop.f32.mrb[0].mxu0
        %v2213 = vadd.f32 0.0, %v2212
        %v2214 = vpop.f32.mrb[0].mxu0
        %v2215 = vadd.f32 0.0, %v2214
        %v2216 = vpop.f32.mrb[0].mxu0
        %v2217 = vadd.f32 0.0, %v2216
        %v2218 = vpop.f32.mrb[0].mxu0
        %v2219 = vadd.f32 0.0, %v2218
        %2220 = vmatprep.mubr.bf16.mxu0 0
        %2221 = vmatmul.mubr.bf16.gmra.mrb[0].mxu0 %v2120
        %v2222 = vpop.f32.mrb[0].mxu0
        %v2223 = vadd.f32 0.0, %v2222
        %v2224 = vpop.f32.mrb[0].mxu0
        %v2225 = vadd.f32 0.0, %v2224
        %v2226 = vpop.f32.mrb[0].mxu0
        %v2227 = vadd.f32 0.0, %v2226
        %v2228 = vpop.f32.mrb[0].mxu0
        %v2229 = vadd.f32 0.0, %v2228
        %2230 = vmatprep.mubr.bf16.mxu0 0
        %2231 = vmatmul.mubr.bf16.gmra.mrb[0].mxu0 %v2123
        %v2232 = vpop.f32.mrb[0].mxu0
        %v2233 = vadd.f32 0.0, %v2232
        %v2234 = vpop.f32.mrb[0].mxu0
        %v2235 = vadd.f32 0.0, %v2234
        %v2236 = vpop.f32.mrb[0].mxu0
        %v2237 = vadd.f32 0.0, %v2236
        %v2238 = vpop.f32.mrb[0].mxu0
        %v2239 = vadd.f32 0.0, %v2238
        %2240 = vmatprep.mubr.bf16.mxu0 0
        %2241 = vmatmul.mubr.bf16.gmra.mrb[0].mxu0 %v2126
        %v2242 = vpop.f32.mrb[0].mxu0
        %v2243 = vadd.f32 0.0, %v2242
        %v2244 = vpop.f32.mrb[0].mxu0
        %v2245 = vadd.f32 0.0, %v2244
        %v2246 = vpop.f32.mrb[0].mxu0
        %v2247 = vadd.f32 0.0, %v2246
        %v2248 = vpop.f32.mrb[0].mxu0
        %v2249 = vadd.f32 0.0, %v2248
        %2250 = vmatprep.mubr.bf16.mxu0 0
        %2251 = vmatmul.mubr.bf16.gmra.mrb[0].mxu0 %v2129
        %v2252 = vpop.f32.mrb[0].mxu0
        %v2253 = vadd.f32 0.0, %v2252
        %v2254 = vpop.f32.mrb[0].mxu0
        %v2255 = vadd.f32 0.0, %v2254
        %v2256 = vpop.f32.mrb[0].mxu0
        %v2257 = vadd.f32 0.0, %v2256
        %v2258 = vpop.f32.mrb[0].mxu0
        %v2259 = vadd.f32 0.0, %v2258
        %2260 = vmatprep.mubr.bf16.mxu0 0
        %2261 = vmatmul.mubr.bf16.gmra.mrb[0].mxu0 %v2132
        %v2262 = vpop.f32.mrb[0].mxu0
        %v2263 = vadd.f32 0.0, %v2262
        %v2264 = vpop.f32.mrb[0].mxu0
        %v2265 = vadd.f32 0.0, %v2264
        %v2266 = vpop.f32.mrb[0].mxu0
        %v2267 = vadd.f32 0.0, %v2266
        %v2268 = vpop.f32.mrb[0].mxu0
        %v2269 = vadd.f32 0.0, %v2268
        %2270 = vmatprep.mubr.bf16.mxu0 0
        %2271 = vmatmul.mubr.bf16.gmra.mrb[0].mxu0 %v2135
        %v2272 = vpop.f32.mrb[0].mxu0
        %v2273 = vadd.f32 0.0, %v2272
        %v2274 = vpop.f32.mrb[0].mxu0
        %v2275 = vadd.f32 0.0, %v2274
        %v2276 = vpop.f32.mrb[0].mxu0
        %v2277 = vadd.f32 0.0, %v2276
        %v2278 = vpop.f32.mrb[0].mxu0
        %v2279 = vadd.f32 0.0, %v2278
        %2280 = vmatprep.mubr.bf16.mxu0 0
        %2281 = vmatmul.mubr.bf16.gmra.mrb[0].mxu0 %v2138
        %v2282 = vpop.f32.mrb[0].mxu0
        %v2283 = vadd.f32 0.0, %v2282
        %v2284 = vpop.f32.mrb[0].mxu0
        %v2285 = vadd.f32 0.0, %v2284
        %v2286 = vpop.f32.mrb[0].mxu0
        %v2287 = vadd.f32 0.0, %v2286
        %v2288 = vpop.f32.mrb[0].mxu0
        %v2289 = vadd.f32 0.0, %v2288
        %2290 = vmatprep.mubr.bf16.mxu0 0
        %2291 = vmatmul.mubr.bf16.gmra.mrb[0].mxu0 %v2141
        %v2292 = vpop.f32.mrb[0].mxu0
        %v2293 = vadd.f32 0.0, %v2292
        %v2294 = vpop.f32.mrb[0].mxu0
        %v2295 = vadd.f32 0.0, %v2294
        %v2296 = vpop.f32.mrb[0].mxu0
        %v2297 = vadd.f32 0.0, %v2296
        %v2298 = vpop.f32.mrb[0].mxu0
        %v2299 = vadd.f32 0.0, %v2298
        %2300 = vmatprep.mubr.bf16.mxu0 0
        %2301 = vmatmul.mubr.bf16.gmra.mrb[0].mxu0 %v2144
        %v2302 = vpop.f32.mrb[0].mxu0
        %v2303 = vadd.f32 0.0, %v2302
        %v2304 = vpop.f32.mrb[0].mxu0
        %v2305 = vadd.f32 0.0, %v2304
        %v2306 = vpop.f32.mrb[0].mxu0
        %v2307 = vadd.f32 0.0, %v2306
        %v2308 = vpop.f32.mrb[0].mxu0
        %v2309 = vadd.f32 0.0, %v2308
        %2310 = vmatprep.mubr.bf16.mxu0 0
        %2311 = vmatmul.mubr.bf16.gmra.mrb[0].mxu0 %v2147
        %v2312 = vpop.f32.mrb[0].mxu0
        %v2313 = vadd.f32 0.0, %v2312
        %v2314 = vpop.f32.mrb[0].mxu0
        %v2315 = vadd.f32 0.0, %v2314
        %v2316 = vpop.f32.mrb[0].mxu0
        %v2317 = vadd.f32 0.0, %v2316
        %v2318 = vpop.f32.mrb[0].mxu0
        %v2319 = vadd.f32 0.0, %v2318
        %2320 = vmatprep.mubr.bf16.mxu0 0
        %2321 = vmatmul.mubr.bf16.gmra.mrb[0].mxu0 %v2150
        %v2322 = vpop.f32.mrb[0].mxu0
        %v2323 = vadd.f32 0.0, %v2322
        %v2324 = vpop.f32.mrb[0].mxu0
        %v2325 = vadd.f32 0.0, %v2324
        %v2326 = vpop.f32.mrb[0].mxu0
        %v2327 = vadd.f32 0.0, %v2326
        %v2328 = vpop.f32.mrb[0].mxu0
        %v2329 = vadd.f32 0.0, %v2328
        %2330 = vmatprep.mubr.bf16.mxu0 0
        %2331 = vmatmul.mubr.bf16.gmra.mrb[0].mxu0 %v2153
        %v2332 = vpop.f32.mrb[0].mxu0
        %v2333 = vadd.f32 0.0, %v2332
        %v2334 = vpop.f32.mrb[0].mxu0
        %v2335 = vadd.f32 0.0, %v2334
        %v2336 = vpop.f32.mrb[0].mxu0
        %v2337 = vadd.f32 0.0, %v2336
        %v2338 = vpop.f32.mrb[0].mxu0
        %v2339 = vadd.f32 0.0, %v2338
        %2340 = vmatprep.mubr.bf16.mxu0 0
        %2341 = vmatmul.mubr.bf16.gmra.mrb[0].mxu0 %v2156
        %v2342 = vpop.f32.mrb[0].mxu0
        %v2343 = vadd.f32 0.0, %v2342
        %v2344 = vpop.f32.mrb[0].mxu0
        %v2345 = vadd.f32 0.0, %v2344
        %v2346 = vpop.f32.mrb[0].mxu0
        %v2347 = vadd.f32 0.0, %v2346
        %v2348 = vpop.f32.mrb[0].mxu0
        %v2349 = vadd.f32 0.0, %v2348
        %2350 = vdwg.mxu0
        %2351 = vxpose.xlu0.c.b16.start [1/8] %v1760, 128
        %2352 = vxpose.xlu0.c.b16.cont [2/8] 0, 128
        %2353 = vxpose.xlu0.c.b16.cont [3/8] 0, 128
        %2354 = vxpose.xlu0.c.b16.cont [4/8] 0, 128
        %2355 = vxpose.xlu0.c.b16.cont [5/8] 0, 128
        %2356 = vxpose.xlu0.c.b16.cont [6/8] 0, 128
        %2357 = vxpose.xlu0.c.b16.cont [7/8] 0, 128
        %2358 = vxpose.xlu0.c.b16.end [8/8] 0, 128
        %v2359 = vpop.trf.xlu0
        %v2360 = vpop.trf.xlu0
        %v2361 = vpop.trf.xlu0
        %v2362 = vpop.trf.xlu0
        %v2363 = vpop.trf.xlu0
        %v2364 = vpop.trf.xlu0
        %v2365 = vpop.trf.xlu0
        %v2366 = vpop.trf.xlu0
        %2367 = vxpose.xlu0.c.b16.start [1/8] %v1761, 128
        %2368 = vxpose.xlu0.c.b16.cont [2/8] 0, 128
        %2369 = vxpose.xlu0.c.b16.cont [3/8] 0, 128
        %2370 = vxpose.xlu0.c.b16.cont [4/8] 0, 128
        %2371 = vxpose.xlu0.c.b16.cont [5/8] 0, 128
        %2372 = vxpose.xlu0.c.b16.cont [6/8] 0, 128
        %2373 = vxpose.xlu0.c.b16.cont [7/8] 0, 128
        %2374 = vxpose.xlu0.c.b16.end [8/8] 0, 128
        %v2375 = vpop.trf.xlu0
        %v2376 = vpop.trf.xlu0
        %v2377 = vpop.trf.xlu0
        %v2378 = vpop.trf.xlu0
        %v2379 = vpop.trf.xlu0
        %v2380 = vpop.trf.xlu0
        %v2381 = vpop.trf.xlu0
        %v2382 = vpop.trf.xlu0
        %v2384 = vsel %vm1836, %v2359, 0
        %v2387 = vsel %vm1836, %v2360, 0
        %v2390 = vsel %vm1836, %v2361, 0
        %v2393 = vsel %vm1836, %v2362, 0
        %v2396 = vsel %vm1836, %v2363, 0
        %v2399 = vsel %vm1836, %v2364, 0
        %v2402 = vsel %vm1836, %v2365, 0
        %v2405 = vsel %vm1836, %v2366, 0
        %v2408 = vsel %vm1836, %v2375, 0
        %v2411 = vsel %vm1836, %v2376, 0
        %v2414 = vsel %vm1836, %v2377, 0
        %v2417 = vsel %vm1836, %v2378, 0
        %v2420 = vsel %vm1836, %v2379, 0
        %v2423 = vsel %vm1836, %v2380, 0
        %v2426 = vsel %vm1836, %v2381, 0
        %v2429 = vsel %vm1836, %v2382, 0
        %2431 = vmatprep.subr.bf16.mxu0 %v1777
        %2432 = vmatpush1.bf16.msra.mxu0 %v1776
        %2433 = vmatprep.subr.bf16.mxu0 0
        %2434 = vmatpush1.bf16.msra.mxu0 0
        %2435 = vmatprep.subr.bf16.mxu0 0
        %2436 = vmatpush1.bf16.msra.mxu0 0
        %2437 = vmatprep.subr.bf16.mxu0 0
        %2438 = vmatpush1.bf16.msra.mxu0 0
        %2439 = vmatprep.subr.bf16.mxu0 0
        %2440 = vmatpush1.bf16.msra.mxu0 0
        %2441 = vmatprep.subr.bf16.mxu0 0
        %2442 = vmatpush1.bf16.msra.mxu0 0
        %2443 = vmatprep.subr.bf16.mxu0 0
        %2444 = vmatpush1.bf16.msra.mxu0 0
        %2445 = vmatprep.subr.bf16.mxu0 0
        %2446 = vmatpush1.bf16.msra.mxu0 0
        %2447 = vmatprep.subr.bf16.mxu0 0
        %2448 = vmatpush1.bf16.msra.mxu0 0
        %2449 = vmatprep.subr.bf16.mxu0 0
        %2450 = vmatpush1.bf16.msra.mxu0 0
        %2451 = vmatprep.subr.bf16.mxu0 0
        %2452 = vmatpush1.bf16.msra.mxu0 0
        %2453 = vmatprep.subr.bf16.mxu0 0
        %2454 = vmatpush1.bf16.msra.mxu0 0
        %2455 = vmatprep.subr.bf16.mxu0 0
        %2456 = vmatpush1.bf16.msra.mxu0 0
        %2457 = vmatprep.subr.bf16.mxu0 0
        %2458 = vmatpush1.bf16.msra.mxu0 0
        %2459 = vmatprep.subr.bf16.mxu0 0
        %2460 = vmatpush1.bf16.msra.mxu0 0
        %2461 = vmatprep.subr.bf16.mxu0 0
        %2462 = vmatpush1.bf16.msra.mxu0 0
        %2463 = vmatprep.mubr.bf16.mxu0 0
        %2464 = vmatmul.mubr.bf16.gmra.mrb[0].mxu0 %v2384
        %v2465 = vpop.f32.mrb[0].mxu0
        %v2466 = vadd.f32 0.0, %v2465
        %v2467 = vpop.f32.mrb[0].mxu0
        %v2468 = vadd.f32 0.0, %v2467
        %v2469 = vpop.f32.mrb[0].mxu0
        %v2470 = vadd.f32 0.0, %v2469
        %v2471 = vpop.f32.mrb[0].mxu0
        %v2472 = vadd.f32 0.0, %v2471
        %2473 = vmatprep.mubr.bf16.mxu0 0
        %2474 = vmatmul.mubr.bf16.gmra.mrb[0].mxu0 %v2387
        %v2475 = vpop.f32.mrb[0].mxu0
        %v2476 = vadd.f32 0.0, %v2475
        %v2477 = vpop.f32.mrb[0].mxu0
        %v2478 = vadd.f32 0.0, %v2477
        %v2479 = vpop.f32.mrb[0].mxu0
        %v2480 = vadd.f32 0.0, %v2479
        %v2481 = vpop.f32.mrb[0].mxu0
        %v2482 = vadd.f32 0.0, %v2481
        %2483 = vmatprep.mubr.bf16.mxu0 0
        %2484 = vmatmul.mubr.bf16.gmra.mrb[0].mxu0 %v2390
        %v2485 = vpop.f32.mrb[0].mxu0
        %v2486 = vadd.f32 0.0, %v2485
        %v2487 = vpop.f32.mrb[0].mxu0
        %v2488 = vadd.f32 0.0, %v2487
        %v2489 = vpop.f32.mrb[0].mxu0
        %v2490 = vadd.f32 0.0, %v2489
        %v2491 = vpop.f32.mrb[0].mxu0
        %v2492 = vadd.f32 0.0, %v2491
        %2493 = vmatprep.mubr.bf16.mxu0 0
        %2494 = vmatmul.mubr.bf16.gmra.mrb[0].mxu0 %v2393
        %v2495 = vpop.f32.mrb[0].mxu0
        %v2496 = vadd.f32 0.0, %v2495
        %v2497 = vpop.f32.mrb[0].mxu0
        %v2498 = vadd.f32 0.0, %v2497
        %v2499 = vpop.f32.mrb[0].mxu0
        %v2500 = vadd.f32 0.0, %v2499
        %v2501 = vpop.f32.mrb[0].mxu0
        %v2502 = vadd.f32 0.0, %v2501
        %2503 = vmatprep.mubr.bf16.mxu0 0
        %2504 = vmatmul.mubr.bf16.gmra.mrb[0].mxu0 %v2396
        %v2505 = vpop.f32.mrb[0].mxu0
        %v2506 = vadd.f32 0.0, %v2505
        %v2507 = vpop.f32.mrb[0].mxu0
        %v2508 = vadd.f32 0.0, %v2507
        %v2509 = vpop.f32.mrb[0].mxu0
        %v2510 = vadd.f32 0.0, %v2509
        %v2511 = vpop.f32.mrb[0].mxu0
        %v2512 = vadd.f32 0.0, %v2511
        %2513 = vmatprep.mubr.bf16.mxu0 0
        %2514 = vmatmul.mubr.bf16.gmra.mrb[0].mxu0 %v2399
        %v2515 = vpop.f32.mrb[0].mxu0
        %v2516 = vadd.f32 0.0, %v2515
        %v2517 = vpop.f32.mrb[0].mxu0
        %v2518 = vadd.f32 0.0, %v2517
        %v2519 = vpop.f32.mrb[0].mxu0
        %v2520 = vadd.f32 0.0, %v2519
        %v2521 = vpop.f32.mrb[0].mxu0
        %v2522 = vadd.f32 0.0, %v2521
        %2523 = vmatprep.mubr.bf16.mxu0 0
        %2524 = vmatmul.mubr.bf16.gmra.mrb[0].mxu0 %v2402
        %v2525 = vpop.f32.mrb[0].mxu0
        %v2526 = vadd.f32 0.0, %v2525
        %v2527 = vpop.f32.mrb[0].mxu0
        %v2528 = vadd.f32 0.0, %v2527
        %v2529 = vpop.f32.mrb[0].mxu0
        %v2530 = vadd.f32 0.0, %v2529
        %v2531 = vpop.f32.mrb[0].mxu0
        %v2532 = vadd.f32 0.0, %v2531
        %2533 = vmatprep.mubr.bf16.mxu0 0
        %2534 = vmatmul.mubr.bf16.gmra.mrb[0].mxu0 %v2405
        %v2535 = vpop.f32.mrb[0].mxu0
        %v2536 = vadd.f32 0.0, %v2535
        %v2537 = vpop.f32.mrb[0].mxu0
        %v2538 = vadd.f32 0.0, %v2537
        %v2539 = vpop.f32.mrb[0].mxu0
        %v2540 = vadd.f32 0.0, %v2539
        %v2541 = vpop.f32.mrb[0].mxu0
        %v2542 = vadd.f32 0.0, %v2541
        %2543 = vmatprep.mubr.bf16.mxu0 0
        %2544 = vmatmul.mubr.bf16.gmra.mrb[0].mxu0 %v2408
        %v2545 = vpop.f32.mrb[0].mxu0
        %v2546 = vadd.f32 0.0, %v2545
        %v2547 = vpop.f32.mrb[0].mxu0
        %v2548 = vadd.f32 0.0, %v2547
        %v2549 = vpop.f32.mrb[0].mxu0
        %v2550 = vadd.f32 0.0, %v2549
        %v2551 = vpop.f32.mrb[0].mxu0
        %v2552 = vadd.f32 0.0, %v2551
        %2553 = vmatprep.mubr.bf16.mxu0 0
        %2554 = vmatmul.mubr.bf16.gmra.mrb[0].mxu0 %v2411
        %v2555 = vpop.f32.mrb[0].mxu0
        %v2556 = vadd.f32 0.0, %v2555
        %v2557 = vpop.f32.mrb[0].mxu0
        %v2558 = vadd.f32 0.0, %v2557
        %v2559 = vpop.f32.mrb[0].mxu0
        %v2560 = vadd.f32 0.0, %v2559
        %v2561 = vpop.f32.mrb[0].mxu0
        %v2562 = vadd.f32 0.0, %v2561
        %2563 = vmatprep.mubr.bf16.mxu0 0
        %2564 = vmatmul.mubr.bf16.gmra.mrb[0].mxu0 %v2414
        %v2565 = vpop.f32.mrb[0].mxu0
        %v2566 = vadd.f32 0.0, %v2565
        %v2567 = vpop.f32.mrb[0].mxu0
        %v2568 = vadd.f32 0.0, %v2567
        %v2569 = vpop.f32.mrb[0].mxu0
        %v2570 = vadd.f32 0.0, %v2569
        %v2571 = vpop.f32.mrb[0].mxu0
        %v2572 = vadd.f32 0.0, %v2571
        %2573 = vmatprep.mubr.bf16.mxu0 0
        %2574 = vmatmul.mubr.bf16.gmra.mrb[0].mxu0 %v2417
        %v2575 = vpop.f32.mrb[0].mxu0
        %v2576 = vadd.f32 0.0, %v2575
        %v2577 = vpop.f32.mrb[0].mxu0
        %v2578 = vadd.f32 0.0, %v2577
        %v2579 = vpop.f32.mrb[0].mxu0
        %v2580 = vadd.f32 0.0, %v2579
        %v2581 = vpop.f32.mrb[0].mxu0
        %v2582 = vadd.f32 0.0, %v2581
        %2583 = vmatprep.mubr.bf16.mxu0 0
        %2584 = vmatmul.mubr.bf16.gmra.mrb[0].mxu0 %v2420
        %v2585 = vpop.f32.mrb[0].mxu0
        %v2586 = vadd.f32 0.0, %v2585
        %v2587 = vpop.f32.mrb[0].mxu0
        %v2588 = vadd.f32 0.0, %v2587
        %v2589 = vpop.f32.mrb[0].mxu0
        %v2590 = vadd.f32 0.0, %v2589
        %v2591 = vpop.f32.mrb[0].mxu0
        %v2592 = vadd.f32 0.0, %v2591
        %2593 = vmatprep.mubr.bf16.mxu0 0
        %2594 = vmatmul.mubr.bf16.gmra.mrb[0].mxu0 %v2423
        %v2595 = vpop.f32.mrb[0].mxu0
        %v2596 = vadd.f32 0.0, %v2595
        %v2597 = vpop.f32.mrb[0].mxu0
        %v2598 = vadd.f32 0.0, %v2597
        %v2599 = vpop.f32.mrb[0].mxu0
        %v2600 = vadd.f32 0.0, %v2599
        %v2601 = vpop.f32.mrb[0].mxu0
        %v2602 = vadd.f32 0.0, %v2601
        %2603 = vmatprep.mubr.bf16.mxu0 0
        %2604 = vmatmul.mubr.bf16.gmra.mrb[0].mxu0 %v2426
        %v2605 = vpop.f32.mrb[0].mxu0
        %v2606 = vadd.f32 0.0, %v2605
        %v2607 = vpop.f32.mrb[0].mxu0
        %v2608 = vadd.f32 0.0, %v2607
        %v2609 = vpop.f32.mrb[0].mxu0
        %v2610 = vadd.f32 0.0, %v2609
        %v2611 = vpop.f32.mrb[0].mxu0
        %v2612 = vadd.f32 0.0, %v2611
        %2613 = vmatprep.mubr.bf16.mxu0 0
        %2614 = vmatmul.mubr.bf16.gmra.mrb[0].mxu0 %v2429
        %v2615 = vpop.f32.mrb[0].mxu0
        %v2616 = vadd.f32 0.0, %v2615
        %v2617 = vpop.f32.mrb[0].mxu0
        %v2618 = vadd.f32 0.0, %v2617
        %v2619 = vpop.f32.mrb[0].mxu0
        %v2620 = vadd.f32 0.0, %v2619
        %v2621 = vpop.f32.mrb[0].mxu0
        %v2622 = vadd.f32 0.0, %v2621
        %2623 = vdwg.mxu0
        %2624 = vxpose.xlu0.c.b16.start [1/8] %v1762, 128
        %2625 = vxpose.xlu0.c.b16.cont [2/8] 0, 128
        %2626 = vxpose.xlu0.c.b16.cont [3/8] 0, 128
        %2627 = vxpose.xlu0.c.b16.cont [4/8] 0, 128
        %2628 = vxpose.xlu0.c.b16.cont [5/8] 0, 128
        %2629 = vxpose.xlu0.c.b16.cont [6/8] 0, 128
        %2630 = vxpose.xlu0.c.b16.cont [7/8] 0, 128
        %2631 = vxpose.xlu0.c.b16.end [8/8] 0, 128
        %v2632 = vpop.trf.xlu0
        %v2633 = vpop.trf.xlu0
        %v2634 = vpop.trf.xlu0
        %v2635 = vpop.trf.xlu0
        %v2636 = vpop.trf.xlu0
        %v2637 = vpop.trf.xlu0
        %v2638 = vpop.trf.xlu0
        %v2639 = vpop.trf.xlu0
        %2640 = vxpose.xlu0.c.b16.start [1/8] %v1763, 128
        %2641 = vxpose.xlu0.c.b16.cont [2/8] 0, 128
        %2642 = vxpose.xlu0.c.b16.cont [3/8] 0, 128
        %2643 = vxpose.xlu0.c.b16.cont [4/8] 0, 128
        %2644 = vxpose.xlu0.c.b16.cont [5/8] 0, 128
        %2645 = vxpose.xlu0.c.b16.cont [6/8] 0, 128
        %2646 = vxpose.xlu0.c.b16.cont [7/8] 0, 128
        %2647 = vxpose.xlu0.c.b16.end [8/8] 0, 128
        %v2648 = vpop.trf.xlu0
        %v2649 = vpop.trf.xlu0
        %v2650 = vpop.trf.xlu0
        %v2651 = vpop.trf.xlu0
        %v2652 = vpop.trf.xlu0
        %v2653 = vpop.trf.xlu0
        %v2654 = vpop.trf.xlu0
        %v2655 = vpop.trf.xlu0
        %v2657 = vsel %vm1836, %v2632, 0
        %v2660 = vsel %vm1836, %v2633, 0
        %v2663 = vsel %vm1836, %v2634, 0
        %v2666 = vsel %vm1836, %v2635, 0
        %v2669 = vsel %vm1836, %v2636, 0
        %v2672 = vsel %vm1836, %v2637, 0
        %v2675 = vsel %vm1836, %v2638, 0
        %v2678 = vsel %vm1836, %v2639, 0
        %v2681 = vsel %vm1836, %v2648, 0
        %v2684 = vsel %vm1836, %v2649, 0
        %v2687 = vsel %vm1836, %v2650, 0
        %v2690 = vsel %vm1836, %v2651, 0
        %v2693 = vsel %vm1836, %v2652, 0
        %v2696 = vsel %vm1836, %v2653, 0
        %v2699 = vsel %vm1836, %v2654, 0
        %v2702 = vsel %vm1836, %v2655, 0
        %2704 = vmatprep.subr.bf16.mxu0 %v1779
        %2705 = vmatpush1.bf16.msra.mxu0 %v1778
        %2706 = vmatprep.subr.bf16.mxu0 0
        %2707 = vmatpush1.bf16.msra.mxu0 0
        %2708 = vmatprep.subr.bf16.mxu0 0
        %2709 = vmatpush1.bf16.msra.mxu0 0
        %2710 = vmatprep.subr.bf16.mxu0 0
        %2711 = vmatpush1.bf16.msra.mxu0 0
        %2712 = vmatprep.subr.bf16.mxu0 0
        %2713 = vmatpush1.bf16.msra.mxu0 0
        %2714 = vmatprep.subr.bf16.mxu0 0
        %2715 = vmatpush1.bf16.msra.mxu0 0
        %2716 = vmatprep.subr.bf16.mxu0 0
        %2717 = vmatpush1.bf16.msra.mxu0 0
        %2718 = vmatprep.subr.bf16.mxu0 0
        %2719 = vmatpush1.bf16.msra.mxu0 0
        %2720 = vmatprep.subr.bf16.mxu0 0
        %2721 = vmatpush1.bf16.msra.mxu0 0
        %2722 = vmatprep.subr.bf16.mxu0 0
        %2723 = vmatpush1.bf16.msra.mxu0 0
        %2724 = vmatprep.subr.bf16.mxu0 0
        %2725 = vmatpush1.bf16.msra.mxu0 0
        %2726 = vmatprep.subr.bf16.mxu0 0
        %2727 = vmatpush1.bf16.msra.mxu0 0
        %2728 = vmatprep.subr.bf16.mxu0 0
        %2729 = vmatpush1.bf16.msra.mxu0 0
        %2730 = vmatprep.subr.bf16.mxu0 0
        %2731 = vmatpush1.bf16.msra.mxu0 0
        %2732 = vmatprep.subr.bf16.mxu0 0
        %2733 = vmatpush1.bf16.msra.mxu0 0
        %2734 = vmatprep.subr.bf16.mxu0 0
        %2735 = vmatpush1.bf16.msra.mxu0 0
        %2736 = vmatprep.mubr.bf16.mxu0 0
        %2737 = vmatmul.mubr.bf16.gmra.mrb[0].mxu0 %v2657
        %v2738 = vpop.f32.mrb[0].mxu0
        %v2739 = vadd.f32 0.0, %v2738
        %v2740 = vpop.f32.mrb[0].mxu0
        %v2741 = vadd.f32 0.0, %v2740
        %v2742 = vpop.f32.mrb[0].mxu0
        %v2743 = vadd.f32 0.0, %v2742
        %v2744 = vpop.f32.mrb[0].mxu0
        %v2745 = vadd.f32 0.0, %v2744
        %2746 = vmatprep.mubr.bf16.mxu0 0
        %2747 = vmatmul.mubr.bf16.gmra.mrb[0].mxu0 %v2660
        %v2748 = vpop.f32.mrb[0].mxu0
        %v2749 = vadd.f32 0.0, %v2748
        %v2750 = vpop.f32.mrb[0].mxu0
        %v2751 = vadd.f32 0.0, %v2750
        %v2752 = vpop.f32.mrb[0].mxu0
        %v2753 = vadd.f32 0.0, %v2752
        %v2754 = vpop.f32.mrb[0].mxu0
        %v2755 = vadd.f32 0.0, %v2754
        %2756 = vmatprep.mubr.bf16.mxu0 0
        %2757 = vmatmul.mubr.bf16.gmra.mrb[0].mxu0 %v2663
        %v2758 = vpop.f32.mrb[0].mxu0
        %v2759 = vadd.f32 0.0, %v2758
        %v2760 = vpop.f32.mrb[0].mxu0
        %v2761 = vadd.f32 0.0, %v2760
        %v2762 = vpop.f32.mrb[0].mxu0
        %v2763 = vadd.f32 0.0, %v2762
        %v2764 = vpop.f32.mrb[0].mxu0
        %v2765 = vadd.f32 0.0, %v2764
        %2766 = vmatprep.mubr.bf16.mxu0 0
        %2767 = vmatmul.mubr.bf16.gmra.mrb[0].mxu0 %v2666
        %v2768 = vpop.f32.mrb[0].mxu0
        %v2769 = vadd.f32 0.0, %v2768
        %v2770 = vpop.f32.mrb[0].mxu0
        %v2771 = vadd.f32 0.0, %v2770
        %v2772 = vpop.f32.mrb[0].mxu0
        %v2773 = vadd.f32 0.0, %v2772
        %v2774 = vpop.f32.mrb[0].mxu0
        %v2775 = vadd.f32 0.0, %v2774
        %2776 = vmatprep.mubr.bf16.mxu0 0
        %2777 = vmatmul.mubr.bf16.gmra.mrb[0].mxu0 %v2669
        %v2778 = vpop.f32.mrb[0].mxu0
        %v2779 = vadd.f32 0.0, %v2778
        %v2780 = vpop.f32.mrb[0].mxu0
        %v2781 = vadd.f32 0.0, %v2780
        %v2782 = vpop.f32.mrb[0].mxu0
        %v2783 = vadd.f32 0.0, %v2782
        %v2784 = vpop.f32.mrb[0].mxu0
        %v2785 = vadd.f32 0.0, %v2784
        %2786 = vmatprep.mubr.bf16.mxu0 0
        %2787 = vmatmul.mubr.bf16.gmra.mrb[0].mxu0 %v2672
        %v2788 = vpop.f32.mrb[0].mxu0
        %v2789 = vadd.f32 0.0, %v2788
        %v2790 = vpop.f32.mrb[0].mxu0
        %v2791 = vadd.f32 0.0, %v2790
        %v2792 = vpop.f32.mrb[0].mxu0
        %v2793 = vadd.f32 0.0, %v2792
        %v2794 = vpop.f32.mrb[0].mxu0
        %v2795 = vadd.f32 0.0, %v2794
        %2796 = vmatprep.mubr.bf16.mxu0 0
        %2797 = vmatmul.mubr.bf16.gmra.mrb[0].mxu0 %v2675
        %v2798 = vpop.f32.mrb[0].mxu0
        %v2799 = vadd.f32 0.0, %v2798
        %v2800 = vpop.f32.mrb[0].mxu0
        %v2801 = vadd.f32 0.0, %v2800
        %v2802 = vpop.f32.mrb[0].mxu0
        %v2803 = vadd.f32 0.0, %v2802
        %v2804 = vpop.f32.mrb[0].mxu0
        %v2805 = vadd.f32 0.0, %v2804
        %2806 = vmatprep.mubr.bf16.mxu0 0
        %2807 = vmatmul.mubr.bf16.gmra.mrb[0].mxu0 %v2678
        %v2808 = vpop.f32.mrb[0].mxu0
        %v2809 = vadd.f32 0.0, %v2808
        %v2810 = vpop.f32.mrb[0].mxu0
        %v2811 = vadd.f32 0.0, %v2810
        %v2812 = vpop.f32.mrb[0].mxu0
        %v2813 = vadd.f32 0.0, %v2812
        %v2814 = vpop.f32.mrb[0].mxu0
        %v2815 = vadd.f32 0.0, %v2814
        %2816 = vmatprep.mubr.bf16.mxu0 0
        %2817 = vmatmul.mubr.bf16.gmra.mrb[0].mxu0 %v2681
        %v2818 = vpop.f32.mrb[0].mxu0
        %v2819 = vadd.f32 0.0, %v2818
        %v2820 = vpop.f32.mrb[0].mxu0
        %v2821 = vadd.f32 0.0, %v2820
        %v2822 = vpop.f32.mrb[0].mxu0
        %v2823 = vadd.f32 0.0, %v2822
        %v2824 = vpop.f32.mrb[0].mxu0
        %v2825 = vadd.f32 0.0, %v2824
        %2826 = vmatprep.mubr.bf16.mxu0 0
        %2827 = vmatmul.mubr.bf16.gmra.mrb[0].mxu0 %v2684
        %v2828 = vpop.f32.mrb[0].mxu0
        %v2829 = vadd.f32 0.0, %v2828
        %v2830 = vpop.f32.mrb[0].mxu0
        %v2831 = vadd.f32 0.0, %v2830
        %v2832 = vpop.f32.mrb[0].mxu0
        %v2833 = vadd.f32 0.0, %v2832
        %v2834 = vpop.f32.mrb[0].mxu0
        %v2835 = vadd.f32 0.0, %v2834
        %2836 = vmatprep.mubr.bf16.mxu0 0
        %2837 = vmatmul.mubr.bf16.gmra.mrb[0].mxu0 %v2687
        %v2838 = vpop.f32.mrb[0].mxu0
        %v2839 = vadd.f32 0.0, %v2838
        %v2840 = vpop.f32.mrb[0].mxu0
        %v2841 = vadd.f32 0.0, %v2840
        %v2842 = vpop.f32.mrb[0].mxu0
        %v2843 = vadd.f32 0.0, %v2842
        %v2844 = vpop.f32.mrb[0].mxu0
        %v2845 = vadd.f32 0.0, %v2844
        %2846 = vmatprep.mubr.bf16.mxu0 0
        %2847 = vmatmul.mubr.bf16.gmra.mrb[0].mxu0 %v2690
        %v2848 = vpop.f32.mrb[0].mxu0
        %v2849 = vadd.f32 0.0, %v2848
        %v2850 = vpop.f32.mrb[0].mxu0
        %v2851 = vadd.f32 0.0, %v2850
        %v2852 = vpop.f32.mrb[0].mxu0
        %v2853 = vadd.f32 0.0, %v2852
        %v2854 = vpop.f32.mrb[0].mxu0
        %v2855 = vadd.f32 0.0, %v2854
        %2856 = vmatprep.mubr.bf16.mxu0 0
        %2857 = vmatmul.mubr.bf16.gmra.mrb[0].mxu0 %v2693
        %v2858 = vpop.f32.mrb[0].mxu0
        %v2859 = vadd.f32 0.0, %v2858
        %v2860 = vpop.f32.mrb[0].mxu0
        %v2861 = vadd.f32 0.0, %v2860
        %v2862 = vpop.f32.mrb[0].mxu0
        %v2863 = vadd.f32 0.0, %v2862
        %v2864 = vpop.f32.mrb[0].mxu0
        %v2865 = vadd.f32 0.0, %v2864
        %2866 = vmatprep.mubr.bf16.mxu0 0
        %2867 = vmatmul.mubr.bf16.gmra.mrb[0].mxu0 %v2696
        %v2868 = vpop.f32.mrb[0].mxu0
        %v2869 = vadd.f32 0.0, %v2868
        %v2870 = vpop.f32.mrb[0].mxu0
        %v2871 = vadd.f32 0.0, %v2870
        %v2872 = vpop.f32.mrb[0].mxu0
        %v2873 = vadd.f32 0.0, %v2872
        %v2874 = vpop.f32.mrb[0].mxu0
        %v2875 = vadd.f32 0.0, %v2874
        %2876 = vmatprep.mubr.bf16.mxu0 0
        %2877 = vmatmul.mubr.bf16.gmra.mrb[0].mxu0 %v2699
        %v2878 = vpop.f32.mrb[0].mxu0
        %v2879 = vadd.f32 0.0, %v2878
        %v2880 = vpop.f32.mrb[0].mxu0
        %v2881 = vadd.f32 0.0, %v2880
        %v2882 = vpop.f32.mrb[0].mxu0
        %v2883 = vadd.f32 0.0, %v2882
        %v2884 = vpop.f32.mrb[0].mxu0
        %v2885 = vadd.f32 0.0, %v2884
        %2886 = vmatprep.mubr.bf16.mxu0 0
        %2887 = vmatmul.mubr.bf16.gmra.mrb[0].mxu0 %v2702
        %v2888 = vpop.f32.mrb[0].mxu0
        %v2889 = vadd.f32 0.0, %v2888
        %v2890 = vpop.f32.mrb[0].mxu0
        %v2891 = vadd.f32 0.0, %v2890
        %v2892 = vpop.f32.mrb[0].mxu0
        %v2893 = vadd.f32 0.0, %v2892
        %v2894 = vpop.f32.mrb[0].mxu0
        %v2895 = vadd.f32 0.0, %v2894
        %2896 = vdwg.mxu0
        %2897 = vxpose.xlu0.c.b16.start [1/8] %v1764, 128
        %2898 = vxpose.xlu0.c.b16.cont [2/8] 0, 128
        %2899 = vxpose.xlu0.c.b16.cont [3/8] 0, 128
        %2900 = vxpose.xlu0.c.b16.cont [4/8] 0, 128
        %2901 = vxpose.xlu0.c.b16.cont [5/8] 0, 128
        %2902 = vxpose.xlu0.c.b16.cont [6/8] 0, 128
        %2903 = vxpose.xlu0.c.b16.cont [7/8] 0, 128
        %2904 = vxpose.xlu0.c.b16.end [8/8] 0, 128
        %v2905 = vpop.trf.xlu0
        %v2906 = vpop.trf.xlu0
        %v2907 = vpop.trf.xlu0
        %v2908 = vpop.trf.xlu0
        %v2909 = vpop.trf.xlu0
        %v2910 = vpop.trf.xlu0
        %v2911 = vpop.trf.xlu0
        %v2912 = vpop.trf.xlu0
        %2913 = vxpose.xlu0.c.b16.start [1/8] %v1765, 128
        %2914 = vxpose.xlu0.c.b16.cont [2/8] 0, 128
        %2915 = vxpose.xlu0.c.b16.cont [3/8] 0, 128
        %2916 = vxpose.xlu0.c.b16.cont [4/8] 0, 128
        %2917 = vxpose.xlu0.c.b16.cont [5/8] 0, 128
        %2918 = vxpose.xlu0.c.b16.cont [6/8] 0, 128
        %2919 = vxpose.xlu0.c.b16.cont [7/8] 0, 128
        %2920 = vxpose.xlu0.c.b16.end [8/8] 0, 128
        %v2921 = vpop.trf.xlu0
        %v2922 = vpop.trf.xlu0
        %v2923 = vpop.trf.xlu0
        %v2924 = vpop.trf.xlu0
        %v2925 = vpop.trf.xlu0
        %v2926 = vpop.trf.xlu0
        %v2927 = vpop.trf.xlu0
        %v2928 = vpop.trf.xlu0
        %v2930 = vsel %vm1836, %v2905, 0
        %v2933 = vsel %vm1836, %v2906, 0
        %v2936 = vsel %vm1836, %v2907, 0
        %v2939 = vsel %vm1836, %v2908, 0
        %v2942 = vsel %vm1836, %v2909, 0
        %v2945 = vsel %vm1836, %v2910, 0
        %v2948 = vsel %vm1836, %v2911, 0
        %v2951 = vsel %vm1836, %v2912, 0
        %v2954 = vsel %vm1836, %v2921, 0
        %v2957 = vsel %vm1836, %v2922, 0
        %v2960 = vsel %vm1836, %v2923, 0
        %v2963 = vsel %vm1836, %v2924, 0
        %v2966 = vsel %vm1836, %v2925, 0
        %v2969 = vsel %vm1836, %v2926, 0
        %v2972 = vsel %vm1836, %v2927, 0
        %v2975 = vsel %vm1836, %v2928, 0
        %2977 = vmatprep.subr.bf16.mxu0 %v1781
        %2978 = vmatpush1.bf16.msra.mxu0 %v1780
        %2979 = vmatprep.subr.bf16.mxu0 0
        %2980 = vmatpush1.bf16.msra.mxu0 0
        %2981 = vmatprep.subr.bf16.mxu0 0
        %2982 = vmatpush1.bf16.msra.mxu0 0
        %2983 = vmatprep.subr.bf16.mxu0 0
        %2984 = vmatpush1.bf16.msra.mxu0 0
        %2985 = vmatprep.subr.bf16.mxu0 0
        %2986 = vmatpush1.bf16.msra.mxu0 0
        %2987 = vmatprep.subr.bf16.mxu0 0
        %2988 = vmatpush1.bf16.msra.mxu0 0
        %2989 = vmatprep.subr.bf16.mxu0 0
        %2990 = vmatpush1.bf16.msra.mxu0 0
        %2991 = vmatprep.subr.bf16.mxu0 0
        %2992 = vmatpush1.bf16.msra.mxu0 0
        %2993 = vmatprep.subr.bf16.mxu0 0
        %2994 = vmatpush1.bf16.msra.mxu0 0
        %2995 = vmatprep.subr.bf16.mxu0 0
        %2996 = vmatpush1.bf16.msra.mxu0 0
        %2997 = vmatprep.subr.bf16.mxu0 0
        %2998 = vmatpush1.bf16.msra.mxu0 0
        %2999 = vmatprep.subr.bf16.mxu0 0
        %3000 = vmatpush1.bf16.msra.mxu0 0
        %3001 = vmatprep.subr.bf16.mxu0 0
        %3002 = vmatpush1.bf16.msra.mxu0 0
        %3003 = vmatprep.subr.bf16.mxu0 0
        %3004 = vmatpush1.bf16.msra.mxu0 0
        %3005 = vmatprep.subr.bf16.mxu0 0
        %3006 = vmatpush1.bf16.msra.mxu0 0
        %3007 = vmatprep.subr.bf16.mxu0 0
        %3008 = vmatpush1.bf16.msra.mxu0 0
        %3009 = vmatprep.mubr.bf16.mxu0 0
        %3010 = vmatmul.mubr.bf16.gmra.mrb[0].mxu0 %v2930
        %v3011 = vpop.f32.mrb[0].mxu0
        %v3012 = vadd.f32 0.0, %v3011
        %v3013 = vpop.f32.mrb[0].mxu0
        %v3014 = vadd.f32 0.0, %v3013
        %v3015 = vpop.f32.mrb[0].mxu0
        %v3016 = vadd.f32 0.0, %v3015
        %v3017 = vpop.f32.mrb[0].mxu0
        %v3018 = vadd.f32 0.0, %v3017
        %3019 = vmatprep.mubr.bf16.mxu0 0
        %3020 = vmatmul.mubr.bf16.gmra.mrb[0].mxu0 %v2933
        %v3021 = vpop.f32.mrb[0].mxu0
        %v3022 = vadd.f32 0.0, %v3021
        %v3023 = vpop.f32.mrb[0].mxu0
        %v3024 = vadd.f32 0.0, %v3023
        %v3025 = vpop.f32.mrb[0].mxu0
        %v3026 = vadd.f32 0.0, %v3025
        %v3027 = vpop.f32.mrb[0].mxu0
        %v3028 = vadd.f32 0.0, %v3027
        %3029 = vmatprep.mubr.bf16.mxu0 0
        %3030 = vmatmul.mubr.bf16.gmra.mrb[0].mxu0 %v2936
        %v3031 = vpop.f32.mrb[0].mxu0
        %v3032 = vadd.f32 0.0, %v3031
        %v3033 = vpop.f32.mrb[0].mxu0
        %v3034 = vadd.f32 0.0, %v3033
        %v3035 = vpop.f32.mrb[0].mxu0
        %v3036 = vadd.f32 0.0, %v3035
        %v3037 = vpop.f32.mrb[0].mxu0
        %v3038 = vadd.f32 0.0, %v3037
        %3039 = vmatprep.mubr.bf16.mxu0 0
        %3040 = vmatmul.mubr.bf16.gmra.mrb[0].mxu0 %v2939
        %v3041 = vpop.f32.mrb[0].mxu0
        %v3042 = vadd.f32 0.0, %v3041
        %v3043 = vpop.f32.mrb[0].mxu0
        %v3044 = vadd.f32 0.0, %v3043
        %v3045 = vpop.f32.mrb[0].mxu0
        %v3046 = vadd.f32 0.0, %v3045
        %v3047 = vpop.f32.mrb[0].mxu0
        %v3048 = vadd.f32 0.0, %v3047
        %3049 = vmatprep.mubr.bf16.mxu0 0
        %3050 = vmatmul.mubr.bf16.gmra.mrb[0].mxu0 %v2942
        %v3051 = vpop.f32.mrb[0].mxu0
        %v3052 = vadd.f32 0.0, %v3051
        %v3053 = vpop.f32.mrb[0].mxu0
        %v3054 = vadd.f32 0.0, %v3053
        %v3055 = vpop.f32.mrb[0].mxu0
        %v3056 = vadd.f32 0.0, %v3055
        %v3057 = vpop.f32.mrb[0].mxu0
        %v3058 = vadd.f32 0.0, %v3057
        %3059 = vmatprep.mubr.bf16.mxu0 0
        %3060 = vmatmul.mubr.bf16.gmra.mrb[0].mxu0 %v2945
        %v3061 = vpop.f32.mrb[0].mxu0
        %v3062 = vadd.f32 0.0, %v3061
        %v3063 = vpop.f32.mrb[0].mxu0
        %v3064 = vadd.f32 0.0, %v3063
        %v3065 = vpop.f32.mrb[0].mxu0
        %v3066 = vadd.f32 0.0, %v3065
        %v3067 = vpop.f32.mrb[0].mxu0
        %v3068 = vadd.f32 0.0, %v3067
        %3069 = vmatprep.mubr.bf16.mxu0 0
        %3070 = vmatmul.mubr.bf16.gmra.mrb[0].mxu0 %v2948
        %v3071 = vpop.f32.mrb[0].mxu0
        %v3072 = vadd.f32 0.0, %v3071
        %v3073 = vpop.f32.mrb[0].mxu0
        %v3074 = vadd.f32 0.0, %v3073
        %v3075 = vpop.f32.mrb[0].mxu0
        %v3076 = vadd.f32 0.0, %v3075
        %v3077 = vpop.f32.mrb[0].mxu0
        %v3078 = vadd.f32 0.0, %v3077
        %3079 = vmatprep.mubr.bf16.mxu0 0
        %3080 = vmatmul.mubr.bf16.gmra.mrb[0].mxu0 %v2951
        %v3081 = vpop.f32.mrb[0].mxu0
        %v3082 = vadd.f32 0.0, %v3081
        %v3083 = vpop.f32.mrb[0].mxu0
        %v3084 = vadd.f32 0.0, %v3083
        %v3085 = vpop.f32.mrb[0].mxu0
        %v3086 = vadd.f32 0.0, %v3085
        %v3087 = vpop.f32.mrb[0].mxu0
        %v3088 = vadd.f32 0.0, %v3087
        %3089 = vmatprep.mubr.bf16.mxu0 0
        %3090 = vmatmul.mubr.bf16.gmra.mrb[0].mxu0 %v2954
        %v3091 = vpop.f32.mrb[0].mxu0
        %v3092 = vadd.f32 0.0, %v3091
        %v3093 = vpop.f32.mrb[0].mxu0
        %v3094 = vadd.f32 0.0, %v3093
        %v3095 = vpop.f32.mrb[0].mxu0
        %v3096 = vadd.f32 0.0, %v3095
        %v3097 = vpop.f32.mrb[0].mxu0
        %v3098 = vadd.f32 0.0, %v3097
        %3099 = vmatprep.mubr.bf16.mxu0 0
        %3100 = vmatmul.mubr.bf16.gmra.mrb[0].mxu0 %v2957
        %v3101 = vpop.f32.mrb[0].mxu0
        %v3102 = vadd.f32 0.0, %v3101
        %v3103 = vpop.f32.mrb[0].mxu0
        %v3104 = vadd.f32 0.0, %v3103
        %v3105 = vpop.f32.mrb[0].mxu0
        %v3106 = vadd.f32 0.0, %v3105
        %v3107 = vpop.f32.mrb[0].mxu0
        %v3108 = vadd.f32 0.0, %v3107
        %3109 = vmatprep.mubr.bf16.mxu0 0
        %3110 = vmatmul.mubr.bf16.gmra.mrb[0].mxu0 %v2960
        %v3111 = vpop.f32.mrb[0].mxu0
        %v3112 = vadd.f32 0.0, %v3111
        %v3113 = vpop.f32.mrb[0].mxu0
        %v3114 = vadd.f32 0.0, %v3113
        %v3115 = vpop.f32.mrb[0].mxu0
        %v3116 = vadd.f32 0.0, %v3115
        %v3117 = vpop.f32.mrb[0].mxu0
        %v3118 = vadd.f32 0.0, %v3117
        %3119 = vmatprep.mubr.bf16.mxu0 0
        %3120 = vmatmul.mubr.bf16.gmra.mrb[0].mxu0 %v2963
        %v3121 = vpop.f32.mrb[0].mxu0
        %v3122 = vadd.f32 0.0, %v3121
        %v3123 = vpop.f32.mrb[0].mxu0
        %v3124 = vadd.f32 0.0, %v3123
        %v3125 = vpop.f32.mrb[0].mxu0
        %v3126 = vadd.f32 0.0, %v3125
        %v3127 = vpop.f32.mrb[0].mxu0
        %v3128 = vadd.f32 0.0, %v3127
        %3129 = vmatprep.mubr.bf16.mxu0 0
        %3130 = vmatmul.mubr.bf16.gmra.mrb[0].mxu0 %v2966
        %v3131 = vpop.f32.mrb[0].mxu0
        %v3132 = vadd.f32 0.0, %v3131
        %v3133 = vpop.f32.mrb[0].mxu0
        %v3134 = vadd.f32 0.0, %v3133
        %v3135 = vpop.f32.mrb[0].mxu0
        %v3136 = vadd.f32 0.0, %v3135
        %v3137 = vpop.f32.mrb[0].mxu0
        %v3138 = vadd.f32 0.0, %v3137
        %3139 = vmatprep.mubr.bf16.mxu0 0
        %3140 = vmatmul.mubr.bf16.gmra.mrb[0].mxu0 %v2969
        %v3141 = vpop.f32.mrb[0].mxu0
        %v3142 = vadd.f32 0.0, %v3141
        %v3143 = vpop.f32.mrb[0].mxu0
        %v3144 = vadd.f32 0.0, %v3143
        %v3145 = vpop.f32.mrb[0].mxu0
        %v3146 = vadd.f32 0.0, %v3145
        %v3147 = vpop.f32.mrb[0].mxu0
        %v3148 = vadd.f32 0.0, %v3147
        %3149 = vmatprep.mubr.bf16.mxu0 0
        %3150 = vmatmul.mubr.bf16.gmra.mrb[0].mxu0 %v2972
        %v3151 = vpop.f32.mrb[0].mxu0
        %v3152 = vadd.f32 0.0, %v3151
        %v3153 = vpop.f32.mrb[0].mxu0
        %v3154 = vadd.f32 0.0, %v3153
        %v3155 = vpop.f32.mrb[0].mxu0
        %v3156 = vadd.f32 0.0, %v3155
        %v3157 = vpop.f32.mrb[0].mxu0
        %v3158 = vadd.f32 0.0, %v3157
        %3159 = vmatprep.mubr.bf16.mxu0 0
        %3160 = vmatmul.mubr.bf16.gmra.mrb[0].mxu0 %v2975
        %v3161 = vpop.f32.mrb[0].mxu0
        %v3162 = vadd.f32 0.0, %v3161
        %v3163 = vpop.f32.mrb[0].mxu0
        %v3164 = vadd.f32 0.0, %v3163
        %v3165 = vpop.f32.mrb[0].mxu0
        %v3166 = vadd.f32 0.0, %v3165
        %v3167 = vpop.f32.mrb[0].mxu0
        %v3168 = vadd.f32 0.0, %v3167
        %3169 = vdwg.mxu0
        %3170 = vxpose.xlu0.c.b16.start [1/8] %v1766, 128
        %3171 = vxpose.xlu0.c.b16.cont [2/8] 0, 128
        %3172 = vxpose.xlu0.c.b16.cont [3/8] 0, 128
        %3173 = vxpose.xlu0.c.b16.cont [4/8] 0, 128
        %3174 = vxpose.xlu0.c.b16.cont [5/8] 0, 128
        %3175 = vxpose.xlu0.c.b16.cont [6/8] 0, 128
        %3176 = vxpose.xlu0.c.b16.cont [7/8] 0, 128
        %3177 = vxpose.xlu0.c.b16.end [8/8] 0, 128
        %v3178 = vpop.trf.xlu0
        %v3179 = vpop.trf.xlu0
        %v3180 = vpop.trf.xlu0
        %v3181 = vpop.trf.xlu0
        %v3182 = vpop.trf.xlu0
        %v3183 = vpop.trf.xlu0
        %v3184 = vpop.trf.xlu0
        %v3185 = vpop.trf.xlu0
        %3186 = vxpose.xlu0.c.b16.start [1/8] %v1767, 128
        %3187 = vxpose.xlu0.c.b16.cont [2/8] 0, 128
        %3188 = vxpose.xlu0.c.b16.cont [3/8] 0, 128
        %3189 = vxpose.xlu0.c.b16.cont [4/8] 0, 128
        %3190 = vxpose.xlu0.c.b16.cont [5/8] 0, 128
        %3191 = vxpose.xlu0.c.b16.cont [6/8] 0, 128
        %3192 = vxpose.xlu0.c.b16.cont [7/8] 0, 128
        %3193 = vxpose.xlu0.c.b16.end [8/8] 0, 128
        %v3194 = vpop.trf.xlu0
        %v3195 = vpop.trf.xlu0
        %v3196 = vpop.trf.xlu0
        %v3197 = vpop.trf.xlu0
        %v3198 = vpop.trf.xlu0
        %v3199 = vpop.trf.xlu0
        %v3200 = vpop.trf.xlu0
        %v3201 = vpop.trf.xlu0
        %v3203 = vsel %vm1836, %v3178, 0
        %v3206 = vsel %vm1836, %v3179, 0
        %v3209 = vsel %vm1836, %v3180, 0
        %v3212 = vsel %vm1836, %v3181, 0
        %v3215 = vsel %vm1836, %v3182, 0
        %v3218 = vsel %vm1836, %v3183, 0
        %v3221 = vsel %vm1836, %v3184, 0
        %v3224 = vsel %vm1836, %v3185, 0
        %v3227 = vsel %vm1836, %v3194, 0
        %v3230 = vsel %vm1836, %v3195, 0
        %v3233 = vsel %vm1836, %v3196, 0
        %v3236 = vsel %vm1836, %v3197, 0
        %v3239 = vsel %vm1836, %v3198, 0
        %v3242 = vsel %vm1836, %v3199, 0
        %v3245 = vsel %vm1836, %v3200, 0
        %v3248 = vsel %vm1836, %v3201, 0
        %3250 = vmatprep.subr.bf16.mxu0 %v1783
        %3251 = vmatpush1.bf16.msra.mxu0 %v1782
        %3252 = vmatprep.subr.bf16.mxu0 0
        %3253 = vmatpush1.bf16.msra.mxu0 0
        %3254 = vmatprep.subr.bf16.mxu0 0
        %3255 = vmatpush1.bf16.msra.mxu0 0
        %3256 = vmatprep.subr.bf16.mxu0 0
        %3257 = vmatpush1.bf16.msra.mxu0 0
        %3258 = vmatprep.subr.bf16.mxu0 0
        %3259 = vmatpush1.bf16.msra.mxu0 0
        %3260 = vmatprep.subr.bf16.mxu0 0
        %3261 = vmatpush1.bf16.msra.mxu0 0
        %3262 = vmatprep.subr.bf16.mxu0 0
        %3263 = vmatpush1.bf16.msra.mxu0 0
        %3264 = vmatprep.subr.bf16.mxu0 0
        %3265 = vmatpush1.bf16.msra.mxu0 0
        %3266 = vmatprep.subr.bf16.mxu0 0
        %3267 = vmatpush1.bf16.msra.mxu0 0
        %3268 = vmatprep.subr.bf16.mxu0 0
        %3269 = vmatpush1.bf16.msra.mxu0 0
        %3270 = vmatprep.subr.bf16.mxu0 0
        %3271 = vmatpush1.bf16.msra.mxu0 0
        %3272 = vmatprep.subr.bf16.mxu0 0
        %3273 = vmatpush1.bf16.msra.mxu0 0
        %3274 = vmatprep.subr.bf16.mxu0 0
        %3275 = vmatpush1.bf16.msra.mxu0 0
        %3276 = vmatprep.subr.bf16.mxu0 0
        %3277 = vmatpush1.bf16.msra.mxu0 0
        %3278 = vmatprep.subr.bf16.mxu0 0
        %3279 = vmatpush1.bf16.msra.mxu0 0
        %3280 = vmatprep.subr.bf16.mxu0 0
        %3281 = vmatpush1.bf16.msra.mxu0 0
        %3282 = vmatprep.mubr.bf16.mxu0 0
        %3283 = vmatmul.mubr.bf16.gmra.mrb[0].mxu0 %v3203
        %v3284 = vpop.f32.mrb[0].mxu0
        %v3285 = vadd.f32 0.0, %v3284
        %v3286 = vpop.f32.mrb[0].mxu0
        %v3287 = vadd.f32 0.0, %v3286
        %v3288 = vpop.f32.mrb[0].mxu0
        %v3289 = vadd.f32 0.0, %v3288
        %v3290 = vpop.f32.mrb[0].mxu0
        %v3291 = vadd.f32 0.0, %v3290
        %3292 = vmatprep.mubr.bf16.mxu0 0
        %3293 = vmatmul.mubr.bf16.gmra.mrb[0].mxu0 %v3206
        %v3294 = vpop.f32.mrb[0].mxu0
        %v3295 = vadd.f32 0.0, %v3294
        %v3296 = vpop.f32.mrb[0].mxu0
        %v3297 = vadd.f32 0.0, %v3296
        %v3298 = vpop.f32.mrb[0].mxu0
        %v3299 = vadd.f32 0.0, %v3298
        %v3300 = vpop.f32.mrb[0].mxu0
        %v3301 = vadd.f32 0.0, %v3300
        %3302 = vmatprep.mubr.bf16.mxu0 0
        %3303 = vmatmul.mubr.bf16.gmra.mrb[0].mxu0 %v3209
        %v3304 = vpop.f32.mrb[0].mxu0
        %v3305 = vadd.f32 0.0, %v3304
        %v3306 = vpop.f32.mrb[0].mxu0
        %v3307 = vadd.f32 0.0, %v3306
        %v3308 = vpop.f32.mrb[0].mxu0
        %v3309 = vadd.f32 0.0, %v3308
        %v3310 = vpop.f32.mrb[0].mxu0
        %v3311 = vadd.f32 0.0, %v3310
        %3312 = vmatprep.mubr.bf16.mxu0 0
        %3313 = vmatmul.mubr.bf16.gmra.mrb[0].mxu0 %v3212
        %v3314 = vpop.f32.mrb[0].mxu0
        %v3315 = vadd.f32 0.0, %v3314
        %v3316 = vpop.f32.mrb[0].mxu0
        %v3317 = vadd.f32 0.0, %v3316
        %v3318 = vpop.f32.mrb[0].mxu0
        %v3319 = vadd.f32 0.0, %v3318
        %v3320 = vpop.f32.mrb[0].mxu0
        %v3321 = vadd.f32 0.0, %v3320
        %3322 = vmatprep.mubr.bf16.mxu0 0
        %3323 = vmatmul.mubr.bf16.gmra.mrb[0].mxu0 %v3215
        %v3324 = vpop.f32.mrb[0].mxu0
        %v3325 = vadd.f32 0.0, %v3324
        %v3326 = vpop.f32.mrb[0].mxu0
        %v3327 = vadd.f32 0.0, %v3326
        %v3328 = vpop.f32.mrb[0].mxu0
        %v3329 = vadd.f32 0.0, %v3328
        %v3330 = vpop.f32.mrb[0].mxu0
        %v3331 = vadd.f32 0.0, %v3330
        %3332 = vmatprep.mubr.bf16.mxu0 0
        %3333 = vmatmul.mubr.bf16.gmra.mrb[0].mxu0 %v3218
        %v3334 = vpop.f32.mrb[0].mxu0
        %v3335 = vadd.f32 0.0, %v3334
        %v3336 = vpop.f32.mrb[0].mxu0
        %v3337 = vadd.f32 0.0, %v3336
        %v3338 = vpop.f32.mrb[0].mxu0
        %v3339 = vadd.f32 0.0, %v3338
        %v3340 = vpop.f32.mrb[0].mxu0
        %v3341 = vadd.f32 0.0, %v3340
        %3342 = vmatprep.mubr.bf16.mxu0 0
        %3343 = vmatmul.mubr.bf16.gmra.mrb[0].mxu0 %v3221
        %v3344 = vpop.f32.mrb[0].mxu0
        %v3345 = vadd.f32 0.0, %v3344
        %v3346 = vpop.f32.mrb[0].mxu0
        %v3347 = vadd.f32 0.0, %v3346
        %v3348 = vpop.f32.mrb[0].mxu0
        %v3349 = vadd.f32 0.0, %v3348
        %v3350 = vpop.f32.mrb[0].mxu0
        %v3351 = vadd.f32 0.0, %v3350
        %3352 = vmatprep.mubr.bf16.mxu0 0
        %3353 = vmatmul.mubr.bf16.gmra.mrb[0].mxu0 %v3224
        %v3354 = vpop.f32.mrb[0].mxu0
        %v3355 = vadd.f32 0.0, %v3354
        %v3356 = vpop.f32.mrb[0].mxu0
        %v3357 = vadd.f32 0.0, %v3356
        %v3358 = vpop.f32.mrb[0].mxu0
        %v3359 = vadd.f32 0.0, %v3358
        %v3360 = vpop.f32.mrb[0].mxu0
        %v3361 = vadd.f32 0.0, %v3360
        %3362 = vmatprep.mubr.bf16.mxu0 0
        %3363 = vmatmul.mubr.bf16.gmra.mrb[0].mxu0 %v3227
        %v3364 = vpop.f32.mrb[0].mxu0
        %v3365 = vadd.f32 0.0, %v3364
        %v3366 = vpop.f32.mrb[0].mxu0
        %v3367 = vadd.f32 0.0, %v3366
        %v3368 = vpop.f32.mrb[0].mxu0
        %v3369 = vadd.f32 0.0, %v3368
        %v3370 = vpop.f32.mrb[0].mxu0
        %v3371 = vadd.f32 0.0, %v3370
        %3372 = vmatprep.mubr.bf16.mxu0 0
        %3373 = vmatmul.mubr.bf16.gmra.mrb[0].mxu0 %v3230
        %v3374 = vpop.f32.mrb[0].mxu0
        %v3375 = vadd.f32 0.0, %v3374
        %v3376 = vpop.f32.mrb[0].mxu0
        %v3377 = vadd.f32 0.0, %v3376
        %v3378 = vpop.f32.mrb[0].mxu0
        %v3379 = vadd.f32 0.0, %v3378
        %v3380 = vpop.f32.mrb[0].mxu0
        %v3381 = vadd.f32 0.0, %v3380
        %3382 = vmatprep.mubr.bf16.mxu0 0
        %3383 = vmatmul.mubr.bf16.gmra.mrb[0].mxu0 %v3233
        %v3384 = vpop.f32.mrb[0].mxu0
        %v3385 = vadd.f32 0.0, %v3384
        %v3386 = vpop.f32.mrb[0].mxu0
        %v3387 = vadd.f32 0.0, %v3386
        %v3388 = vpop.f32.mrb[0].mxu0
        %v3389 = vadd.f32 0.0, %v3388
        %v3390 = vpop.f32.mrb[0].mxu0
        %v3391 = vadd.f32 0.0, %v3390
        %3392 = vmatprep.mubr.bf16.mxu0 0
        %3393 = vmatmul.mubr.bf16.gmra.mrb[0].mxu0 %v3236
        %v3394 = vpop.f32.mrb[0].mxu0
        %v3395 = vadd.f32 0.0, %v3394
        %v3396 = vpop.f32.mrb[0].mxu0
        %v3397 = vadd.f32 0.0, %v3396
        %v3398 = vpop.f32.mrb[0].mxu0
        %v3399 = vadd.f32 0.0, %v3398
        %v3400 = vpop.f32.mrb[0].mxu0
        %v3401 = vadd.f32 0.0, %v3400
        %3402 = vmatprep.mubr.bf16.mxu0 0
        %3403 = vmatmul.mubr.bf16.gmra.mrb[0].mxu0 %v3239
        %v3404 = vpop.f32.mrb[0].mxu0
        %v3405 = vadd.f32 0.0, %v3404
        %v3406 = vpop.f32.mrb[0].mxu0
        %v3407 = vadd.f32 0.0, %v3406
        %v3408 = vpop.f32.mrb[0].mxu0
        %v3409 = vadd.f32 0.0, %v3408
        %v3410 = vpop.f32.mrb[0].mxu0
        %v3411 = vadd.f32 0.0, %v3410
        %3412 = vmatprep.mubr.bf16.mxu0 0
        %3413 = vmatmul.mubr.bf16.gmra.mrb[0].mxu0 %v3242
        %v3414 = vpop.f32.mrb[0].mxu0
        %v3415 = vadd.f32 0.0, %v3414
        %v3416 = vpop.f32.mrb[0].mxu0
        %v3417 = vadd.f32 0.0, %v3416
        %v3418 = vpop.f32.mrb[0].mxu0
        %v3419 = vadd.f32 0.0, %v3418
        %v3420 = vpop.f32.mrb[0].mxu0
        %v3421 = vadd.f32 0.0, %v3420
        %3422 = vmatprep.mubr.bf16.mxu0 0
        %3423 = vmatmul.mubr.bf16.gmra.mrb[0].mxu0 %v3245
        %v3424 = vpop.f32.mrb[0].mxu0
        %v3425 = vadd.f32 0.0, %v3424
        %v3426 = vpop.f32.mrb[0].mxu0
        %v3427 = vadd.f32 0.0, %v3426
        %v3428 = vpop.f32.mrb[0].mxu0
        %v3429 = vadd.f32 0.0, %v3428
        %v3430 = vpop.f32.mrb[0].mxu0
        %v3431 = vadd.f32 0.0, %v3430
        %3432 = vmatprep.mubr.bf16.mxu0 0
        %3433 = vmatmul.mubr.bf16.gmra.mrb[0].mxu0 %v3248
        %v3434 = vpop.f32.mrb[0].mxu0
        %v3435 = vadd.f32 0.0, %v3434
        %v3436 = vpop.f32.mrb[0].mxu0
        %v3437 = vadd.f32 0.0, %v3436
        %v3438 = vpop.f32.mrb[0].mxu0
        %v3439 = vadd.f32 0.0, %v3438
        %v3440 = vpop.f32.mrb[0].mxu0
        %v3441 = vadd.f32 0.0, %v3440
        %3442 = vdwg.mxu0
        %3443 = vxpose.xlu0.c.b16.start [1/8] %v1768, 128
        %3444 = vxpose.xlu0.c.b16.cont [2/8] 0, 128
        %3445 = vxpose.xlu0.c.b16.cont [3/8] 0, 128
        %3446 = vxpose.xlu0.c.b16.cont [4/8] 0, 128
        %3447 = vxpose.xlu0.c.b16.cont [5/8] 0, 128
        %3448 = vxpose.xlu0.c.b16.cont [6/8] 0, 128
        %3449 = vxpose.xlu0.c.b16.cont [7/8] 0, 128
        %3450 = vxpose.xlu0.c.b16.end [8/8] 0, 128
        %v3451 = vpop.trf.xlu0
        %v3452 = vpop.trf.xlu0
        %v3453 = vpop.trf.xlu0
        %v3454 = vpop.trf.xlu0
        %v3455 = vpop.trf.xlu0
        %v3456 = vpop.trf.xlu0
        %v3457 = vpop.trf.xlu0
        %v3458 = vpop.trf.xlu0
        %3459 = vxpose.xlu0.c.b16.start [1/8] %v1769, 128
        %3460 = vxpose.xlu0.c.b16.cont [2/8] 0, 128
        %3461 = vxpose.xlu0.c.b16.cont [3/8] 0, 128
        %3462 = vxpose.xlu0.c.b16.cont [4/8] 0, 128
        %3463 = vxpose.xlu0.c.b16.cont [5/8] 0, 128
        %3464 = vxpose.xlu0.c.b16.cont [6/8] 0, 128
        %3465 = vxpose.xlu0.c.b16.cont [7/8] 0, 128
        %3466 = vxpose.xlu0.c.b16.end [8/8] 0, 128
        %v3467 = vpop.trf.xlu0
        %v3468 = vpop.trf.xlu0
        %v3469 = vpop.trf.xlu0
        %v3470 = vpop.trf.xlu0
        %v3471 = vpop.trf.xlu0
        %v3472 = vpop.trf.xlu0
        %v3473 = vpop.trf.xlu0
        %v3474 = vpop.trf.xlu0
        %v3476 = vsel %vm1836, %v3451, 0
        %v3479 = vsel %vm1836, %v3452, 0
        %v3482 = vsel %vm1836, %v3453, 0
        %v3485 = vsel %vm1836, %v3454, 0
        %v3488 = vsel %vm1836, %v3455, 0
        %v3491 = vsel %vm1836, %v3456, 0
        %v3494 = vsel %vm1836, %v3457, 0
        %v3497 = vsel %vm1836, %v3458, 0
        %v3500 = vsel %vm1836, %v3467, 0
        %v3503 = vsel %vm1836, %v3468, 0
        %v3506 = vsel %vm1836, %v3469, 0
        %v3509 = vsel %vm1836, %v3470, 0
        %v3512 = vsel %vm1836, %v3471, 0
        %v3515 = vsel %vm1836, %v3472, 0
        %v3518 = vsel %vm1836, %v3473, 0
        %v3521 = vsel %vm1836, %v3474, 0
        %3523 = vmatprep.subr.bf16.mxu0 %v1785
        %3524 = vmatpush1.bf16.msra.mxu0 %v1784
        %3525 = vmatprep.subr.bf16.mxu0 0
        %3526 = vmatpush1.bf16.msra.mxu0 0
        %3527 = vmatprep.subr.bf16.mxu0 0
        %3528 = vmatpush1.bf16.msra.mxu0 0
        %3529 = vmatprep.subr.bf16.mxu0 0
        %3530 = vmatpush1.bf16.msra.mxu0 0
        %3531 = vmatprep.subr.bf16.mxu0 0
        %3532 = vmatpush1.bf16.msra.mxu0 0
        %3533 = vmatprep.subr.bf16.mxu0 0
        %3534 = vmatpush1.bf16.msra.mxu0 0
        %3535 = vmatprep.subr.bf16.mxu0 0
        %3536 = vmatpush1.bf16.msra.mxu0 0
        %3537 = vmatprep.subr.bf16.mxu0 0
        %3538 = vmatpush1.bf16.msra.mxu0 0
        %3539 = vmatprep.subr.bf16.mxu0 0
        %3540 = vmatpush1.bf16.msra.mxu0 0
        %3541 = vmatprep.subr.bf16.mxu0 0
        %3542 = vmatpush1.bf16.msra.mxu0 0
        %3543 = vmatprep.subr.bf16.mxu0 0
        %3544 = vmatpush1.bf16.msra.mxu0 0
        %3545 = vmatprep.subr.bf16.mxu0 0
        %3546 = vmatpush1.bf16.msra.mxu0 0
        %3547 = vmatprep.subr.bf16.mxu0 0
        %3548 = vmatpush1.bf16.msra.mxu0 0
        %3549 = vmatprep.subr.bf16.mxu0 0
        %3550 = vmatpush1.bf16.msra.mxu0 0
        %3551 = vmatprep.subr.bf16.mxu0 0
        %3552 = vmatpush1.bf16.msra.mxu0 0
        %3553 = vmatprep.subr.bf16.mxu0 0
        %3554 = vmatpush1.bf16.msra.mxu0 0
        %3555 = vmatprep.mubr.bf16.mxu0 0
        %3556 = vmatmul.mubr.bf16.gmra.mrb[0].mxu0 %v3476
        %v3557 = vpop.f32.mrb[0].mxu0
        %v3558 = vadd.f32 0.0, %v3557
        %v3559 = vpop.f32.mrb[0].mxu0
        %v3560 = vadd.f32 0.0, %v3559
        %v3561 = vpop.f32.mrb[0].mxu0
        %v3562 = vadd.f32 0.0, %v3561
        %v3563 = vpop.f32.mrb[0].mxu0
        %v3564 = vadd.f32 0.0, %v3563
        %3565 = vmatprep.mubr.bf16.mxu0 0
        %3566 = vmatmul.mubr.bf16.gmra.mrb[0].mxu0 %v3479
        %v3567 = vpop.f32.mrb[0].mxu0
        %v3568 = vadd.f32 0.0, %v3567
        %v3569 = vpop.f32.mrb[0].mxu0
        %v3570 = vadd.f32 0.0, %v3569
        %v3571 = vpop.f32.mrb[0].mxu0
        %v3572 = vadd.f32 0.0, %v3571
        %v3573 = vpop.f32.mrb[0].mxu0
        %v3574 = vadd.f32 0.0, %v3573
        %3575 = vmatprep.mubr.bf16.mxu0 0
        %3576 = vmatmul.mubr.bf16.gmra.mrb[0].mxu0 %v3482
        %v3577 = vpop.f32.mrb[0].mxu0
        %v3578 = vadd.f32 0.0, %v3577
        %v3579 = vpop.f32.mrb[0].mxu0
        %v3580 = vadd.f32 0.0, %v3579
        %v3581 = vpop.f32.mrb[0].mxu0
        %v3582 = vadd.f32 0.0, %v3581
        %v3583 = vpop.f32.mrb[0].mxu0
        %v3584 = vadd.f32 0.0, %v3583
        %3585 = vmatprep.mubr.bf16.mxu0 0
        %3586 = vmatmul.mubr.bf16.gmra.mrb[0].mxu0 %v3485
        %v3587 = vpop.f32.mrb[0].mxu0
        %v3588 = vadd.f32 0.0, %v3587
        %v3589 = vpop.f32.mrb[0].mxu0
        %v3590 = vadd.f32 0.0, %v3589
        %v3591 = vpop.f32.mrb[0].mxu0
        %v3592 = vadd.f32 0.0, %v3591
        %v3593 = vpop.f32.mrb[0].mxu0
        %v3594 = vadd.f32 0.0, %v3593
        %3595 = vmatprep.mubr.bf16.mxu0 0
        %3596 = vmatmul.mubr.bf16.gmra.mrb[0].mxu0 %v3488
        %v3597 = vpop.f32.mrb[0].mxu0
        %v3598 = vadd.f32 0.0, %v3597
        %v3599 = vpop.f32.mrb[0].mxu0
        %v3600 = vadd.f32 0.0, %v3599
        %v3601 = vpop.f32.mrb[0].mxu0
        %v3602 = vadd.f32 0.0, %v3601
        %v3603 = vpop.f32.mrb[0].mxu0
        %v3604 = vadd.f32 0.0, %v3603
        %3605 = vmatprep.mubr.bf16.mxu0 0
        %3606 = vmatmul.mubr.bf16.gmra.mrb[0].mxu0 %v3491
        %v3607 = vpop.f32.mrb[0].mxu0
        %v3608 = vadd.f32 0.0, %v3607
        %v3609 = vpop.f32.mrb[0].mxu0
        %v3610 = vadd.f32 0.0, %v3609
        %v3611 = vpop.f32.mrb[0].mxu0
        %v3612 = vadd.f32 0.0, %v3611
        %v3613 = vpop.f32.mrb[0].mxu0
        %v3614 = vadd.f32 0.0, %v3613
        %3615 = vmatprep.mubr.bf16.mxu0 0
        %3616 = vmatmul.mubr.bf16.gmra.mrb[0].mxu0 %v3494
        %v3617 = vpop.f32.mrb[0].mxu0
        %v3618 = vadd.f32 0.0, %v3617
        %v3619 = vpop.f32.mrb[0].mxu0
        %v3620 = vadd.f32 0.0, %v3619
        %v3621 = vpop.f32.mrb[0].mxu0
        %v3622 = vadd.f32 0.0, %v3621
        %v3623 = vpop.f32.mrb[0].mxu0
        %v3624 = vadd.f32 0.0, %v3623
        %3625 = vmatprep.mubr.bf16.mxu0 0
        %3626 = vmatmul.mubr.bf16.gmra.mrb[0].mxu0 %v3497
        %v3627 = vpop.f32.mrb[0].mxu0
        %v3628 = vadd.f32 0.0, %v3627
        %v3629 = vpop.f32.mrb[0].mxu0
        %v3630 = vadd.f32 0.0, %v3629
        %v3631 = vpop.f32.mrb[0].mxu0
        %v3632 = vadd.f32 0.0, %v3631
        %v3633 = vpop.f32.mrb[0].mxu0
        %v3634 = vadd.f32 0.0, %v3633
        %3635 = vmatprep.mubr.bf16.mxu0 0
        %3636 = vmatmul.mubr.bf16.gmra.mrb[0].mxu0 %v3500
        %v3637 = vpop.f32.mrb[0].mxu0
        %v3638 = vadd.f32 0.0, %v3637
        %v3639 = vpop.f32.mrb[0].mxu0
        %v3640 = vadd.f32 0.0, %v3639
        %v3641 = vpop.f32.mrb[0].mxu0
        %v3642 = vadd.f32 0.0, %v3641
        %v3643 = vpop.f32.mrb[0].mxu0
        %v3644 = vadd.f32 0.0, %v3643
        %3645 = vmatprep.mubr.bf16.mxu0 0
        %3646 = vmatmul.mubr.bf16.gmra.mrb[0].mxu0 %v3503
        %v3647 = vpop.f32.mrb[0].mxu0
        %v3648 = vadd.f32 0.0, %v3647
        %v3649 = vpop.f32.mrb[0].mxu0
        %v3650 = vadd.f32 0.0, %v3649
        %v3651 = vpop.f32.mrb[0].mxu0
        %v3652 = vadd.f32 0.0, %v3651
        %v3653 = vpop.f32.mrb[0].mxu0
        %v3654 = vadd.f32 0.0, %v3653
        %3655 = vmatprep.mubr.bf16.mxu0 0
        %3656 = vmatmul.mubr.bf16.gmra.mrb[0].mxu0 %v3506
        %v3657 = vpop.f32.mrb[0].mxu0
        %v3658 = vadd.f32 0.0, %v3657
        %v3659 = vpop.f32.mrb[0].mxu0
        %v3660 = vadd.f32 0.0, %v3659
        %v3661 = vpop.f32.mrb[0].mxu0
        %v3662 = vadd.f32 0.0, %v3661
        %v3663 = vpop.f32.mrb[0].mxu0
        %v3664 = vadd.f32 0.0, %v3663
        %3665 = vmatprep.mubr.bf16.mxu0 0
        %3666 = vmatmul.mubr.bf16.gmra.mrb[0].mxu0 %v3509
        %v3667 = vpop.f32.mrb[0].mxu0
        %v3668 = vadd.f32 0.0, %v3667
        %v3669 = vpop.f32.mrb[0].mxu0
        %v3670 = vadd.f32 0.0, %v3669
        %v3671 = vpop.f32.mrb[0].mxu0
        %v3672 = vadd.f32 0.0, %v3671
        %v3673 = vpop.f32.mrb[0].mxu0
        %v3674 = vadd.f32 0.0, %v3673
        %3675 = vmatprep.mubr.bf16.mxu0 0
        %3676 = vmatmul.mubr.bf16.gmra.mrb[0].mxu0 %v3512
        %v3677 = vpop.f32.mrb[0].mxu0
        %v3678 = vadd.f32 0.0, %v3677
        %v3679 = vpop.f32.mrb[0].mxu0
        %v3680 = vadd.f32 0.0, %v3679
        %v3681 = vpop.f32.mrb[0].mxu0
        %v3682 = vadd.f32 0.0, %v3681
        %v3683 = vpop.f32.mrb[0].mxu0
        %v3684 = vadd.f32 0.0, %v3683
        %3685 = vmatprep.mubr.bf16.mxu0 0
        %3686 = vmatmul.mubr.bf16.gmra.mrb[0].mxu0 %v3515
        %v3687 = vpop.f32.mrb[0].mxu0
        %v3688 = vadd.f32 0.0, %v3687
        %v3689 = vpop.f32.mrb[0].mxu0
        %v3690 = vadd.f32 0.0, %v3689
        %v3691 = vpop.f32.mrb[0].mxu0
        %v3692 = vadd.f32 0.0, %v3691
        %v3693 = vpop.f32.mrb[0].mxu0
        %v3694 = vadd.f32 0.0, %v3693
        %3695 = vmatprep.mubr.bf16.mxu0 0
        %3696 = vmatmul.mubr.bf16.gmra.mrb[0].mxu0 %v3518
        %v3697 = vpop.f32.mrb[0].mxu0
        %v3698 = vadd.f32 0.0, %v3697
        %v3699 = vpop.f32.mrb[0].mxu0
        %v3700 = vadd.f32 0.0, %v3699
        %v3701 = vpop.f32.mrb[0].mxu0
        %v3702 = vadd.f32 0.0, %v3701
        %v3703 = vpop.f32.mrb[0].mxu0
        %v3704 = vadd.f32 0.0, %v3703
        %3705 = vmatprep.mubr.bf16.mxu0 0
        %3706 = vmatmul.mubr.bf16.gmra.mrb[0].mxu0 %v3521
        %v3707 = vpop.f32.mrb[0].mxu0
        %v3708 = vadd.f32 0.0, %v3707
        %v3709 = vpop.f32.mrb[0].mxu0
        %v3710 = vadd.f32 0.0, %v3709
        %v3711 = vpop.f32.mrb[0].mxu0
        %v3712 = vadd.f32 0.0, %v3711
        %v3713 = vpop.f32.mrb[0].mxu0
        %v3714 = vadd.f32 0.0, %v3713
        %3715 = vdwg.mxu0
        %3716 = vxpose.xlu0.c.b16.start [1/8] %v1770, 128
        %3717 = vxpose.xlu0.c.b16.cont [2/8] 0, 128
        %3718 = vxpose.xlu0.c.b16.cont [3/8] 0, 128
        %3719 = vxpose.xlu0.c.b16.cont [4/8] 0, 128
        %3720 = vxpose.xlu0.c.b16.cont [5/8] 0, 128
        %3721 = vxpose.xlu0.c.b16.cont [6/8] 0, 128
        %3722 = vxpose.xlu0.c.b16.cont [7/8] 0, 128
        %3723 = vxpose.xlu0.c.b16.end [8/8] 0, 128
        %v3724 = vpop.trf.xlu0
        %v3725 = vpop.trf.xlu0
        %v3726 = vpop.trf.xlu0
        %v3727 = vpop.trf.xlu0
        %v3728 = vpop.trf.xlu0
        %v3729 = vpop.trf.xlu0
        %v3730 = vpop.trf.xlu0
        %v3731 = vpop.trf.xlu0
        %3732 = vxpose.xlu0.c.b16.start [1/8] %v1771, 128
        %3733 = vxpose.xlu0.c.b16.cont [2/8] 0, 128
        %3734 = vxpose.xlu0.c.b16.cont [3/8] 0, 128
        %3735 = vxpose.xlu0.c.b16.cont [4/8] 0, 128
        %3736 = vxpose.xlu0.c.b16.cont [5/8] 0, 128
        %3737 = vxpose.xlu0.c.b16.cont [6/8] 0, 128
        %3738 = vxpose.xlu0.c.b16.cont [7/8] 0, 128
        %3739 = vxpose.xlu0.c.b16.end [8/8] 0, 128
        %v3740 = vpop.trf.xlu0
        %v3741 = vpop.trf.xlu0
        %v3742 = vpop.trf.xlu0
        %v3743 = vpop.trf.xlu0
        %v3744 = vpop.trf.xlu0
        %v3745 = vpop.trf.xlu0
        %v3746 = vpop.trf.xlu0
        %v3747 = vpop.trf.xlu0
        %v3749 = vsel %vm1836, %v3724, 0
        %v3752 = vsel %vm1836, %v3725, 0
        %v3755 = vsel %vm1836, %v3726, 0
        %v3758 = vsel %vm1836, %v3727, 0
        %v3761 = vsel %vm1836, %v3728, 0
        %v3764 = vsel %vm1836, %v3729, 0
        %v3767 = vsel %vm1836, %v3730, 0
        %v3770 = vsel %vm1836, %v3731, 0
        %v3773 = vsel %vm1836, %v3740, 0
        %v3776 = vsel %vm1836, %v3741, 0
        %v3779 = vsel %vm1836, %v3742, 0
        %v3782 = vsel %vm1836, %v3743, 0
        %v3785 = vsel %vm1836, %v3744, 0
        %v3788 = vsel %vm1836, %v3745, 0
        %v3791 = vsel %vm1836, %v3746, 0
        %v3794 = vsel %vm1836, %v3747, 0
        %3796 = vmatprep.subr.bf16.mxu0 %v1787
        %3797 = vmatpush1.bf16.msra.mxu0 %v1786
        %3798 = vmatprep.subr.bf16.mxu0 0
        %3799 = vmatpush1.bf16.msra.mxu0 0
        %3800 = vmatprep.subr.bf16.mxu0 0
        %3801 = vmatpush1.bf16.msra.mxu0 0
        %3802 = vmatprep.subr.bf16.mxu0 0
        %3803 = vmatpush1.bf16.msra.mxu0 0
        %3804 = vmatprep.subr.bf16.mxu0 0
        %3805 = vmatpush1.bf16.msra.mxu0 0
        %3806 = vmatprep.subr.bf16.mxu0 0
        %3807 = vmatpush1.bf16.msra.mxu0 0
        %3808 = vmatprep.subr.bf16.mxu0 0
        %3809 = vmatpush1.bf16.msra.mxu0 0
        %3810 = vmatprep.subr.bf16.mxu0 0
        %3811 = vmatpush1.bf16.msra.mxu0 0
        %3812 = vmatprep.subr.bf16.mxu0 0
        %3813 = vmatpush1.bf16.msra.mxu0 0
        %3814 = vmatprep.subr.bf16.mxu0 0
        %3815 = vmatpush1.bf16.msra.mxu0 0
        %3816 = vmatprep.subr.bf16.mxu0 0
        %3817 = vmatpush1.bf16.msra.mxu0 0
        %3818 = vmatprep.subr.bf16.mxu0 0
        %3819 = vmatpush1.bf16.msra.mxu0 0
        %3820 = vmatprep.subr.bf16.mxu0 0
        %3821 = vmatpush1.bf16.msra.mxu0 0
        %3822 = vmatprep.subr.bf16.mxu0 0
        %3823 = vmatpush1.bf16.msra.mxu0 0
        %3824 = vmatprep.subr.bf16.mxu0 0
        %3825 = vmatpush1.bf16.msra.mxu0 0
        %3826 = vmatprep.subr.bf16.mxu0 0
        %3827 = vmatpush1.bf16.msra.mxu0 0
        %3828 = vmatprep.mubr.bf16.mxu0 0
        %3829 = vmatmul.mubr.bf16.gmra.mrb[0].mxu0 %v3749
        %v3830 = vpop.f32.mrb[0].mxu0
        %v3831 = vadd.f32 0.0, %v3830
        %v3832 = vpop.f32.mrb[0].mxu0
        %v3833 = vadd.f32 0.0, %v3832
        %v3834 = vpop.f32.mrb[0].mxu0
        %v3835 = vadd.f32 0.0, %v3834
        %v3836 = vpop.f32.mrb[0].mxu0
        %v3837 = vadd.f32 0.0, %v3836
        %3838 = vmatprep.mubr.bf16.mxu0 0
        %3839 = vmatmul.mubr.bf16.gmra.mrb[0].mxu0 %v3752
        %v3840 = vpop.f32.mrb[0].mxu0
        %v3841 = vadd.f32 0.0, %v3840
        %v3842 = vpop.f32.mrb[0].mxu0
        %v3843 = vadd.f32 0.0, %v3842
        %v3844 = vpop.f32.mrb[0].mxu0
        %v3845 = vadd.f32 0.0, %v3844
        %v3846 = vpop.f32.mrb[0].mxu0
        %v3847 = vadd.f32 0.0, %v3846
        %3848 = vmatprep.mubr.bf16.mxu0 0
        %3849 = vmatmul.mubr.bf16.gmra.mrb[0].mxu0 %v3755
        %v3850 = vpop.f32.mrb[0].mxu0
        %v3851 = vadd.f32 0.0, %v3850
        %v3852 = vpop.f32.mrb[0].mxu0
        %v3853 = vadd.f32 0.0, %v3852
        %v3854 = vpop.f32.mrb[0].mxu0
        %v3855 = vadd.f32 0.0, %v3854
        %v3856 = vpop.f32.mrb[0].mxu0
        %v3857 = vadd.f32 0.0, %v3856
        %3858 = vmatprep.mubr.bf16.mxu0 0
        %3859 = vmatmul.mubr.bf16.gmra.mrb[0].mxu0 %v3758
        %v3860 = vpop.f32.mrb[0].mxu0
        %v3861 = vadd.f32 0.0, %v3860
        %v3862 = vpop.f32.mrb[0].mxu0
        %v3863 = vadd.f32 0.0, %v3862
        %v3864 = vpop.f32.mrb[0].mxu0
        %v3865 = vadd.f32 0.0, %v3864
        %v3866 = vpop.f32.mrb[0].mxu0
        %v3867 = vadd.f32 0.0, %v3866
        %3868 = vmatprep.mubr.bf16.mxu0 0
        %3869 = vmatmul.mubr.bf16.gmra.mrb[0].mxu0 %v3761
        %v3870 = vpop.f32.mrb[0].mxu0
        %v3871 = vadd.f32 0.0, %v3870
        %v3872 = vpop.f32.mrb[0].mxu0
        %v3873 = vadd.f32 0.0, %v3872
        %v3874 = vpop.f32.mrb[0].mxu0
        %v3875 = vadd.f32 0.0, %v3874
        %v3876 = vpop.f32.mrb[0].mxu0
        %v3877 = vadd.f32 0.0, %v3876
        %3878 = vmatprep.mubr.bf16.mxu0 0
        %3879 = vmatmul.mubr.bf16.gmra.mrb[0].mxu0 %v3764
        %v3880 = vpop.f32.mrb[0].mxu0
        %v3881 = vadd.f32 0.0, %v3880
        %v3882 = vpop.f32.mrb[0].mxu0
        %v3883 = vadd.f32 0.0, %v3882
        %v3884 = vpop.f32.mrb[0].mxu0
        %v3885 = vadd.f32 0.0, %v3884
        %v3886 = vpop.f32.mrb[0].mxu0
        %v3887 = vadd.f32 0.0, %v3886
        %3888 = vmatprep.mubr.bf16.mxu0 0
        %3889 = vmatmul.mubr.bf16.gmra.mrb[0].mxu0 %v3767
        %v3890 = vpop.f32.mrb[0].mxu0
        %v3891 = vadd.f32 0.0, %v3890
        %v3892 = vpop.f32.mrb[0].mxu0
        %v3893 = vadd.f32 0.0, %v3892
        %v3894 = vpop.f32.mrb[0].mxu0
        %v3895 = vadd.f32 0.0, %v3894
        %v3896 = vpop.f32.mrb[0].mxu0
        %v3897 = vadd.f32 0.0, %v3896
        %3898 = vmatprep.mubr.bf16.mxu0 0
        %3899 = vmatmul.mubr.bf16.gmra.mrb[0].mxu0 %v3770
        %v3900 = vpop.f32.mrb[0].mxu0
        %v3901 = vadd.f32 0.0, %v3900
        %v3902 = vpop.f32.mrb[0].mxu0
        %v3903 = vadd.f32 0.0, %v3902
        %v3904 = vpop.f32.mrb[0].mxu0
        %v3905 = vadd.f32 0.0, %v3904
        %v3906 = vpop.f32.mrb[0].mxu0
        %v3907 = vadd.f32 0.0, %v3906
        %3908 = vmatprep.mubr.bf16.mxu0 0
        %3909 = vmatmul.mubr.bf16.gmra.mrb[0].mxu0 %v3773
        %v3910 = vpop.f32.mrb[0].mxu0
        %v3911 = vadd.f32 0.0, %v3910
        %v3912 = vpop.f32.mrb[0].mxu0
        %v3913 = vadd.f32 0.0, %v3912
        %v3914 = vpop.f32.mrb[0].mxu0
        %v3915 = vadd.f32 0.0, %v3914
        %v3916 = vpop.f32.mrb[0].mxu0
        %v3917 = vadd.f32 0.0, %v3916
        %3918 = vmatprep.mubr.bf16.mxu0 0
        %3919 = vmatmul.mubr.bf16.gmra.mrb[0].mxu0 %v3776
        %v3920 = vpop.f32.mrb[0].mxu0
        %v3921 = vadd.f32 0.0, %v3920
        %v3922 = vpop.f32.mrb[0].mxu0
        %v3923 = vadd.f32 0.0, %v3922
        %v3924 = vpop.f32.mrb[0].mxu0
        %v3925 = vadd.f32 0.0, %v3924
        %v3926 = vpop.f32.mrb[0].mxu0
        %v3927 = vadd.f32 0.0, %v3926
        %3928 = vmatprep.mubr.bf16.mxu0 0
        %3929 = vmatmul.mubr.bf16.gmra.mrb[0].mxu0 %v3779
        %v3930 = vpop.f32.mrb[0].mxu0
        %v3931 = vadd.f32 0.0, %v3930
        %v3932 = vpop.f32.mrb[0].mxu0
        %v3933 = vadd.f32 0.0, %v3932
        %v3934 = vpop.f32.mrb[0].mxu0
        %v3935 = vadd.f32 0.0, %v3934
        %v3936 = vpop.f32.mrb[0].mxu0
        %v3937 = vadd.f32 0.0, %v3936
        %3938 = vmatprep.mubr.bf16.mxu0 0
        %3939 = vmatmul.mubr.bf16.gmra.mrb[0].mxu0 %v3782
        %v3940 = vpop.f32.mrb[0].mxu0
        %v3941 = vadd.f32 0.0, %v3940
        %v3942 = vpop.f32.mrb[0].mxu0
        %v3943 = vadd.f32 0.0, %v3942
        %v3944 = vpop.f32.mrb[0].mxu0
        %v3945 = vadd.f32 0.0, %v3944
        %v3946 = vpop.f32.mrb[0].mxu0
        %v3947 = vadd.f32 0.0, %v3946
        %3948 = vmatprep.mubr.bf16.mxu0 0
        %3949 = vmatmul.mubr.bf16.gmra.mrb[0].mxu0 %v3785
        %v3950 = vpop.f32.mrb[0].mxu0
        %v3951 = vadd.f32 0.0, %v3950
        %v3952 = vpop.f32.mrb[0].mxu0
        %v3953 = vadd.f32 0.0, %v3952
        %v3954 = vpop.f32.mrb[0].mxu0
        %v3955 = vadd.f32 0.0, %v3954
        %v3956 = vpop.f32.mrb[0].mxu0
        %v3957 = vadd.f32 0.0, %v3956
        %3958 = vmatprep.mubr.bf16.mxu0 0
        %3959 = vmatmul.mubr.bf16.gmra.mrb[0].mxu0 %v3788
        %v3960 = vpop.f32.mrb[0].mxu0
        %v3961 = vadd.f32 0.0, %v3960
        %v3962 = vpop.f32.mrb[0].mxu0
        %v3963 = vadd.f32 0.0, %v3962
        %v3964 = vpop.f32.mrb[0].mxu0
        %v3965 = vadd.f32 0.0, %v3964
        %v3966 = vpop.f32.mrb[0].mxu0
        %v3967 = vadd.f32 0.0, %v3966
        %3968 = vmatprep.mubr.bf16.mxu0 0
        %3969 = vmatmul.mubr.bf16.gmra.mrb[0].mxu0 %v3791
        %v3970 = vpop.f32.mrb[0].mxu0
        %v3971 = vadd.f32 0.0, %v3970
        %v3972 = vpop.f32.mrb[0].mxu0
        %v3973 = vadd.f32 0.0, %v3972
        %v3974 = vpop.f32.mrb[0].mxu0
        %v3975 = vadd.f32 0.0, %v3974
        %v3976 = vpop.f32.mrb[0].mxu0
        %v3977 = vadd.f32 0.0, %v3976
        %3978 = vmatprep.mubr.bf16.mxu0 0
        %3979 = vmatmul.mubr.bf16.gmra.mrb[0].mxu0 %v3794
        %v3980 = vpop.f32.mrb[0].mxu0
        %v3981 = vadd.f32 0.0, %v3980
        %v3982 = vpop.f32.mrb[0].mxu0
        %v3983 = vadd.f32 0.0, %v3982
        %v3984 = vpop.f32.mrb[0].mxu0
        %v3985 = vadd.f32 0.0, %v3984
        %v3986 = vpop.f32.mrb[0].mxu0
        %v3987 = vadd.f32 0.0, %v3986
        %3988 = vdwg.mxu0
        %v3989 = vmax.f32 %v1920, %v1922
        %3990 = vmax.xlane.f32.xlu0 %v3989
        %v3991 = vpop.xlane.xlu0 %3990
        %v3992 = vmax.f32 %v1924, %v1926
        %3993 = vmax.xlane.f32.xlu0 %v3992
        %v3994 = vpop.xlane.xlu0 %3993
        %v3995 = vmax.f32 %v1930, %v1932
        %3996 = vmax.xlane.f32.xlu0 %v3995
        %v3997 = vpop.xlane.xlu0 %3996
        %v3998 = vmax.f32 %v1934, %v1936
        %3999 = vmax.xlane.f32.xlu0 %v3998
        %v4000 = vpop.xlane.xlu0 %3999
        %v4001 = vmax.f32 %v1940, %v1942
        %4002 = vmax.xlane.f32.xlu0 %v4001
        %v4003 = vpop.xlane.xlu0 %4002
        %v4004 = vmax.f32 %v1944, %v1946
        %4005 = vmax.xlane.f32.xlu0 %v4004
        %v4006 = vpop.xlane.xlu0 %4005
        %v4007 = vmax.f32 %v1950, %v1952
        %4008 = vmax.xlane.f32.xlu0 %v4007
        %v4009 = vpop.xlane.xlu0 %4008
        %v4010 = vmax.f32 %v1954, %v1956
        %4011 = vmax.xlane.f32.xlu0 %v4010
        %v4012 = vpop.xlane.xlu0 %4011
        %v4013 = vmax.f32 %v1960, %v1962
        %4014 = vmax.xlane.f32.xlu0 %v4013
        %v4015 = vpop.xlane.xlu0 %4014
        %v4016 = vmax.f32 %v1964, %v1966
        %4017 = vmax.xlane.f32.xlu0 %v4016
        %v4018 = vpop.xlane.xlu0 %4017
        %v4019 = vmax.f32 %v1970, %v1972
        %4020 = vmax.xlane.f32.xlu0 %v4019
        %v4021 = vpop.xlane.xlu0 %4020
        %v4022 = vmax.f32 %v1974, %v1976
        %4023 = vmax.xlane.f32.xlu0 %v4022
        %v4024 = vpop.xlane.xlu0 %4023
        %v4025 = vmax.f32 %v1980, %v1982
        %4026 = vmax.xlane.f32.xlu0 %v4025
        %v4027 = vpop.xlane.xlu0 %4026
        %v4028 = vmax.f32 %v1984, %v1986
        %4029 = vmax.xlane.f32.xlu0 %v4028
        %v4030 = vpop.xlane.xlu0 %4029
        %v4031 = vmax.f32 %v1990, %v1992
        %4032 = vmax.xlane.f32.xlu0 %v4031
        %v4033 = vpop.xlane.xlu0 %4032
        %v4034 = vmax.f32 %v1994, %v1996
        %4035 = vmax.xlane.f32.xlu0 %v4034
        %v4036 = vpop.xlane.xlu0 %4035
        %v4037 = vmax.f32 %v2000, %v2002
        %4038 = vmax.xlane.f32.xlu0 %v4037
        %v4039 = vpop.xlane.xlu0 %4038
        %v4040 = vmax.f32 %v2004, %v2006
        %4041 = vmax.xlane.f32.xlu0 %v4040
        %v4042 = vpop.xlane.xlu0 %4041
        %v4043 = vmax.f32 %v2010, %v2012
        %4044 = vmax.xlane.f32.xlu0 %v4043
        %v4045 = vpop.xlane.xlu0 %4044
        %v4046 = vmax.f32 %v2014, %v2016
        %4047 = vmax.xlane.f32.xlu0 %v4046
        %v4048 = vpop.xlane.xlu0 %4047
        %v4049 = vmax.f32 %v2020, %v2022
        %4050 = vmax.xlane.f32.xlu0 %v4049
        %v4051 = vpop.xlane.xlu0 %4050
        %v4052 = vmax.f32 %v2024, %v2026
        %4053 = vmax.xlane.f32.xlu0 %v4052
        %v4054 = vpop.xlane.xlu0 %4053
        %v4055 = vmax.f32 %v2030, %v2032
        %4056 = vmax.xlane.f32.xlu0 %v4055
        %v4057 = vpop.xlane.xlu0 %4056
        %v4058 = vmax.f32 %v2034, %v2036
        %4059 = vmax.xlane.f32.xlu0 %v4058
        %v4060 = vpop.xlane.xlu0 %4059
        %v4061 = vmax.f32 %v2040, %v2042
        %4062 = vmax.xlane.f32.xlu0 %v4061
        %v4063 = vpop.xlane.xlu0 %4062
        %v4064 = vmax.f32 %v2044, %v2046
        %4065 = vmax.xlane.f32.xlu0 %v4064
        %v4066 = vpop.xlane.xlu0 %4065
        %v4067 = vmax.f32 %v2050, %v2052
        %4068 = vmax.xlane.f32.xlu0 %v4067
        %v4069 = vpop.xlane.xlu0 %4068
        %v4070 = vmax.f32 %v2054, %v2056
        %4071 = vmax.xlane.f32.xlu0 %v4070
        %v4072 = vpop.xlane.xlu0 %4071
        %v4073 = vmax.f32 %v2060, %v2062
        %4074 = vmax.xlane.f32.xlu0 %v4073
        %v4075 = vpop.xlane.xlu0 %4074
        %v4076 = vmax.f32 %v2064, %v2066
        %4077 = vmax.xlane.f32.xlu0 %v4076
        %v4078 = vpop.xlane.xlu0 %4077
        %v4079 = vmax.f32 %v2070, %v2072
        %4080 = vmax.xlane.f32.xlu0 %v4079
        %v4081 = vpop.xlane.xlu0 %4080
        %v4082 = vmax.f32 %v2074, %v2076
        %4083 = vmax.xlane.f32.xlu0 %v4082
        %v4084 = vpop.xlane.xlu0 %4083
        %v4085 = vmax.f32 %v2193, %v2195
        %4086 = vmax.xlane.f32.xlu0 %v4085
        %v4087 = vpop.xlane.xlu0 %4086
        %v4088 = vmax.f32 %v2197, %v2199
        %4089 = vmax.xlane.f32.xlu0 %v4088
        %v4090 = vpop.xlane.xlu0 %4089
        %v4091 = vmax.f32 %v2203, %v2205
        %4092 = vmax.xlane.f32.xlu0 %v4091
        %v4093 = vpop.xlane.xlu0 %4092
        %v4094 = vmax.f32 %v2207, %v2209
        %4095 = vmax.xlane.f32.xlu0 %v4094
        %v4096 = vpop.xlane.xlu0 %4095
        %v4097 = vmax.f32 %v2213, %v2215
        %4098 = vmax.xlane.f32.xlu0 %v4097
        %v4099 = vpop.xlane.xlu0 %4098
        %v4100 = vmax.f32 %v2217, %v2219
        %4101 = vmax.xlane.f32.xlu0 %v4100
        %v4102 = vpop.xlane.xlu0 %4101
        %v4103 = vmax.f32 %v2223, %v2225
        %4104 = vmax.xlane.f32.xlu0 %v4103
        %v4105 = vpop.xlane.xlu0 %4104
        %v4106 = vmax.f32 %v2227, %v2229
        %4107 = vmax.xlane.f32.xlu0 %v4106
        %v4108 = vpop.xlane.xlu0 %4107
        %v4109 = vmax.f32 %v2233, %v2235
        %4110 = vmax.xlane.f32.xlu0 %v4109
        %v4111 = vpop.xlane.xlu0 %4110
        %v4112 = vmax.f32 %v2237, %v2239
        %4113 = vmax.xlane.f32.xlu0 %v4112
        %v4114 = vpop.xlane.xlu0 %4113
        %v4115 = vmax.f32 %v2243, %v2245
        %4116 = vmax.xlane.f32.xlu0 %v4115
        %v4117 = vpop.xlane.xlu0 %4116
        %v4118 = vmax.f32 %v2247, %v2249
        %4119 = vmax.xlane.f32.xlu0 %v4118
        %v4120 = vpop.xlane.xlu0 %4119
        %v4121 = vmax.f32 %v2253, %v2255
        %4122 = vmax.xlane.f32.xlu0 %v4121
        %v4123 = vpop.xlane.xlu0 %4122
        %v4124 = vmax.f32 %v2257, %v2259
        %4125 = vmax.xlane.f32.xlu0 %v4124
        %v4126 = vpop.xlane.xlu0 %4125
        %v4127 = vmax.f32 %v2263, %v2265
        %4128 = vmax.xlane.f32.xlu0 %v4127
        %v4129 = vpop.xlane.xlu0 %4128
        %v4130 = vmax.f32 %v2267, %v2269
        %4131 = vmax.xlane.f32.xlu0 %v4130
        %v4132 = vpop.xlane.xlu0 %4131
        %v4133 = vmax.f32 %v2273, %v2275
        %4134 = vmax.xlane.f32.xlu0 %v4133
        %v4135 = vpop.xlane.xlu0 %4134
        %v4136 = vmax.f32 %v2277, %v2279
        %4137 = vmax.xlane.f32.xlu0 %v4136
        %v4138 = vpop.xlane.xlu0 %4137
        %v4139 = vmax.f32 %v2283, %v2285
        %4140 = vmax.xlane.f32.xlu0 %v4139
        %v4141 = vpop.xlane.xlu0 %4140
        %v4142 = vmax.f32 %v2287, %v2289
        %4143 = vmax.xlane.f32.xlu0 %v4142
        %v4144 = vpop.xlane.xlu0 %4143
        %v4145 = vmax.f32 %v2293, %v2295
        %4146 = vmax.xlane.f32.xlu0 %v4145
        %v4147 = vpop.xlane.xlu0 %4146
        %v4148 = vmax.f32 %v2297, %v2299
        %4149 = vmax.xlane.f32.xlu0 %v4148
        %v4150 = vpop.xlane.xlu0 %4149
        %v4151 = vmax.f32 %v2303, %v2305
        %4152 = vmax.xlane.f32.xlu0 %v4151
        %v4153 = vpop.xlane.xlu0 %4152
        %v4154 = vmax.f32 %v2307, %v2309
        %4155 = vmax.xlane.f32.xlu0 %v4154
        %v4156 = vpop.xlane.xlu0 %4155
        %v4157 = vmax.f32 %v2313, %v2315
        %4158 = vmax.xlane.f32.xlu0 %v4157
        %v4159 = vpop.xlane.xlu0 %4158
        %v4160 = vmax.f32 %v2317, %v2319
        %4161 = vmax.xlane.f32.xlu0 %v4160
        %v4162 = vpop.xlane.xlu0 %4161
        %v4163 = vmax.f32 %v2323, %v2325
        %4164 = vmax.xlane.f32.xlu0 %v4163
        %v4165 = vpop.xlane.xlu0 %4164
        %v4166 = vmax.f32 %v2327, %v2329
        %4167 = vmax.xlane.f32.xlu0 %v4166
        %v4168 = vpop.xlane.xlu0 %4167
        %v4169 = vmax.f32 %v2333, %v2335
        %4170 = vmax.xlane.f32.xlu0 %v4169
        %v4171 = vpop.xlane.xlu0 %4170
        %v4172 = vmax.f32 %v2337, %v2339
        %4173 = vmax.xlane.f32.xlu0 %v4172
        %v4174 = vpop.xlane.xlu0 %4173
        %v4175 = vmax.f32 %v2343, %v2345
        %4176 = vmax.xlane.f32.xlu0 %v4175
        %v4177 = vpop.xlane.xlu0 %4176
        %v4178 = vmax.f32 %v2347, %v2349
        %4179 = vmax.xlane.f32.xlu0 %v4178
        %v4180 = vpop.xlane.xlu0 %4179
        %v4181 = vmax.f32 %v2466, %v2468
        %4182 = vmax.xlane.f32.xlu0 %v4181
        %v4183 = vpop.xlane.xlu0 %4182
        %v4184 = vmax.f32 %v2470, %v2472
        %4185 = vmax.xlane.f32.xlu0 %v4184
        %v4186 = vpop.xlane.xlu0 %4185
        %v4187 = vmax.f32 %v2476, %v2478
        %4188 = vmax.xlane.f32.xlu0 %v4187
        %v4189 = vpop.xlane.xlu0 %4188
        %v4190 = vmax.f32 %v2480, %v2482
        %4191 = vmax.xlane.f32.xlu0 %v4190
        %v4192 = vpop.xlane.xlu0 %4191
        %v4193 = vmax.f32 %v2486, %v2488
        %4194 = vmax.xlane.f32.xlu0 %v4193
        %v4195 = vpop.xlane.xlu0 %4194
        %v4196 = vmax.f32 %v2490, %v2492
        %4197 = vmax.xlane.f32.xlu0 %v4196
        %v4198 = vpop.xlane.xlu0 %4197
        %v4199 = vmax.f32 %v2496, %v2498
        %4200 = vmax.xlane.f32.xlu0 %v4199
        %v4201 = vpop.xlane.xlu0 %4200
        %v4202 = vmax.f32 %v2500, %v2502
        %4203 = vmax.xlane.f32.xlu0 %v4202
        %v4204 = vpop.xlane.xlu0 %4203
        %v4205 = vmax.f32 %v2506, %v2508
        %4206 = vmax.xlane.f32.xlu0 %v4205
        %v4207 = vpop.xlane.xlu0 %4206
        %v4208 = vmax.f32 %v2510, %v2512
        %4209 = vmax.xlane.f32.xlu0 %v4208
        %v4210 = vpop.xlane.xlu0 %4209
        %v4211 = vmax.f32 %v2516, %v2518
        %4212 = vmax.xlane.f32.xlu0 %v4211
        %v4213 = vpop.xlane.xlu0 %4212
        %v4214 = vmax.f32 %v2520, %v2522
        %4215 = vmax.xlane.f32.xlu0 %v4214
        %v4216 = vpop.xlane.xlu0 %4215
        %v4217 = vmax.f32 %v2526, %v2528
        %4218 = vmax.xlane.f32.xlu0 %v4217
        %v4219 = vpop.xlane.xlu0 %4218
        %v4220 = vmax.f32 %v2530, %v2532
        %4221 = vmax.xlane.f32.xlu0 %v4220
        %v4222 = vpop.xlane.xlu0 %4221
        %v4223 = vmax.f32 %v2536, %v2538
        %4224 = vmax.xlane.f32.xlu0 %v4223
        %v4225 = vpop.xlane.xlu0 %4224
        %v4226 = vmax.f32 %v2540, %v2542
        %4227 = vmax.xlane.f32.xlu0 %v4226
        %v4228 = vpop.xlane.xlu0 %4227
        %v4229 = vmax.f32 %v2546, %v2548
        %4230 = vmax.xlane.f32.xlu0 %v4229
        %v4231 = vpop.xlane.xlu0 %4230
        %v4232 = vmax.f32 %v2550, %v2552
        %4233 = vmax.xlane.f32.xlu0 %v4232
        %v4234 = vpop.xlane.xlu0 %4233
        %v4235 = vmax.f32 %v2556, %v2558
        %4236 = vmax.xlane.f32.xlu0 %v4235
        %v4237 = vpop.xlane.xlu0 %4236
        %v4238 = vmax.f32 %v2560, %v2562
        %4239 = vmax.xlane.f32.xlu0 %v4238
        %v4240 = vpop.xlane.xlu0 %4239
        %v4241 = vmax.f32 %v2566, %v2568
        %4242 = vmax.xlane.f32.xlu0 %v4241
        %v4243 = vpop.xlane.xlu0 %4242
        %v4244 = vmax.f32 %v2570, %v2572
        %4245 = vmax.xlane.f32.xlu0 %v4244
        %v4246 = vpop.xlane.xlu0 %4245
        %v4247 = vmax.f32 %v2576, %v2578
        %4248 = vmax.xlane.f32.xlu0 %v4247
        %v4249 = vpop.xlane.xlu0 %4248
        %v4250 = vmax.f32 %v2580, %v2582
        %4251 = vmax.xlane.f32.xlu0 %v4250
        %v4252 = vpop.xlane.xlu0 %4251
        %v4253 = vmax.f32 %v2586, %v2588
        %4254 = vmax.xlane.f32.xlu0 %v4253
        %v4255 = vpop.xlane.xlu0 %4254
        %v4256 = vmax.f32 %v2590, %v2592
        %4257 = vmax.xlane.f32.xlu0 %v4256
        %v4258 = vpop.xlane.xlu0 %4257
        %v4259 = vmax.f32 %v2596, %v2598
        %4260 = vmax.xlane.f32.xlu0 %v4259
        %v4261 = vpop.xlane.xlu0 %4260
        %v4262 = vmax.f32 %v2600, %v2602
        %4263 = vmax.xlane.f32.xlu0 %v4262
        %v4264 = vpop.xlane.xlu0 %4263
        %v4265 = vmax.f32 %v2606, %v2608
        %4266 = vmax.xlane.f32.xlu0 %v4265
        %v4267 = vpop.xlane.xlu0 %4266
        %v4268 = vmax.f32 %v2610, %v2612
        %4269 = vmax.xlane.f32.xlu0 %v4268
        %v4270 = vpop.xlane.xlu0 %4269
        %v4271 = vmax.f32 %v2616, %v2618
        %4272 = vmax.xlane.f32.xlu0 %v4271
        %v4273 = vpop.xlane.xlu0 %4272
        %v4274 = vmax.f32 %v2620, %v2622
        %4275 = vmax.xlane.f32.xlu0 %v4274
        %v4276 = vpop.xlane.xlu0 %4275
        %v4277 = vmax.f32 %v2739, %v2741
        %4278 = vmax.xlane.f32.xlu0 %v4277
        %v4279 = vpop.xlane.xlu0 %4278
        %v4280 = vmax.f32 %v2743, %v2745
        %4281 = vmax.xlane.f32.xlu0 %v4280
        %v4282 = vpop.xlane.xlu0 %4281
        %v4283 = vmax.f32 %v2749, %v2751
        %4284 = vmax.xlane.f32.xlu0 %v4283
        %v4285 = vpop.xlane.xlu0 %4284
        %v4286 = vmax.f32 %v2753, %v2755
        %4287 = vmax.xlane.f32.xlu0 %v4286
        %v4288 = vpop.xlane.xlu0 %4287
        %v4289 = vmax.f32 %v2759, %v2761
        %4290 = vmax.xlane.f32.xlu0 %v4289
        %v4291 = vpop.xlane.xlu0 %4290
        %v4292 = vmax.f32 %v2763, %v2765
        %4293 = vmax.xlane.f32.xlu0 %v4292
        %v4294 = vpop.xlane.xlu0 %4293
        %v4295 = vmax.f32 %v2769, %v2771
        %4296 = vmax.xlane.f32.xlu0 %v4295
        %v4297 = vpop.xlane.xlu0 %4296
        %v4298 = vmax.f32 %v2773, %v2775
        %4299 = vmax.xlane.f32.xlu0 %v4298
        %v4300 = vpop.xlane.xlu0 %4299
        %v4301 = vmax.f32 %v2779, %v2781
        %4302 = vmax.xlane.f32.xlu0 %v4301
        %v4303 = vpop.xlane.xlu0 %4302
        %v4304 = vmax.f32 %v2783, %v2785
        %4305 = vmax.xlane.f32.xlu0 %v4304
        %v4306 = vpop.xlane.xlu0 %4305
        %v4307 = vmax.f32 %v2789, %v2791
        %4308 = vmax.xlane.f32.xlu0 %v4307
        %v4309 = vpop.xlane.xlu0 %4308
        %v4310 = vmax.f32 %v2793, %v2795
        %4311 = vmax.xlane.f32.xlu0 %v4310
        %v4312 = vpop.xlane.xlu0 %4311
        %v4313 = vmax.f32 %v2799, %v2801
        %4314 = vmax.xlane.f32.xlu0 %v4313
        %v4315 = vpop.xlane.xlu0 %4314
        %v4316 = vmax.f32 %v2803, %v2805
        %4317 = vmax.xlane.f32.xlu0 %v4316
        %v4318 = vpop.xlane.xlu0 %4317
        %v4319 = vmax.f32 %v2809, %v2811
        %4320 = vmax.xlane.f32.xlu0 %v4319
        %v4321 = vpop.xlane.xlu0 %4320
        %v4322 = vmax.f32 %v2813, %v2815
        %4323 = vmax.xlane.f32.xlu0 %v4322
        %v4324 = vpop.xlane.xlu0 %4323
        %v4325 = vmax.f32 %v2819, %v2821
        %4326 = vmax.xlane.f32.xlu0 %v4325
        %v4327 = vpop.xlane.xlu0 %4326
        %v4328 = vmax.f32 %v2823, %v2825
        %4329 = vmax.xlane.f32.xlu0 %v4328
        %v4330 = vpop.xlane.xlu0 %4329
        %v4331 = vmax.f32 %v2829, %v2831
        %4332 = vmax.xlane.f32.xlu0 %v4331
        %v4333 = vpop.xlane.xlu0 %4332
        %v4334 = vmax.f32 %v2833, %v2835
        %4335 = vmax.xlane.f32.xlu0 %v4334
        %v4336 = vpop.xlane.xlu0 %4335
        %v4337 = vmax.f32 %v2839, %v2841
        %4338 = vmax.xlane.f32.xlu0 %v4337
        %v4339 = vpop.xlane.xlu0 %4338
        %v4340 = vmax.f32 %v2843, %v2845
        %4341 = vmax.xlane.f32.xlu0 %v4340
        %v4342 = vpop.xlane.xlu0 %4341
        %v4343 = vmax.f32 %v2849, %v2851
        %4344 = vmax.xlane.f32.xlu0 %v4343
        %v4345 = vpop.xlane.xlu0 %4344
        %v4346 = vmax.f32 %v2853, %v2855
        %4347 = vmax.xlane.f32.xlu0 %v4346
        %v4348 = vpop.xlane.xlu0 %4347
        %v4349 = vmax.f32 %v2859, %v2861
        %4350 = vmax.xlane.f32.xlu0 %v4349
        %v4351 = vpop.xlane.xlu0 %4350
        %v4352 = vmax.f32 %v2863, %v2865
        %4353 = vmax.xlane.f32.xlu0 %v4352
        %v4354 = vpop.xlane.xlu0 %4353
        %v4355 = vmax.f32 %v2869, %v2871
        %4356 = vmax.xlane.f32.xlu0 %v4355
        %v4357 = vpop.xlane.xlu0 %4356
        %v4358 = vmax.f32 %v2873, %v2875
        %4359 = vmax.xlane.f32.xlu0 %v4358
        %v4360 = vpop.xlane.xlu0 %4359
        %v4361 = vmax.f32 %v2879, %v2881
        %4362 = vmax.xlane.f32.xlu0 %v4361
        %v4363 = vpop.xlane.xlu0 %4362
        %v4364 = vmax.f32 %v2883, %v2885
        %4365 = vmax.xlane.f32.xlu0 %v4364
        %v4366 = vpop.xlane.xlu0 %4365
        %v4367 = vmax.f32 %v2889, %v2891
        %4368 = vmax.xlane.f32.xlu0 %v4367
        %v4369 = vpop.xlane.xlu0 %4368
        %v4370 = vmax.f32 %v2893, %v2895
        %4371 = vmax.xlane.f32.xlu0 %v4370
        %v4372 = vpop.xlane.xlu0 %4371
        %v4373 = vmax.f32 %v3012, %v3014
        %4374 = vmax.xlane.f32.xlu0 %v4373
        %v4375 = vpop.xlane.xlu0 %4374
        %v4376 = vmax.f32 %v3016, %v3018
        %4377 = vmax.xlane.f32.xlu0 %v4376
        %v4378 = vpop.xlane.xlu0 %4377
        %v4379 = vmax.f32 %v3022, %v3024
        %4380 = vmax.xlane.f32.xlu0 %v4379
        %v4381 = vpop.xlane.xlu0 %4380
        %v4382 = vmax.f32 %v3026, %v3028
        %4383 = vmax.xlane.f32.xlu0 %v4382
        %v4384 = vpop.xlane.xlu0 %4383
        %v4385 = vmax.f32 %v3032, %v3034
        %4386 = vmax.xlane.f32.xlu0 %v4385
        %v4387 = vpop.xlane.xlu0 %4386
        %v4388 = vmax.f32 %v3036, %v3038
        %4389 = vmax.xlane.f32.xlu0 %v4388
        %v4390 = vpop.xlane.xlu0 %4389
        %v4391 = vmax.f32 %v3042, %v3044
        %4392 = vmax.xlane.f32.xlu0 %v4391
        %v4393 = vpop.xlane.xlu0 %4392
        %v4394 = vmax.f32 %v3046, %v3048
        %4395 = vmax.xlane.f32.xlu0 %v4394
        %v4396 = vpop.xlane.xlu0 %4395
        %v4397 = vmax.f32 %v3052, %v3054
        %4398 = vmax.xlane.f32.xlu0 %v4397
        %v4399 = vpop.xlane.xlu0 %4398
        %v4400 = vmax.f32 %v3056, %v3058
        %4401 = vmax.xlane.f32.xlu0 %v4400
        %v4402 = vpop.xlane.xlu0 %4401
        %v4403 = vmax.f32 %v3062, %v3064
        %4404 = vmax.xlane.f32.xlu0 %v4403
        %v4405 = vpop.xlane.xlu0 %4404
        %v4406 = vmax.f32 %v3066, %v3068
        %4407 = vmax.xlane.f32.xlu0 %v4406
        %v4408 = vpop.xlane.xlu0 %4407
        %v4409 = vmax.f32 %v3072, %v3074
        %4410 = vmax.xlane.f32.xlu0 %v4409
        %v4411 = vpop.xlane.xlu0 %4410
        %v4412 = vmax.f32 %v3076, %v3078
        %4413 = vmax.xlane.f32.xlu0 %v4412
        %v4414 = vpop.xlane.xlu0 %4413
        %v4415 = vmax.f32 %v3082, %v3084
        %4416 = vmax.xlane.f32.xlu0 %v4415
        %v4417 = vpop.xlane.xlu0 %4416
        %v4418 = vmax.f32 %v3086, %v3088
        %4419 = vmax.xlane.f32.xlu0 %v4418
        %v4420 = vpop.xlane.xlu0 %4419
        %v4421 = vmax.f32 %v3092, %v3094
        %4422 = vmax.xlane.f32.xlu0 %v4421
        %v4423 = vpop.xlane.xlu0 %4422
        %v4424 = vmax.f32 %v3096, %v3098
        %4425 = vmax.xlane.f32.xlu0 %v4424
        %v4426 = vpop.xlane.xlu0 %4425
        %v4427 = vmax.f32 %v3102, %v3104
        %4428 = vmax.xlane.f32.xlu0 %v4427
        %v4429 = vpop.xlane.xlu0 %4428
        %v4430 = vmax.f32 %v3106, %v3108
        %4431 = vmax.xlane.f32.xlu0 %v4430
        %v4432 = vpop.xlane.xlu0 %4431
        %v4433 = vmax.f32 %v3112, %v3114
        %4434 = vmax.xlane.f32.xlu0 %v4433
        %v4435 = vpop.xlane.xlu0 %4434
        %v4436 = vmax.f32 %v3116, %v3118
        %4437 = vmax.xlane.f32.xlu0 %v4436
        %v4438 = vpop.xlane.xlu0 %4437
        %v4439 = vmax.f32 %v3122, %v3124
        %4440 = vmax.xlane.f32.xlu0 %v4439
        %v4441 = vpop.xlane.xlu0 %4440
        %v4442 = vmax.f32 %v3126, %v3128
        %4443 = vmax.xlane.f32.xlu0 %v4442
        %v4444 = vpop.xlane.xlu0 %4443
        %v4445 = vmax.f32 %v3132, %v3134
        %4446 = vmax.xlane.f32.xlu0 %v4445
        %v4447 = vpop.xlane.xlu0 %4446
        %v4448 = vmax.f32 %v3136, %v3138
        %4449 = vmax.xlane.f32.xlu0 %v4448
        %v4450 = vpop.xlane.xlu0 %4449
        %v4451 = vmax.f32 %v3142, %v3144
        %4452 = vmax.xlane.f32.xlu0 %v4451
        %v4453 = vpop.xlane.xlu0 %4452
        %v4454 = vmax.f32 %v3146, %v3148
        %4455 = vmax.xlane.f32.xlu0 %v4454
        %v4456 = vpop.xlane.xlu0 %4455
        %v4457 = vmax.f32 %v3152, %v3154
        %4458 = vmax.xlane.f32.xlu0 %v4457
        %v4459 = vpop.xlane.xlu0 %4458
        %v4460 = vmax.f32 %v3156, %v3158
        %4461 = vmax.xlane.f32.xlu0 %v4460
        %v4462 = vpop.xlane.xlu0 %4461
        %v4463 = vmax.f32 %v3162, %v3164
        %4464 = vmax.xlane.f32.xlu0 %v4463
        %v4465 = vpop.xlane.xlu0 %4464
        %v4466 = vmax.f32 %v3166, %v3168
        %4467 = vmax.xlane.f32.xlu0 %v4466
        %v4468 = vpop.xlane.xlu0 %4467
        %v4469 = vmax.f32 %v3285, %v3287
        %4470 = vmax.xlane.f32.xlu0 %v4469
        %v4471 = vpop.xlane.xlu0 %4470
        %v4472 = vmax.f32 %v3289, %v3291
        %4473 = vmax.xlane.f32.xlu0 %v4472
        %v4474 = vpop.xlane.xlu0 %4473
        %v4475 = vmax.f32 %v3295, %v3297
        %4476 = vmax.xlane.f32.xlu0 %v4475
        %v4477 = vpop.xlane.xlu0 %4476
        %v4478 = vmax.f32 %v3299, %v3301
        %4479 = vmax.xlane.f32.xlu0 %v4478
        %v4480 = vpop.xlane.xlu0 %4479
        %v4481 = vmax.f32 %v3305, %v3307
        %4482 = vmax.xlane.f32.xlu0 %v4481
        %v4483 = vpop.xlane.xlu0 %4482
        %v4484 = vmax.f32 %v3309, %v3311
        %4485 = vmax.xlane.f32.xlu0 %v4484
        %v4486 = vpop.xlane.xlu0 %4485
        %v4487 = vmax.f32 %v3315, %v3317
        %4488 = vmax.xlane.f32.xlu0 %v4487
        %v4489 = vpop.xlane.xlu0 %4488
        %v4490 = vmax.f32 %v3319, %v3321
        %4491 = vmax.xlane.f32.xlu0 %v4490
        %v4492 = vpop.xlane.xlu0 %4491
        %v4493 = vmax.f32 %v3325, %v3327
        %4494 = vmax.xlane.f32.xlu0 %v4493
        %v4495 = vpop.xlane.xlu0 %4494
        %v4496 = vmax.f32 %v3329, %v3331
        %4497 = vmax.xlane.f32.xlu0 %v4496
        %v4498 = vpop.xlane.xlu0 %4497
        %v4499 = vmax.f32 %v3335, %v3337
        %4500 = vmax.xlane.f32.xlu0 %v4499
        %v4501 = vpop.xlane.xlu0 %4500
        %v4502 = vmax.f32 %v3339, %v3341
        %4503 = vmax.xlane.f32.xlu0 %v4502
        %v4504 = vpop.xlane.xlu0 %4503
        %v4505 = vmax.f32 %v3345, %v3347
        %4506 = vmax.xlane.f32.xlu0 %v4505
        %v4507 = vpop.xlane.xlu0 %4506
        %v4508 = vmax.f32 %v3349, %v3351
        %4509 = vmax.xlane.f32.xlu0 %v4508
        %v4510 = vpop.xlane.xlu0 %4509
        %v4511 = vmax.f32 %v3355, %v3357
        %4512 = vmax.xlane.f32.xlu0 %v4511
        %v4513 = vpop.xlane.xlu0 %4512
        %v4514 = vmax.f32 %v3359, %v3361
        %4515 = vmax.xlane.f32.xlu0 %v4514
        %v4516 = vpop.xlane.xlu0 %4515
        %v4517 = vmax.f32 %v3365, %v3367
        %4518 = vmax.xlane.f32.xlu0 %v4517
        %v4519 = vpop.xlane.xlu0 %4518
        %v4520 = vmax.f32 %v3369, %v3371
        %4521 = vmax.xlane.f32.xlu0 %v4520
        %v4522 = vpop.xlane.xlu0 %4521
        %v4523 = vmax.f32 %v3375, %v3377
        %4524 = vmax.xlane.f32.xlu0 %v4523
        %v4525 = vpop.xlane.xlu0 %4524
        %v4526 = vmax.f32 %v3379, %v3381
        %4527 = vmax.xlane.f32.xlu0 %v4526
        %v4528 = vpop.xlane.xlu0 %4527
        %v4529 = vmax.f32 %v3385, %v3387
        %4530 = vmax.xlane.f32.xlu0 %v4529
        %v4531 = vpop.xlane.xlu0 %4530
        %v4532 = vmax.f32 %v3389, %v3391
        %4533 = vmax.xlane.f32.xlu0 %v4532
        %v4534 = vpop.xlane.xlu0 %4533
        %v4535 = vmax.f32 %v3395, %v3397
        %4536 = vmax.xlane.f32.xlu0 %v4535
        %v4537 = vpop.xlane.xlu0 %4536
        %v4538 = vmax.f32 %v3399, %v3401
        %4539 = vmax.xlane.f32.xlu0 %v4538
        %v4540 = vpop.xlane.xlu0 %4539
        %v4541 = vmax.f32 %v3405, %v3407
        %4542 = vmax.xlane.f32.xlu0 %v4541
        %v4543 = vpop.xlane.xlu0 %4542
        %v4544 = vmax.f32 %v3409, %v3411
        %4545 = vmax.xlane.f32.xlu0 %v4544
        %v4546 = vpop.xlane.xlu0 %4545
        %v4547 = vmax.f32 %v3415, %v3417
        %4548 = vmax.xlane.f32.xlu0 %v4547
        %v4549 = vpop.xlane.xlu0 %4548
        %v4550 = vmax.f32 %v3419, %v3421
        %4551 = vmax.xlane.f32.xlu0 %v4550
        %v4552 = vpop.xlane.xlu0 %4551
        %v4553 = vmax.f32 %v3425, %v3427
        %4554 = vmax.xlane.f32.xlu0 %v4553
        %v4555 = vpop.xlane.xlu0 %4554
        %v4556 = vmax.f32 %v3429, %v3431
        %4557 = vmax.xlane.f32.xlu0 %v4556
        %v4558 = vpop.xlane.xlu0 %4557
        %v4559 = vmax.f32 %v3435, %v3437
        %4560 = vmax.xlane.f32.xlu0 %v4559
        %v4561 = vpop.xlane.xlu0 %4560
        %v4562 = vmax.f32 %v3439, %v3441
        %4563 = vmax.xlane.f32.xlu0 %v4562
        %v4564 = vpop.xlane.xlu0 %4563
        %v4565 = vmax.f32 %v3558, %v3560
        %4566 = vmax.xlane.f32.xlu0 %v4565
        %v4567 = vpop.xlane.xlu0 %4566
        %v4568 = vmax.f32 %v3562, %v3564
        %4569 = vmax.xlane.f32.xlu0 %v4568
        %v4570 = vpop.xlane.xlu0 %4569
        %v4571 = vmax.f32 %v3568, %v3570
        %4572 = vmax.xlane.f32.xlu0 %v4571
        %v4573 = vpop.xlane.xlu0 %4572
        %v4574 = vmax.f32 %v3572, %v3574
        %4575 = vmax.xlane.f32.xlu0 %v4574
        %v4576 = vpop.xlane.xlu0 %4575
        %v4577 = vmax.f32 %v3578, %v3580
        %4578 = vmax.xlane.f32.xlu0 %v4577
        %v4579 = vpop.xlane.xlu0 %4578
        %v4580 = vmax.f32 %v3582, %v3584
        %4581 = vmax.xlane.f32.xlu0 %v4580
        %v4582 = vpop.xlane.xlu0 %4581
        %v4583 = vmax.f32 %v3588, %v3590
        %4584 = vmax.xlane.f32.xlu0 %v4583
        %v4585 = vpop.xlane.xlu0 %4584
        %v4586 = vmax.f32 %v3592, %v3594
        %4587 = vmax.xlane.f32.xlu0 %v4586
        %v4588 = vpop.xlane.xlu0 %4587
        %v4589 = vmax.f32 %v3598, %v3600
        %4590 = vmax.xlane.f32.xlu0 %v4589
        %v4591 = vpop.xlane.xlu0 %4590
        %v4592 = vmax.f32 %v3602, %v3604
        %4593 = vmax.xlane.f32.xlu0 %v4592
        %v4594 = vpop.xlane.xlu0 %4593
        %v4595 = vmax.f32 %v3608, %v3610
        %4596 = vmax.xlane.f32.xlu0 %v4595
        %v4597 = vpop.xlane.xlu0 %4596
        %v4598 = vmax.f32 %v3612, %v3614
        %4599 = vmax.xlane.f32.xlu0 %v4598
        %v4600 = vpop.xlane.xlu0 %4599
        %v4601 = vmax.f32 %v3618, %v3620
        %4602 = vmax.xlane.f32.xlu0 %v4601
        %v4603 = vpop.xlane.xlu0 %4602
        %v4604 = vmax.f32 %v3622, %v3624
        %4605 = vmax.xlane.f32.xlu0 %v4604
        %v4606 = vpop.xlane.xlu0 %4605
        %v4607 = vmax.f32 %v3628, %v3630
        %4608 = vmax.xlane.f32.xlu0 %v4607
        %v4609 = vpop.xlane.xlu0 %4608
        %v4610 = vmax.f32 %v3632, %v3634
        %4611 = vmax.xlane.f32.xlu0 %v4610
        %v4612 = vpop.xlane.xlu0 %4611
        %v4613 = vmax.f32 %v3638, %v3640
        %4614 = vmax.xlane.f32.xlu0 %v4613
        %v4615 = vpop.xlane.xlu0 %4614
        %v4616 = vmax.f32 %v3642, %v3644
        %4617 = vmax.xlane.f32.xlu0 %v4616
        %v4618 = vpop.xlane.xlu0 %4617
        %v4619 = vmax.f32 %v3648, %v3650
        %4620 = vmax.xlane.f32.xlu0 %v4619
        %v4621 = vpop.xlane.xlu0 %4620
        %v4622 = vmax.f32 %v3652, %v3654
        %4623 = vmax.xlane.f32.xlu0 %v4622
        %v4624 = vpop.xlane.xlu0 %4623
        %v4625 = vmax.f32 %v3658, %v3660
        %4626 = vmax.xlane.f32.xlu0 %v4625
        %v4627 = vpop.xlane.xlu0 %4626
        %v4628 = vmax.f32 %v3662, %v3664
        %4629 = vmax.xlane.f32.xlu0 %v4628
        %v4630 = vpop.xlane.xlu0 %4629
        %v4631 = vmax.f32 %v3668, %v3670
        %4632 = vmax.xlane.f32.xlu0 %v4631
        %v4633 = vpop.xlane.xlu0 %4632
        %v4634 = vmax.f32 %v3672, %v3674
        %4635 = vmax.xlane.f32.xlu0 %v4634
        %v4636 = vpop.xlane.xlu0 %4635
        %v4637 = vmax.f32 %v3678, %v3680
        %4638 = vmax.xlane.f32.xlu0 %v4637
        %v4639 = vpop.xlane.xlu0 %4638
        %v4640 = vmax.f32 %v3682, %v3684
        %4641 = vmax.xlane.f32.xlu0 %v4640
        %v4642 = vpop.xlane.xlu0 %4641
        %v4643 = vmax.f32 %v3688, %v3690
        %4644 = vmax.xlane.f32.xlu0 %v4643
        %v4645 = vpop.xlane.xlu0 %4644
        %v4646 = vmax.f32 %v3692, %v3694
        %4647 = vmax.xlane.f32.xlu0 %v4646
        %v4648 = vpop.xlane.xlu0 %4647
        %v4649 = vmax.f32 %v3698, %v3700
        %4650 = vmax.xlane.f32.xlu0 %v4649
        %v4651 = vpop.xlane.xlu0 %4650
        %v4652 = vmax.f32 %v3702, %v3704
        %4653 = vmax.xlane.f32.xlu0 %v4652
        %v4654 = vpop.xlane.xlu0 %4653
        %v4655 = vmax.f32 %v3708, %v3710
        %4656 = vmax.xlane.f32.xlu0 %v4655
        %v4657 = vpop.xlane.xlu0 %4656
        %v4658 = vmax.f32 %v3712, %v3714
        %4659 = vmax.xlane.f32.xlu0 %v4658
        %v4660 = vpop.xlane.xlu0 %4659
        %v4661 = vmax.f32 %v3831, %v3833
        %4662 = vmax.xlane.f32.xlu0 %v4661
        %v4663 = vpop.xlane.xlu0 %4662
        %v4664 = vmax.f32 %v3835, %v3837
        %4665 = vmax.xlane.f32.xlu0 %v4664
        %v4666 = vpop.xlane.xlu0 %4665
        %v4667 = vmax.f32 %v3841, %v3843
        %4668 = vmax.xlane.f32.xlu0 %v4667
        %v4669 = vpop.xlane.xlu0 %4668
        %v4670 = vmax.f32 %v3845, %v3847
        %4671 = vmax.xlane.f32.xlu0 %v4670
        %v4672 = vpop.xlane.xlu0 %4671
        %v4673 = vmax.f32 %v3851, %v3853
        %4674 = vmax.xlane.f32.xlu0 %v4673
        %v4675 = vpop.xlane.xlu0 %4674
        %v4676 = vmax.f32 %v3855, %v3857
        %4677 = vmax.xlane.f32.xlu0 %v4676
        %v4678 = vpop.xlane.xlu0 %4677
        %v4679 = vmax.f32 %v3861, %v3863
        %4680 = vmax.xlane.f32.xlu0 %v4679
        %v4681 = vpop.xlane.xlu0 %4680
        %v4682 = vmax.f32 %v3865, %v3867
        %4683 = vmax.xlane.f32.xlu0 %v4682
        %v4684 = vpop.xlane.xlu0 %4683
        %v4685 = vmax.f32 %v3871, %v3873
        %4686 = vmax.xlane.f32.xlu0 %v4685
        %v4687 = vpop.xlane.xlu0 %4686
        %v4688 = vmax.f32 %v3875, %v3877
        %4689 = vmax.xlane.f32.xlu0 %v4688
        %v4690 = vpop.xlane.xlu0 %4689
        %v4691 = vmax.f32 %v3881, %v3883
        %4692 = vmax.xlane.f32.xlu0 %v4691
        %v4693 = vpop.xlane.xlu0 %4692
        %v4694 = vmax.f32 %v3885, %v3887
        %4695 = vmax.xlane.f32.xlu0 %v4694
        %v4696 = vpop.xlane.xlu0 %4695
        %v4697 = vmax.f32 %v3891, %v3893
        %4698 = vmax.xlane.f32.xlu0 %v4697
        %v4699 = vpop.xlane.xlu0 %4698
        %v4700 = vmax.f32 %v3895, %v3897
        %4701 = vmax.xlane.f32.xlu0 %v4700
        %v4702 = vpop.xlane.xlu0 %4701
        %v4703 = vmax.f32 %v3901, %v3903
        %4704 = vmax.xlane.f32.xlu0 %v4703
        %v4705 = vpop.xlane.xlu0 %4704
        %v4706 = vmax.f32 %v3905, %v3907
        %4707 = vmax.xlane.f32.xlu0 %v4706
        %v4708 = vpop.xlane.xlu0 %4707
        %v4709 = vmax.f32 %v3911, %v3913
        %4710 = vmax.xlane.f32.xlu0 %v4709
        %v4711 = vpop.xlane.xlu0 %4710
        %v4712 = vmax.f32 %v3915, %v3917
        %4713 = vmax.xlane.f32.xlu0 %v4712
        %v4714 = vpop.xlane.xlu0 %4713
        %v4715 = vmax.f32 %v3921, %v3923
        %4716 = vmax.xlane.f32.xlu0 %v4715
        %v4717 = vpop.xlane.xlu0 %4716
        %v4718 = vmax.f32 %v3925, %v3927
        %4719 = vmax.xlane.f32.xlu0 %v4718
        %v4720 = vpop.xlane.xlu0 %4719
        %v4721 = vmax.f32 %v3931, %v3933
        %4722 = vmax.xlane.f32.xlu0 %v4721
        %v4723 = vpop.xlane.xlu0 %4722
        %v4724 = vmax.f32 %v3935, %v3937
        %4725 = vmax.xlane.f32.xlu0 %v4724
        %v4726 = vpop.xlane.xlu0 %4725
        %v4727 = vmax.f32 %v3941, %v3943
        %4728 = vmax.xlane.f32.xlu0 %v4727
        %v4729 = vpop.xlane.xlu0 %4728
        %v4730 = vmax.f32 %v3945, %v3947
        %4731 = vmax.xlane.f32.xlu0 %v4730
        %v4732 = vpop.xlane.xlu0 %4731
        %v4733 = vmax.f32 %v3951, %v3953
        %4734 = vmax.xlane.f32.xlu0 %v4733
        %v4735 = vpop.xlane.xlu0 %4734
        %v4736 = vmax.f32 %v3955, %v3957
        %4737 = vmax.xlane.f32.xlu0 %v4736
        %v4738 = vpop.xlane.xlu0 %4737
        %v4739 = vmax.f32 %v3961, %v3963
        %4740 = vmax.xlane.f32.xlu0 %v4739
        %v4741 = vpop.xlane.xlu0 %4740
        %v4742 = vmax.f32 %v3965, %v3967
        %4743 = vmax.xlane.f32.xlu0 %v4742
        %v4744 = vpop.xlane.xlu0 %4743
        %v4745 = vmax.f32 %v3971, %v3973
        %4746 = vmax.xlane.f32.xlu0 %v4745
        %v4747 = vpop.xlane.xlu0 %4746
        %v4748 = vmax.f32 %v3975, %v3977
        %4749 = vmax.xlane.f32.xlu0 %v4748
        %v4750 = vpop.xlane.xlu0 %4749
        %v4751 = vmax.f32 %v3981, %v3983
        %4752 = vmax.xlane.f32.xlu0 %v4751
        %v4753 = vpop.xlane.xlu0 %4752
        %v4754 = vmax.f32 %v3985, %v3987
        %4755 = vmax.xlane.f32.xlu0 %v4754
        %v4756 = vpop.xlane.xlu0 %4755
        %v4757 = vsub.f32 %v1920, %v3991
        %v4758 = vsub.f32 %v1922, %v3991
        %v4759 = vsub.f32 %v1924, %v3994
        %v4760 = vsub.f32 %v1926, %v3994
        %v4761 = vsub.f32 %v1930, %v3997
        %v4762 = vsub.f32 %v1932, %v3997
        %v4763 = vsub.f32 %v1934, %v4000
        %v4764 = vsub.f32 %v1936, %v4000
        %v4765 = vsub.f32 %v1940, %v4003
        %v4766 = vsub.f32 %v1942, %v4003
        %v4767 = vsub.f32 %v1944, %v4006
        %v4768 = vsub.f32 %v1946, %v4006
        %v4769 = vsub.f32 %v1950, %v4009
        %v4770 = vsub.f32 %v1952, %v4009
        %v4771 = vsub.f32 %v1954, %v4012
        %v4772 = vsub.f32 %v1956, %v4012
        %v4773 = vsub.f32 %v1960, %v4015
        %v4774 = vsub.f32 %v1962, %v4015
        %v4775 = vsub.f32 %v1964, %v4018
        %v4776 = vsub.f32 %v1966, %v4018
        %v4777 = vsub.f32 %v1970, %v4021
        %v4778 = vsub.f32 %v1972, %v4021
        %v4779 = vsub.f32 %v1974, %v4024
        %v4780 = vsub.f32 %v1976, %v4024
        %v4781 = vsub.f32 %v1980, %v4027
        %v4782 = vsub.f32 %v1982, %v4027
        %v4783 = vsub.f32 %v1984, %v4030
        %v4784 = vsub.f32 %v1986, %v4030
        %v4785 = vsub.f32 %v1990, %v4033
        %v4786 = vsub.f32 %v1992, %v4033
        %v4787 = vsub.f32 %v1994, %v4036
        %v4788 = vsub.f32 %v1996, %v4036
        %v4789 = vsub.f32 %v2000, %v4039
        %v4790 = vsub.f32 %v2002, %v4039
        %v4791 = vsub.f32 %v2004, %v4042
        %v4792 = vsub.f32 %v2006, %v4042
        %v4793 = vsub.f32 %v2010, %v4045
        %v4794 = vsub.f32 %v2012, %v4045
        %v4795 = vsub.f32 %v2014, %v4048
        %v4796 = vsub.f32 %v2016, %v4048
        %v4797 = vsub.f32 %v2020, %v4051
        %v4798 = vsub.f32 %v2022, %v4051
        %v4799 = vsub.f32 %v2024, %v4054
        %v4800 = vsub.f32 %v2026, %v4054
        %v4801 = vsub.f32 %v2030, %v4057
        %v4802 = vsub.f32 %v2032, %v4057
        %v4803 = vsub.f32 %v2034, %v4060
        %v4804 = vsub.f32 %v2036, %v4060
        %v4805 = vsub.f32 %v2040, %v4063
        %v4806 = vsub.f32 %v2042, %v4063
        %v4807 = vsub.f32 %v2044, %v4066
        %v4808 = vsub.f32 %v2046, %v4066
        %v4809 = vsub.f32 %v2050, %v4069
        %v4810 = vsub.f32 %v2052, %v4069
        %v4811 = vsub.f32 %v2054, %v4072
        %v4812 = vsub.f32 %v2056, %v4072
        %v4813 = vsub.f32 %v2060, %v4075
        %v4814 = vsub.f32 %v2062, %v4075
        %v4815 = vsub.f32 %v2064, %v4078
        %v4816 = vsub.f32 %v2066, %v4078
        %v4817 = vsub.f32 %v2070, %v4081
        %v4818 = vsub.f32 %v2072, %v4081
        %v4819 = vsub.f32 %v2074, %v4084
        %v4820 = vsub.f32 %v2076, %v4084
        %v4821 = vsub.f32 %v2193, %v4087
        %v4822 = vsub.f32 %v2195, %v4087
        %v4823 = vsub.f32 %v2197, %v4090
        %v4824 = vsub.f32 %v2199, %v4090
        %v4825 = vsub.f32 %v2203, %v4093
        %v4826 = vsub.f32 %v2205, %v4093
        %v4827 = vsub.f32 %v2207, %v4096
        %v4828 = vsub.f32 %v2209, %v4096
        %v4829 = vsub.f32 %v2213, %v4099
        %v4830 = vsub.f32 %v2215, %v4099
        %v4831 = vsub.f32 %v2217, %v4102
        %v4832 = vsub.f32 %v2219, %v4102
        %v4833 = vsub.f32 %v2223, %v4105
        %v4834 = vsub.f32 %v2225, %v4105
        %v4835 = vsub.f32 %v2227, %v4108
        %v4836 = vsub.f32 %v2229, %v4108
        %v4837 = vsub.f32 %v2233, %v4111
        %v4838 = vsub.f32 %v2235, %v4111
        %v4839 = vsub.f32 %v2237, %v4114
        %v4840 = vsub.f32 %v2239, %v4114
        %v4841 = vsub.f32 %v2243, %v4117
        %v4842 = vsub.f32 %v2245, %v4117
        %v4843 = vsub.f32 %v2247, %v4120
        %v4844 = vsub.f32 %v2249, %v4120
        %v4845 = vsub.f32 %v2253, %v4123
        %v4846 = vsub.f32 %v2255, %v4123
        %v4847 = vsub.f32 %v2257, %v4126
        %v4848 = vsub.f32 %v2259, %v4126
        %v4849 = vsub.f32 %v2263, %v4129
        %v4850 = vsub.f32 %v2265, %v4129
        %v4851 = vsub.f32 %v2267, %v4132
        %v4852 = vsub.f32 %v2269, %v4132
        %v4853 = vsub.f32 %v2273, %v4135
        %v4854 = vsub.f32 %v2275, %v4135
        %v4855 = vsub.f32 %v2277, %v4138
        %v4856 = vsub.f32 %v2279, %v4138
        %v4857 = vsub.f32 %v2283, %v4141
        %v4858 = vsub.f32 %v2285, %v4141
        %v4859 = vsub.f32 %v2287, %v4144
        %v4860 = vsub.f32 %v2289, %v4144
        %v4861 = vsub.f32 %v2293, %v4147
        %v4862 = vsub.f32 %v2295, %v4147
        %v4863 = vsub.f32 %v2297, %v4150
        %v4864 = vsub.f32 %v2299, %v4150
        %v4865 = vsub.f32 %v2303, %v4153
        %v4866 = vsub.f32 %v2305, %v4153
        %v4867 = vsub.f32 %v2307, %v4156
        %v4868 = vsub.f32 %v2309, %v4156
        %v4869 = vsub.f32 %v2313, %v4159
        %v4870 = vsub.f32 %v2315, %v4159
        %v4871 = vsub.f32 %v2317, %v4162
        %v4872 = vsub.f32 %v2319, %v4162
        %v4873 = vsub.f32 %v2323, %v4165
        %v4874 = vsub.f32 %v2325, %v4165
        %v4875 = vsub.f32 %v2327, %v4168
        %v4876 = vsub.f32 %v2329, %v4168
        %v4877 = vsub.f32 %v2333, %v4171
        %v4878 = vsub.f32 %v2335, %v4171
        %v4879 = vsub.f32 %v2337, %v4174
        %v4880 = vsub.f32 %v2339, %v4174
        %v4881 = vsub.f32 %v2343, %v4177
        %v4882 = vsub.f32 %v2345, %v4177
        %v4883 = vsub.f32 %v2347, %v4180
        %v4884 = vsub.f32 %v2349, %v4180
        %v4885 = vsub.f32 %v2466, %v4183
        %v4886 = vsub.f32 %v2468, %v4183
        %v4887 = vsub.f32 %v2470, %v4186
        %v4888 = vsub.f32 %v2472, %v4186
        %v4889 = vsub.f32 %v2476, %v4189
        %v4890 = vsub.f32 %v2478, %v4189
        %v4891 = vsub.f32 %v2480, %v4192
        %v4892 = vsub.f32 %v2482, %v4192
        %v4893 = vsub.f32 %v2486, %v4195
        %v4894 = vsub.f32 %v2488, %v4195
        %v4895 = vsub.f32 %v2490, %v4198
        %v4896 = vsub.f32 %v2492, %v4198
        %v4897 = vsub.f32 %v2496, %v4201
        %v4898 = vsub.f32 %v2498, %v4201
        %v4899 = vsub.f32 %v2500, %v4204
        %v4900 = vsub.f32 %v2502, %v4204
        %v4901 = vsub.f32 %v2506, %v4207
        %v4902 = vsub.f32 %v2508, %v4207
        %v4903 = vsub.f32 %v2510, %v4210
        %v4904 = vsub.f32 %v2512, %v4210
        %v4905 = vsub.f32 %v2516, %v4213
        %v4906 = vsub.f32 %v2518, %v4213
        %v4907 = vsub.f32 %v2520, %v4216
        %v4908 = vsub.f32 %v2522, %v4216
        %v4909 = vsub.f32 %v2526, %v4219
        %v4910 = vsub.f32 %v2528, %v4219
        %v4911 = vsub.f32 %v2530, %v4222
        %v4912 = vsub.f32 %v2532, %v4222
        %v4913 = vsub.f32 %v2536, %v4225
        %v4914 = vsub.f32 %v2538, %v4225
        %v4915 = vsub.f32 %v2540, %v4228
        %v4916 = vsub.f32 %v2542, %v4228
        %v4917 = vsub.f32 %v2546, %v4231
        %v4918 = vsub.f32 %v2548, %v4231
        %v4919 = vsub.f32 %v2550, %v4234
        %v4920 = vsub.f32 %v2552, %v4234
        %v4921 = vsub.f32 %v2556, %v4237
        %v4922 = vsub.f32 %v2558, %v4237
        %v4923 = vsub.f32 %v2560, %v4240
        %v4924 = vsub.f32 %v2562, %v4240
        %v4925 = vsub.f32 %v2566, %v4243
        %v4926 = vsub.f32 %v2568, %v4243
        %v4927 = vsub.f32 %v2570, %v4246
        %v4928 = vsub.f32 %v2572, %v4246
        %v4929 = vsub.f32 %v2576, %v4249
        %v4930 = vsub.f32 %v2578, %v4249
        %v4931 = vsub.f32 %v2580, %v4252
        %v4932 = vsub.f32 %v2582, %v4252
        %v4933 = vsub.f32 %v2586, %v4255
        %v4934 = vsub.f32 %v2588, %v4255
        %v4935 = vsub.f32 %v2590, %v4258
        %v4936 = vsub.f32 %v2592, %v4258
        %v4937 = vsub.f32 %v2596, %v4261
        %v4938 = vsub.f32 %v2598, %v4261
        %v4939 = vsub.f32 %v2600, %v4264
        %v4940 = vsub.f32 %v2602, %v4264
        %v4941 = vsub.f32 %v2606, %v4267
        %v4942 = vsub.f32 %v2608, %v4267
        %v4943 = vsub.f32 %v2610, %v4270
        %v4944 = vsub.f32 %v2612, %v4270
        %v4945 = vsub.f32 %v2616, %v4273
        %v4946 = vsub.f32 %v2618, %v4273
        %v4947 = vsub.f32 %v2620, %v4276
        %v4948 = vsub.f32 %v2622, %v4276
        %v4949 = vsub.f32 %v2739, %v4279
        %v4950 = vsub.f32 %v2741, %v4279
        %v4951 = vsub.f32 %v2743, %v4282
        %v4952 = vsub.f32 %v2745, %v4282
        %v4953 = vsub.f32 %v2749, %v4285
        %v4954 = vsub.f32 %v2751, %v4285
        %v4955 = vsub.f32 %v2753, %v4288
        %v4956 = vsub.f32 %v2755, %v4288
        %v4957 = vsub.f32 %v2759, %v4291
        %v4958 = vsub.f32 %v2761, %v4291
        %v4959 = vsub.f32 %v2763, %v4294
        %v4960 = vsub.f32 %v2765, %v4294
        %v4961 = vsub.f32 %v2769, %v4297
        %v4962 = vsub.f32 %v2771, %v4297
        %v4963 = vsub.f32 %v2773, %v4300
        %v4964 = vsub.f32 %v2775, %v4300
        %v4965 = vsub.f32 %v2779, %v4303
        %v4966 = vsub.f32 %v2781, %v4303
        %v4967 = vsub.f32 %v2783, %v4306
        %v4968 = vsub.f32 %v2785, %v4306
        %v4969 = vsub.f32 %v2789, %v4309
        %v4970 = vsub.f32 %v2791, %v4309
        %v4971 = vsub.f32 %v2793, %v4312
        %v4972 = vsub.f32 %v2795, %v4312
        %v4973 = vsub.f32 %v2799, %v4315
        %v4974 = vsub.f32 %v2801, %v4315
        %v4975 = vsub.f32 %v2803, %v4318
        %v4976 = vsub.f32 %v2805, %v4318
        %v4977 = vsub.f32 %v2809, %v4321
        %v4978 = vsub.f32 %v2811, %v4321
        %v4979 = vsub.f32 %v2813, %v4324
        %v4980 = vsub.f32 %v2815, %v4324
        %v4981 = vsub.f32 %v2819, %v4327
        %v4982 = vsub.f32 %v2821, %v4327
        %v4983 = vsub.f32 %v2823, %v4330
        %v4984 = vsub.f32 %v2825, %v4330
        %v4985 = vsub.f32 %v2829, %v4333
        %v4986 = vsub.f32 %v2831, %v4333
        %v4987 = vsub.f32 %v2833, %v4336
        %v4988 = vsub.f32 %v2835, %v4336
        %v4989 = vsub.f32 %v2839, %v4339
        %v4990 = vsub.f32 %v2841, %v4339
        %v4991 = vsub.f32 %v2843, %v4342
        %v4992 = vsub.f32 %v2845, %v4342
        %v4993 = vsub.f32 %v2849, %v4345
        %v4994 = vsub.f32 %v2851, %v4345
        %v4995 = vsub.f32 %v2853, %v4348
        %v4996 = vsub.f32 %v2855, %v4348
        %v4997 = vsub.f32 %v2859, %v4351
        %v4998 = vsub.f32 %v2861, %v4351
        %v4999 = vsub.f32 %v2863, %v4354
        %v5000 = vsub.f32 %v2865, %v4354
        %v5001 = vsub.f32 %v2869, %v4357
        %v5002 = vsub.f32 %v2871, %v4357
        %v5003 = vsub.f32 %v2873, %v4360
        %v5004 = vsub.f32 %v2875, %v4360
        %v5005 = vsub.f32 %v2879, %v4363
        %v5006 = vsub.f32 %v2881, %v4363
        %v5007 = vsub.f32 %v2883, %v4366
        %v5008 = vsub.f32 %v2885, %v4366
        %v5009 = vsub.f32 %v2889, %v4369
        %v5010 = vsub.f32 %v2891, %v4369
        %v5011 = vsub.f32 %v2893, %v4372
        %v5012 = vsub.f32 %v2895, %v4372
        %v5013 = vsub.f32 %v3012, %v4375
        %v5014 = vsub.f32 %v3014, %v4375
        %v5015 = vsub.f32 %v3016, %v4378
        %v5016 = vsub.f32 %v3018, %v4378
        %v5017 = vsub.f32 %v3022, %v4381
        %v5018 = vsub.f32 %v3024, %v4381
        %v5019 = vsub.f32 %v3026, %v4384
        %v5020 = vsub.f32 %v3028, %v4384
        %v5021 = vsub.f32 %v3032, %v4387
        %v5022 = vsub.f32 %v3034, %v4387
        %v5023 = vsub.f32 %v3036, %v4390
        %v5024 = vsub.f32 %v3038, %v4390
        %v5025 = vsub.f32 %v3042, %v4393
        %v5026 = vsub.f32 %v3044, %v4393
        %v5027 = vsub.f32 %v3046, %v4396
        %v5028 = vsub.f32 %v3048, %v4396
        %v5029 = vsub.f32 %v3052, %v4399
        %v5030 = vsub.f32 %v3054, %v4399
        %v5031 = vsub.f32 %v3056, %v4402
        %v5032 = vsub.f32 %v3058, %v4402
        %v5033 = vsub.f32 %v3062, %v4405
        %v5034 = vsub.f32 %v3064, %v4405
        %v5035 = vsub.f32 %v3066, %v4408
        %v5036 = vsub.f32 %v3068, %v4408
        %v5037 = vsub.f32 %v3072, %v4411
        %v5038 = vsub.f32 %v3074, %v4411
        %v5039 = vsub.f32 %v3076, %v4414
        %v5040 = vsub.f32 %v3078, %v4414
        %v5041 = vsub.f32 %v3082, %v4417
        %v5042 = vsub.f32 %v3084, %v4417
        %v5043 = vsub.f32 %v3086, %v4420
        %v5044 = vsub.f32 %v3088, %v4420
        %v5045 = vsub.f32 %v3092, %v4423
        %v5046 = vsub.f32 %v3094, %v4423
        %v5047 = vsub.f32 %v3096, %v4426
        %v5048 = vsub.f32 %v3098, %v4426
        %v5049 = vsub.f32 %v3102, %v4429
        %v5050 = vsub.f32 %v3104, %v4429
        %v5051 = vsub.f32 %v3106, %v4432
        %v5052 = vsub.f32 %v3108, %v4432
        %v5053 = vsub.f32 %v3112, %v4435
        %v5054 = vsub.f32 %v3114, %v4435
        %v5055 = vsub.f32 %v3116, %v4438
        %v5056 = vsub.f32 %v3118, %v4438
        %v5057 = vsub.f32 %v3122, %v4441
        %v5058 = vsub.f32 %v3124, %v4441
        %v5059 = vsub.f32 %v3126, %v4444
        %v5060 = vsub.f32 %v3128, %v4444
        %v5061 = vsub.f32 %v3132, %v4447
        %v5062 = vsub.f32 %v3134, %v4447
        %v5063 = vsub.f32 %v3136, %v4450
        %v5064 = vsub.f32 %v3138, %v4450
        %v5065 = vsub.f32 %v3142, %v4453
        %v5066 = vsub.f32 %v3144, %v4453
        %v5067 = vsub.f32 %v3146, %v4456
        %v5068 = vsub.f32 %v3148, %v4456
        %v5069 = vsub.f32 %v3152, %v4459
        %v5070 = vsub.f32 %v3154, %v4459
        %v5071 = vsub.f32 %v3156, %v4462
        %v5072 = vsub.f32 %v3158, %v4462
        %v5073 = vsub.f32 %v3162, %v4465
        %v5074 = vsub.f32 %v3164, %v4465
        %v5075 = vsub.f32 %v3166, %v4468
        %v5076 = vsub.f32 %v3168, %v4468
        %v5077 = vsub.f32 %v3285, %v4471
        %v5078 = vsub.f32 %v3287, %v4471
        %v5079 = vsub.f32 %v3289, %v4474
        %v5080 = vsub.f32 %v3291, %v4474
        %v5081 = vsub.f32 %v3295, %v4477
        %v5082 = vsub.f32 %v3297, %v4477
        %v5083 = vsub.f32 %v3299, %v4480
        %v5084 = vsub.f32 %v3301, %v4480
        %v5085 = vsub.f32 %v3305, %v4483
        %v5086 = vsub.f32 %v3307, %v4483
        %v5087 = vsub.f32 %v3309, %v4486
        %v5088 = vsub.f32 %v3311, %v4486
        %v5089 = vsub.f32 %v3315, %v4489
        %v5090 = vsub.f32 %v3317, %v4489
        %v5091 = vsub.f32 %v3319, %v4492
        %v5092 = vsub.f32 %v3321, %v4492
        %v5093 = vsub.f32 %v3325, %v4495
        %v5094 = vsub.f32 %v3327, %v4495
        %v5095 = vsub.f32 %v3329, %v4498
        %v5096 = vsub.f32 %v3331, %v4498
        %v5097 = vsub.f32 %v3335, %v4501
        %v5098 = vsub.f32 %v3337, %v4501
        %v5099 = vsub.f32 %v3339, %v4504
        %v5100 = vsub.f32 %v3341, %v4504
        %v5101 = vsub.f32 %v3345, %v4507
        %v5102 = vsub.f32 %v3347, %v4507
        %v5103 = vsub.f32 %v3349, %v4510
        %v5104 = vsub.f32 %v3351, %v4510
        %v5105 = vsub.f32 %v3355, %v4513
        %v5106 = vsub.f32 %v3357, %v4513
        %v5107 = vsub.f32 %v3359, %v4516
        %v5108 = vsub.f32 %v3361, %v4516
        %v5109 = vsub.f32 %v3365, %v4519
        %v5110 = vsub.f32 %v3367, %v4519
        %v5111 = vsub.f32 %v3369, %v4522
        %v5112 = vsub.f32 %v3371, %v4522
        %v5113 = vsub.f32 %v3375, %v4525
        %v5114 = vsub.f32 %v3377, %v4525
        %v5115 = vsub.f32 %v3379, %v4528
        %v5116 = vsub.f32 %v3381, %v4528
        %v5117 = vsub.f32 %v3385, %v4531
        %v5118 = vsub.f32 %v3387, %v4531
        %v5119 = vsub.f32 %v3389, %v4534
        %v5120 = vsub.f32 %v3391, %v4534
        %v5121 = vsub.f32 %v3395, %v4537
        %v5122 = vsub.f32 %v3397, %v4537
        %v5123 = vsub.f32 %v3399, %v4540
        %v5124 = vsub.f32 %v3401, %v4540
        %v5125 = vsub.f32 %v3405, %v4543
        %v5126 = vsub.f32 %v3407, %v4543
        %v5127 = vsub.f32 %v3409, %v4546
        %v5128 = vsub.f32 %v3411, %v4546
        %v5129 = vsub.f32 %v3415, %v4549
        %v5130 = vsub.f32 %v3417, %v4549
        %v5131 = vsub.f32 %v3419, %v4552
        %v5132 = vsub.f32 %v3421, %v4552
        %v5133 = vsub.f32 %v3425, %v4555
        %v5134 = vsub.f32 %v3427, %v4555
        %v5135 = vsub.f32 %v3429, %v4558
        %v5136 = vsub.f32 %v3431, %v4558
        %v5137 = vsub.f32 %v3435, %v4561
        %v5138 = vsub.f32 %v3437, %v4561
        %v5139 = vsub.f32 %v3439, %v4564
        %v5140 = vsub.f32 %v3441, %v4564
        %v5141 = vsub.f32 %v3558, %v4567
        %v5142 = vsub.f32 %v3560, %v4567
        %v5143 = vsub.f32 %v3562, %v4570
        %v5144 = vsub.f32 %v3564, %v4570
        %v5145 = vsub.f32 %v3568, %v4573
        %v5146 = vsub.f32 %v3570, %v4573
        %v5147 = vsub.f32 %v3572, %v4576
        %v5148 = vsub.f32 %v3574, %v4576
        %v5149 = vsub.f32 %v3578, %v4579
        %v5150 = vsub.f32 %v3580, %v4579
        %v5151 = vsub.f32 %v3582, %v4582
        %v5152 = vsub.f32 %v3584, %v4582
        %v5153 = vsub.f32 %v3588, %v4585
        %v5154 = vsub.f32 %v3590, %v4585
        %v5155 = vsub.f32 %v3592, %v4588
        %v5156 = vsub.f32 %v3594, %v4588
        %v5157 = vsub.f32 %v3598, %v4591
        %v5158 = vsub.f32 %v3600, %v4591
        %v5159 = vsub.f32 %v3602, %v4594
        %v5160 = vsub.f32 %v3604, %v4594
        %v5161 = vsub.f32 %v3608, %v4597
        %v5162 = vsub.f32 %v3610, %v4597
        %v5163 = vsub.f32 %v3612, %v4600
        %v5164 = vsub.f32 %v3614, %v4600
        %v5165 = vsub.f32 %v3618, %v4603
        %v5166 = vsub.f32 %v3620, %v4603
        %v5167 = vsub.f32 %v3622, %v4606
        %v5168 = vsub.f32 %v3624, %v4606
        %v5169 = vsub.f32 %v3628, %v4609
        %v5170 = vsub.f32 %v3630, %v4609
        %v5171 = vsub.f32 %v3632, %v4612
        %v5172 = vsub.f32 %v3634, %v4612
        %v5173 = vsub.f32 %v3638, %v4615
        %v5174 = vsub.f32 %v3640, %v4615
        %v5175 = vsub.f32 %v3642, %v4618
        %v5176 = vsub.f32 %v3644, %v4618
        %v5177 = vsub.f32 %v3648, %v4621
        %v5178 = vsub.f32 %v3650, %v4621
        %v5179 = vsub.f32 %v3652, %v4624
        %v5180 = vsub.f32 %v3654, %v4624
        %v5181 = vsub.f32 %v3658, %v4627
        %v5182 = vsub.f32 %v3660, %v4627
        %v5183 = vsub.f32 %v3662, %v4630
        %v5184 = vsub.f32 %v3664, %v4630
        %v5185 = vsub.f32 %v3668, %v4633
        %v5186 = vsub.f32 %v3670, %v4633
        %v5187 = vsub.f32 %v3672, %v4636
        %v5188 = vsub.f32 %v3674, %v4636
        %v5189 = vsub.f32 %v3678, %v4639
        %v5190 = vsub.f32 %v3680, %v4639
        %v5191 = vsub.f32 %v3682, %v4642
        %v5192 = vsub.f32 %v3684, %v4642
        %v5193 = vsub.f32 %v3688, %v4645
        %v5194 = vsub.f32 %v3690, %v4645
        %v5195 = vsub.f32 %v3692, %v4648
        %v5196 = vsub.f32 %v3694, %v4648
        %v5197 = vsub.f32 %v3698, %v4651
        %v5198 = vsub.f32 %v3700, %v4651
        %v5199 = vsub.f32 %v3702, %v4654
        %v5200 = vsub.f32 %v3704, %v4654
        %v5201 = vsub.f32 %v3708, %v4657
        %v5202 = vsub.f32 %v3710, %v4657
        %v5203 = vsub.f32 %v3712, %v4660
        %v5204 = vsub.f32 %v3714, %v4660
        %v5205 = vsub.f32 %v3831, %v4663
        %v5206 = vsub.f32 %v3833, %v4663
        %v5207 = vsub.f32 %v3835, %v4666
        %v5208 = vsub.f32 %v3837, %v4666
        %v5209 = vsub.f32 %v3841, %v4669
        %v5210 = vsub.f32 %v3843, %v4669
        %v5211 = vsub.f32 %v3845, %v4672
        %v5212 = vsub.f32 %v3847, %v4672
        %v5213 = vsub.f32 %v3851, %v4675
        %v5214 = vsub.f32 %v3853, %v4675
        %v5215 = vsub.f32 %v3855, %v4678
        %v5216 = vsub.f32 %v3857, %v4678
        %v5217 = vsub.f32 %v3861, %v4681
        %v5218 = vsub.f32 %v3863, %v4681
        %v5219 = vsub.f32 %v3865, %v4684
        %v5220 = vsub.f32 %v3867, %v4684
        %v5221 = vsub.f32 %v3871, %v4687
        %v5222 = vsub.f32 %v3873, %v4687
        %v5223 = vsub.f32 %v3875, %v4690
        %v5224 = vsub.f32 %v3877, %v4690
        %v5225 = vsub.f32 %v3881, %v4693
        %v5226 = vsub.f32 %v3883, %v4693
        %v5227 = vsub.f32 %v3885, %v4696
        %v5228 = vsub.f32 %v3887, %v4696
        %v5229 = vsub.f32 %v3891, %v4699
        %v5230 = vsub.f32 %v3893, %v4699
        %v5231 = vsub.f32 %v3895, %v4702
        %v5232 = vsub.f32 %v3897, %v4702
        %v5233 = vsub.f32 %v3901, %v4705
        %v5234 = vsub.f32 %v3903, %v4705
        %v5235 = vsub.f32 %v3905, %v4708
        %v5236 = vsub.f32 %v3907, %v4708
        %v5237 = vsub.f32 %v3911, %v4711
        %v5238 = vsub.f32 %v3913, %v4711
        %v5239 = vsub.f32 %v3915, %v4714
        %v5240 = vsub.f32 %v3917, %v4714
        %v5241 = vsub.f32 %v3921, %v4717
        %v5242 = vsub.f32 %v3923, %v4717
        %v5243 = vsub.f32 %v3925, %v4720
        %v5244 = vsub.f32 %v3927, %v4720
        %v5245 = vsub.f32 %v3931, %v4723
        %v5246 = vsub.f32 %v3933, %v4723
        %v5247 = vsub.f32 %v3935, %v4726
        %v5248 = vsub.f32 %v3937, %v4726
        %v5249 = vsub.f32 %v3941, %v4729
        %v5250 = vsub.f32 %v3943, %v4729
        %v5251 = vsub.f32 %v3945, %v4732
        %v5252 = vsub.f32 %v3947, %v4732
        %v5253 = vsub.f32 %v3951, %v4735
        %v5254 = vsub.f32 %v3953, %v4735
        %v5255 = vsub.f32 %v3955, %v4738
        %v5256 = vsub.f32 %v3957, %v4738
        %v5257 = vsub.f32 %v3961, %v4741
        %v5258 = vsub.f32 %v3963, %v4741
        %v5259 = vsub.f32 %v3965, %v4744
        %v5260 = vsub.f32 %v3967, %v4744
        %v5261 = vsub.f32 %v3971, %v4747
        %v5262 = vsub.f32 %v3973, %v4747
        %v5263 = vsub.f32 %v3975, %v4750
        %v5264 = vsub.f32 %v3977, %v4750
        %v5265 = vsub.f32 %v3981, %v4753
        %v5266 = vsub.f32 %v3983, %v4753
        %v5267 = vsub.f32 %v3985, %v4756
        %v5268 = vsub.f32 %v3987, %v4756
        %v5269 = vmul.f32 %v4757, 1.442695
        %v5270 = vpow.pop %v5269
        %v5271 = vmul.f32 %v4758, 1.442695
        %v5272 = vpow.pop %v5271
        %v5273 = vmul.f32 %v4759, 1.442695
        %v5274 = vpow.pop %v5273
        %v5275 = vmul.f32 %v4760, 1.442695
        %v5276 = vpow.pop %v5275
        %v5277 = vmul.f32 %v4761, 1.442695
        %v5278 = vpow.pop %v5277
        %v5279 = vmul.f32 %v4762, 1.442695
        %v5280 = vpow.pop %v5279
        %v5281 = vmul.f32 %v4763, 1.442695
        %v5282 = vpow.pop %v5281
        %v5283 = vmul.f32 %v4764, 1.442695
        %v5284 = vpow.pop %v5283
        %v5285 = vmul.f32 %v4765, 1.442695
        %v5286 = vpow.pop %v5285
        %v5287 = vmul.f32 %v4766, 1.442695
        %v5288 = vpow.pop %v5287
        %v5289 = vmul.f32 %v4767, 1.442695
        %v5290 = vpow.pop %v5289
        %v5291 = vmul.f32 %v4768, 1.442695
        %v5292 = vpow.pop %v5291
        %v5293 = vmul.f32 %v4769, 1.442695
        %v5294 = vpow.pop %v5293
        %v5295 = vmul.f32 %v4770, 1.442695
        %v5296 = vpow.pop %v5295
        %v5297 = vmul.f32 %v4771, 1.442695
        %v5298 = vpow.pop %v5297
        %v5299 = vmul.f32 %v4772, 1.442695
        %v5300 = vpow.pop %v5299
        %v5301 = vmul.f32 %v4773, 1.442695
        %v5302 = vpow.pop %v5301
        %v5303 = vmul.f32 %v4774, 1.442695
        %v5304 = vpow.pop %v5303
        %v5305 = vmul.f32 %v4775, 1.442695
        %v5306 = vpow.pop %v5305
        %v5307 = vmul.f32 %v4776, 1.442695
        %v5308 = vpow.pop %v5307
        %v5309 = vmul.f32 %v4777, 1.442695
        %v5310 = vpow.pop %v5309
        %v5311 = vmul.f32 %v4778, 1.442695
        %v5312 = vpow.pop %v5311
        %v5313 = vmul.f32 %v4779, 1.442695
        %v5314 = vpow.pop %v5313
        %v5315 = vmul.f32 %v4780, 1.442695
        %v5316 = vpow.pop %v5315
        %v5317 = vmul.f32 %v4781, 1.442695
        %v5318 = vpow.pop %v5317
        %v5319 = vmul.f32 %v4782, 1.442695
        %v5320 = vpow.pop %v5319
        %v5321 = vmul.f32 %v4783, 1.442695
        %v5322 = vpow.pop %v5321
        %v5323 = vmul.f32 %v4784, 1.442695
        %v5324 = vpow.pop %v5323
        %v5325 = vmul.f32 %v4785, 1.442695
        %v5326 = vpow.pop %v5325
        %v5327 = vmul.f32 %v4786, 1.442695
        %v5328 = vpow.pop %v5327
        %v5329 = vmul.f32 %v4787, 1.442695
        %v5330 = vpow.pop %v5329
        %v5331 = vmul.f32 %v4788, 1.442695
        %v5332 = vpow.pop %v5331
        %v5333 = vmul.f32 %v4789, 1.442695
        %v5334 = vpow.pop %v5333
        %v5335 = vmul.f32 %v4790, 1.442695
        %v5336 = vpow.pop %v5335
        %v5337 = vmul.f32 %v4791, 1.442695
        %v5338 = vpow.pop %v5337
        %v5339 = vmul.f32 %v4792, 1.442695
        %v5340 = vpow.pop %v5339
        %v5341 = vmul.f32 %v4793, 1.442695
        %v5342 = vpow.pop %v5341
        %v5343 = vmul.f32 %v4794, 1.442695
        %v5344 = vpow.pop %v5343
        %v5345 = vmul.f32 %v4795, 1.442695
        %v5346 = vpow.pop %v5345
        %v5347 = vmul.f32 %v4796, 1.442695
        %v5348 = vpow.pop %v5347
        %v5349 = vmul.f32 %v4797, 1.442695
        %v5350 = vpow.pop %v5349
        %v5351 = vmul.f32 %v4798, 1.442695
        %v5352 = vpow.pop %v5351
        %v5353 = vmul.f32 %v4799, 1.442695
        %v5354 = vpow.pop %v5353
        %v5355 = vmul.f32 %v4800, 1.442695
        %v5356 = vpow.pop %v5355
        %v5357 = vmul.f32 %v4801, 1.442695
        %v5358 = vpow.pop %v5357
        %v5359 = vmul.f32 %v4802, 1.442695
        %v5360 = vpow.pop %v5359
        %v5361 = vmul.f32 %v4803, 1.442695
        %v5362 = vpow.pop %v5361
        %v5363 = vmul.f32 %v4804, 1.442695
        %v5364 = vpow.pop %v5363
        %v5365 = vmul.f32 %v4805, 1.442695
        %v5366 = vpow.pop %v5365
        %v5367 = vmul.f32 %v4806, 1.442695
        %v5368 = vpow.pop %v5367
        %v5369 = vmul.f32 %v4807, 1.442695
        %v5370 = vpow.pop %v5369
        %v5371 = vmul.f32 %v4808, 1.442695
        %v5372 = vpow.pop %v5371
        %v5373 = vmul.f32 %v4809, 1.442695
        %v5374 = vpow.pop %v5373
        %v5375 = vmul.f32 %v4810, 1.442695
        %v5376 = vpow.pop %v5375
        %v5377 = vmul.f32 %v4811, 1.442695
        %v5378 = vpow.pop %v5377
        %v5379 = vmul.f32 %v4812, 1.442695
        %v5380 = vpow.pop %v5379
        %v5381 = vmul.f32 %v4813, 1.442695
        %v5382 = vpow.pop %v5381
        %v5383 = vmul.f32 %v4814, 1.442695
        %v5384 = vpow.pop %v5383
        %v5385 = vmul.f32 %v4815, 1.442695
        %v5386 = vpow.pop %v5385
        %v5387 = vmul.f32 %v4816, 1.442695
        %v5388 = vpow.pop %v5387
        %v5389 = vmul.f32 %v4817, 1.442695
        %v5390 = vpow.pop %v5389
        %v5391 = vmul.f32 %v4818, 1.442695
        %v5392 = vpow.pop %v5391
        %v5393 = vmul.f32 %v4819, 1.442695
        %v5394 = vpow.pop %v5393
        %v5395 = vmul.f32 %v4820, 1.442695
        %v5396 = vpow.pop %v5395
        %v5397 = vmul.f32 %v4821, 1.442695
        %v5398 = vpow.pop %v5397
        %v5399 = vmul.f32 %v4822, 1.442695
        %v5400 = vpow.pop %v5399
        %v5401 = vmul.f32 %v4823, 1.442695
        %v5402 = vpow.pop %v5401
        %v5403 = vmul.f32 %v4824, 1.442695
        %v5404 = vpow.pop %v5403
        %v5405 = vmul.f32 %v4825, 1.442695
        %v5406 = vpow.pop %v5405
        %v5407 = vmul.f32 %v4826, 1.442695
        %v5408 = vpow.pop %v5407
        %v5409 = vmul.f32 %v4827, 1.442695
        %v5410 = vpow.pop %v5409
        %v5411 = vmul.f32 %v4828, 1.442695
        %v5412 = vpow.pop %v5411
        %v5413 = vmul.f32 %v4829, 1.442695
        %v5414 = vpow.pop %v5413
        %v5415 = vmul.f32 %v4830, 1.442695
        %v5416 = vpow.pop %v5415
        %v5417 = vmul.f32 %v4831, 1.442695
        %v5418 = vpow.pop %v5417
        %v5419 = vmul.f32 %v4832, 1.442695
        %v5420 = vpow.pop %v5419
        %v5421 = vmul.f32 %v4833, 1.442695
        %v5422 = vpow.pop %v5421
        %v5423 = vmul.f32 %v4834, 1.442695
        %v5424 = vpow.pop %v5423
        %v5425 = vmul.f32 %v4835, 1.442695
        %v5426 = vpow.pop %v5425
        %v5427 = vmul.f32 %v4836, 1.442695
        %v5428 = vpow.pop %v5427
        %v5429 = vmul.f32 %v4837, 1.442695
        %v5430 = vpow.pop %v5429
        %v5431 = vmul.f32 %v4838, 1.442695
        %v5432 = vpow.pop %v5431
        %v5433 = vmul.f32 %v4839, 1.442695
        %v5434 = vpow.pop %v5433
        %v5435 = vmul.f32 %v4840, 1.442695
        %v5436 = vpow.pop %v5435
        %v5437 = vmul.f32 %v4841, 1.442695
        %v5438 = vpow.pop %v5437
        %v5439 = vmul.f32 %v4842, 1.442695
        %v5440 = vpow.pop %v5439
        %v5441 = vmul.f32 %v4843, 1.442695
        %v5442 = vpow.pop %v5441
        %v5443 = vmul.f32 %v4844, 1.442695
        %v5444 = vpow.pop %v5443
        %v5445 = vmul.f32 %v4845, 1.442695
        %v5446 = vpow.pop %v5445
        %v5447 = vmul.f32 %v4846, 1.442695
        %v5448 = vpow.pop %v5447
        %v5449 = vmul.f32 %v4847, 1.442695
        %v5450 = vpow.pop %v5449
        %v5451 = vmul.f32 %v4848, 1.442695
        %v5452 = vpow.pop %v5451
        %v5453 = vmul.f32 %v4849, 1.442695
        %v5454 = vpow.pop %v5453
        %v5455 = vmul.f32 %v4850, 1.442695
        %v5456 = vpow.pop %v5455
        %v5457 = vmul.f32 %v4851, 1.442695
        %v5458 = vpow.pop %v5457
        %v5459 = vmul.f32 %v4852, 1.442695
        %v5460 = vpow.pop %v5459
        %v5461 = vmul.f32 %v4853, 1.442695
        %v5462 = vpow.pop %v5461
        %v5463 = vmul.f32 %v4854, 1.442695
        %v5464 = vpow.pop %v5463
        %v5465 = vmul.f32 %v4855, 1.442695
        %v5466 = vpow.pop %v5465
        %v5467 = vmul.f32 %v4856, 1.442695
        %v5468 = vpow.pop %v5467
        %v5469 = vmul.f32 %v4857, 1.442695
        %v5470 = vpow.pop %v5469
        %v5471 = vmul.f32 %v4858, 1.442695
        %v5472 = vpow.pop %v5471
        %v5473 = vmul.f32 %v4859, 1.442695
        %v5474 = vpow.pop %v5473
        %v5475 = vmul.f32 %v4860, 1.442695
        %v5476 = vpow.pop %v5475
        %v5477 = vmul.f32 %v4861, 1.442695
        %v5478 = vpow.pop %v5477
        %v5479 = vmul.f32 %v4862, 1.442695
        %v5480 = vpow.pop %v5479
        %v5481 = vmul.f32 %v4863, 1.442695
        %v5482 = vpow.pop %v5481
        %v5483 = vmul.f32 %v4864, 1.442695
        %v5484 = vpow.pop %v5483
        %v5485 = vmul.f32 %v4865, 1.442695
        %v5486 = vpow.pop %v5485
        %v5487 = vmul.f32 %v4866, 1.442695
        %v5488 = vpow.pop %v5487
        %v5489 = vmul.f32 %v4867, 1.442695
        %v5490 = vpow.pop %v5489
        %v5491 = vmul.f32 %v4868, 1.442695
        %v5492 = vpow.pop %v5491
        %v5493 = vmul.f32 %v4869, 1.442695
        %v5494 = vpow.pop %v5493
        %v5495 = vmul.f32 %v4870, 1.442695
        %v5496 = vpow.pop %v5495
        %v5497 = vmul.f32 %v4871, 1.442695
        %v5498 = vpow.pop %v5497
        %v5499 = vmul.f32 %v4872, 1.442695
        %v5500 = vpow.pop %v5499
        %v5501 = vmul.f32 %v4873, 1.442695
        %v5502 = vpow.pop %v5501
        %v5503 = vmul.f32 %v4874, 1.442695
        %v5504 = vpow.pop %v5503
        %v5505 = vmul.f32 %v4875, 1.442695
        %v5506 = vpow.pop %v5505
        %v5507 = vmul.f32 %v4876, 1.442695
        %v5508 = vpow.pop %v5507
        %v5509 = vmul.f32 %v4877, 1.442695
        %v5510 = vpow.pop %v5509
        %v5511 = vmul.f32 %v4878, 1.442695
        %v5512 = vpow.pop %v5511
        %v5513 = vmul.f32 %v4879, 1.442695
        %v5514 = vpow.pop %v5513
        %v5515 = vmul.f32 %v4880, 1.442695
        %v5516 = vpow.pop %v5515
        %v5517 = vmul.f32 %v4881, 1.442695
        %v5518 = vpow.pop %v5517
        %v5519 = vmul.f32 %v4882, 1.442695
        %v5520 = vpow.pop %v5519
        %v5521 = vmul.f32 %v4883, 1.442695
        %v5522 = vpow.pop %v5521
        %v5523 = vmul.f32 %v4884, 1.442695
        %v5524 = vpow.pop %v5523
        %v5525 = vmul.f32 %v4885, 1.442695
        %v5526 = vpow.pop %v5525
        %v5527 = vmul.f32 %v4886, 1.442695
        %v5528 = vpow.pop %v5527
        %v5529 = vmul.f32 %v4887, 1.442695
        %v5530 = vpow.pop %v5529
        %v5531 = vmul.f32 %v4888, 1.442695
        %v5532 = vpow.pop %v5531
        %v5533 = vmul.f32 %v4889, 1.442695
        %v5534 = vpow.pop %v5533
        %v5535 = vmul.f32 %v4890, 1.442695
        %v5536 = vpow.pop %v5535
        %v5537 = vmul.f32 %v4891, 1.442695
        %v5538 = vpow.pop %v5537
        %v5539 = vmul.f32 %v4892, 1.442695
        %v5540 = vpow.pop %v5539
        %v5541 = vmul.f32 %v4893, 1.442695
        %v5542 = vpow.pop %v5541
        %v5543 = vmul.f32 %v4894, 1.442695
        %v5544 = vpow.pop %v5543
        %v5545 = vmul.f32 %v4895, 1.442695
        %v5546 = vpow.pop %v5545
        %v5547 = vmul.f32 %v4896, 1.442695
        %v5548 = vpow.pop %v5547
        %v5549 = vmul.f32 %v4897, 1.442695
        %v5550 = vpow.pop %v5549
        %v5551 = vmul.f32 %v4898, 1.442695
        %v5552 = vpow.pop %v5551
        %v5553 = vmul.f32 %v4899, 1.442695
        %v5554 = vpow.pop %v5553
        %v5555 = vmul.f32 %v4900, 1.442695
        %v5556 = vpow.pop %v5555
        %v5557 = vmul.f32 %v4901, 1.442695
        %v5558 = vpow.pop %v5557
        %v5559 = vmul.f32 %v4902, 1.442695
        %v5560 = vpow.pop %v5559
        %v5561 = vmul.f32 %v4903, 1.442695
        %v5562 = vpow.pop %v5561
        %v5563 = vmul.f32 %v4904, 1.442695
        %v5564 = vpow.pop %v5563
        %v5565 = vmul.f32 %v4905, 1.442695
        %v5566 = vpow.pop %v5565
        %v5567 = vmul.f32 %v4906, 1.442695
        %v5568 = vpow.pop %v5567
        %v5569 = vmul.f32 %v4907, 1.442695
        %v5570 = vpow.pop %v5569
        %v5571 = vmul.f32 %v4908, 1.442695
        %v5572 = vpow.pop %v5571
        %v5573 = vmul.f32 %v4909, 1.442695
        %v5574 = vpow.pop %v5573
        %v5575 = vmul.f32 %v4910, 1.442695
        %v5576 = vpow.pop %v5575
        %v5577 = vmul.f32 %v4911, 1.442695
        %v5578 = vpow.pop %v5577
        %v5579 = vmul.f32 %v4912, 1.442695
        %v5580 = vpow.pop %v5579
        %v5581 = vmul.f32 %v4913, 1.442695
        %v5582 = vpow.pop %v5581
        %v5583 = vmul.f32 %v4914, 1.442695
        %v5584 = vpow.pop %v5583
        %v5585 = vmul.f32 %v4915, 1.442695
        %v5586 = vpow.pop %v5585
        %v5587 = vmul.f32 %v4916, 1.442695
        %v5588 = vpow.pop %v5587
        %v5589 = vmul.f32 %v4917, 1.442695
        %v5590 = vpow.pop %v5589
        %v5591 = vmul.f32 %v4918, 1.442695
        %v5592 = vpow.pop %v5591
        %v5593 = vmul.f32 %v4919, 1.442695
        %v5594 = vpow.pop %v5593
        %v5595 = vmul.f32 %v4920, 1.442695
        %v5596 = vpow.pop %v5595
        %v5597 = vmul.f32 %v4921, 1.442695
        %v5598 = vpow.pop %v5597
        %v5599 = vmul.f32 %v4922, 1.442695
        %v5600 = vpow.pop %v5599
        %v5601 = vmul.f32 %v4923, 1.442695
        %v5602 = vpow.pop %v5601
        %v5603 = vmul.f32 %v4924, 1.442695
        %v5604 = vpow.pop %v5603
        %v5605 = vmul.f32 %v4925, 1.442695
        %v5606 = vpow.pop %v5605
        %v5607 = vmul.f32 %v4926, 1.442695
        %v5608 = vpow.pop %v5607
        %v5609 = vmul.f32 %v4927, 1.442695
        %v5610 = vpow.pop %v5609
        %v5611 = vmul.f32 %v4928, 1.442695
        %v5612 = vpow.pop %v5611
        %v5613 = vmul.f32 %v4929, 1.442695
        %v5614 = vpow.pop %v5613
        %v5615 = vmul.f32 %v4930, 1.442695
        %v5616 = vpow.pop %v5615
        %v5617 = vmul.f32 %v4931, 1.442695
        %v5618 = vpow.pop %v5617
        %v5619 = vmul.f32 %v4932, 1.442695
        %v5620 = vpow.pop %v5619
        %v5621 = vmul.f32 %v4933, 1.442695
        %v5622 = vpow.pop %v5621
        %v5623 = vmul.f32 %v4934, 1.442695
        %v5624 = vpow.pop %v5623
        %v5625 = vmul.f32 %v4935, 1.442695
        %v5626 = vpow.pop %v5625
        %v5627 = vmul.f32 %v4936, 1.442695
        %v5628 = vpow.pop %v5627
        %v5629 = vmul.f32 %v4937, 1.442695
        %v5630 = vpow.pop %v5629
        %v5631 = vmul.f32 %v4938, 1.442695
        %v5632 = vpow.pop %v5631
        %v5633 = vmul.f32 %v4939, 1.442695
        %v5634 = vpow.pop %v5633
        %v5635 = vmul.f32 %v4940, 1.442695
        %v5636 = vpow.pop %v5635
        %v5637 = vmul.f32 %v4941, 1.442695
        %v5638 = vpow.pop %v5637
        %v5639 = vmul.f32 %v4942, 1.442695
        %v5640 = vpow.pop %v5639
        %v5641 = vmul.f32 %v4943, 1.442695
        %v5642 = vpow.pop %v5641
        %v5643 = vmul.f32 %v4944, 1.442695
        %v5644 = vpow.pop %v5643
        %v5645 = vmul.f32 %v4945, 1.442695
        %v5646 = vpow.pop %v5645
        %v5647 = vmul.f32 %v4946, 1.442695
        %v5648 = vpow.pop %v5647
        %v5649 = vmul.f32 %v4947, 1.442695
        %v5650 = vpow.pop %v5649
        %v5651 = vmul.f32 %v4948, 1.442695
        %v5652 = vpow.pop %v5651
        %v5653 = vmul.f32 %v4949, 1.442695
        %v5654 = vpow.pop %v5653
        %v5655 = vmul.f32 %v4950, 1.442695
        %v5656 = vpow.pop %v5655
        %v5657 = vmul.f32 %v4951, 1.442695
        %v5658 = vpow.pop %v5657
        %v5659 = vmul.f32 %v4952, 1.442695
        %v5660 = vpow.pop %v5659
        %v5661 = vmul.f32 %v4953, 1.442695
        %v5662 = vpow.pop %v5661
        %v5663 = vmul.f32 %v4954, 1.442695
        %v5664 = vpow.pop %v5663
        %v5665 = vmul.f32 %v4955, 1.442695
        %v5666 = vpow.pop %v5665
        %v5667 = vmul.f32 %v4956, 1.442695
        %v5668 = vpow.pop %v5667
        %v5669 = vmul.f32 %v4957, 1.442695
        %v5670 = vpow.pop %v5669
        %v5671 = vmul.f32 %v4958, 1.442695
        %v5672 = vpow.pop %v5671
        %v5673 = vmul.f32 %v4959, 1.442695
        %v5674 = vpow.pop %v5673
        %v5675 = vmul.f32 %v4960, 1.442695
        %v5676 = vpow.pop %v5675
        %v5677 = vmul.f32 %v4961, 1.442695
        %v5678 = vpow.pop %v5677
        %v5679 = vmul.f32 %v4962, 1.442695
        %v5680 = vpow.pop %v5679
        %v5681 = vmul.f32 %v4963, 1.442695
        %v5682 = vpow.pop %v5681
        %v5683 = vmul.f32 %v4964, 1.442695
        %v5684 = vpow.pop %v5683
        %v5685 = vmul.f32 %v4965, 1.442695
        %v5686 = vpow.pop %v5685
        %v5687 = vmul.f32 %v4966, 1.442695
        %v5688 = vpow.pop %v5687
        %v5689 = vmul.f32 %v4967, 1.442695
        %v5690 = vpow.pop %v5689
        %v5691 = vmul.f32 %v4968, 1.442695
        %v5692 = vpow.pop %v5691
        %v5693 = vmul.f32 %v4969, 1.442695
        %v5694 = vpow.pop %v5693
        %v5695 = vmul.f32 %v4970, 1.442695
        %v5696 = vpow.pop %v5695
        %v5697 = vmul.f32 %v4971, 1.442695
        %v5698 = vpow.pop %v5697
        %v5699 = vmul.f32 %v4972, 1.442695
        %v5700 = vpow.pop %v5699
        %v5701 = vmul.f32 %v4973, 1.442695
        %v5702 = vpow.pop %v5701
        %v5703 = vmul.f32 %v4974, 1.442695
        %v5704 = vpow.pop %v5703
        %v5705 = vmul.f32 %v4975, 1.442695
        %v5706 = vpow.pop %v5705
        %v5707 = vmul.f32 %v4976, 1.442695
        %v5708 = vpow.pop %v5707
        %v5709 = vmul.f32 %v4977, 1.442695
        %v5710 = vpow.pop %v5709
        %v5711 = vmul.f32 %v4978, 1.442695
        %v5712 = vpow.pop %v5711
        %v5713 = vmul.f32 %v4979, 1.442695
        %v5714 = vpow.pop %v5713
        %v5715 = vmul.f32 %v4980, 1.442695
        %v5716 = vpow.pop %v5715
        %v5717 = vmul.f32 %v4981, 1.442695
        %v5718 = vpow.pop %v5717
        %v5719 = vmul.f32 %v4982, 1.442695
        %v5720 = vpow.pop %v5719
        %v5721 = vmul.f32 %v4983, 1.442695
        %v5722 = vpow.pop %v5721
        %v5723 = vmul.f32 %v4984, 1.442695
        %v5724 = vpow.pop %v5723
        %v5725 = vmul.f32 %v4985, 1.442695
        %v5726 = vpow.pop %v5725
        %v5727 = vmul.f32 %v4986, 1.442695
        %v5728 = vpow.pop %v5727
        %v5729 = vmul.f32 %v4987, 1.442695
        %v5730 = vpow.pop %v5729
        %v5731 = vmul.f32 %v4988, 1.442695
        %v5732 = vpow.pop %v5731
        %v5733 = vmul.f32 %v4989, 1.442695
        %v5734 = vpow.pop %v5733
        %v5735 = vmul.f32 %v4990, 1.442695
        %v5736 = vpow.pop %v5735
        %v5737 = vmul.f32 %v4991, 1.442695
        %v5738 = vpow.pop %v5737
        %v5739 = vmul.f32 %v4992, 1.442695
        %v5740 = vpow.pop %v5739
        %v5741 = vmul.f32 %v4993, 1.442695
        %v5742 = vpow.pop %v5741
        %v5743 = vmul.f32 %v4994, 1.442695
        %v5744 = vpow.pop %v5743
        %v5745 = vmul.f32 %v4995, 1.442695
        %v5746 = vpow.pop %v5745
        %v5747 = vmul.f32 %v4996, 1.442695
        %v5748 = vpow.pop %v5747
        %v5749 = vmul.f32 %v4997, 1.442695
        %v5750 = vpow.pop %v5749
        %v5751 = vmul.f32 %v4998, 1.442695
        %v5752 = vpow.pop %v5751
        %v5753 = vmul.f32 %v4999, 1.442695
        %v5754 = vpow.pop %v5753
        %v5755 = vmul.f32 %v5000, 1.442695
        %v5756 = vpow.pop %v5755
        %v5757 = vmul.f32 %v5001, 1.442695
        %v5758 = vpow.pop %v5757
        %v5759 = vmul.f32 %v5002, 1.442695
        %v5760 = vpow.pop %v5759
        %v5761 = vmul.f32 %v5003, 1.442695
        %v5762 = vpow.pop %v5761
        %v5763 = vmul.f32 %v5004, 1.442695
        %v5764 = vpow.pop %v5763
        %v5765 = vmul.f32 %v5005, 1.442695
        %v5766 = vpow.pop %v5765
        %v5767 = vmul.f32 %v5006, 1.442695
        %v5768 = vpow.pop %v5767
        %v5769 = vmul.f32 %v5007, 1.442695
        %v5770 = vpow.pop %v5769
        %v5771 = vmul.f32 %v5008, 1.442695
        %v5772 = vpow.pop %v5771
        %v5773 = vmul.f32 %v5009, 1.442695
        %v5774 = vpow.pop %v5773
        %v5775 = vmul.f32 %v5010, 1.442695
        %v5776 = vpow.pop %v5775
        %v5777 = vmul.f32 %v5011, 1.442695
        %v5778 = vpow.pop %v5777
        %v5779 = vmul.f32 %v5012, 1.442695
        %v5780 = vpow.pop %v5779
        %v5781 = vmul.f32 %v5013, 1.442695
        %v5782 = vpow.pop %v5781
        %v5783 = vmul.f32 %v5014, 1.442695
        %v5784 = vpow.pop %v5783
        %v5785 = vmul.f32 %v5015, 1.442695
        %v5786 = vpow.pop %v5785
        %v5787 = vmul.f32 %v5016, 1.442695
        %v5788 = vpow.pop %v5787
        %v5789 = vmul.f32 %v5017, 1.442695
        %v5790 = vpow.pop %v5789
        %v5791 = vmul.f32 %v5018, 1.442695
        %v5792 = vpow.pop %v5791
        %v5793 = vmul.f32 %v5019, 1.442695
        %v5794 = vpow.pop %v5793
        %v5795 = vmul.f32 %v5020, 1.442695
        %v5796 = vpow.pop %v5795
        %v5797 = vmul.f32 %v5021, 1.442695
        %v5798 = vpow.pop %v5797
        %v5799 = vmul.f32 %v5022, 1.442695
        %v5800 = vpow.pop %v5799
        %v5801 = vmul.f32 %v5023, 1.442695
        %v5802 = vpow.pop %v5801
        %v5803 = vmul.f32 %v5024, 1.442695
        %v5804 = vpow.pop %v5803
        %v5805 = vmul.f32 %v5025, 1.442695
        %v5806 = vpow.pop %v5805
        %v5807 = vmul.f32 %v5026, 1.442695
        %v5808 = vpow.pop %v5807
        %v5809 = vmul.f32 %v5027, 1.442695
        %v5810 = vpow.pop %v5809
        %v5811 = vmul.f32 %v5028, 1.442695
        %v5812 = vpow.pop %v5811
        %v5813 = vmul.f32 %v5029, 1.442695
        %v5814 = vpow.pop %v5813
        %v5815 = vmul.f32 %v5030, 1.442695
        %v5816 = vpow.pop %v5815
        %v5817 = vmul.f32 %v5031, 1.442695
        %v5818 = vpow.pop %v5817
        %v5819 = vmul.f32 %v5032, 1.442695
        %v5820 = vpow.pop %v5819
        %v5821 = vmul.f32 %v5033, 1.442695
        %v5822 = vpow.pop %v5821
        %v5823 = vmul.f32 %v5034, 1.442695
        %v5824 = vpow.pop %v5823
        %v5825 = vmul.f32 %v5035, 1.442695
        %v5826 = vpow.pop %v5825
        %v5827 = vmul.f32 %v5036, 1.442695
        %v5828 = vpow.pop %v5827
        %v5829 = vmul.f32 %v5037, 1.442695
        %v5830 = vpow.pop %v5829
        %v5831 = vmul.f32 %v5038, 1.442695
        %v5832 = vpow.pop %v5831
        %v5833 = vmul.f32 %v5039, 1.442695
        %v5834 = vpow.pop %v5833
        %v5835 = vmul.f32 %v5040, 1.442695
        %v5836 = vpow.pop %v5835
        %v5837 = vmul.f32 %v5041, 1.442695
        %v5838 = vpow.pop %v5837
        %v5839 = vmul.f32 %v5042, 1.442695
        %v5840 = vpow.pop %v5839
        %v5841 = vmul.f32 %v5043, 1.442695
        %v5842 = vpow.pop %v5841
        %v5843 = vmul.f32 %v5044, 1.442695
        %v5844 = vpow.pop %v5843
        %v5845 = vmul.f32 %v5045, 1.442695
        %v5846 = vpow.pop %v5845
        %v5847 = vmul.f32 %v5046, 1.442695
        %v5848 = vpow.pop %v5847
        %v5849 = vmul.f32 %v5047, 1.442695
        %v5850 = vpow.pop %v5849
        %v5851 = vmul.f32 %v5048, 1.442695
        %v5852 = vpow.pop %v5851
        %v5853 = vmul.f32 %v5049, 1.442695
        %v5854 = vpow.pop %v5853
        %v5855 = vmul.f32 %v5050, 1.442695
        %v5856 = vpow.pop %v5855
        %v5857 = vmul.f32 %v5051, 1.442695
        %v5858 = vpow.pop %v5857
        %v5859 = vmul.f32 %v5052, 1.442695
        %v5860 = vpow.pop %v5859
        %v5861 = vmul.f32 %v5053, 1.442695
        %v5862 = vpow.pop %v5861
        %v5863 = vmul.f32 %v5054, 1.442695
        %v5864 = vpow.pop %v5863
        %v5865 = vmul.f32 %v5055, 1.442695
        %v5866 = vpow.pop %v5865
        %v5867 = vmul.f32 %v5056, 1.442695
        %v5868 = vpow.pop %v5867
        %v5869 = vmul.f32 %v5057, 1.442695
        %v5870 = vpow.pop %v5869
        %v5871 = vmul.f32 %v5058, 1.442695
        %v5872 = vpow.pop %v5871
        %v5873 = vmul.f32 %v5059, 1.442695
        %v5874 = vpow.pop %v5873
        %v5875 = vmul.f32 %v5060, 1.442695
        %v5876 = vpow.pop %v5875
        %v5877 = vmul.f32 %v5061, 1.442695
        %v5878 = vpow.pop %v5877
        %v5879 = vmul.f32 %v5062, 1.442695
        %v5880 = vpow.pop %v5879
        %v5881 = vmul.f32 %v5063, 1.442695
        %v5882 = vpow.pop %v5881
        %v5883 = vmul.f32 %v5064, 1.442695
        %v5884 = vpow.pop %v5883
        %v5885 = vmul.f32 %v5065, 1.442695
        %v5886 = vpow.pop %v5885
        %v5887 = vmul.f32 %v5066, 1.442695
        %v5888 = vpow.pop %v5887
        %v5889 = vmul.f32 %v5067, 1.442695
        %v5890 = vpow.pop %v5889
        %v5891 = vmul.f32 %v5068, 1.442695
        %v5892 = vpow.pop %v5891
        %v5893 = vmul.f32 %v5069, 1.442695
        %v5894 = vpow.pop %v5893
        %v5895 = vmul.f32 %v5070, 1.442695
        %v5896 = vpow.pop %v5895
        %v5897 = vmul.f32 %v5071, 1.442695
        %v5898 = vpow.pop %v5897
        %v5899 = vmul.f32 %v5072, 1.442695
        %v5900 = vpow.pop %v5899
        %v5901 = vmul.f32 %v5073, 1.442695
        %v5902 = vpow.pop %v5901
        %v5903 = vmul.f32 %v5074, 1.442695
        %v5904 = vpow.pop %v5903
        %v5905 = vmul.f32 %v5075, 1.442695
        %v5906 = vpow.pop %v5905
        %v5907 = vmul.f32 %v5076, 1.442695
        %v5908 = vpow.pop %v5907
        %v5909 = vmul.f32 %v5077, 1.442695
        %v5910 = vpow.pop %v5909
        %v5911 = vmul.f32 %v5078, 1.442695
        %v5912 = vpow.pop %v5911
        %v5913 = vmul.f32 %v5079, 1.442695
        %v5914 = vpow.pop %v5913
        %v5915 = vmul.f32 %v5080, 1.442695
        %v5916 = vpow.pop %v5915
        %v5917 = vmul.f32 %v5081, 1.442695
        %v5918 = vpow.pop %v5917
        %v5919 = vmul.f32 %v5082, 1.442695
        %v5920 = vpow.pop %v5919
        %v5921 = vmul.f32 %v5083, 1.442695
        %v5922 = vpow.pop %v5921
        %v5923 = vmul.f32 %v5084, 1.442695
        %v5924 = vpow.pop %v5923
        %v5925 = vmul.f32 %v5085, 1.442695
        %v5926 = vpow.pop %v5925
        %v5927 = vmul.f32 %v5086, 1.442695
        %v5928 = vpow.pop %v5927
        %v5929 = vmul.f32 %v5087, 1.442695
        %v5930 = vpow.pop %v5929
        %v5931 = vmul.f32 %v5088, 1.442695
        %v5932 = vpow.pop %v5931
        %v5933 = vmul.f32 %v5089, 1.442695
        %v5934 = vpow.pop %v5933
        %v5935 = vmul.f32 %v5090, 1.442695
        %v5936 = vpow.pop %v5935
        %v5937 = vmul.f32 %v5091, 1.442695
        %v5938 = vpow.pop %v5937
        %v5939 = vmul.f32 %v5092, 1.442695
        %v5940 = vpow.pop %v5939
        %v5941 = vmul.f32 %v5093, 1.442695
        %v5942 = vpow.pop %v5941
        %v5943 = vmul.f32 %v5094, 1.442695
        %v5944 = vpow.pop %v5943
        %v5945 = vmul.f32 %v5095, 1.442695
        %v5946 = vpow.pop %v5945
        %v5947 = vmul.f32 %v5096, 1.442695
        %v5948 = vpow.pop %v5947
        %v5949 = vmul.f32 %v5097, 1.442695
        %v5950 = vpow.pop %v5949
        %v5951 = vmul.f32 %v5098, 1.442695
        %v5952 = vpow.pop %v5951
        %v5953 = vmul.f32 %v5099, 1.442695
        %v5954 = vpow.pop %v5953
        %v5955 = vmul.f32 %v5100, 1.442695
        %v5956 = vpow.pop %v5955
        %v5957 = vmul.f32 %v5101, 1.442695
        %v5958 = vpow.pop %v5957
        %v5959 = vmul.f32 %v5102, 1.442695
        %v5960 = vpow.pop %v5959
        %v5961 = vmul.f32 %v5103, 1.442695
        %v5962 = vpow.pop %v5961
        %v5963 = vmul.f32 %v5104, 1.442695
        %v5964 = vpow.pop %v5963
        %v5965 = vmul.f32 %v5105, 1.442695
        %v5966 = vpow.pop %v5965
        %v5967 = vmul.f32 %v5106, 1.442695
        %v5968 = vpow.pop %v5967
        %v5969 = vmul.f32 %v5107, 1.442695
        %v5970 = vpow.pop %v5969
        %v5971 = vmul.f32 %v5108, 1.442695
        %v5972 = vpow.pop %v5971
        %v5973 = vmul.f32 %v5109, 1.442695
        %v5974 = vpow.pop %v5973
        %v5975 = vmul.f32 %v5110, 1.442695
        %v5976 = vpow.pop %v5975
        %v5977 = vmul.f32 %v5111, 1.442695
        %v5978 = vpow.pop %v5977
        %v5979 = vmul.f32 %v5112, 1.442695
        %v5980 = vpow.pop %v5979
        %v5981 = vmul.f32 %v5113, 1.442695
        %v5982 = vpow.pop %v5981
        %v5983 = vmul.f32 %v5114, 1.442695
        %v5984 = vpow.pop %v5983
        %v5985 = vmul.f32 %v5115, 1.442695
        %v5986 = vpow.pop %v5985
        %v5987 = vmul.f32 %v5116, 1.442695
        %v5988 = vpow.pop %v5987
        %v5989 = vmul.f32 %v5117, 1.442695
        %v5990 = vpow.pop %v5989
        %v5991 = vmul.f32 %v5118, 1.442695
        %v5992 = vpow.pop %v5991
        %v5993 = vmul.f32 %v5119, 1.442695
        %v5994 = vpow.pop %v5993
        %v5995 = vmul.f32 %v5120, 1.442695
        %v5996 = vpow.pop %v5995
        %v5997 = vmul.f32 %v5121, 1.442695
        %v5998 = vpow.pop %v5997
        %v5999 = vmul.f32 %v5122, 1.442695
        %v6000 = vpow.pop %v5999
        %v6001 = vmul.f32 %v5123, 1.442695
        %v6002 = vpow.pop %v6001
        %v6003 = vmul.f32 %v5124, 1.442695
        %v6004 = vpow.pop %v6003
        %v6005 = vmul.f32 %v5125, 1.442695
        %v6006 = vpow.pop %v6005
        %v6007 = vmul.f32 %v5126, 1.442695
        %v6008 = vpow.pop %v6007
        %v6009 = vmul.f32 %v5127, 1.442695
        %v6010 = vpow.pop %v6009
        %v6011 = vmul.f32 %v5128, 1.442695
        %v6012 = vpow.pop %v6011
        %v6013 = vmul.f32 %v5129, 1.442695
        %v6014 = vpow.pop %v6013
        %v6015 = vmul.f32 %v5130, 1.442695
        %v6016 = vpow.pop %v6015
        %v6017 = vmul.f32 %v5131, 1.442695
        %v6018 = vpow.pop %v6017
        %v6019 = vmul.f32 %v5132, 1.442695
        %v6020 = vpow.pop %v6019
        %v6021 = vmul.f32 %v5133, 1.442695
        %v6022 = vpow.pop %v6021
        %v6023 = vmul.f32 %v5134, 1.442695
        %v6024 = vpow.pop %v6023
        %v6025 = vmul.f32 %v5135, 1.442695
        %v6026 = vpow.pop %v6025
        %v6027 = vmul.f32 %v5136, 1.442695
        %v6028 = vpow.pop %v6027
        %v6029 = vmul.f32 %v5137, 1.442695
        %v6030 = vpow.pop %v6029
        %v6031 = vmul.f32 %v5138, 1.442695
        %v6032 = vpow.pop %v6031
        %v6033 = vmul.f32 %v5139, 1.442695
        %v6034 = vpow.pop %v6033
        %v6035 = vmul.f32 %v5140, 1.442695
        %v6036 = vpow.pop %v6035
        %v6037 = vmul.f32 %v5141, 1.442695
        %v6038 = vpow.pop %v6037
        %v6039 = vmul.f32 %v5142, 1.442695
        %v6040 = vpow.pop %v6039
        %v6041 = vmul.f32 %v5143, 1.442695
        %v6042 = vpow.pop %v6041
        %v6043 = vmul.f32 %v5144, 1.442695
        %v6044 = vpow.pop %v6043
        %v6045 = vmul.f32 %v5145, 1.442695
        %v6046 = vpow.pop %v6045
        %v6047 = vmul.f32 %v5146, 1.442695
        %v6048 = vpow.pop %v6047
        %v6049 = vmul.f32 %v5147, 1.442695
        %v6050 = vpow.pop %v6049
        %v6051 = vmul.f32 %v5148, 1.442695
        %v6052 = vpow.pop %v6051
        %v6053 = vmul.f32 %v5149, 1.442695
        %v6054 = vpow.pop %v6053
        %v6055 = vmul.f32 %v5150, 1.442695
        %v6056 = vpow.pop %v6055
        %v6057 = vmul.f32 %v5151, 1.442695
        %v6058 = vpow.pop %v6057
        %v6059 = vmul.f32 %v5152, 1.442695
        %v6060 = vpow.pop %v6059
        %v6061 = vmul.f32 %v5153, 1.442695
        %v6062 = vpow.pop %v6061
        %v6063 = vmul.f32 %v5154, 1.442695
        %v6064 = vpow.pop %v6063
        %v6065 = vmul.f32 %v5155, 1.442695
        %v6066 = vpow.pop %v6065
        %v6067 = vmul.f32 %v5156, 1.442695
        %v6068 = vpow.pop %v6067
        %v6069 = vmul.f32 %v5157, 1.442695
        %v6070 = vpow.pop %v6069
        %v6071 = vmul.f32 %v5158, 1.442695
        %v6072 = vpow.pop %v6071
        %v6073 = vmul.f32 %v5159, 1.442695
        %v6074 = vpow.pop %v6073
        %v6075 = vmul.f32 %v5160, 1.442695
        %v6076 = vpow.pop %v6075
        %v6077 = vmul.f32 %v5161, 1.442695
        %v6078 = vpow.pop %v6077
        %v6079 = vmul.f32 %v5162, 1.442695
        %v6080 = vpow.pop %v6079
        %v6081 = vmul.f32 %v5163, 1.442695
        %v6082 = vpow.pop %v6081
        %v6083 = vmul.f32 %v5164, 1.442695
        %v6084 = vpow.pop %v6083
        %v6085 = vmul.f32 %v5165, 1.442695
        %v6086 = vpow.pop %v6085
        %v6087 = vmul.f32 %v5166, 1.442695
        %v6088 = vpow.pop %v6087
        %v6089 = vmul.f32 %v5167, 1.442695
        %v6090 = vpow.pop %v6089
        %v6091 = vmul.f32 %v5168, 1.442695
        %v6092 = vpow.pop %v6091
        %v6093 = vmul.f32 %v5169, 1.442695
        %v6094 = vpow.pop %v6093
        %v6095 = vmul.f32 %v5170, 1.442695
        %v6096 = vpow.pop %v6095
        %v6097 = vmul.f32 %v5171, 1.442695
        %v6098 = vpow.pop %v6097
        %v6099 = vmul.f32 %v5172, 1.442695
        %v6100 = vpow.pop %v6099
        %v6101 = vmul.f32 %v5173, 1.442695
        %v6102 = vpow.pop %v6101
        %v6103 = vmul.f32 %v5174, 1.442695
        %v6104 = vpow.pop %v6103
        %v6105 = vmul.f32 %v5175, 1.442695
        %v6106 = vpow.pop %v6105
        %v6107 = vmul.f32 %v5176, 1.442695
        %v6108 = vpow.pop %v6107
        %v6109 = vmul.f32 %v5177, 1.442695
        %v6110 = vpow.pop %v6109
        %v6111 = vmul.f32 %v5178, 1.442695
        %v6112 = vpow.pop %v6111
        %v6113 = vmul.f32 %v5179, 1.442695
        %v6114 = vpow.pop %v6113
        %v6115 = vmul.f32 %v5180, 1.442695
        %v6116 = vpow.pop %v6115
        %v6117 = vmul.f32 %v5181, 1.442695
        %v6118 = vpow.pop %v6117
        %v6119 = vmul.f32 %v5182, 1.442695
        %v6120 = vpow.pop %v6119
        %v6121 = vmul.f32 %v5183, 1.442695
        %v6122 = vpow.pop %v6121
        %v6123 = vmul.f32 %v5184, 1.442695
        %v6124 = vpow.pop %v6123
        %v6125 = vmul.f32 %v5185, 1.442695
        %v6126 = vpow.pop %v6125
        %v6127 = vmul.f32 %v5186, 1.442695
        %v6128 = vpow.pop %v6127
        %v6129 = vmul.f32 %v5187, 1.442695
        %v6130 = vpow.pop %v6129
        %v6131 = vmul.f32 %v5188, 1.442695
        %v6132 = vpow.pop %v6131
        %v6133 = vmul.f32 %v5189, 1.442695
        %v6134 = vpow.pop %v6133
        %v6135 = vmul.f32 %v5190, 1.442695
        %v6136 = vpow.pop %v6135
        %v6137 = vmul.f32 %v5191, 1.442695
        %v6138 = vpow.pop %v6137
        %v6139 = vmul.f32 %v5192, 1.442695
        %v6140 = vpow.pop %v6139
        %v6141 = vmul.f32 %v5193, 1.442695
        %v6142 = vpow.pop %v6141
        %v6143 = vmul.f32 %v5194, 1.442695
        %v6144 = vpow.pop %v6143
        %v6145 = vmul.f32 %v5195, 1.442695
        %v6146 = vpow.pop %v6145
        %v6147 = vmul.f32 %v5196, 1.442695
        %v6148 = vpow.pop %v6147
        %v6149 = vmul.f32 %v5197, 1.442695
        %v6150 = vpow.pop %v6149
        %v6151 = vmul.f32 %v5198, 1.442695
        %v6152 = vpow.pop %v6151
        %v6153 = vmul.f32 %v5199, 1.442695
        %v6154 = vpow.pop %v6153
        %v6155 = vmul.f32 %v5200, 1.442695
        %v6156 = vpow.pop %v6155
        %v6157 = vmul.f32 %v5201, 1.442695
        %v6158 = vpow.pop %v6157
        %v6159 = vmul.f32 %v5202, 1.442695
        %v6160 = vpow.pop %v6159
        %v6161 = vmul.f32 %v5203, 1.442695
        %v6162 = vpow.pop %v6161
        %v6163 = vmul.f32 %v5204, 1.442695
        %v6164 = vpow.pop %v6163
        %v6165 = vmul.f32 %v5205, 1.442695
        %v6166 = vpow.pop %v6165
        %v6167 = vmul.f32 %v5206, 1.442695
        %v6168 = vpow.pop %v6167
        %v6169 = vmul.f32 %v5207, 1.442695
        %v6170 = vpow.pop %v6169
        %v6171 = vmul.f32 %v5208, 1.442695
        %v6172 = vpow.pop %v6171
        %v6173 = vmul.f32 %v5209, 1.442695
        %v6174 = vpow.pop %v6173
        %v6175 = vmul.f32 %v5210, 1.442695
        %v6176 = vpow.pop %v6175
        %v6177 = vmul.f32 %v5211, 1.442695
        %v6178 = vpow.pop %v6177
        %v6179 = vmul.f32 %v5212, 1.442695
        %v6180 = vpow.pop %v6179
        %v6181 = vmul.f32 %v5213, 1.442695
        %v6182 = vpow.pop %v6181
        %v6183 = vmul.f32 %v5214, 1.442695
        %v6184 = vpow.pop %v6183
        %v6185 = vmul.f32 %v5215, 1.442695
        %v6186 = vpow.pop %v6185
        %v6187 = vmul.f32 %v5216, 1.442695
        %v6188 = vpow.pop %v6187
        %v6189 = vmul.f32 %v5217, 1.442695
        %v6190 = vpow.pop %v6189
        %v6191 = vmul.f32 %v5218, 1.442695
        %v6192 = vpow.pop %v6191
        %v6193 = vmul.f32 %v5219, 1.442695
        %v6194 = vpow.pop %v6193
        %v6195 = vmul.f32 %v5220, 1.442695
        %v6196 = vpow.pop %v6195
        %v6197 = vmul.f32 %v5221, 1.442695
        %v6198 = vpow.pop %v6197
        %v6199 = vmul.f32 %v5222, 1.442695
        %v6200 = vpow.pop %v6199
        %v6201 = vmul.f32 %v5223, 1.442695
        %v6202 = vpow.pop %v6201
        %v6203 = vmul.f32 %v5224, 1.442695
        %v6204 = vpow.pop %v6203
        %v6205 = vmul.f32 %v5225, 1.442695
        %v6206 = vpow.pop %v6205
        %v6207 = vmul.f32 %v5226, 1.442695
        %v6208 = vpow.pop %v6207
        %v6209 = vmul.f32 %v5227, 1.442695
        %v6210 = vpow.pop %v6209
        %v6211 = vmul.f32 %v5228, 1.442695
        %v6212 = vpow.pop %v6211
        %v6213 = vmul.f32 %v5229, 1.442695
        %v6214 = vpow.pop %v6213
        %v6215 = vmul.f32 %v5230, 1.442695
        %v6216 = vpow.pop %v6215
        %v6217 = vmul.f32 %v5231, 1.442695
        %v6218 = vpow.pop %v6217
        %v6219 = vmul.f32 %v5232, 1.442695
        %v6220 = vpow.pop %v6219
        %v6221 = vmul.f32 %v5233, 1.442695
        %v6222 = vpow.pop %v6221
        %v6223 = vmul.f32 %v5234, 1.442695
        %v6224 = vpow.pop %v6223
        %v6225 = vmul.f32 %v5235, 1.442695
        %v6226 = vpow.pop %v6225
        %v6227 = vmul.f32 %v5236, 1.442695
        %v6228 = vpow.pop %v6227
        %v6229 = vmul.f32 %v5237, 1.442695
        %v6230 = vpow.pop %v6229
        %v6231 = vmul.f32 %v5238, 1.442695
        %v6232 = vpow.pop %v6231
        %v6233 = vmul.f32 %v5239, 1.442695
        %v6234 = vpow.pop %v6233
        %v6235 = vmul.f32 %v5240, 1.442695
        %v6236 = vpow.pop %v6235
        %v6237 = vmul.f32 %v5241, 1.442695
        %v6238 = vpow.pop %v6237
        %v6239 = vmul.f32 %v5242, 1.442695
        %v6240 = vpow.pop %v6239
        %v6241 = vmul.f32 %v5243, 1.442695
        %v6242 = vpow.pop %v6241
        %v6243 = vmul.f32 %v5244, 1.442695
        %v6244 = vpow.pop %v6243
        %v6245 = vmul.f32 %v5245, 1.442695
        %v6246 = vpow.pop %v6245
        %v6247 = vmul.f32 %v5246, 1.442695
        %v6248 = vpow.pop %v6247
        %v6249 = vmul.f32 %v5247, 1.442695
        %v6250 = vpow.pop %v6249
        %v6251 = vmul.f32 %v5248, 1.442695
        %v6252 = vpow.pop %v6251
        %v6253 = vmul.f32 %v5249, 1.442695
        %v6254 = vpow.pop %v6253
        %v6255 = vmul.f32 %v5250, 1.442695
        %v6256 = vpow.pop %v6255
        %v6257 = vmul.f32 %v5251, 1.442695
        %v6258 = vpow.pop %v6257
        %v6259 = vmul.f32 %v5252, 1.442695
        %v6260 = vpow.pop %v6259
        %v6261 = vmul.f32 %v5253, 1.442695
        %v6262 = vpow.pop %v6261
        %v6263 = vmul.f32 %v5254, 1.442695
        %v6264 = vpow.pop %v6263
        %v6265 = vmul.f32 %v5255, 1.442695
        %v6266 = vpow.pop %v6265
        %v6267 = vmul.f32 %v5256, 1.442695
        %v6268 = vpow.pop %v6267
        %v6269 = vmul.f32 %v5257, 1.442695
        %v6270 = vpow.pop %v6269
        %v6271 = vmul.f32 %v5258, 1.442695
        %v6272 = vpow.pop %v6271
        %v6273 = vmul.f32 %v5259, 1.442695
        %v6274 = vpow.pop %v6273
        %v6275 = vmul.f32 %v5260, 1.442695
        %v6276 = vpow.pop %v6275
        %v6277 = vmul.f32 %v5261, 1.442695
        %v6278 = vpow.pop %v6277
        %v6279 = vmul.f32 %v5262, 1.442695
        %v6280 = vpow.pop %v6279
        %v6281 = vmul.f32 %v5263, 1.442695
        %v6282 = vpow.pop %v6281
        %v6283 = vmul.f32 %v5264, 1.442695
        %v6284 = vpow.pop %v6283
        %v6285 = vmul.f32 %v5265, 1.442695
        %v6286 = vpow.pop %v6285
        %v6287 = vmul.f32 %v5266, 1.442695
        %v6288 = vpow.pop %v6287
        %v6289 = vmul.f32 %v5267, 1.442695
        %v6290 = vpow.pop %v6289
        %v6291 = vmul.f32 %v5268, 1.442695
        %v6292 = vpow.pop %v6291
        %v6293 = vadd.f32 %v5270, %v5272
        %6294 = vadd.xlane.f32.xlu0 %v6293
        %v6295 = vpop.xlane.xlu0 %6294
        %v6296 = vadd.f32 %v5274, %v5276
        %6297 = vadd.xlane.f32.xlu0 %v6296
        %v6298 = vpop.xlane.xlu0 %6297
        %v6299 = vadd.f32 %v5278, %v5280
        %6300 = vadd.xlane.f32.xlu0 %v6299
        %v6301 = vpop.xlane.xlu0 %6300
        %v6302 = vadd.f32 %v5282, %v5284
        %6303 = vadd.xlane.f32.xlu0 %v6302
        %v6304 = vpop.xlane.xlu0 %6303
        %v6305 = vadd.f32 %v5286, %v5288
        %6306 = vadd.xlane.f32.xlu0 %v6305
        %v6307 = vpop.xlane.xlu0 %6306
        %v6308 = vadd.f32 %v5290, %v5292
        %6309 = vadd.xlane.f32.xlu0 %v6308
        %v6310 = vpop.xlane.xlu0 %6309
        %v6311 = vadd.f32 %v5294, %v5296
        %6312 = vadd.xlane.f32.xlu0 %v6311
        %v6313 = vpop.xlane.xlu0 %6312
        %v6314 = vadd.f32 %v5298, %v5300
        %6315 = vadd.xlane.f32.xlu0 %v6314
        %v6316 = vpop.xlane.xlu0 %6315
        %v6317 = vadd.f32 %v5302, %v5304
        %6318 = vadd.xlane.f32.xlu0 %v6317
        %v6319 = vpop.xlane.xlu0 %6318
        %v6320 = vadd.f32 %v5306, %v5308
        %6321 = vadd.xlane.f32.xlu0 %v6320
        %v6322 = vpop.xlane.xlu0 %6321
        %v6323 = vadd.f32 %v5310, %v5312
        %6324 = vadd.xlane.f32.xlu0 %v6323
        %v6325 = vpop.xlane.xlu0 %6324
        %v6326 = vadd.f32 %v5314, %v5316
        %6327 = vadd.xlane.f32.xlu0 %v6326
        %v6328 = vpop.xlane.xlu0 %6327
        %v6329 = vadd.f32 %v5318, %v5320
        %6330 = vadd.xlane.f32.xlu0 %v6329
        %v6331 = vpop.xlane.xlu0 %6330
        %v6332 = vadd.f32 %v5322, %v5324
        %6333 = vadd.xlane.f32.xlu0 %v6332
        %v6334 = vpop.xlane.xlu0 %6333
        %v6335 = vadd.f32 %v5326, %v5328
        %6336 = vadd.xlane.f32.xlu0 %v6335
        %v6337 = vpop.xlane.xlu0 %6336
        %v6338 = vadd.f32 %v5330, %v5332
        %6339 = vadd.xlane.f32.xlu0 %v6338
        %v6340 = vpop.xlane.xlu0 %6339
        %v6341 = vadd.f32 %v5334, %v5336
        %6342 = vadd.xlane.f32.xlu0 %v6341
        %v6343 = vpop.xlane.xlu0 %6342
        %v6344 = vadd.f32 %v5338, %v5340
        %6345 = vadd.xlane.f32.xlu0 %v6344
        %v6346 = vpop.xlane.xlu0 %6345
        %v6347 = vadd.f32 %v5342, %v5344
        %6348 = vadd.xlane.f32.xlu0 %v6347
        %v6349 = vpop.xlane.xlu0 %6348
        %v6350 = vadd.f32 %v5346, %v5348
        %6351 = vadd.xlane.f32.xlu0 %v6350
        %v6352 = vpop.xlane.xlu0 %6351
        %v6353 = vadd.f32 %v5350, %v5352
        %6354 = vadd.xlane.f32.xlu0 %v6353
        %v6355 = vpop.xlane.xlu0 %6354
        %v6356 = vadd.f32 %v5354, %v5356
        %6357 = vadd.xlane.f32.xlu0 %v6356
        %v6358 = vpop.xlane.xlu0 %6357
        %v6359 = vadd.f32 %v5358, %v5360
        %6360 = vadd.xlane.f32.xlu0 %v6359
        %v6361 = vpop.xlane.xlu0 %6360
        %v6362 = vadd.f32 %v5362, %v5364
        %6363 = vadd.xlane.f32.xlu0 %v6362
        %v6364 = vpop.xlane.xlu0 %6363
        %v6365 = vadd.f32 %v5366, %v5368
        %6366 = vadd.xlane.f32.xlu0 %v6365
        %v6367 = vpop.xlane.xlu0 %6366
        %v6368 = vadd.f32 %v5370, %v5372
        %6369 = vadd.xlane.f32.xlu0 %v6368
        %v6370 = vpop.xlane.xlu0 %6369
        %v6371 = vadd.f32 %v5374, %v5376
        %6372 = vadd.xlane.f32.xlu0 %v6371
        %v6373 = vpop.xlane.xlu0 %6372
        %v6374 = vadd.f32 %v5378, %v5380
        %6375 = vadd.xlane.f32.xlu0 %v6374
        %v6376 = vpop.xlane.xlu0 %6375
        %v6377 = vadd.f32 %v5382, %v5384
        %6378 = vadd.xlane.f32.xlu0 %v6377
        %v6379 = vpop.xlane.xlu0 %6378
        %v6380 = vadd.f32 %v5386, %v5388
        %6381 = vadd.xlane.f32.xlu0 %v6380
        %v6382 = vpop.xlane.xlu0 %6381
        %v6383 = vadd.f32 %v5390, %v5392
        %6384 = vadd.xlane.f32.xlu0 %v6383
        %v6385 = vpop.xlane.xlu0 %6384
        %v6386 = vadd.f32 %v5394, %v5396
        %6387 = vadd.xlane.f32.xlu0 %v6386
        %v6388 = vpop.xlane.xlu0 %6387
        %v6389 = vadd.f32 %v5398, %v5400
        %6390 = vadd.xlane.f32.xlu0 %v6389
        %v6391 = vpop.xlane.xlu0 %6390
        %v6392 = vadd.f32 %v5402, %v5404
        %6393 = vadd.xlane.f32.xlu0 %v6392
        %v6394 = vpop.xlane.xlu0 %6393
        %v6395 = vadd.f32 %v5406, %v5408
        %6396 = vadd.xlane.f32.xlu0 %v6395
        %v6397 = vpop.xlane.xlu0 %6396
        %v6398 = vadd.f32 %v5410, %v5412
        %6399 = vadd.xlane.f32.xlu0 %v6398
        %v6400 = vpop.xlane.xlu0 %6399
        %v6401 = vadd.f32 %v5414, %v5416
        %6402 = vadd.xlane.f32.xlu0 %v6401
        %v6403 = vpop.xlane.xlu0 %6402
        %v6404 = vadd.f32 %v5418, %v5420
        %6405 = vadd.xlane.f32.xlu0 %v6404
        %v6406 = vpop.xlane.xlu0 %6405
        %v6407 = vadd.f32 %v5422, %v5424
        %6408 = vadd.xlane.f32.xlu0 %v6407
        %v6409 = vpop.xlane.xlu0 %6408
        %v6410 = vadd.f32 %v5426, %v5428
        %6411 = vadd.xlane.f32.xlu0 %v6410
        %v6412 = vpop.xlane.xlu0 %6411
        %v6413 = vadd.f32 %v5430, %v5432
        %6414 = vadd.xlane.f32.xlu0 %v6413
        %v6415 = vpop.xlane.xlu0 %6414
        %v6416 = vadd.f32 %v5434, %v5436
        %6417 = vadd.xlane.f32.xlu0 %v6416
        %v6418 = vpop.xlane.xlu0 %6417
        %v6419 = vadd.f32 %v5438, %v5440
        %6420 = vadd.xlane.f32.xlu0 %v6419
        %v6421 = vpop.xlane.xlu0 %6420
        %v6422 = vadd.f32 %v5442, %v5444
        %6423 = vadd.xlane.f32.xlu0 %v6422
        %v6424 = vpop.xlane.xlu0 %6423
        %v6425 = vadd.f32 %v5446, %v5448
        %6426 = vadd.xlane.f32.xlu0 %v6425
        %v6427 = vpop.xlane.xlu0 %6426
        %v6428 = vadd.f32 %v5450, %v5452
        %6429 = vadd.xlane.f32.xlu0 %v6428
        %v6430 = vpop.xlane.xlu0 %6429
        %v6431 = vadd.f32 %v5454, %v5456
        %6432 = vadd.xlane.f32.xlu0 %v6431
        %v6433 = vpop.xlane.xlu0 %6432
        %v6434 = vadd.f32 %v5458, %v5460
        %6435 = vadd.xlane.f32.xlu0 %v6434
        %v6436 = vpop.xlane.xlu0 %6435
        %v6437 = vadd.f32 %v5462, %v5464
        %6438 = vadd.xlane.f32.xlu0 %v6437
        %v6439 = vpop.xlane.xlu0 %6438
        %v6440 = vadd.f32 %v5466, %v5468
        %6441 = vadd.xlane.f32.xlu0 %v6440
        %v6442 = vpop.xlane.xlu0 %6441
        %v6443 = vadd.f32 %v5470, %v5472
        %6444 = vadd.xlane.f32.xlu0 %v6443
        %v6445 = vpop.xlane.xlu0 %6444
        %v6446 = vadd.f32 %v5474, %v5476
        %6447 = vadd.xlane.f32.xlu0 %v6446
        %v6448 = vpop.xlane.xlu0 %6447
        %v6449 = vadd.f32 %v5478, %v5480
        %6450 = vadd.xlane.f32.xlu0 %v6449
        %v6451 = vpop.xlane.xlu0 %6450
        %v6452 = vadd.f32 %v5482, %v5484
        %6453 = vadd.xlane.f32.xlu0 %v6452
        %v6454 = vpop.xlane.xlu0 %6453
        %v6455 = vadd.f32 %v5486, %v5488
        %6456 = vadd.xlane.f32.xlu0 %v6455
        %v6457 = vpop.xlane.xlu0 %6456
        %v6458 = vadd.f32 %v5490, %v5492
        %6459 = vadd.xlane.f32.xlu0 %v6458
        %v6460 = vpop.xlane.xlu0 %6459
        %v6461 = vadd.f32 %v5494, %v5496
        %6462 = vadd.xlane.f32.xlu0 %v6461
        %v6463 = vpop.xlane.xlu0 %6462
        %v6464 = vadd.f32 %v5498, %v5500
        %6465 = vadd.xlane.f32.xlu0 %v6464
        %v6466 = vpop.xlane.xlu0 %6465
        %v6467 = vadd.f32 %v5502, %v5504
        %6468 = vadd.xlane.f32.xlu0 %v6467
        %v6469 = vpop.xlane.xlu0 %6468
        %v6470 = vadd.f32 %v5506, %v5508
        %6471 = vadd.xlane.f32.xlu0 %v6470
        %v6472 = vpop.xlane.xlu0 %6471
        %v6473 = vadd.f32 %v5510, %v5512
        %6474 = vadd.xlane.f32.xlu0 %v6473
        %v6475 = vpop.xlane.xlu0 %6474
        %v6476 = vadd.f32 %v5514, %v5516
        %6477 = vadd.xlane.f32.xlu0 %v6476
        %v6478 = vpop.xlane.xlu0 %6477
        %v6479 = vadd.f32 %v5518, %v5520
        %6480 = vadd.xlane.f32.xlu0 %v6479
        %v6481 = vpop.xlane.xlu0 %6480
        %v6482 = vadd.f32 %v5522, %v5524
        %6483 = vadd.xlane.f32.xlu0 %v6482
        %v6484 = vpop.xlane.xlu0 %6483
        %v6485 = vadd.f32 %v5526, %v5528
        %6486 = vadd.xlane.f32.xlu0 %v6485
        %v6487 = vpop.xlane.xlu0 %6486
        %v6488 = vadd.f32 %v5530, %v5532
        %6489 = vadd.xlane.f32.xlu0 %v6488
        %v6490 = vpop.xlane.xlu0 %6489
        %v6491 = vadd.f32 %v5534, %v5536
        %6492 = vadd.xlane.f32.xlu0 %v6491
        %v6493 = vpop.xlane.xlu0 %6492
        %v6494 = vadd.f32 %v5538, %v5540
        %6495 = vadd.xlane.f32.xlu0 %v6494
        %v6496 = vpop.xlane.xlu0 %6495
        %v6497 = vadd.f32 %v5542, %v5544
        %6498 = vadd.xlane.f32.xlu0 %v6497
        %v6499 = vpop.xlane.xlu0 %6498
        %v6500 = vadd.f32 %v5546, %v5548
        %6501 = vadd.xlane.f32.xlu0 %v6500
        %v6502 = vpop.xlane.xlu0 %6501
        %v6503 = vadd.f32 %v5550, %v5552
        %6504 = vadd.xlane.f32.xlu0 %v6503
        %v6505 = vpop.xlane.xlu0 %6504
        %v6506 = vadd.f32 %v5554, %v5556
        %6507 = vadd.xlane.f32.xlu0 %v6506
        %v6508 = vpop.xlane.xlu0 %6507
        %v6509 = vadd.f32 %v5558, %v5560
        %6510 = vadd.xlane.f32.xlu0 %v6509
        %v6511 = vpop.xlane.xlu0 %6510
        %v6512 = vadd.f32 %v5562, %v5564
        %6513 = vadd.xlane.f32.xlu0 %v6512
        %v6514 = vpop.xlane.xlu0 %6513
        %v6515 = vadd.f32 %v5566, %v5568
        %6516 = vadd.xlane.f32.xlu0 %v6515
        %v6517 = vpop.xlane.xlu0 %6516
        %v6518 = vadd.f32 %v5570, %v5572
        %6519 = vadd.xlane.f32.xlu0 %v6518
        %v6520 = vpop.xlane.xlu0 %6519
        %v6521 = vadd.f32 %v5574, %v5576
        %6522 = vadd.xlane.f32.xlu0 %v6521
        %v6523 = vpop.xlane.xlu0 %6522
        %v6524 = vadd.f32 %v5578, %v5580
        %6525 = vadd.xlane.f32.xlu0 %v6524
        %v6526 = vpop.xlane.xlu0 %6525
        %v6527 = vadd.f32 %v5582, %v5584
        %6528 = vadd.xlane.f32.xlu0 %v6527
        %v6529 = vpop.xlane.xlu0 %6528
        %v6530 = vadd.f32 %v5586, %v5588
        %6531 = vadd.xlane.f32.xlu0 %v6530
        %v6532 = vpop.xlane.xlu0 %6531
        %v6533 = vadd.f32 %v5590, %v5592
        %6534 = vadd.xlane.f32.xlu0 %v6533
        %v6535 = vpop.xlane.xlu0 %6534
        %v6536 = vadd.f32 %v5594, %v5596
        %6537 = vadd.xlane.f32.xlu0 %v6536
        %v6538 = vpop.xlane.xlu0 %6537
        %v6539 = vadd.f32 %v5598, %v5600
        %6540 = vadd.xlane.f32.xlu0 %v6539
        %v6541 = vpop.xlane.xlu0 %6540
        %v6542 = vadd.f32 %v5602, %v5604
        %6543 = vadd.xlane.f32.xlu0 %v6542
        %v6544 = vpop.xlane.xlu0 %6543
        %v6545 = vadd.f32 %v5606, %v5608
        %6546 = vadd.xlane.f32.xlu0 %v6545
        %v6547 = vpop.xlane.xlu0 %6546
        %v6548 = vadd.f32 %v5610, %v5612
        %6549 = vadd.xlane.f32.xlu0 %v6548
        %v6550 = vpop.xlane.xlu0 %6549
        %v6551 = vadd.f32 %v5614, %v5616
        %6552 = vadd.xlane.f32.xlu0 %v6551
        %v6553 = vpop.xlane.xlu0 %6552
        %v6554 = vadd.f32 %v5618, %v5620
        %6555 = vadd.xlane.f32.xlu0 %v6554
        %v6556 = vpop.xlane.xlu0 %6555
        %v6557 = vadd.f32 %v5622, %v5624
        %6558 = vadd.xlane.f32.xlu0 %v6557
        %v6559 = vpop.xlane.xlu0 %6558
        %v6560 = vadd.f32 %v5626, %v5628
        %6561 = vadd.xlane.f32.xlu0 %v6560
        %v6562 = vpop.xlane.xlu0 %6561
        %v6563 = vadd.f32 %v5630, %v5632
        %6564 = vadd.xlane.f32.xlu0 %v6563
        %v6565 = vpop.xlane.xlu0 %6564
        %v6566 = vadd.f32 %v5634, %v5636
        %6567 = vadd.xlane.f32.xlu0 %v6566
        %v6568 = vpop.xlane.xlu0 %6567
        %v6569 = vadd.f32 %v5638, %v5640
        %6570 = vadd.xlane.f32.xlu0 %v6569
        %v6571 = vpop.xlane.xlu0 %6570
        %v6572 = vadd.f32 %v5642, %v5644
        %6573 = vadd.xlane.f32.xlu0 %v6572
        %v6574 = vpop.xlane.xlu0 %6573
        %v6575 = vadd.f32 %v5646, %v5648
        %6576 = vadd.xlane.f32.xlu0 %v6575
        %v6577 = vpop.xlane.xlu0 %6576
        %v6578 = vadd.f32 %v5650, %v5652
        %6579 = vadd.xlane.f32.xlu0 %v6578
        %v6580 = vpop.xlane.xlu0 %6579
        %v6581 = vadd.f32 %v5654, %v5656
        %6582 = vadd.xlane.f32.xlu0 %v6581
        %v6583 = vpop.xlane.xlu0 %6582
        %v6584 = vadd.f32 %v5658, %v5660
        %6585 = vadd.xlane.f32.xlu0 %v6584
        %v6586 = vpop.xlane.xlu0 %6585
        %v6587 = vadd.f32 %v5662, %v5664
        %6588 = vadd.xlane.f32.xlu0 %v6587
        %v6589 = vpop.xlane.xlu0 %6588
        %v6590 = vadd.f32 %v5666, %v5668
        %6591 = vadd.xlane.f32.xlu0 %v6590
        %v6592 = vpop.xlane.xlu0 %6591
        %v6593 = vadd.f32 %v5670, %v5672
        %6594 = vadd.xlane.f32.xlu0 %v6593
        %v6595 = vpop.xlane.xlu0 %6594
        %v6596 = vadd.f32 %v5674, %v5676
        %6597 = vadd.xlane.f32.xlu0 %v6596
        %v6598 = vpop.xlane.xlu0 %6597
        %v6599 = vadd.f32 %v5678, %v5680
        %6600 = vadd.xlane.f32.xlu0 %v6599
        %v6601 = vpop.xlane.xlu0 %6600
        %v6602 = vadd.f32 %v5682, %v5684
        %6603 = vadd.xlane.f32.xlu0 %v6602
        %v6604 = vpop.xlane.xlu0 %6603
        %v6605 = vadd.f32 %v5686, %v5688
        %6606 = vadd.xlane.f32.xlu0 %v6605
        %v6607 = vpop.xlane.xlu0 %6606
        %v6608 = vadd.f32 %v5690, %v5692
        %6609 = vadd.xlane.f32.xlu0 %v6608
        %v6610 = vpop.xlane.xlu0 %6609
        %v6611 = vadd.f32 %v5694, %v5696
        %6612 = vadd.xlane.f32.xlu0 %v6611
        %v6613 = vpop.xlane.xlu0 %6612
        %v6614 = vadd.f32 %v5698, %v5700
        %6615 = vadd.xlane.f32.xlu0 %v6614
        %v6616 = vpop.xlane.xlu0 %6615
        %v6617 = vadd.f32 %v5702, %v5704
        %6618 = vadd.xlane.f32.xlu0 %v6617
        %v6619 = vpop.xlane.xlu0 %6618
        %v6620 = vadd.f32 %v5706, %v5708
        %6621 = vadd.xlane.f32.xlu0 %v6620
        %v6622 = vpop.xlane.xlu0 %6621
        %v6623 = vadd.f32 %v5710, %v5712
        %6624 = vadd.xlane.f32.xlu0 %v6623
        %v6625 = vpop.xlane.xlu0 %6624
        %v6626 = vadd.f32 %v5714, %v5716
        %6627 = vadd.xlane.f32.xlu0 %v6626
        %v6628 = vpop.xlane.xlu0 %6627
        %v6629 = vadd.f32 %v5718, %v5720
        %6630 = vadd.xlane.f32.xlu0 %v6629
        %v6631 = vpop.xlane.xlu0 %6630
        %v6632 = vadd.f32 %v5722, %v5724
        %6633 = vadd.xlane.f32.xlu0 %v6632
        %v6634 = vpop.xlane.xlu0 %6633
        %v6635 = vadd.f32 %v5726, %v5728
        %6636 = vadd.xlane.f32.xlu0 %v6635
        %v6637 = vpop.xlane.xlu0 %6636
        %v6638 = vadd.f32 %v5730, %v5732
        %6639 = vadd.xlane.f32.xlu0 %v6638
        %v6640 = vpop.xlane.xlu0 %6639
        %v6641 = vadd.f32 %v5734, %v5736
        %6642 = vadd.xlane.f32.xlu0 %v6641
        %v6643 = vpop.xlane.xlu0 %6642
        %v6644 = vadd.f32 %v5738, %v5740
        %6645 = vadd.xlane.f32.xlu0 %v6644
        %v6646 = vpop.xlane.xlu0 %6645
        %v6647 = vadd.f32 %v5742, %v5744
        %6648 = vadd.xlane.f32.xlu0 %v6647
        %v6649 = vpop.xlane.xlu0 %6648
        %v6650 = vadd.f32 %v5746, %v5748
        %6651 = vadd.xlane.f32.xlu0 %v6650
        %v6652 = vpop.xlane.xlu0 %6651
        %v6653 = vadd.f32 %v5750, %v5752
        %6654 = vadd.xlane.f32.xlu0 %v6653
        %v6655 = vpop.xlane.xlu0 %6654
        %v6656 = vadd.f32 %v5754, %v5756
        %6657 = vadd.xlane.f32.xlu0 %v6656
        %v6658 = vpop.xlane.xlu0 %6657
        %v6659 = vadd.f32 %v5758, %v5760
        %6660 = vadd.xlane.f32.xlu0 %v6659
        %v6661 = vpop.xlane.xlu0 %6660
        %v6662 = vadd.f32 %v5762, %v5764
        %6663 = vadd.xlane.f32.xlu0 %v6662
        %v6664 = vpop.xlane.xlu0 %6663
        %v6665 = vadd.f32 %v5766, %v5768
        %6666 = vadd.xlane.f32.xlu0 %v6665
        %v6667 = vpop.xlane.xlu0 %6666
        %v6668 = vadd.f32 %v5770, %v5772
        %6669 = vadd.xlane.f32.xlu0 %v6668
        %v6670 = vpop.xlane.xlu0 %6669
        %v6671 = vadd.f32 %v5774, %v5776
        %6672 = vadd.xlane.f32.xlu0 %v6671
        %v6673 = vpop.xlane.xlu0 %6672
        %v6674 = vadd.f32 %v5778, %v5780
        %6675 = vadd.xlane.f32.xlu0 %v6674
        %v6676 = vpop.xlane.xlu0 %6675
        %v6677 = vadd.f32 %v5782, %v5784
        %6678 = vadd.xlane.f32.xlu0 %v6677
        %v6679 = vpop.xlane.xlu0 %6678
        %v6680 = vadd.f32 %v5786, %v5788
        %6681 = vadd.xlane.f32.xlu0 %v6680
        %v6682 = vpop.xlane.xlu0 %6681
        %v6683 = vadd.f32 %v5790, %v5792
        %6684 = vadd.xlane.f32.xlu0 %v6683
        %v6685 = vpop.xlane.xlu0 %6684
        %v6686 = vadd.f32 %v5794, %v5796
        %6687 = vadd.xlane.f32.xlu0 %v6686
        %v6688 = vpop.xlane.xlu0 %6687
        %v6689 = vadd.f32 %v5798, %v5800
        %6690 = vadd.xlane.f32.xlu0 %v6689
        %v6691 = vpop.xlane.xlu0 %6690
        %v6692 = vadd.f32 %v5802, %v5804
        %6693 = vadd.xlane.f32.xlu0 %v6692
        %v6694 = vpop.xlane.xlu0 %6693
        %v6695 = vadd.f32 %v5806, %v5808
        %6696 = vadd.xlane.f32.xlu0 %v6695
        %v6697 = vpop.xlane.xlu0 %6696
        %v6698 = vadd.f32 %v5810, %v5812
        %6699 = vadd.xlane.f32.xlu0 %v6698
        %v6700 = vpop.xlane.xlu0 %6699
        %v6701 = vadd.f32 %v5814, %v5816
        %6702 = vadd.xlane.f32.xlu0 %v6701
        %v6703 = vpop.xlane.xlu0 %6702
        %v6704 = vadd.f32 %v5818, %v5820
        %6705 = vadd.xlane.f32.xlu0 %v6704
        %v6706 = vpop.xlane.xlu0 %6705
        %v6707 = vadd.f32 %v5822, %v5824
        %6708 = vadd.xlane.f32.xlu0 %v6707
        %v6709 = vpop.xlane.xlu0 %6708
        %v6710 = vadd.f32 %v5826, %v5828
        %6711 = vadd.xlane.f32.xlu0 %v6710
        %v6712 = vpop.xlane.xlu0 %6711
        %v6713 = vadd.f32 %v5830, %v5832
        %6714 = vadd.xlane.f32.xlu0 %v6713
        %v6715 = vpop.xlane.xlu0 %6714
        %v6716 = vadd.f32 %v5834, %v5836
        %6717 = vadd.xlane.f32.xlu0 %v6716
        %v6718 = vpop.xlane.xlu0 %6717
        %v6719 = vadd.f32 %v5838, %v5840
        %6720 = vadd.xlane.f32.xlu0 %v6719
        %v6721 = vpop.xlane.xlu0 %6720
        %v6722 = vadd.f32 %v5842, %v5844
        %6723 = vadd.xlane.f32.xlu0 %v6722
        %v6724 = vpop.xlane.xlu0 %6723
        %v6725 = vadd.f32 %v5846, %v5848
        %6726 = vadd.xlane.f32.xlu0 %v6725
        %v6727 = vpop.xlane.xlu0 %6726
        %v6728 = vadd.f32 %v5850, %v5852
        %6729 = vadd.xlane.f32.xlu0 %v6728
        %v6730 = vpop.xlane.xlu0 %6729
        %v6731 = vadd.f32 %v5854, %v5856
        %6732 = vadd.xlane.f32.xlu0 %v6731
        %v6733 = vpop.xlane.xlu0 %6732
        %v6734 = vadd.f32 %v5858, %v5860
        %6735 = vadd.xlane.f32.xlu0 %v6734
        %v6736 = vpop.xlane.xlu0 %6735
        %v6737 = vadd.f32 %v5862, %v5864
        %6738 = vadd.xlane.f32.xlu0 %v6737
        %v6739 = vpop.xlane.xlu0 %6738
        %v6740 = vadd.f32 %v5866, %v5868
        %6741 = vadd.xlane.f32.xlu0 %v6740
        %v6742 = vpop.xlane.xlu0 %6741
        %v6743 = vadd.f32 %v5870, %v5872
        %6744 = vadd.xlane.f32.xlu0 %v6743
        %v6745 = vpop.xlane.xlu0 %6744
        %v6746 = vadd.f32 %v5874, %v5876
        %6747 = vadd.xlane.f32.xlu0 %v6746
        %v6748 = vpop.xlane.xlu0 %6747
        %v6749 = vadd.f32 %v5878, %v5880
        %6750 = vadd.xlane.f32.xlu0 %v6749
        %v6751 = vpop.xlane.xlu0 %6750
        %v6752 = vadd.f32 %v5882, %v5884
        %6753 = vadd.xlane.f32.xlu0 %v6752
        %v6754 = vpop.xlane.xlu0 %6753
        %v6755 = vadd.f32 %v5886, %v5888
        %6756 = vadd.xlane.f32.xlu0 %v6755
        %v6757 = vpop.xlane.xlu0 %6756
        %v6758 = vadd.f32 %v5890, %v5892
        %6759 = vadd.xlane.f32.xlu0 %v6758
        %v6760 = vpop.xlane.xlu0 %6759
        %v6761 = vadd.f32 %v5894, %v5896
        %6762 = vadd.xlane.f32.xlu0 %v6761
        %v6763 = vpop.xlane.xlu0 %6762
        %v6764 = vadd.f32 %v5898, %v5900
        %6765 = vadd.xlane.f32.xlu0 %v6764
        %v6766 = vpop.xlane.xlu0 %6765
        %v6767 = vadd.f32 %v5902, %v5904
        %6768 = vadd.xlane.f32.xlu0 %v6767
        %v6769 = vpop.xlane.xlu0 %6768
        %v6770 = vadd.f32 %v5906, %v5908
        %6771 = vadd.xlane.f32.xlu0 %v6770
        %v6772 = vpop.xlane.xlu0 %6771
        %v6773 = vadd.f32 %v5910, %v5912
        %6774 = vadd.xlane.f32.xlu0 %v6773
        %v6775 = vpop.xlane.xlu0 %6774
        %v6776 = vadd.f32 %v5914, %v5916
        %6777 = vadd.xlane.f32.xlu0 %v6776
        %v6778 = vpop.xlane.xlu0 %6777
        %v6779 = vadd.f32 %v5918, %v5920
        %6780 = vadd.xlane.f32.xlu0 %v6779
        %v6781 = vpop.xlane.xlu0 %6780
        %v6782 = vadd.f32 %v5922, %v5924
        %6783 = vadd.xlane.f32.xlu0 %v6782
        %v6784 = vpop.xlane.xlu0 %6783
        %v6785 = vadd.f32 %v5926, %v5928
        %6786 = vadd.xlane.f32.xlu0 %v6785
        %v6787 = vpop.xlane.xlu0 %6786
        %v6788 = vadd.f32 %v5930, %v5932
        %6789 = vadd.xlane.f32.xlu0 %v6788
        %v6790 = vpop.xlane.xlu0 %6789
        %v6791 = vadd.f32 %v5934, %v5936
        %6792 = vadd.xlane.f32.xlu0 %v6791
        %v6793 = vpop.xlane.xlu0 %6792
        %v6794 = vadd.f32 %v5938, %v5940
        %6795 = vadd.xlane.f32.xlu0 %v6794
        %v6796 = vpop.xlane.xlu0 %6795
        %v6797 = vadd.f32 %v5942, %v5944
        %6798 = vadd.xlane.f32.xlu0 %v6797
        %v6799 = vpop.xlane.xlu0 %6798
        %v6800 = vadd.f32 %v5946, %v5948
        %6801 = vadd.xlane.f32.xlu0 %v6800
        %v6802 = vpop.xlane.xlu0 %6801
        %v6803 = vadd.f32 %v5950, %v5952
        %6804 = vadd.xlane.f32.xlu0 %v6803
        %v6805 = vpop.xlane.xlu0 %6804
        %v6806 = vadd.f32 %v5954, %v5956
        %6807 = vadd.xlane.f32.xlu0 %v6806
        %v6808 = vpop.xlane.xlu0 %6807
        %v6809 = vadd.f32 %v5958, %v5960
        %6810 = vadd.xlane.f32.xlu0 %v6809
        %v6811 = vpop.xlane.xlu0 %6810
        %v6812 = vadd.f32 %v5962, %v5964
        %6813 = vadd.xlane.f32.xlu0 %v6812
        %v6814 = vpop.xlane.xlu0 %6813
        %v6815 = vadd.f32 %v5966, %v5968
        %6816 = vadd.xlane.f32.xlu0 %v6815
        %v6817 = vpop.xlane.xlu0 %6816
        %v6818 = vadd.f32 %v5970, %v5972
        %6819 = vadd.xlane.f32.xlu0 %v6818
        %v6820 = vpop.xlane.xlu0 %6819
        %v6821 = vadd.f32 %v5974, %v5976
        %6822 = vadd.xlane.f32.xlu0 %v6821
        %v6823 = vpop.xlane.xlu0 %6822
        %v6824 = vadd.f32 %v5978, %v5980
        %6825 = vadd.xlane.f32.xlu0 %v6824
        %v6826 = vpop.xlane.xlu0 %6825
        %v6827 = vadd.f32 %v5982, %v5984
        %6828 = vadd.xlane.f32.xlu0 %v6827
        %v6829 = vpop.xlane.xlu0 %6828
        %v6830 = vadd.f32 %v5986, %v5988
        %6831 = vadd.xlane.f32.xlu0 %v6830
        %v6832 = vpop.xlane.xlu0 %6831
        %v6833 = vadd.f32 %v5990, %v5992
        %6834 = vadd.xlane.f32.xlu0 %v6833
        %v6835 = vpop.xlane.xlu0 %6834
        %v6836 = vadd.f32 %v5994, %v5996
        %6837 = vadd.xlane.f32.xlu0 %v6836
        %v6838 = vpop.xlane.xlu0 %6837
        %v6839 = vadd.f32 %v5998, %v6000
        %6840 = vadd.xlane.f32.xlu0 %v6839
        %v6841 = vpop.xlane.xlu0 %6840
        %v6842 = vadd.f32 %v6002, %v6004
        %6843 = vadd.xlane.f32.xlu0 %v6842
        %v6844 = vpop.xlane.xlu0 %6843
        %v6845 = vadd.f32 %v6006, %v6008
        %6846 = vadd.xlane.f32.xlu0 %v6845
        %v6847 = vpop.xlane.xlu0 %6846
        %v6848 = vadd.f32 %v6010, %v6012
        %6849 = vadd.xlane.f32.xlu0 %v6848
        %v6850 = vpop.xlane.xlu0 %6849
        %v6851 = vadd.f32 %v6014, %v6016
        %6852 = vadd.xlane.f32.xlu0 %v6851
        %v6853 = vpop.xlane.xlu0 %6852
        %v6854 = vadd.f32 %v6018, %v6020
        %6855 = vadd.xlane.f32.xlu0 %v6854
        %v6856 = vpop.xlane.xlu0 %6855
        %v6857 = vadd.f32 %v6022, %v6024
        %6858 = vadd.xlane.f32.xlu0 %v6857
        %v6859 = vpop.xlane.xlu0 %6858
        %v6860 = vadd.f32 %v6026, %v6028
        %6861 = vadd.xlane.f32.xlu0 %v6860
        %v6862 = vpop.xlane.xlu0 %6861
        %v6863 = vadd.f32 %v6030, %v6032
        %6864 = vadd.xlane.f32.xlu0 %v6863
        %v6865 = vpop.xlane.xlu0 %6864
        %v6866 = vadd.f32 %v6034, %v6036
        %6867 = vadd.xlane.f32.xlu0 %v6866
        %v6868 = vpop.xlane.xlu0 %6867
        %v6869 = vadd.f32 %v6038, %v6040
        %6870 = vadd.xlane.f32.xlu0 %v6869
        %v6871 = vpop.xlane.xlu0 %6870
        %v6872 = vadd.f32 %v6042, %v6044
        %6873 = vadd.xlane.f32.xlu0 %v6872
        %v6874 = vpop.xlane.xlu0 %6873
        %v6875 = vadd.f32 %v6046, %v6048
        %6876 = vadd.xlane.f32.xlu0 %v6875
        %v6877 = vpop.xlane.xlu0 %6876
        %v6878 = vadd.f32 %v6050, %v6052
        %6879 = vadd.xlane.f32.xlu0 %v6878
        %v6880 = vpop.xlane.xlu0 %6879
        %v6881 = vadd.f32 %v6054, %v6056
        %6882 = vadd.xlane.f32.xlu0 %v6881
        %v6883 = vpop.xlane.xlu0 %6882
        %v6884 = vadd.f32 %v6058, %v6060
        %6885 = vadd.xlane.f32.xlu0 %v6884
        %v6886 = vpop.xlane.xlu0 %6885
        %v6887 = vadd.f32 %v6062, %v6064
        %6888 = vadd.xlane.f32.xlu0 %v6887
        %v6889 = vpop.xlane.xlu0 %6888
        %v6890 = vadd.f32 %v6066, %v6068
        %6891 = vadd.xlane.f32.xlu0 %v6890
        %v6892 = vpop.xlane.xlu0 %6891
        %v6893 = vadd.f32 %v6070, %v6072
        %6894 = vadd.xlane.f32.xlu0 %v6893
        %v6895 = vpop.xlane.xlu0 %6894
        %v6896 = vadd.f32 %v6074, %v6076
        %6897 = vadd.xlane.f32.xlu0 %v6896
        %v6898 = vpop.xlane.xlu0 %6897
        %v6899 = vadd.f32 %v6078, %v6080
        %6900 = vadd.xlane.f32.xlu0 %v6899
        %v6901 = vpop.xlane.xlu0 %6900
        %v6902 = vadd.f32 %v6082, %v6084
        %6903 = vadd.xlane.f32.xlu0 %v6902
        %v6904 = vpop.xlane.xlu0 %6903
        %v6905 = vadd.f32 %v6086, %v6088
        %6906 = vadd.xlane.f32.xlu0 %v6905
        %v6907 = vpop.xlane.xlu0 %6906
        %v6908 = vadd.f32 %v6090, %v6092
        %6909 = vadd.xlane.f32.xlu0 %v6908
        %v6910 = vpop.xlane.xlu0 %6909
        %v6911 = vadd.f32 %v6094, %v6096
        %6912 = vadd.xlane.f32.xlu0 %v6911
        %v6913 = vpop.xlane.xlu0 %6912
        %v6914 = vadd.f32 %v6098, %v6100
        %6915 = vadd.xlane.f32.xlu0 %v6914
        %v6916 = vpop.xlane.xlu0 %6915
        %v6917 = vadd.f32 %v6102, %v6104
        %6918 = vadd.xlane.f32.xlu0 %v6917
        %v6919 = vpop.xlane.xlu0 %6918
        %v6920 = vadd.f32 %v6106, %v6108
        %6921 = vadd.xlane.f32.xlu0 %v6920
        %v6922 = vpop.xlane.xlu0 %6921
        %v6923 = vadd.f32 %v6110, %v6112
        %6924 = vadd.xlane.f32.xlu0 %v6923
        %v6925 = vpop.xlane.xlu0 %6924
        %v6926 = vadd.f32 %v6114, %v6116
        %6927 = vadd.xlane.f32.xlu0 %v6926
        %v6928 = vpop.xlane.xlu0 %6927
        %v6929 = vadd.f32 %v6118, %v6120
        %6930 = vadd.xlane.f32.xlu0 %v6929
        %v6931 = vpop.xlane.xlu0 %6930
        %v6932 = vadd.f32 %v6122, %v6124
        %6933 = vadd.xlane.f32.xlu0 %v6932
        %v6934 = vpop.xlane.xlu0 %6933
        %v6935 = vadd.f32 %v6126, %v6128
        %6936 = vadd.xlane.f32.xlu0 %v6935
        %v6937 = vpop.xlane.xlu0 %6936
        %v6938 = vadd.f32 %v6130, %v6132
        %6939 = vadd.xlane.f32.xlu0 %v6938
        %v6940 = vpop.xlane.xlu0 %6939
        %v6941 = vadd.f32 %v6134, %v6136
        %6942 = vadd.xlane.f32.xlu0 %v6941
        %v6943 = vpop.xlane.xlu0 %6942
        %v6944 = vadd.f32 %v6138, %v6140
        %6945 = vadd.xlane.f32.xlu0 %v6944
        %v6946 = vpop.xlane.xlu0 %6945
        %v6947 = vadd.f32 %v6142, %v6144
        %6948 = vadd.xlane.f32.xlu0 %v6947
        %v6949 = vpop.xlane.xlu0 %6948
        %v6950 = vadd.f32 %v6146, %v6148
        %6951 = vadd.xlane.f32.xlu0 %v6950
        %v6952 = vpop.xlane.xlu0 %6951
        %v6953 = vadd.f32 %v6150, %v6152
        %6954 = vadd.xlane.f32.xlu0 %v6953
        %v6955 = vpop.xlane.xlu0 %6954
        %v6956 = vadd.f32 %v6154, %v6156
        %6957 = vadd.xlane.f32.xlu0 %v6956
        %v6958 = vpop.xlane.xlu0 %6957
        %v6959 = vadd.f32 %v6158, %v6160
        %6960 = vadd.xlane.f32.xlu0 %v6959
        %v6961 = vpop.xlane.xlu0 %6960
        %v6962 = vadd.f32 %v6162, %v6164
        %6963 = vadd.xlane.f32.xlu0 %v6962
        %v6964 = vpop.xlane.xlu0 %6963
        %v6965 = vadd.f32 %v6166, %v6168
        %6966 = vadd.xlane.f32.xlu0 %v6965
        %v6967 = vpop.xlane.xlu0 %6966
        %v6968 = vadd.f32 %v6170, %v6172
        %6969 = vadd.xlane.f32.xlu0 %v6968
        %v6970 = vpop.xlane.xlu0 %6969
        %v6971 = vadd.f32 %v6174, %v6176
        %6972 = vadd.xlane.f32.xlu0 %v6971
        %v6973 = vpop.xlane.xlu0 %6972
        %v6974 = vadd.f32 %v6178, %v6180
        %6975 = vadd.xlane.f32.xlu0 %v6974
        %v6976 = vpop.xlane.xlu0 %6975
        %v6977 = vadd.f32 %v6182, %v6184
        %6978 = vadd.xlane.f32.xlu0 %v6977
        %v6979 = vpop.xlane.xlu0 %6978
        %v6980 = vadd.f32 %v6186, %v6188
        %6981 = vadd.xlane.f32.xlu0 %v6980
        %v6982 = vpop.xlane.xlu0 %6981
        %v6983 = vadd.f32 %v6190, %v6192
        %6984 = vadd.xlane.f32.xlu0 %v6983
        %v6985 = vpop.xlane.xlu0 %6984
        %v6986 = vadd.f32 %v6194, %v6196
        %6987 = vadd.xlane.f32.xlu0 %v6986
        %v6988 = vpop.xlane.xlu0 %6987
        %v6989 = vadd.f32 %v6198, %v6200
        %6990 = vadd.xlane.f32.xlu0 %v6989
        %v6991 = vpop.xlane.xlu0 %6990
        %v6992 = vadd.f32 %v6202, %v6204
        %6993 = vadd.xlane.f32.xlu0 %v6992
        %v6994 = vpop.xlane.xlu0 %6993
        %v6995 = vadd.f32 %v6206, %v6208
        %6996 = vadd.xlane.f32.xlu0 %v6995
        %v6997 = vpop.xlane.xlu0 %6996
        %v6998 = vadd.f32 %v6210, %v6212
        %6999 = vadd.xlane.f32.xlu0 %v6998
        %v7000 = vpop.xlane.xlu0 %6999
        %v7001 = vadd.f32 %v6214, %v6216
        %7002 = vadd.xlane.f32.xlu0 %v7001
        %v7003 = vpop.xlane.xlu0 %7002
        %v7004 = vadd.f32 %v6218, %v6220
        %7005 = vadd.xlane.f32.xlu0 %v7004
        %v7006 = vpop.xlane.xlu0 %7005
        %v7007 = vadd.f32 %v6222, %v6224
        %7008 = vadd.xlane.f32.xlu0 %v7007
        %v7009 = vpop.xlane.xlu0 %7008
        %v7010 = vadd.f32 %v6226, %v6228
        %7011 = vadd.xlane.f32.xlu0 %v7010
        %v7012 = vpop.xlane.xlu0 %7011
        %v7013 = vadd.f32 %v6230, %v6232
        %7014 = vadd.xlane.f32.xlu0 %v7013
        %v7015 = vpop.xlane.xlu0 %7014
        %v7016 = vadd.f32 %v6234, %v6236
        %7017 = vadd.xlane.f32.xlu0 %v7016
        %v7018 = vpop.xlane.xlu0 %7017
        %v7019 = vadd.f32 %v6238, %v6240
        %7020 = vadd.xlane.f32.xlu0 %v7019
        %v7021 = vpop.xlane.xlu0 %7020
        %v7022 = vadd.f32 %v6242, %v6244
        %7023 = vadd.xlane.f32.xlu0 %v7022
        %v7024 = vpop.xlane.xlu0 %7023
        %v7025 = vadd.f32 %v6246, %v6248
        %7026 = vadd.xlane.f32.xlu0 %v7025
        %v7027 = vpop.xlane.xlu0 %7026
        %v7028 = vadd.f32 %v6250, %v6252
        %7029 = vadd.xlane.f32.xlu0 %v7028
        %v7030 = vpop.xlane.xlu0 %7029
        %v7031 = vadd.f32 %v6254, %v6256
        %7032 = vadd.xlane.f32.xlu0 %v7031
        %v7033 = vpop.xlane.xlu0 %7032
        %v7034 = vadd.f32 %v6258, %v6260
        %7035 = vadd.xlane.f32.xlu0 %v7034
        %v7036 = vpop.xlane.xlu0 %7035
        %v7037 = vadd.f32 %v6262, %v6264
        %7038 = vadd.xlane.f32.xlu0 %v7037
        %v7039 = vpop.xlane.xlu0 %7038
        %v7040 = vadd.f32 %v6266, %v6268
        %7041 = vadd.xlane.f32.xlu0 %v7040
        %v7042 = vpop.xlane.xlu0 %7041
        %v7043 = vadd.f32 %v6270, %v6272
        %7044 = vadd.xlane.f32.xlu0 %v7043
        %v7045 = vpop.xlane.xlu0 %7044
        %v7046 = vadd.f32 %v6274, %v6276
        %7047 = vadd.xlane.f32.xlu0 %v7046
        %v7048 = vpop.xlane.xlu0 %7047
        %v7049 = vadd.f32 %v6278, %v6280
        %7050 = vadd.xlane.f32.xlu0 %v7049
        %v7051 = vpop.xlane.xlu0 %7050
        %v7052 = vadd.f32 %v6282, %v6284
        %7053 = vadd.xlane.f32.xlu0 %v7052
        %v7054 = vpop.xlane.xlu0 %7053
        %v7055 = vadd.f32 %v6286, %v6288
        %7056 = vadd.xlane.f32.xlu0 %v7055
        %v7057 = vpop.xlane.xlu0 %7056
        %v7058 = vadd.f32 %v6290, %v6292
        %7059 = vadd.xlane.f32.xlu0 %v7058
        %v7060 = vpop.xlane.xlu0 %7059
        %v7061 = vrcp.pop %v6295
        %v7062 = vrcp.pop %v6298
        %v7063 = vrcp.pop %v6301
        %v7064 = vrcp.pop %v6304
        %v7065 = vrcp.pop %v6307
        %v7066 = vrcp.pop %v6310
        %v7067 = vrcp.pop %v6313
        %v7068 = vrcp.pop %v6316
        %v7069 = vrcp.pop %v6319
        %v7070 = vrcp.pop %v6322
        %v7071 = vrcp.pop %v6325
        %v7072 = vrcp.pop %v6328
        %v7073 = vrcp.pop %v6331
        %v7074 = vrcp.pop %v6334
        %v7075 = vrcp.pop %v6337
        %v7076 = vrcp.pop %v6340
        %v7077 = vrcp.pop %v6343
        %v7078 = vrcp.pop %v6346
        %v7079 = vrcp.pop %v6349
        %v7080 = vrcp.pop %v6352
        %v7081 = vrcp.pop %v6355
        %v7082 = vrcp.pop %v6358
        %v7083 = vrcp.pop %v6361
        %v7084 = vrcp.pop %v6364
        %v7085 = vrcp.pop %v6367
        %v7086 = vrcp.pop %v6370
        %v7087 = vrcp.pop %v6373
        %v7088 = vrcp.pop %v6376
        %v7089 = vrcp.pop %v6379
        %v7090 = vrcp.pop %v6382
        %v7091 = vrcp.pop %v6385
        %v7092 = vrcp.pop %v6388
        %v7093 = vrcp.pop %v6391
        %v7094 = vrcp.pop %v6394
        %v7095 = vrcp.pop %v6397
        %v7096 = vrcp.pop %v6400
        %v7097 = vrcp.pop %v6403
        %v7098 = vrcp.pop %v6406
        %v7099 = vrcp.pop %v6409
        %v7100 = vrcp.pop %v6412
        %v7101 = vrcp.pop %v6415
        %v7102 = vrcp.pop %v6418
        %v7103 = vrcp.pop %v6421
        %v7104 = vrcp.pop %v6424
        %v7105 = vrcp.pop %v6427
        %v7106 = vrcp.pop %v6430
        %v7107 = vrcp.pop %v6433
        %v7108 = vrcp.pop %v6436
        %v7109 = vrcp.pop %v6439
        %v7110 = vrcp.pop %v6442
        %v7111 = vrcp.pop %v6445
        %v7112 = vrcp.pop %v6448
        %v7113 = vrcp.pop %v6451
        %v7114 = vrcp.pop %v6454
        %v7115 = vrcp.pop %v6457
        %v7116 = vrcp.pop %v6460
        %v7117 = vrcp.pop %v6463
        %v7118 = vrcp.pop %v6466
        %v7119 = vrcp.pop %v6469
        %v7120 = vrcp.pop %v6472
        %v7121 = vrcp.pop %v6475
        %v7122 = vrcp.pop %v6478
        %v7123 = vrcp.pop %v6481
        %v7124 = vrcp.pop %v6484
        %v7125 = vrcp.pop %v6487
        %v7126 = vrcp.pop %v6490
        %v7127 = vrcp.pop %v6493
        %v7128 = vrcp.pop %v6496
        %v7129 = vrcp.pop %v6499
        %v7130 = vrcp.pop %v6502
        %v7131 = vrcp.pop %v6505
        %v7132 = vrcp.pop %v6508
        %v7133 = vrcp.pop %v6511
        %v7134 = vrcp.pop %v6514
        %v7135 = vrcp.pop %v6517
        %v7136 = vrcp.pop %v6520
        %v7137 = vrcp.pop %v6523
        %v7138 = vrcp.pop %v6526
        %v7139 = vrcp.pop %v6529
        %v7140 = vrcp.pop %v6532
        %v7141 = vrcp.pop %v6535
        %v7142 = vrcp.pop %v6538
        %v7143 = vrcp.pop %v6541
        %v7144 = vrcp.pop %v6544
        %v7145 = vrcp.pop %v6547
        %v7146 = vrcp.pop %v6550
        %v7147 = vrcp.pop %v6553
        %v7148 = vrcp.pop %v6556
        %v7149 = vrcp.pop %v6559
        %v7150 = vrcp.pop %v6562
        %v7151 = vrcp.pop %v6565
        %v7152 = vrcp.pop %v6568
        %v7153 = vrcp.pop %v6571
        %v7154 = vrcp.pop %v6574
        %v7155 = vrcp.pop %v6577
        %v7156 = vrcp.pop %v6580
        %v7157 = vrcp.pop %v6583
        %v7158 = vrcp.pop %v6586
        %v7159 = vrcp.pop %v6589
        %v7160 = vrcp.pop %v6592
        %v7161 = vrcp.pop %v6595
        %v7162 = vrcp.pop %v6598
        %v7163 = vrcp.pop %v6601
        %v7164 = vrcp.pop %v6604
        %v7165 = vrcp.pop %v6607
        %v7166 = vrcp.pop %v6610
        %v7167 = vrcp.pop %v6613
        %v7168 = vrcp.pop %v6616
        %v7169 = vrcp.pop %v6619
        %v7170 = vrcp.pop %v6622
        %v7171 = vrcp.pop %v6625
        %v7172 = vrcp.pop %v6628
        %v7173 = vrcp.pop %v6631
        %v7174 = vrcp.pop %v6634
        %v7175 = vrcp.pop %v6637
        %v7176 = vrcp.pop %v6640
        %v7177 = vrcp.pop %v6643
        %v7178 = vrcp.pop %v6646
        %v7179 = vrcp.pop %v6649
        %v7180 = vrcp.pop %v6652
        %v7181 = vrcp.pop %v6655
        %v7182 = vrcp.pop %v6658
        %v7183 = vrcp.pop %v6661
        %v7184 = vrcp.pop %v6664
        %v7185 = vrcp.pop %v6667
        %v7186 = vrcp.pop %v6670
        %v7187 = vrcp.pop %v6673
        %v7188 = vrcp.pop %v6676
        %v7189 = vrcp.pop %v6679
        %v7190 = vrcp.pop %v6682
        %v7191 = vrcp.pop %v6685
        %v7192 = vrcp.pop %v6688
        %v7193 = vrcp.pop %v6691
        %v7194 = vrcp.pop %v6694
        %v7195 = vrcp.pop %v6697
        %v7196 = vrcp.pop %v6700
        %v7197 = vrcp.pop %v6703
        %v7198 = vrcp.pop %v6706
        %v7199 = vrcp.pop %v6709
        %v7200 = vrcp.pop %v6712
        %v7201 = vrcp.pop %v6715
        %v7202 = vrcp.pop %v6718
        %v7203 = vrcp.pop %v6721
        %v7204 = vrcp.pop %v6724
        %v7205 = vrcp.pop %v6727
        %v7206 = vrcp.pop %v6730
        %v7207 = vrcp.pop %v6733
        %v7208 = vrcp.pop %v6736
        %v7209 = vrcp.pop %v6739
        %v7210 = vrcp.pop %v6742
        %v7211 = vrcp.pop %v6745
        %v7212 = vrcp.pop %v6748
        %v7213 = vrcp.pop %v6751
        %v7214 = vrcp.pop %v6754
        %v7215 = vrcp.pop %v6757
        %v7216 = vrcp.pop %v6760
        %v7217 = vrcp.pop %v6763
        %v7218 = vrcp.pop %v6766
        %v7219 = vrcp.pop %v6769
        %v7220 = vrcp.pop %v6772
        %v7221 = vrcp.pop %v6775
        %v7222 = vrcp.pop %v6778
        %v7223 = vrcp.pop %v6781
        %v7224 = vrcp.pop %v6784
        %v7225 = vrcp.pop %v6787
        %v7226 = vrcp.pop %v6790
        %v7227 = vrcp.pop %v6793
        %v7228 = vrcp.pop %v6796
        %v7229 = vrcp.pop %v6799
        %v7230 = vrcp.pop %v6802
        %v7231 = vrcp.pop %v6805
        %v7232 = vrcp.pop %v6808
        %v7233 = vrcp.pop %v6811
        %v7234 = vrcp.pop %v6814
        %v7235 = vrcp.pop %v6817
        %v7236 = vrcp.pop %v6820
        %v7237 = vrcp.pop %v6823
        %v7238 = vrcp.pop %v6826
        %v7239 = vrcp.pop %v6829
        %v7240 = vrcp.pop %v6832
        %v7241 = vrcp.pop %v6835
        %v7242 = vrcp.pop %v6838
        %v7243 = vrcp.pop %v6841
        %v7244 = vrcp.pop %v6844
        %v7245 = vrcp.pop %v6847
        %v7246 = vrcp.pop %v6850
        %v7247 = vrcp.pop %v6853
        %v7248 = vrcp.pop %v6856
        %v7249 = vrcp.pop %v6859
        %v7250 = vrcp.pop %v6862
        %v7251 = vrcp.pop %v6865
        %v7252 = vrcp.pop %v6868
        %v7253 = vrcp.pop %v6871
        %v7254 = vrcp.pop %v6874
        %v7255 = vrcp.pop %v6877
        %v7256 = vrcp.pop %v6880
        %v7257 = vrcp.pop %v6883
        %v7258 = vrcp.pop %v6886
        %v7259 = vrcp.pop %v6889
        %v7260 = vrcp.pop %v6892
        %v7261 = vrcp.pop %v6895
        %v7262 = vrcp.pop %v6898
        %v7263 = vrcp.pop %v6901
        %v7264 = vrcp.pop %v6904
        %v7265 = vrcp.pop %v6907
        %v7266 = vrcp.pop %v6910
        %v7267 = vrcp.pop %v6913
        %v7268 = vrcp.pop %v6916
        %v7269 = vrcp.pop %v6919
        %v7270 = vrcp.pop %v6922
        %v7271 = vrcp.pop %v6925
        %v7272 = vrcp.pop %v6928
        %v7273 = vrcp.pop %v6931
        %v7274 = vrcp.pop %v6934
        %v7275 = vrcp.pop %v6937
        %v7276 = vrcp.pop %v6940
        %v7277 = vrcp.pop %v6943
        %v7278 = vrcp.pop %v6946
        %v7279 = vrcp.pop %v6949
        %v7280 = vrcp.pop %v6952
        %v7281 = vrcp.pop %v6955
        %v7282 = vrcp.pop %v6958
        %v7283 = vrcp.pop %v6961
        %v7284 = vrcp.pop %v6964
        %v7285 = vrcp.pop %v6967
        %v7286 = vrcp.pop %v6970
        %v7287 = vrcp.pop %v6973
        %v7288 = vrcp.pop %v6976
        %v7289 = vrcp.pop %v6979
        %v7290 = vrcp.pop %v6982
        %v7291 = vrcp.pop %v6985
        %v7292 = vrcp.pop %v6988
        %v7293 = vrcp.pop %v6991
        %v7294 = vrcp.pop %v6994
        %v7295 = vrcp.pop %v6997
        %v7296 = vrcp.pop %v7000
        %v7297 = vrcp.pop %v7003
        %v7298 = vrcp.pop %v7006
        %v7299 = vrcp.pop %v7009
        %v7300 = vrcp.pop %v7012
        %v7301 = vrcp.pop %v7015
        %v7302 = vrcp.pop %v7018
        %v7303 = vrcp.pop %v7021
        %v7304 = vrcp.pop %v7024
        %v7305 = vrcp.pop %v7027
        %v7306 = vrcp.pop %v7030
        %v7307 = vrcp.pop %v7033
        %v7308 = vrcp.pop %v7036
        %v7309 = vrcp.pop %v7039
        %v7310 = vrcp.pop %v7042
        %v7311 = vrcp.pop %v7045
        %v7312 = vrcp.pop %v7048
        %v7313 = vrcp.pop %v7051
        %v7314 = vrcp.pop %v7054
        %v7315 = vrcp.pop %v7057
        %v7316 = vrcp.pop %v7060
        %v7317 = vmul.f32 %v5270, %v7061
        %v7318 = vmul.f32 %v5272, %v7061
        %v7319 = vmul.f32 %v5274, %v7062
        %v7320 = vmul.f32 %v5276, %v7062
        %v7321 = vmul.f32 %v5278, %v7063
        %v7322 = vmul.f32 %v5280, %v7063
        %v7323 = vmul.f32 %v5282, %v7064
        %v7324 = vmul.f32 %v5284, %v7064
        %v7325 = vmul.f32 %v5286, %v7065
        %v7326 = vmul.f32 %v5288, %v7065
        %v7327 = vmul.f32 %v5290, %v7066
        %v7328 = vmul.f32 %v5292, %v7066
        %v7329 = vmul.f32 %v5294, %v7067
        %v7330 = vmul.f32 %v5296, %v7067
        %v7331 = vmul.f32 %v5298, %v7068
        %v7332 = vmul.f32 %v5300, %v7068
        %v7333 = vmul.f32 %v5302, %v7069
        %v7334 = vmul.f32 %v5304, %v7069
        %v7335 = vmul.f32 %v5306, %v7070
        %v7336 = vmul.f32 %v5308, %v7070
        %v7337 = vmul.f32 %v5310, %v7071
        %v7338 = vmul.f32 %v5312, %v7071
        %v7339 = vmul.f32 %v5314, %v7072
        %v7340 = vmul.f32 %v5316, %v7072
        %v7341 = vmul.f32 %v5318, %v7073
        %v7342 = vmul.f32 %v5320, %v7073
        %v7343 = vmul.f32 %v5322, %v7074
        %v7344 = vmul.f32 %v5324, %v7074
        %v7345 = vmul.f32 %v5326, %v7075
        %v7346 = vmul.f32 %v5328, %v7075
        %v7347 = vmul.f32 %v5330, %v7076
        %v7348 = vmul.f32 %v5332, %v7076
        %v7349 = vmul.f32 %v5334, %v7077
        %v7350 = vmul.f32 %v5336, %v7077
        %v7351 = vmul.f32 %v5338, %v7078
        %v7352 = vmul.f32 %v5340, %v7078
        %v7353 = vmul.f32 %v5342, %v7079
        %v7354 = vmul.f32 %v5344, %v7079
        %v7355 = vmul.f32 %v5346, %v7080
        %v7356 = vmul.f32 %v5348, %v7080
        %v7357 = vmul.f32 %v5350, %v7081
        %v7358 = vmul.f32 %v5352, %v7081
        %v7359 = vmul.f32 %v5354, %v7082
        %v7360 = vmul.f32 %v5356, %v7082
        %v7361 = vmul.f32 %v5358, %v7083
        %v7362 = vmul.f32 %v5360, %v7083
        %v7363 = vmul.f32 %v5362, %v7084
        %v7364 = vmul.f32 %v5364, %v7084
        %v7365 = vmul.f32 %v5366, %v7085
        %v7366 = vmul.f32 %v5368, %v7085
        %v7367 = vmul.f32 %v5370, %v7086
        %v7368 = vmul.f32 %v5372, %v7086
        %v7369 = vmul.f32 %v5374, %v7087
        %v7370 = vmul.f32 %v5376, %v7087
        %v7371 = vmul.f32 %v5378, %v7088
        %v7372 = vmul.f32 %v5380, %v7088
        %v7373 = vmul.f32 %v5382, %v7089
        %v7374 = vmul.f32 %v5384, %v7089
        %v7375 = vmul.f32 %v5386, %v7090
        %v7376 = vmul.f32 %v5388, %v7090
        %v7377 = vmul.f32 %v5390, %v7091
        %v7378 = vmul.f32 %v5392, %v7091
        %v7379 = vmul.f32 %v5394, %v7092
        %v7380 = vmul.f32 %v5396, %v7092
        %v7381 = vmul.f32 %v5398, %v7093
        %v7382 = vmul.f32 %v5400, %v7093
        %v7383 = vmul.f32 %v5402, %v7094
        %v7384 = vmul.f32 %v5404, %v7094
        %v7385 = vmul.f32 %v5406, %v7095
        %v7386 = vmul.f32 %v5408, %v7095
        %v7387 = vmul.f32 %v5410, %v7096
        %v7388 = vmul.f32 %v5412, %v7096
        %v7389 = vmul.f32 %v5414, %v7097
        %v7390 = vmul.f32 %v5416, %v7097
        %v7391 = vmul.f32 %v5418, %v7098
        %v7392 = vmul.f32 %v5420, %v7098
        %v7393 = vmul.f32 %v5422, %v7099
        %v7394 = vmul.f32 %v5424, %v7099
        %v7395 = vmul.f32 %v5426, %v7100
        %v7396 = vmul.f32 %v5428, %v7100
        %v7397 = vmul.f32 %v5430, %v7101
        %v7398 = vmul.f32 %v5432, %v7101
        %v7399 = vmul.f32 %v5434, %v7102
        %v7400 = vmul.f32 %v5436, %v7102
        %v7401 = vmul.f32 %v5438, %v7103
        %v7402 = vmul.f32 %v5440, %v7103
        %v7403 = vmul.f32 %v5442, %v7104
        %v7404 = vmul.f32 %v5444, %v7104
        %v7405 = vmul.f32 %v5446, %v7105
        %v7406 = vmul.f32 %v5448, %v7105
        %v7407 = vmul.f32 %v5450, %v7106
        %v7408 = vmul.f32 %v5452, %v7106
        %v7409 = vmul.f32 %v5454, %v7107
        %v7410 = vmul.f32 %v5456, %v7107
        %v7411 = vmul.f32 %v5458, %v7108
        %v7412 = vmul.f32 %v5460, %v7108
        %v7413 = vmul.f32 %v5462, %v7109
        %v7414 = vmul.f32 %v5464, %v7109
        %v7415 = vmul.f32 %v5466, %v7110
        %v7416 = vmul.f32 %v5468, %v7110
        %v7417 = vmul.f32 %v5470, %v7111
        %v7418 = vmul.f32 %v5472, %v7111
        %v7419 = vmul.f32 %v5474, %v7112
        %v7420 = vmul.f32 %v5476, %v7112
        %v7421 = vmul.f32 %v5478, %v7113
        %v7422 = vmul.f32 %v5480, %v7113
        %v7423 = vmul.f32 %v5482, %v7114
        %v7424 = vmul.f32 %v5484, %v7114
        %v7425 = vmul.f32 %v5486, %v7115
        %v7426 = vmul.f32 %v5488, %v7115
        %v7427 = vmul.f32 %v5490, %v7116
        %v7428 = vmul.f32 %v5492, %v7116
        %v7429 = vmul.f32 %v5494, %v7117
        %v7430 = vmul.f32 %v5496, %v7117
        %v7431 = vmul.f32 %v5498, %v7118
        %v7432 = vmul.f32 %v5500, %v7118
        %v7433 = vmul.f32 %v5502, %v7119
        %v7434 = vmul.f32 %v5504, %v7119
        %v7435 = vmul.f32 %v5506, %v7120
        %v7436 = vmul.f32 %v5508, %v7120
        %v7437 = vmul.f32 %v5510, %v7121
        %v7438 = vmul.f32 %v5512, %v7121
        %v7439 = vmul.f32 %v5514, %v7122
        %v7440 = vmul.f32 %v5516, %v7122
        %v7441 = vmul.f32 %v5518, %v7123
        %v7442 = vmul.f32 %v5520, %v7123
        %v7443 = vmul.f32 %v5522, %v7124
        %v7444 = vmul.f32 %v5524, %v7124
        %v7445 = vmul.f32 %v5526, %v7125
        %v7446 = vmul.f32 %v5528, %v7125
        %v7447 = vmul.f32 %v5530, %v7126
        %v7448 = vmul.f32 %v5532, %v7126
        %v7449 = vmul.f32 %v5534, %v7127
        %v7450 = vmul.f32 %v5536, %v7127
        %v7451 = vmul.f32 %v5538, %v7128
        %v7452 = vmul.f32 %v5540, %v7128
        %v7453 = vmul.f32 %v5542, %v7129
        %v7454 = vmul.f32 %v5544, %v7129
        %v7455 = vmul.f32 %v5546, %v7130
        %v7456 = vmul.f32 %v5548, %v7130
        %v7457 = vmul.f32 %v5550, %v7131
        %v7458 = vmul.f32 %v5552, %v7131
        %v7459 = vmul.f32 %v5554, %v7132
        %v7460 = vmul.f32 %v5556, %v7132
        %v7461 = vmul.f32 %v5558, %v7133
        %v7462 = vmul.f32 %v5560, %v7133
        %v7463 = vmul.f32 %v5562, %v7134
        %v7464 = vmul.f32 %v5564, %v7134
        %v7465 = vmul.f32 %v5566, %v7135
        %v7466 = vmul.f32 %v5568, %v7135
        %v7467 = vmul.f32 %v5570, %v7136
        %v7468 = vmul.f32 %v5572, %v7136
        %v7469 = vmul.f32 %v5574, %v7137
        %v7470 = vmul.f32 %v5576, %v7137
        %v7471 = vmul.f32 %v5578, %v7138
        %v7472 = vmul.f32 %v5580, %v7138
        %v7473 = vmul.f32 %v5582, %v7139
        %v7474 = vmul.f32 %v5584, %v7139
        %v7475 = vmul.f32 %v5586, %v7140
        %v7476 = vmul.f32 %v5588, %v7140
        %v7477 = vmul.f32 %v5590, %v7141
        %v7478 = vmul.f32 %v5592, %v7141
        %v7479 = vmul.f32 %v5594, %v7142
        %v7480 = vmul.f32 %v5596, %v7142
        %v7481 = vmul.f32 %v5598, %v7143
        %v7482 = vmul.f32 %v5600, %v7143
        %v7483 = vmul.f32 %v5602, %v7144
        %v7484 = vmul.f32 %v5604, %v7144
        %v7485 = vmul.f32 %v5606, %v7145
        %v7486 = vmul.f32 %v5608, %v7145
        %v7487 = vmul.f32 %v5610, %v7146
        %v7488 = vmul.f32 %v5612, %v7146
        %v7489 = vmul.f32 %v5614, %v7147
        %v7490 = vmul.f32 %v5616, %v7147
        %v7491 = vmul.f32 %v5618, %v7148
        %v7492 = vmul.f32 %v5620, %v7148
        %v7493 = vmul.f32 %v5622, %v7149
        %v7494 = vmul.f32 %v5624, %v7149
        %v7495 = vmul.f32 %v5626, %v7150
        %v7496 = vmul.f32 %v5628, %v7150
        %v7497 = vmul.f32 %v5630, %v7151
        %v7498 = vmul.f32 %v5632, %v7151
        %v7499 = vmul.f32 %v5634, %v7152
        %v7500 = vmul.f32 %v5636, %v7152
        %v7501 = vmul.f32 %v5638, %v7153
        %v7502 = vmul.f32 %v5640, %v7153
        %v7503 = vmul.f32 %v5642, %v7154
        %v7504 = vmul.f32 %v5644, %v7154
        %v7505 = vmul.f32 %v5646, %v7155
        %v7506 = vmul.f32 %v5648, %v7155
        %v7507 = vmul.f32 %v5650, %v7156
        %v7508 = vmul.f32 %v5652, %v7156
        %v7509 = vmul.f32 %v5654, %v7157
        %v7510 = vmul.f32 %v5656, %v7157
        %v7511 = vmul.f32 %v5658, %v7158
        %v7512 = vmul.f32 %v5660, %v7158
        %v7513 = vmul.f32 %v5662, %v7159
        %v7514 = vmul.f32 %v5664, %v7159
        %v7515 = vmul.f32 %v5666, %v7160
        %v7516 = vmul.f32 %v5668, %v7160
        %v7517 = vmul.f32 %v5670, %v7161
        %v7518 = vmul.f32 %v5672, %v7161
        %v7519 = vmul.f32 %v5674, %v7162
        %v7520 = vmul.f32 %v5676, %v7162
        %v7521 = vmul.f32 %v5678, %v7163
        %v7522 = vmul.f32 %v5680, %v7163
        %v7523 = vmul.f32 %v5682, %v7164
        %v7524 = vmul.f32 %v5684, %v7164
        %v7525 = vmul.f32 %v5686, %v7165
        %v7526 = vmul.f32 %v5688, %v7165
        %v7527 = vmul.f32 %v5690, %v7166
        %v7528 = vmul.f32 %v5692, %v7166
        %v7529 = vmul.f32 %v5694, %v7167
        %v7530 = vmul.f32 %v5696, %v7167
        %v7531 = vmul.f32 %v5698, %v7168
        %v7532 = vmul.f32 %v5700, %v7168
        %v7533 = vmul.f32 %v5702, %v7169
        %v7534 = vmul.f32 %v5704, %v7169
        %v7535 = vmul.f32 %v5706, %v7170
        %v7536 = vmul.f32 %v5708, %v7170
        %v7537 = vmul.f32 %v5710, %v7171
        %v7538 = vmul.f32 %v5712, %v7171
        %v7539 = vmul.f32 %v5714, %v7172
        %v7540 = vmul.f32 %v5716, %v7172
        %v7541 = vmul.f32 %v5718, %v7173
        %v7542 = vmul.f32 %v5720, %v7173
        %v7543 = vmul.f32 %v5722, %v7174
        %v7544 = vmul.f32 %v5724, %v7174
        %v7545 = vmul.f32 %v5726, %v7175
        %v7546 = vmul.f32 %v5728, %v7175
        %v7547 = vmul.f32 %v5730, %v7176
        %v7548 = vmul.f32 %v5732, %v7176
        %v7549 = vmul.f32 %v5734, %v7177
        %v7550 = vmul.f32 %v5736, %v7177
        %v7551 = vmul.f32 %v5738, %v7178
        %v7552 = vmul.f32 %v5740, %v7178
        %v7553 = vmul.f32 %v5742, %v7179
        %v7554 = vmul.f32 %v5744, %v7179
        %v7555 = vmul.f32 %v5746, %v7180
        %v7556 = vmul.f32 %v5748, %v7180
        %v7557 = vmul.f32 %v5750, %v7181
        %v7558 = vmul.f32 %v5752, %v7181
        %v7559 = vmul.f32 %v5754, %v7182
        %v7560 = vmul.f32 %v5756, %v7182
        %v7561 = vmul.f32 %v5758, %v7183
        %v7562 = vmul.f32 %v5760, %v7183
        %v7563 = vmul.f32 %v5762, %v7184
        %v7564 = vmul.f32 %v5764, %v7184
        %v7565 = vmul.f32 %v5766, %v7185
        %v7566 = vmul.f32 %v5768, %v7185
        %v7567 = vmul.f32 %v5770, %v7186
        %v7568 = vmul.f32 %v5772, %v7186
        %v7569 = vmul.f32 %v5774, %v7187
        %v7570 = vmul.f32 %v5776, %v7187
        %v7571 = vmul.f32 %v5778, %v7188
        %v7572 = vmul.f32 %v5780, %v7188
        %v7573 = vmul.f32 %v5782, %v7189
        %v7574 = vmul.f32 %v5784, %v7189
        %v7575 = vmul.f32 %v5786, %v7190
        %v7576 = vmul.f32 %v5788, %v7190
        %v7577 = vmul.f32 %v5790, %v7191
        %v7578 = vmul.f32 %v5792, %v7191
        %v7579 = vmul.f32 %v5794, %v7192
        %v7580 = vmul.f32 %v5796, %v7192
        %v7581 = vmul.f32 %v5798, %v7193
        %v7582 = vmul.f32 %v5800, %v7193
        %v7583 = vmul.f32 %v5802, %v7194
        %v7584 = vmul.f32 %v5804, %v7194
        %v7585 = vmul.f32 %v5806, %v7195
        %v7586 = vmul.f32 %v5808, %v7195
        %v7587 = vmul.f32 %v5810, %v7196
        %v7588 = vmul.f32 %v5812, %v7196
        %v7589 = vmul.f32 %v5814, %v7197
        %v7590 = vmul.f32 %v5816, %v7197
        %v7591 = vmul.f32 %v5818, %v7198
        %v7592 = vmul.f32 %v5820, %v7198
        %v7593 = vmul.f32 %v5822, %v7199
        %v7594 = vmul.f32 %v5824, %v7199
        %v7595 = vmul.f32 %v5826, %v7200
        %v7596 = vmul.f32 %v5828, %v7200
        %v7597 = vmul.f32 %v5830, %v7201
        %v7598 = vmul.f32 %v5832, %v7201
        %v7599 = vmul.f32 %v5834, %v7202
        %v7600 = vmul.f32 %v5836, %v7202
        %v7601 = vmul.f32 %v5838, %v7203
        %v7602 = vmul.f32 %v5840, %v7203
        %v7603 = vmul.f32 %v5842, %v7204
        %v7604 = vmul.f32 %v5844, %v7204
        %v7605 = vmul.f32 %v5846, %v7205
        %v7606 = vmul.f32 %v5848, %v7205
        %v7607 = vmul.f32 %v5850, %v7206
        %v7608 = vmul.f32 %v5852, %v7206
        %v7609 = vmul.f32 %v5854, %v7207
        %v7610 = vmul.f32 %v5856, %v7207
        %v7611 = vmul.f32 %v5858, %v7208
        %v7612 = vmul.f32 %v5860, %v7208
        %v7613 = vmul.f32 %v5862, %v7209
        %v7614 = vmul.f32 %v5864, %v7209
        %v7615 = vmul.f32 %v5866, %v7210
        %v7616 = vmul.f32 %v5868, %v7210
        %v7617 = vmul.f32 %v5870, %v7211
        %v7618 = vmul.f32 %v5872, %v7211
        %v7619 = vmul.f32 %v5874, %v7212
        %v7620 = vmul.f32 %v5876, %v7212
        %v7621 = vmul.f32 %v5878, %v7213
        %v7622 = vmul.f32 %v5880, %v7213
        %v7623 = vmul.f32 %v5882, %v7214
        %v7624 = vmul.f32 %v5884, %v7214
        %v7625 = vmul.f32 %v5886, %v7215
        %v7626 = vmul.f32 %v5888, %v7215
        %v7627 = vmul.f32 %v5890, %v7216
        %v7628 = vmul.f32 %v5892, %v7216
        %v7629 = vmul.f32 %v5894, %v7217
        %v7630 = vmul.f32 %v5896, %v7217
        %v7631 = vmul.f32 %v5898, %v7218
        %v7632 = vmul.f32 %v5900, %v7218
        %v7633 = vmul.f32 %v5902, %v7219
        %v7634 = vmul.f32 %v5904, %v7219
        %v7635 = vmul.f32 %v5906, %v7220
        %v7636 = vmul.f32 %v5908, %v7220
        %v7637 = vmul.f32 %v5910, %v7221
        %v7638 = vmul.f32 %v5912, %v7221
        %v7639 = vmul.f32 %v5914, %v7222
        %v7640 = vmul.f32 %v5916, %v7222
        %v7641 = vmul.f32 %v5918, %v7223
        %v7642 = vmul.f32 %v5920, %v7223
        %v7643 = vmul.f32 %v5922, %v7224
        %v7644 = vmul.f32 %v5924, %v7224
        %v7645 = vmul.f32 %v5926, %v7225
        %v7646 = vmul.f32 %v5928, %v7225
        %v7647 = vmul.f32 %v5930, %v7226
        %v7648 = vmul.f32 %v5932, %v7226
        %v7649 = vmul.f32 %v5934, %v7227
        %v7650 = vmul.f32 %v5936, %v7227
        %v7651 = vmul.f32 %v5938, %v7228
        %v7652 = vmul.f32 %v5940, %v7228
        %v7653 = vmul.f32 %v5942, %v7229
        %v7654 = vmul.f32 %v5944, %v7229
        %v7655 = vmul.f32 %v5946, %v7230
        %v7656 = vmul.f32 %v5948, %v7230
        %v7657 = vmul.f32 %v5950, %v7231
        %v7658 = vmul.f32 %v5952, %v7231
        %v7659 = vmul.f32 %v5954, %v7232
        %v7660 = vmul.f32 %v5956, %v7232
        %v7661 = vmul.f32 %v5958, %v7233
        %v7662 = vmul.f32 %v5960, %v7233
        %v7663 = vmul.f32 %v5962, %v7234
        %v7664 = vmul.f32 %v5964, %v7234
        %v7665 = vmul.f32 %v5966, %v7235
        %v7666 = vmul.f32 %v5968, %v7235
        %v7667 = vmul.f32 %v5970, %v7236
        %v7668 = vmul.f32 %v5972, %v7236
        %v7669 = vmul.f32 %v5974, %v7237
        %v7670 = vmul.f32 %v5976, %v7237
        %v7671 = vmul.f32 %v5978, %v7238
        %v7672 = vmul.f32 %v5980, %v7238
        %v7673 = vmul.f32 %v5982, %v7239
        %v7674 = vmul.f32 %v5984, %v7239
        %v7675 = vmul.f32 %v5986, %v7240
        %v7676 = vmul.f32 %v5988, %v7240
        %v7677 = vmul.f32 %v5990, %v7241
        %v7678 = vmul.f32 %v5992, %v7241
        %v7679 = vmul.f32 %v5994, %v7242
        %v7680 = vmul.f32 %v5996, %v7242
        %v7681 = vmul.f32 %v5998, %v7243
        %v7682 = vmul.f32 %v6000, %v7243
        %v7683 = vmul.f32 %v6002, %v7244
        %v7684 = vmul.f32 %v6004, %v7244
        %v7685 = vmul.f32 %v6006, %v7245
        %v7686 = vmul.f32 %v6008, %v7245
        %v7687 = vmul.f32 %v6010, %v7246
        %v7688 = vmul.f32 %v6012, %v7246
        %v7689 = vmul.f32 %v6014, %v7247
        %v7690 = vmul.f32 %v6016, %v7247
        %v7691 = vmul.f32 %v6018, %v7248
        %v7692 = vmul.f32 %v6020, %v7248
        %v7693 = vmul.f32 %v6022, %v7249
        %v7694 = vmul.f32 %v6024, %v7249
        %v7695 = vmul.f32 %v6026, %v7250
        %v7696 = vmul.f32 %v6028, %v7250
        %v7697 = vmul.f32 %v6030, %v7251
        %v7698 = vmul.f32 %v6032, %v7251
        %v7699 = vmul.f32 %v6034, %v7252
        %v7700 = vmul.f32 %v6036, %v7252
        %v7701 = vmul.f32 %v6038, %v7253
        %v7702 = vmul.f32 %v6040, %v7253
        %v7703 = vmul.f32 %v6042, %v7254
        %v7704 = vmul.f32 %v6044, %v7254
        %v7705 = vmul.f32 %v6046, %v7255
        %v7706 = vmul.f32 %v6048, %v7255
        %v7707 = vmul.f32 %v6050, %v7256
        %v7708 = vmul.f32 %v6052, %v7256
        %v7709 = vmul.f32 %v6054, %v7257
        %v7710 = vmul.f32 %v6056, %v7257
        %v7711 = vmul.f32 %v6058, %v7258
        %v7712 = vmul.f32 %v6060, %v7258
        %v7713 = vmul.f32 %v6062, %v7259
        %v7714 = vmul.f32 %v6064, %v7259
        %v7715 = vmul.f32 %v6066, %v7260
        %v7716 = vmul.f32 %v6068, %v7260
        %v7717 = vmul.f32 %v6070, %v7261
        %v7718 = vmul.f32 %v6072, %v7261
        %v7719 = vmul.f32 %v6074, %v7262
        %v7720 = vmul.f32 %v6076, %v7262
        %v7721 = vmul.f32 %v6078, %v7263
        %v7722 = vmul.f32 %v6080, %v7263
        %v7723 = vmul.f32 %v6082, %v7264
        %v7724 = vmul.f32 %v6084, %v7264
        %v7725 = vmul.f32 %v6086, %v7265
        %v7726 = vmul.f32 %v6088, %v7265
        %v7727 = vmul.f32 %v6090, %v7266
        %v7728 = vmul.f32 %v6092, %v7266
        %v7729 = vmul.f32 %v6094, %v7267
        %v7730 = vmul.f32 %v6096, %v7267
        %v7731 = vmul.f32 %v6098, %v7268
        %v7732 = vmul.f32 %v6100, %v7268
        %v7733 = vmul.f32 %v6102, %v7269
        %v7734 = vmul.f32 %v6104, %v7269
        %v7735 = vmul.f32 %v6106, %v7270
        %v7736 = vmul.f32 %v6108, %v7270
        %v7737 = vmul.f32 %v6110, %v7271
        %v7738 = vmul.f32 %v6112, %v7271
        %v7739 = vmul.f32 %v6114, %v7272
        %v7740 = vmul.f32 %v6116, %v7272
        %v7741 = vmul.f32 %v6118, %v7273
        %v7742 = vmul.f32 %v6120, %v7273
        %v7743 = vmul.f32 %v6122, %v7274
        %v7744 = vmul.f32 %v6124, %v7274
        %v7745 = vmul.f32 %v6126, %v7275
        %v7746 = vmul.f32 %v6128, %v7275
        %v7747 = vmul.f32 %v6130, %v7276
        %v7748 = vmul.f32 %v6132, %v7276
        %v7749 = vmul.f32 %v6134, %v7277
        %v7750 = vmul.f32 %v6136, %v7277
        %v7751 = vmul.f32 %v6138, %v7278
        %v7752 = vmul.f32 %v6140, %v7278
        %v7753 = vmul.f32 %v6142, %v7279
        %v7754 = vmul.f32 %v6144, %v7279
        %v7755 = vmul.f32 %v6146, %v7280
        %v7756 = vmul.f32 %v6148, %v7280
        %v7757 = vmul.f32 %v6150, %v7281
        %v7758 = vmul.f32 %v6152, %v7281
        %v7759 = vmul.f32 %v6154, %v7282
        %v7760 = vmul.f32 %v6156, %v7282
        %v7761 = vmul.f32 %v6158, %v7283
        %v7762 = vmul.f32 %v6160, %v7283
        %v7763 = vmul.f32 %v6162, %v7284
        %v7764 = vmul.f32 %v6164, %v7284
        %v7765 = vmul.f32 %v6166, %v7285
        %v7766 = vmul.f32 %v6168, %v7285
        %v7767 = vmul.f32 %v6170, %v7286
        %v7768 = vmul.f32 %v6172, %v7286
        %v7769 = vmul.f32 %v6174, %v7287
        %v7770 = vmul.f32 %v6176, %v7287
        %v7771 = vmul.f32 %v6178, %v7288
        %v7772 = vmul.f32 %v6180, %v7288
        %v7773 = vmul.f32 %v6182, %v7289
        %v7774 = vmul.f32 %v6184, %v7289
        %v7775 = vmul.f32 %v6186, %v7290
        %v7776 = vmul.f32 %v6188, %v7290
        %v7777 = vmul.f32 %v6190, %v7291
        %v7778 = vmul.f32 %v6192, %v7291
        %v7779 = vmul.f32 %v6194, %v7292
        %v7780 = vmul.f32 %v6196, %v7292
        %v7781 = vmul.f32 %v6198, %v7293
        %v7782 = vmul.f32 %v6200, %v7293
        %v7783 = vmul.f32 %v6202, %v7294
        %v7784 = vmul.f32 %v6204, %v7294
        %v7785 = vmul.f32 %v6206, %v7295
        %v7786 = vmul.f32 %v6208, %v7295
        %v7787 = vmul.f32 %v6210, %v7296
        %v7788 = vmul.f32 %v6212, %v7296
        %v7789 = vmul.f32 %v6214, %v7297
        %v7790 = vmul.f32 %v6216, %v7297
        %v7791 = vmul.f32 %v6218, %v7298
        %v7792 = vmul.f32 %v6220, %v7298
        %v7793 = vmul.f32 %v6222, %v7299
        %v7794 = vmul.f32 %v6224, %v7299
        %v7795 = vmul.f32 %v6226, %v7300
        %v7796 = vmul.f32 %v6228, %v7300
        %v7797 = vmul.f32 %v6230, %v7301
        %v7798 = vmul.f32 %v6232, %v7301
        %v7799 = vmul.f32 %v6234, %v7302
        %v7800 = vmul.f32 %v6236, %v7302
        %v7801 = vmul.f32 %v6238, %v7303
        %v7802 = vmul.f32 %v6240, %v7303
        %v7803 = vmul.f32 %v6242, %v7304
        %v7804 = vmul.f32 %v6244, %v7304
        %v7805 = vmul.f32 %v6246, %v7305
        %v7806 = vmul.f32 %v6248, %v7305
        %v7807 = vmul.f32 %v6250, %v7306
        %v7808 = vmul.f32 %v6252, %v7306
        %v7809 = vmul.f32 %v6254, %v7307
        %v7810 = vmul.f32 %v6256, %v7307
        %v7811 = vmul.f32 %v6258, %v7308
        %v7812 = vmul.f32 %v6260, %v7308
        %v7813 = vmul.f32 %v6262, %v7309
        %v7814 = vmul.f32 %v6264, %v7309
        %v7815 = vmul.f32 %v6266, %v7310
        %v7816 = vmul.f32 %v6268, %v7310
        %v7817 = vmul.f32 %v6270, %v7311
        %v7818 = vmul.f32 %v6272, %v7311
        %v7819 = vmul.f32 %v6274, %v7312
        %v7820 = vmul.f32 %v6276, %v7312
        %v7821 = vmul.f32 %v6278, %v7313
        %v7822 = vmul.f32 %v6280, %v7313
        %v7823 = vmul.f32 %v6282, %v7314
        %v7824 = vmul.f32 %v6284, %v7314
        %v7825 = vmul.f32 %v6286, %v7315
        %v7826 = vmul.f32 %v6288, %v7315
        %v7827 = vmul.f32 %v6290, %v7316
        %v7828 = vmul.f32 %v6292, %v7316
        %v7829 = vpack.c.bf16 %v7319, %v7317
        %v7830 = vpack.c.bf16 %v7320, %v7318
        %v7831 = vpack.c.bf16 %v7323, %v7321
        %v7832 = vpack.c.bf16 %v7324, %v7322
        %v7833 = vpack.c.bf16 %v7327, %v7325
        %v7834 = vpack.c.bf16 %v7328, %v7326
        %v7835 = vpack.c.bf16 %v7331, %v7329
        %v7836 = vpack.c.bf16 %v7332, %v7330
        %v7837 = vpack.c.bf16 %v7335, %v7333
        %v7838 = vpack.c.bf16 %v7336, %v7334
        %v7839 = vpack.c.bf16 %v7339, %v7337
        %v7840 = vpack.c.bf16 %v7340, %v7338
        %v7841 = vpack.c.bf16 %v7343, %v7341
        %v7842 = vpack.c.bf16 %v7344, %v7342
        %v7843 = vpack.c.bf16 %v7347, %v7345
        %v7844 = vpack.c.bf16 %v7348, %v7346
        %v7845 = vpack.c.bf16 %v7351, %v7349
        %v7846 = vpack.c.bf16 %v7352, %v7350
        %v7847 = vpack.c.bf16 %v7355, %v7353
        %v7848 = vpack.c.bf16 %v7356, %v7354
        %v7849 = vpack.c.bf16 %v7359, %v7357
        %v7850 = vpack.c.bf16 %v7360, %v7358
        %v7851 = vpack.c.bf16 %v7363, %v7361
        %v7852 = vpack.c.bf16 %v7364, %v7362
        %v7853 = vpack.c.bf16 %v7367, %v7365
        %v7854 = vpack.c.bf16 %v7368, %v7366
        %v7855 = vpack.c.bf16 %v7371, %v7369
        %v7856 = vpack.c.bf16 %v7372, %v7370
        %v7857 = vpack.c.bf16 %v7375, %v7373
        %v7858 = vpack.c.bf16 %v7376, %v7374
        %v7859 = vpack.c.bf16 %v7379, %v7377
        %v7860 = vpack.c.bf16 %v7380, %v7378
        %v7861 = vpack.c.bf16 %v7383, %v7381
        %v7862 = vpack.c.bf16 %v7384, %v7382
        %v7863 = vpack.c.bf16 %v7387, %v7385
        %v7864 = vpack.c.bf16 %v7388, %v7386
        %v7865 = vpack.c.bf16 %v7391, %v7389
        %v7866 = vpack.c.bf16 %v7392, %v7390
        %v7867 = vpack.c.bf16 %v7395, %v7393
        %v7868 = vpack.c.bf16 %v7396, %v7394
        %v7869 = vpack.c.bf16 %v7399, %v7397
        %v7870 = vpack.c.bf16 %v7400, %v7398
        %v7871 = vpack.c.bf16 %v7403, %v7401
        %v7872 = vpack.c.bf16 %v7404, %v7402
        %v7873 = vpack.c.bf16 %v7407, %v7405
        %v7874 = vpack.c.bf16 %v7408, %v7406
        %v7875 = vpack.c.bf16 %v7411, %v7409
        %v7876 = vpack.c.bf16 %v7412, %v7410
        %v7877 = vpack.c.bf16 %v7415, %v7413
        %v7878 = vpack.c.bf16 %v7416, %v7414
        %v7879 = vpack.c.bf16 %v7419, %v7417
        %v7880 = vpack.c.bf16 %v7420, %v7418
        %v7881 = vpack.c.bf16 %v7423, %v7421
        %v7882 = vpack.c.bf16 %v7424, %v7422
        %v7883 = vpack.c.bf16 %v7427, %v7425
        %v7884 = vpack.c.bf16 %v7428, %v7426
        %v7885 = vpack.c.bf16 %v7431, %v7429
        %v7886 = vpack.c.bf16 %v7432, %v7430
        %v7887 = vpack.c.bf16 %v7435, %v7433
        %v7888 = vpack.c.bf16 %v7436, %v7434
        %v7889 = vpack.c.bf16 %v7439, %v7437
        %v7890 = vpack.c.bf16 %v7440, %v7438
        %v7891 = vpack.c.bf16 %v7443, %v7441
        %v7892 = vpack.c.bf16 %v7444, %v7442
        %v7893 = vpack.c.bf16 %v7447, %v7445
        %v7894 = vpack.c.bf16 %v7448, %v7446
        %v7895 = vpack.c.bf16 %v7451, %v7449
        %v7896 = vpack.c.bf16 %v7452, %v7450
        %v7897 = vpack.c.bf16 %v7455, %v7453
        %v7898 = vpack.c.bf16 %v7456, %v7454
        %v7899 = vpack.c.bf16 %v7459, %v7457
        %v7900 = vpack.c.bf16 %v7460, %v7458
        %v7901 = vpack.c.bf16 %v7463, %v7461
        %v7902 = vpack.c.bf16 %v7464, %v7462
        %v7903 = vpack.c.bf16 %v7467, %v7465
        %v7904 = vpack.c.bf16 %v7468, %v7466
        %v7905 = vpack.c.bf16 %v7471, %v7469
        %v7906 = vpack.c.bf16 %v7472, %v7470
        %v7907 = vpack.c.bf16 %v7475, %v7473
        %v7908 = vpack.c.bf16 %v7476, %v7474
        %v7909 = vpack.c.bf16 %v7479, %v7477
        %v7910 = vpack.c.bf16 %v7480, %v7478
        %v7911 = vpack.c.bf16 %v7483, %v7481
        %v7912 = vpack.c.bf16 %v7484, %v7482
        %v7913 = vpack.c.bf16 %v7487, %v7485
        %v7914 = vpack.c.bf16 %v7488, %v7486
        %v7915 = vpack.c.bf16 %v7491, %v7489
        %v7916 = vpack.c.bf16 %v7492, %v7490
        %v7917 = vpack.c.bf16 %v7495, %v7493
        %v7918 = vpack.c.bf16 %v7496, %v7494
        %v7919 = vpack.c.bf16 %v7499, %v7497
        %v7920 = vpack.c.bf16 %v7500, %v7498
        %v7921 = vpack.c.bf16 %v7503, %v7501
        %v7922 = vpack.c.bf16 %v7504, %v7502
        %v7923 = vpack.c.bf16 %v7507, %v7505
        %v7924 = vpack.c.bf16 %v7508, %v7506
        %v7925 = vpack.c.bf16 %v7511, %v7509
        %v7926 = vpack.c.bf16 %v7512, %v7510
        %v7927 = vpack.c.bf16 %v7515, %v7513
        %v7928 = vpack.c.bf16 %v7516, %v7514
        %v7929 = vpack.c.bf16 %v7519, %v7517
        %v7930 = vpack.c.bf16 %v7520, %v7518
        %v7931 = vpack.c.bf16 %v7523, %v7521
        %v7932 = vpack.c.bf16 %v7524, %v7522
        %v7933 = vpack.c.bf16 %v7527, %v7525
        %v7934 = vpack.c.bf16 %v7528, %v7526
        %v7935 = vpack.c.bf16 %v7531, %v7529
        %v7936 = vpack.c.bf16 %v7532, %v7530
        %v7937 = vpack.c.bf16 %v7535, %v7533
        %v7938 = vpack.c.bf16 %v7536, %v7534
        %v7939 = vpack.c.bf16 %v7539, %v7537
        %v7940 = vpack.c.bf16 %v7540, %v7538
        %v7941 = vpack.c.bf16 %v7543, %v7541
        %v7942 = vpack.c.bf16 %v7544, %v7542
        %v7943 = vpack.c.bf16 %v7547, %v7545
        %v7944 = vpack.c.bf16 %v7548, %v7546
        %v7945 = vpack.c.bf16 %v7551, %v7549
        %v7946 = vpack.c.bf16 %v7552, %v7550
        %v7947 = vpack.c.bf16 %v7555, %v7553
        %v7948 = vpack.c.bf16 %v7556, %v7554
        %v7949 = vpack.c.bf16 %v7559, %v7557
        %v7950 = vpack.c.bf16 %v7560, %v7558
        %v7951 = vpack.c.bf16 %v7563, %v7561
        %v7952 = vpack.c.bf16 %v7564, %v7562
        %v7953 = vpack.c.bf16 %v7567, %v7565
        %v7954 = vpack.c.bf16 %v7568, %v7566
        %v7955 = vpack.c.bf16 %v7571, %v7569
        %v7956 = vpack.c.bf16 %v7572, %v7570
        %v7957 = vpack.c.bf16 %v7575, %v7573
        %v7958 = vpack.c.bf16 %v7576, %v7574
        %v7959 = vpack.c.bf16 %v7579, %v7577
        %v7960 = vpack.c.bf16 %v7580, %v7578
        %v7961 = vpack.c.bf16 %v7583, %v7581
        %v7962 = vpack.c.bf16 %v7584, %v7582
        %v7963 = vpack.c.bf16 %v7587, %v7585
        %v7964 = vpack.c.bf16 %v7588, %v7586
        %v7965 = vpack.c.bf16 %v7591, %v7589
        %v7966 = vpack.c.bf16 %v7592, %v7590
        %v7967 = vpack.c.bf16 %v7595, %v7593
        %v7968 = vpack.c.bf16 %v7596, %v7594
        %v7969 = vpack.c.bf16 %v7599, %v7597
        %v7970 = vpack.c.bf16 %v7600, %v7598
        %v7971 = vpack.c.bf16 %v7603, %v7601
        %v7972 = vpack.c.bf16 %v7604, %v7602
        %v7973 = vpack.c.bf16 %v7607, %v7605
        %v7974 = vpack.c.bf16 %v7608, %v7606
        %v7975 = vpack.c.bf16 %v7611, %v7609
        %v7976 = vpack.c.bf16 %v7612, %v7610
        %v7977 = vpack.c.bf16 %v7615, %v7613
        %v7978 = vpack.c.bf16 %v7616, %v7614
        %v7979 = vpack.c.bf16 %v7619, %v7617
        %v7980 = vpack.c.bf16 %v7620, %v7618
        %v7981 = vpack.c.bf16 %v7623, %v7621
        %v7982 = vpack.c.bf16 %v7624, %v7622
        %v7983 = vpack.c.bf16 %v7627, %v7625
        %v7984 = vpack.c.bf16 %v7628, %v7626
        %v7985 = vpack.c.bf16 %v7631, %v7629
        %v7986 = vpack.c.bf16 %v7632, %v7630
        %v7987 = vpack.c.bf16 %v7635, %v7633
        %v7988 = vpack.c.bf16 %v7636, %v7634
        %v7989 = vpack.c.bf16 %v7639, %v7637
        %v7990 = vpack.c.bf16 %v7640, %v7638
        %v7991 = vpack.c.bf16 %v7643, %v7641
        %v7992 = vpack.c.bf16 %v7644, %v7642
        %v7993 = vpack.c.bf16 %v7647, %v7645
        %v7994 = vpack.c.bf16 %v7648, %v7646
        %v7995 = vpack.c.bf16 %v7651, %v7649
        %v7996 = vpack.c.bf16 %v7652, %v7650
        %v7997 = vpack.c.bf16 %v7655, %v7653
        %v7998 = vpack.c.bf16 %v7656, %v7654
        %v7999 = vpack.c.bf16 %v7659, %v7657
        %v8000 = vpack.c.bf16 %v7660, %v7658
        %v8001 = vpack.c.bf16 %v7663, %v7661
        %v8002 = vpack.c.bf16 %v7664, %v7662
        %v8003 = vpack.c.bf16 %v7667, %v7665
        %v8004 = vpack.c.bf16 %v7668, %v7666
        %v8005 = vpack.c.bf16 %v7671, %v7669
        %v8006 = vpack.c.bf16 %v7672, %v7670
        %v8007 = vpack.c.bf16 %v7675, %v7673
        %v8008 = vpack.c.bf16 %v7676, %v7674
        %v8009 = vpack.c.bf16 %v7679, %v7677
        %v8010 = vpack.c.bf16 %v7680, %v7678
        %v8011 = vpack.c.bf16 %v7683, %v7681
        %v8012 = vpack.c.bf16 %v7684, %v7682
        %v8013 = vpack.c.bf16 %v7687, %v7685
        %v8014 = vpack.c.bf16 %v7688, %v7686
        %v8015 = vpack.c.bf16 %v7691, %v7689
        %v8016 = vpack.c.bf16 %v7692, %v7690
        %v8017 = vpack.c.bf16 %v7695, %v7693
        %v8018 = vpack.c.bf16 %v7696, %v7694
        %v8019 = vpack.c.bf16 %v7699, %v7697
        %v8020 = vpack.c.bf16 %v7700, %v7698
        %v8021 = vpack.c.bf16 %v7703, %v7701
        %v8022 = vpack.c.bf16 %v7704, %v7702
        %v8023 = vpack.c.bf16 %v7707, %v7705
        %v8024 = vpack.c.bf16 %v7708, %v7706
        %v8025 = vpack.c.bf16 %v7711, %v7709
        %v8026 = vpack.c.bf16 %v7712, %v7710
        %v8027 = vpack.c.bf16 %v7715, %v7713
        %v8028 = vpack.c.bf16 %v7716, %v7714
        %v8029 = vpack.c.bf16 %v7719, %v7717
        %v8030 = vpack.c.bf16 %v7720, %v7718
        %v8031 = vpack.c.bf16 %v7723, %v7721
        %v8032 = vpack.c.bf16 %v7724, %v7722
        %v8033 = vpack.c.bf16 %v7727, %v7725
        %v8034 = vpack.c.bf16 %v7728, %v7726
        %v8035 = vpack.c.bf16 %v7731, %v7729
        %v8036 = vpack.c.bf16 %v7732, %v7730
        %v8037 = vpack.c.bf16 %v7735, %v7733
        %v8038 = vpack.c.bf16 %v7736, %v7734
        %v8039 = vpack.c.bf16 %v7739, %v7737
        %v8040 = vpack.c.bf16 %v7740, %v7738
        %v8041 = vpack.c.bf16 %v7743, %v7741
        %v8042 = vpack.c.bf16 %v7744, %v7742
        %v8043 = vpack.c.bf16 %v7747, %v7745
        %v8044 = vpack.c.bf16 %v7748, %v7746
        %v8045 = vpack.c.bf16 %v7751, %v7749
        %v8046 = vpack.c.bf16 %v7752, %v7750
        %v8047 = vpack.c.bf16 %v7755, %v7753
        %v8048 = vpack.c.bf16 %v7756, %v7754
        %v8049 = vpack.c.bf16 %v7759, %v7757
        %v8050 = vpack.c.bf16 %v7760, %v7758
        %v8051 = vpack.c.bf16 %v7763, %v7761
        %v8052 = vpack.c.bf16 %v7764, %v7762
        %v8053 = vpack.c.bf16 %v7767, %v7765
        %v8054 = vpack.c.bf16 %v7768, %v7766
        %v8055 = vpack.c.bf16 %v7771, %v7769
        %v8056 = vpack.c.bf16 %v7772, %v7770
        %v8057 = vpack.c.bf16 %v7775, %v7773
        %v8058 = vpack.c.bf16 %v7776, %v7774
        %v8059 = vpack.c.bf16 %v7779, %v7777
        %v8060 = vpack.c.bf16 %v7780, %v7778
        %v8061 = vpack.c.bf16 %v7783, %v7781
        %v8062 = vpack.c.bf16 %v7784, %v7782
        %v8063 = vpack.c.bf16 %v7787, %v7785
        %v8064 = vpack.c.bf16 %v7788, %v7786
        %v8065 = vpack.c.bf16 %v7791, %v7789
        %v8066 = vpack.c.bf16 %v7792, %v7790
        %v8067 = vpack.c.bf16 %v7795, %v7793
        %v8068 = vpack.c.bf16 %v7796, %v7794
        %v8069 = vpack.c.bf16 %v7799, %v7797
        %v8070 = vpack.c.bf16 %v7800, %v7798
        %v8071 = vpack.c.bf16 %v7803, %v7801
        %v8072 = vpack.c.bf16 %v7804, %v7802
        %v8073 = vpack.c.bf16 %v7807, %v7805
        %v8074 = vpack.c.bf16 %v7808, %v7806
        %v8075 = vpack.c.bf16 %v7811, %v7809
        %v8076 = vpack.c.bf16 %v7812, %v7810
        %v8077 = vpack.c.bf16 %v7815, %v7813
        %v8078 = vpack.c.bf16 %v7816, %v7814
        %v8079 = vpack.c.bf16 %v7819, %v7817
        %v8080 = vpack.c.bf16 %v7820, %v7818
        %v8081 = vpack.c.bf16 %v7823, %v7821
        %v8082 = vpack.c.bf16 %v7824, %v7822
        %v8083 = vpack.c.bf16 %v7827, %v7825
        %v8084 = vpack.c.bf16 %v7828, %v7826
        %8085 = vmatprep.subr.bf16.mxu0 %v7830
        %8086 = vmatpush1.bf16.xpose.msra.mxu0 %v7829
        %8087 = vmatprep.subr.bf16.mxu0 %v7832
        %8088 = vmatpush1.bf16.xpose.msra.mxu0 %v7831
        %8089 = vmatprep.subr.bf16.mxu0 %v7834
        %8090 = vmatpush1.bf16.xpose.msra.mxu0 %v7833
        %8091 = vmatprep.subr.bf16.mxu0 %v7836
        %8092 = vmatpush1.bf16.xpose.msra.mxu0 %v7835
        %8093 = vmatprep.subr.bf16.mxu0 %v7838
        %8094 = vmatpush1.bf16.xpose.msra.mxu0 %v7837
        %8095 = vmatprep.subr.bf16.mxu0 %v7840
        %8096 = vmatpush1.bf16.xpose.msra.mxu0 %v7839
        %8097 = vmatprep.subr.bf16.mxu0 %v7842
        %8098 = vmatpush1.bf16.xpose.msra.mxu0 %v7841
        %8099 = vmatprep.subr.bf16.mxu0 %v7844
        %8100 = vmatpush1.bf16.xpose.msra.mxu0 %v7843
        %8101 = vmatprep.subr.bf16.mxu0 %v7846
        %8102 = vmatpush1.bf16.xpose.msra.mxu0 %v7845
        %8103 = vmatprep.subr.bf16.mxu0 %v7848
        %8104 = vmatpush1.bf16.xpose.msra.mxu0 %v7847
        %8105 = vmatprep.subr.bf16.mxu0 %v7850
        %8106 = vmatpush1.bf16.xpose.msra.mxu0 %v7849
        %8107 = vmatprep.subr.bf16.mxu0 %v7852
        %8108 = vmatpush1.bf16.xpose.msra.mxu0 %v7851
        %8109 = vmatprep.subr.bf16.mxu0 %v7854
        %8110 = vmatpush1.bf16.xpose.msra.mxu0 %v7853
        %8111 = vmatprep.subr.bf16.mxu0 %v7856
        %8112 = vmatpush1.bf16.xpose.msra.mxu0 %v7855
        %8113 = vmatprep.subr.bf16.mxu0 %v7858
        %8114 = vmatpush1.bf16.xpose.msra.mxu0 %v7857
        %8115 = vmatprep.subr.bf16.mxu0 %v7860
        %8116 = vmatpush1.bf16.xpose.msra.mxu0 %v7859
        %8117 = vmatprep.mubr.bf16.mxu0 %v1789
        %8118 = vmatmul.mubr.bf16.gmra.mrb[0].mxu0 %v1788
        %v8119 = vpop.f32.mrb[0].mxu0
        %v8120 = vadd.f32 0.0, %v8119
        %v8121 = vpop.f32.mrb[0].mxu0
        %v8122 = vadd.f32 0.0, %v8121
        %v8123 = vpop.f32.mrb[0].mxu0
        %v8124 = vadd.f32 0.0, %v8123
        %v8125 = vpop.f32.mrb[0].mxu0
        %v8126 = vadd.f32 0.0, %v8125
        %8127 = vdwg.mxu0
        %8128 = vmatprep.subr.bf16.mxu0 %v7862
        %8129 = vmatpush1.bf16.xpose.msra.mxu0 %v7861
        %8130 = vmatprep.subr.bf16.mxu0 %v7864
        %8131 = vmatpush1.bf16.xpose.msra.mxu0 %v7863
        %8132 = vmatprep.subr.bf16.mxu0 %v7866
        %8133 = vmatpush1.bf16.xpose.msra.mxu0 %v7865
        %8134 = vmatprep.subr.bf16.mxu0 %v7868
        %8135 = vmatpush1.bf16.xpose.msra.mxu0 %v7867
        %8136 = vmatprep.subr.bf16.mxu0 %v7870
        %8137 = vmatpush1.bf16.xpose.msra.mxu0 %v7869
        %8138 = vmatprep.subr.bf16.mxu0 %v7872
        %8139 = vmatpush1.bf16.xpose.msra.mxu0 %v7871
        %8140 = vmatprep.subr.bf16.mxu0 %v7874
        %8141 = vmatpush1.bf16.xpose.msra.mxu0 %v7873
        %8142 = vmatprep.subr.bf16.mxu0 %v7876
        %8143 = vmatpush1.bf16.xpose.msra.mxu0 %v7875
        %8144 = vmatprep.subr.bf16.mxu0 %v7878
        %8145 = vmatpush1.bf16.xpose.msra.mxu0 %v7877
        %8146 = vmatprep.subr.bf16.mxu0 %v7880
        %8147 = vmatpush1.bf16.xpose.msra.mxu0 %v7879
        %8148 = vmatprep.subr.bf16.mxu0 %v7882
        %8149 = vmatpush1.bf16.xpose.msra.mxu0 %v7881
        %8150 = vmatprep.subr.bf16.mxu0 %v7884
        %8151 = vmatpush1.bf16.xpose.msra.mxu0 %v7883
        %8152 = vmatprep.subr.bf16.mxu0 %v7886
        %8153 = vmatpush1.bf16.xpose.msra.mxu0 %v7885
        %8154 = vmatprep.subr.bf16.mxu0 %v7888
        %8155 = vmatpush1.bf16.xpose.msra.mxu0 %v7887
        %8156 = vmatprep.subr.bf16.mxu0 %v7890
        %8157 = vmatpush1.bf16.xpose.msra.mxu0 %v7889
        %8158 = vmatprep.subr.bf16.mxu0 %v7892
        %8159 = vmatpush1.bf16.xpose.msra.mxu0 %v7891
        %8160 = vmatprep.mubr.bf16.mxu0 %v1791
        %8161 = vmatmul.mubr.bf16.gmra.mrb[0].mxu0 %v1790
        %v8162 = vpop.f32.mrb[0].mxu0
        %v8163 = vadd.f32 0.0, %v8162
        %v8164 = vpop.f32.mrb[0].mxu0
        %v8165 = vadd.f32 0.0, %v8164
        %v8166 = vpop.f32.mrb[0].mxu0
        %v8167 = vadd.f32 0.0, %v8166
        %v8168 = vpop.f32.mrb[0].mxu0
        %v8169 = vadd.f32 0.0, %v8168
        %8170 = vdwg.mxu0
        %8171 = vmatprep.subr.bf16.mxu0 %v7894
        %8172 = vmatpush1.bf16.xpose.msra.mxu0 %v7893
        %8173 = vmatprep.subr.bf16.mxu0 %v7896
        %8174 = vmatpush1.bf16.xpose.msra.mxu0 %v7895
        %8175 = vmatprep.subr.bf16.mxu0 %v7898
        %8176 = vmatpush1.bf16.xpose.msra.mxu0 %v7897
        %8177 = vmatprep.subr.bf16.mxu0 %v7900
        %8178 = vmatpush1.bf16.xpose.msra.mxu0 %v7899
        %8179 = vmatprep.subr.bf16.mxu0 %v7902
        %8180 = vmatpush1.bf16.xpose.msra.mxu0 %v7901
        %8181 = vmatprep.subr.bf16.mxu0 %v7904
        %8182 = vmatpush1.bf16.xpose.msra.mxu0 %v7903
        %8183 = vmatprep.subr.bf16.mxu0 %v7906
        %8184 = vmatpush1.bf16.xpose.msra.mxu0 %v7905
        %8185 = vmatprep.subr.bf16.mxu0 %v7908
        %8186 = vmatpush1.bf16.xpose.msra.mxu0 %v7907
        %8187 = vmatprep.subr.bf16.mxu0 %v7910
        %8188 = vmatpush1.bf16.xpose.msra.mxu0 %v7909
        %8189 = vmatprep.subr.bf16.mxu0 %v7912
        %8190 = vmatpush1.bf16.xpose.msra.mxu0 %v7911
        %8191 = vmatprep.subr.bf16.mxu0 %v7914
        %8192 = vmatpush1.bf16.xpose.msra.mxu0 %v7913
        %8193 = vmatprep.subr.bf16.mxu0 %v7916
        %8194 = vmatpush1.bf16.xpose.msra.mxu0 %v7915
        %8195 = vmatprep.subr.bf16.mxu0 %v7918
        %8196 = vmatpush1.bf16.xpose.msra.mxu0 %v7917
        %8197 = vmatprep.subr.bf16.mxu0 %v7920
        %8198 = vmatpush1.bf16.xpose.msra.mxu0 %v7919
        %8199 = vmatprep.subr.bf16.mxu0 %v7922
        %8200 = vmatpush1.bf16.xpose.msra.mxu0 %v7921
        %8201 = vmatprep.subr.bf16.mxu0 %v7924
        %8202 = vmatpush1.bf16.xpose.msra.mxu0 %v7923
        %8203 = vmatprep.mubr.bf16.mxu0 %v1793
        %8204 = vmatmul.mubr.bf16.gmra.mrb[0].mxu0 %v1792
        %v8205 = vpop.f32.mrb[0].mxu0
        %v8206 = vadd.f32 0.0, %v8205
        %v8207 = vpop.f32.mrb[0].mxu0
        %v8208 = vadd.f32 0.0, %v8207
        %v8209 = vpop.f32.mrb[0].mxu0
        %v8210 = vadd.f32 0.0, %v8209
        %v8211 = vpop.f32.mrb[0].mxu0
        %v8212 = vadd.f32 0.0, %v8211
        %8213 = vdwg.mxu0
        %8214 = vmatprep.subr.bf16.mxu0 %v7926
        %8215 = vmatpush1.bf16.xpose.msra.mxu0 %v7925
        %8216 = vmatprep.subr.bf16.mxu0 %v7928
        %8217 = vmatpush1.bf16.xpose.msra.mxu0 %v7927
        %8218 = vmatprep.subr.bf16.mxu0 %v7930
        %8219 = vmatpush1.bf16.xpose.msra.mxu0 %v7929
        %8220 = vmatprep.subr.bf16.mxu0 %v7932
        %8221 = vmatpush1.bf16.xpose.msra.mxu0 %v7931
        %8222 = vmatprep.subr.bf16.mxu0 %v7934
        %8223 = vmatpush1.bf16.xpose.msra.mxu0 %v7933
        %8224 = vmatprep.subr.bf16.mxu0 %v7936
        %8225 = vmatpush1.bf16.xpose.msra.mxu0 %v7935
        %8226 = vmatprep.subr.bf16.mxu0 %v7938
        %8227 = vmatpush1.bf16.xpose.msra.mxu0 %v7937
        %8228 = vmatprep.subr.bf16.mxu0 %v7940
        %8229 = vmatpush1.bf16.xpose.msra.mxu0 %v7939
        %8230 = vmatprep.subr.bf16.mxu0 %v7942
        %8231 = vmatpush1.bf16.xpose.msra.mxu0 %v7941
        %8232 = vmatprep.subr.bf16.mxu0 %v7944
        %8233 = vmatpush1.bf16.xpose.msra.mxu0 %v7943
        %8234 = vmatprep.subr.bf16.mxu0 %v7946
        %8235 = vmatpush1.bf16.xpose.msra.mxu0 %v7945
        %8236 = vmatprep.subr.bf16.mxu0 %v7948
        %8237 = vmatpush1.bf16.xpose.msra.mxu0 %v7947
        %8238 = vmatprep.subr.bf16.mxu0 %v7950
        %8239 = vmatpush1.bf16.xpose.msra.mxu0 %v7949
        %8240 = vmatprep.subr.bf16.mxu0 %v7952
        %8241 = vmatpush1.bf16.xpose.msra.mxu0 %v7951
        %8242 = vmatprep.subr.bf16.mxu0 %v7954
        %8243 = vmatpush1.bf16.xpose.msra.mxu0 %v7953
        %8244 = vmatprep.subr.bf16.mxu0 %v7956
        %8245 = vmatpush1.bf16.xpose.msra.mxu0 %v7955
        %8246 = vmatprep.mubr.bf16.mxu0 %v1795
        %8247 = vmatmul.mubr.bf16.gmra.mrb[0].mxu0 %v1794
        %v8248 = vpop.f32.mrb[0].mxu0
        %v8249 = vadd.f32 0.0, %v8248
        %v8250 = vpop.f32.mrb[0].mxu0
        %v8251 = vadd.f32 0.0, %v8250
        %v8252 = vpop.f32.mrb[0].mxu0
        %v8253 = vadd.f32 0.0, %v8252
        %v8254 = vpop.f32.mrb[0].mxu0
        %v8255 = vadd.f32 0.0, %v8254
        %8256 = vdwg.mxu0
        %8257 = vmatprep.subr.bf16.mxu0 %v7958
        %8258 = vmatpush1.bf16.xpose.msra.mxu0 %v7957
        %8259 = vmatprep.subr.bf16.mxu0 %v7960
        %8260 = vmatpush1.bf16.xpose.msra.mxu0 %v7959
        %8261 = vmatprep.subr.bf16.mxu0 %v7962
        %8262 = vmatpush1.bf16.xpose.msra.mxu0 %v7961
        %8263 = vmatprep.subr.bf16.mxu0 %v7964
        %8264 = vmatpush1.bf16.xpose.msra.mxu0 %v7963
        %8265 = vmatprep.subr.bf16.mxu0 %v7966
        %8266 = vmatpush1.bf16.xpose.msra.mxu0 %v7965
        %8267 = vmatprep.subr.bf16.mxu0 %v7968
        %8268 = vmatpush1.bf16.xpose.msra.mxu0 %v7967
        %8269 = vmatprep.subr.bf16.mxu0 %v7970
        %8270 = vmatpush1.bf16.xpose.msra.mxu0 %v7969
        %8271 = vmatprep.subr.bf16.mxu0 %v7972
        %8272 = vmatpush1.bf16.xpose.msra.mxu0 %v7971
        %8273 = vmatprep.subr.bf16.mxu0 %v7974
        %8274 = vmatpush1.bf16.xpose.msra.mxu0 %v7973
        %8275 = vmatprep.subr.bf16.mxu0 %v7976
        %8276 = vmatpush1.bf16.xpose.msra.mxu0 %v7975
        %8277 = vmatprep.subr.bf16.mxu0 %v7978
        %8278 = vmatpush1.bf16.xpose.msra.mxu0 %v7977
        %8279 = vmatprep.subr.bf16.mxu0 %v7980
        %8280 = vmatpush1.bf16.xpose.msra.mxu0 %v7979
        %8281 = vmatprep.subr.bf16.mxu0 %v7982
        %8282 = vmatpush1.bf16.xpose.msra.mxu0 %v7981
        %8283 = vmatprep.subr.bf16.mxu0 %v7984
        %8284 = vmatpush1.bf16.xpose.msra.mxu0 %v7983
        %8285 = vmatprep.subr.bf16.mxu0 %v7986
        %8286 = vmatpush1.bf16.xpose.msra.mxu0 %v7985
        %8287 = vmatprep.subr.bf16.mxu0 %v7988
        %8288 = vmatpush1.bf16.xpose.msra.mxu0 %v7987
        %8289 = vmatprep.mubr.bf16.mxu0 %v1797
        %8290 = vmatmul.mubr.bf16.gmra.mrb[0].mxu0 %v1796
        %v8291 = vpop.f32.mrb[0].mxu0
        %v8292 = vadd.f32 0.0, %v8291
        %v8293 = vpop.f32.mrb[0].mxu0
        %v8294 = vadd.f32 0.0, %v8293
        %v8295 = vpop.f32.mrb[0].mxu0
        %v8296 = vadd.f32 0.0, %v8295
        %v8297 = vpop.f32.mrb[0].mxu0
        %v8298 = vadd.f32 0.0, %v8297
        %8299 = vdwg.mxu0
        %8300 = vmatprep.subr.bf16.mxu0 %v7990
        %8301 = vmatpush1.bf16.xpose.msra.mxu0 %v7989
        %8302 = vmatprep.subr.bf16.mxu0 %v7992
        %8303 = vmatpush1.bf16.xpose.msra.mxu0 %v7991
        %8304 = vmatprep.subr.bf16.mxu0 %v7994
        %8305 = vmatpush1.bf16.xpose.msra.mxu0 %v7993
        %8306 = vmatprep.subr.bf16.mxu0 %v7996
        %8307 = vmatpush1.bf16.xpose.msra.mxu0 %v7995
        %8308 = vmatprep.subr.bf16.mxu0 %v7998
        %8309 = vmatpush1.bf16.xpose.msra.mxu0 %v7997
        %8310 = vmatprep.subr.bf16.mxu0 %v8000
        %8311 = vmatpush1.bf16.xpose.msra.mxu0 %v7999
        %8312 = vmatprep.subr.bf16.mxu0 %v8002
        %8313 = vmatpush1.bf16.xpose.msra.mxu0 %v8001
        %8314 = vmatprep.subr.bf16.mxu0 %v8004
        %8315 = vmatpush1.bf16.xpose.msra.mxu0 %v8003
        %8316 = vmatprep.subr.bf16.mxu0 %v8006
        %8317 = vmatpush1.bf16.xpose.msra.mxu0 %v8005
        %8318 = vmatprep.subr.bf16.mxu0 %v8008
        %8319 = vmatpush1.bf16.xpose.msra.mxu0 %v8007
        %8320 = vmatprep.subr.bf16.mxu0 %v8010
        %8321 = vmatpush1.bf16.xpose.msra.mxu0 %v8009
        %8322 = vmatprep.subr.bf16.mxu0 %v8012
        %8323 = vmatpush1.bf16.xpose.msra.mxu0 %v8011
        %8324 = vmatprep.subr.bf16.mxu0 %v8014
        %8325 = vmatpush1.bf16.xpose.msra.mxu0 %v8013
        %8326 = vmatprep.subr.bf16.mxu0 %v8016
        %8327 = vmatpush1.bf16.xpose.msra.mxu0 %v8015
        %8328 = vmatprep.subr.bf16.mxu0 %v8018
        %8329 = vmatpush1.bf16.xpose.msra.mxu0 %v8017
        %8330 = vmatprep.subr.bf16.mxu0 %v8020
        %8331 = vmatpush1.bf16.xpose.msra.mxu0 %v8019
        %8332 = vmatprep.mubr.bf16.mxu0 %v1799
        %8333 = vmatmul.mubr.bf16.gmra.mrb[0].mxu0 %v1798
        %v8334 = vpop.f32.mrb[0].mxu0
        %v8335 = vadd.f32 0.0, %v8334
        %v8336 = vpop.f32.mrb[0].mxu0
        %v8337 = vadd.f32 0.0, %v8336
        %v8338 = vpop.f32.mrb[0].mxu0
        %v8339 = vadd.f32 0.0, %v8338
        %v8340 = vpop.f32.mrb[0].mxu0
        %v8341 = vadd.f32 0.0, %v8340
        %8342 = vdwg.mxu0
        %8343 = vmatprep.subr.bf16.mxu0 %v8022
        %8344 = vmatpush1.bf16.xpose.msra.mxu0 %v8021
        %8345 = vmatprep.subr.bf16.mxu0 %v8024
        %8346 = vmatpush1.bf16.xpose.msra.mxu0 %v8023
        %8347 = vmatprep.subr.bf16.mxu0 %v8026
        %8348 = vmatpush1.bf16.xpose.msra.mxu0 %v8025
        %8349 = vmatprep.subr.bf16.mxu0 %v8028
        %8350 = vmatpush1.bf16.xpose.msra.mxu0 %v8027
        %8351 = vmatprep.subr.bf16.mxu0 %v8030
        %8352 = vmatpush1.bf16.xpose.msra.mxu0 %v8029
        %8353 = vmatprep.subr.bf16.mxu0 %v8032
        %8354 = vmatpush1.bf16.xpose.msra.mxu0 %v8031
        %8355 = vmatprep.subr.bf16.mxu0 %v8034
        %8356 = vmatpush1.bf16.xpose.msra.mxu0 %v8033
        %8357 = vmatprep.subr.bf16.mxu0 %v8036
        %8358 = vmatpush1.bf16.xpose.msra.mxu0 %v8035
        %8359 = vmatprep.subr.bf16.mxu0 %v8038
        %8360 = vmatpush1.bf16.xpose.msra.mxu0 %v8037
        %8361 = vmatprep.subr.bf16.mxu0 %v8040
        %8362 = vmatpush1.bf16.xpose.msra.mxu0 %v8039
        %8363 = vmatprep.subr.bf16.mxu0 %v8042
        %8364 = vmatpush1.bf16.xpose.msra.mxu0 %v8041
        %8365 = vmatprep.subr.bf16.mxu0 %v8044
        %8366 = vmatpush1.bf16.xpose.msra.mxu0 %v8043
        %8367 = vmatprep.subr.bf16.mxu0 %v8046
        %8368 = vmatpush1.bf16.xpose.msra.mxu0 %v8045
        %8369 = vmatprep.subr.bf16.mxu0 %v8048
        %8370 = vmatpush1.bf16.xpose.msra.mxu0 %v8047
        %8371 = vmatprep.subr.bf16.mxu0 %v8050
        %8372 = vmatpush1.bf16.xpose.msra.mxu0 %v8049
        %8373 = vmatprep.subr.bf16.mxu0 %v8052
        %8374 = vmatpush1.bf16.xpose.msra.mxu0 %v8051
        %8375 = vmatprep.mubr.bf16.mxu0 %v1801
        %8376 = vmatmul.mubr.bf16.gmra.mrb[0].mxu0 %v1800
        %v8377 = vpop.f32.mrb[0].mxu0
        %v8378 = vadd.f32 0.0, %v8377
        %v8379 = vpop.f32.mrb[0].mxu0
        %v8380 = vadd.f32 0.0, %v8379
        %v8381 = vpop.f32.mrb[0].mxu0
        %v8382 = vadd.f32 0.0, %v8381
        %v8383 = vpop.f32.mrb[0].mxu0
        %v8384 = vadd.f32 0.0, %v8383
        %8385 = vdwg.mxu0
        %8386 = vmatprep.subr.bf16.mxu0 %v8054
        %8387 = vmatpush1.bf16.xpose.msra.mxu0 %v8053
        %8388 = vmatprep.subr.bf16.mxu0 %v8056
        %8389 = vmatpush1.bf16.xpose.msra.mxu0 %v8055
        %8390 = vmatprep.subr.bf16.mxu0 %v8058
        %8391 = vmatpush1.bf16.xpose.msra.mxu0 %v8057
        %8392 = vmatprep.subr.bf16.mxu0 %v8060
        %8393 = vmatpush1.bf16.xpose.msra.mxu0 %v8059
        %8394 = vmatprep.subr.bf16.mxu0 %v8062
        %8395 = vmatpush1.bf16.xpose.msra.mxu0 %v8061
        %8396 = vmatprep.subr.bf16.mxu0 %v8064
        %8397 = vmatpush1.bf16.xpose.msra.mxu0 %v8063
        %8398 = vmatprep.subr.bf16.mxu0 %v8066
        %8399 = vmatpush1.bf16.xpose.msra.mxu0 %v8065
        %8400 = vmatprep.subr.bf16.mxu0 %v8068
        %8401 = vmatpush1.bf16.xpose.msra.mxu0 %v8067
        %8402 = vmatprep.subr.bf16.mxu0 %v8070
        %8403 = vmatpush1.bf16.xpose.msra.mxu0 %v8069
        %8404 = vmatprep.subr.bf16.mxu0 %v8072
        %8405 = vmatpush1.bf16.xpose.msra.mxu0 %v8071
        %8406 = vmatprep.subr.bf16.mxu0 %v8074
        %8407 = vmatpush1.bf16.xpose.msra.mxu0 %v8073
        %8408 = vmatprep.subr.bf16.mxu0 %v8076
        %8409 = vmatpush1.bf16.xpose.msra.mxu0 %v8075
        %8410 = vmatprep.subr.bf16.mxu0 %v8078
        %8411 = vmatpush1.bf16.xpose.msra.mxu0 %v8077
        %8412 = vmatprep.subr.bf16.mxu0 %v8080
        %8413 = vmatpush1.bf16.xpose.msra.mxu0 %v8079
        %8414 = vmatprep.subr.bf16.mxu0 %v8082
        %8415 = vmatpush1.bf16.xpose.msra.mxu0 %v8081
        %8416 = vmatprep.subr.bf16.mxu0 %v8084
        %8417 = vmatpush1.bf16.xpose.msra.mxu0 %v8083
        %8418 = vmatprep.mubr.bf16.mxu0 %v1803
        %8419 = vmatmul.mubr.bf16.gmra.mrb[0].mxu0 %v1802
        %v8420 = vpop.f32.mrb[0].mxu0
        %v8421 = vadd.f32 0.0, %v8420
        %v8422 = vpop.f32.mrb[0].mxu0
        %v8423 = vadd.f32 0.0, %v8422
        %v8424 = vpop.f32.mrb[0].mxu0
        %v8425 = vadd.f32 0.0, %v8424
        %v8426 = vpop.f32.mrb[0].mxu0
        %v8427 = vadd.f32 0.0, %v8426
        %8428 = vdwg.mxu0
        %8429 = vxpose.xlu0.b32.start [1/16] %v8120, 128
        %8430 = vxpose.xlu0.b32.cont [2/16] %v8124, 128
        %8431 = vxpose.xlu0.b32.cont [3/16] %v8163, 128
        %8432 = vxpose.xlu0.b32.cont [4/16] %v8167, 128
        %8433 = vxpose.xlu0.b32.cont [5/16] %v8206, 128
        %8434 = vxpose.xlu0.b32.cont [6/16] %v8210, 128
        %8435 = vxpose.xlu0.b32.cont [7/16] %v8249, 128
        %8436 = vxpose.xlu0.b32.cont [8/16] %v8253, 128
        %8437 = vxpose.xlu0.b32.cont [9/16] %v8292, 128
        %8438 = vxpose.xlu0.b32.cont [10/16] %v8296, 128
        %8439 = vxpose.xlu0.b32.cont [11/16] %v8335, 128
        %8440 = vxpose.xlu0.b32.cont [12/16] %v8339, 128
        %8441 = vxpose.xlu0.b32.cont [13/16] %v8378, 128
        %8442 = vxpose.xlu0.b32.cont [14/16] %v8382, 128
        %8443 = vxpose.xlu0.b32.cont [15/16] %v8421, 128
        %8444 = vxpose.xlu0.b32.end [16/16] %v8425, 128
        %v8445 = vpop.trf.xlu0
        %v8446 = vpop.trf.xlu0
        %v8447 = vpop.trf.xlu0
        %v8448 = vpop.trf.xlu0
        %v8449 = vpop.trf.xlu0
        %v8450 = vpop.trf.xlu0
        %v8451 = vpop.trf.xlu0
        %v8452 = vpop.trf.xlu0
        %v8453 = vpop.trf.xlu0
        %v8454 = vpop.trf.xlu0
        %v8455 = vpop.trf.xlu0
        %v8456 = vpop.trf.xlu0
        %v8457 = vpop.trf.xlu0
        %v8458 = vpop.trf.xlu0
        %v8459 = vpop.trf.xlu0
        %v8460 = vpop.trf.xlu0
        %8461 = vxpose.xlu0.b32.start [1/16] %v8122, 128
        %8462 = vxpose.xlu0.b32.cont [2/16] %v8126, 128
        %8463 = vxpose.xlu0.b32.cont [3/16] %v8165, 128
        %8464 = vxpose.xlu0.b32.cont [4/16] %v8169, 128
        %8465 = vxpose.xlu0.b32.cont [5/16] %v8208, 128
        %8466 = vxpose.xlu0.b32.cont [6/16] %v8212, 128
        %8467 = vxpose.xlu0.b32.cont [7/16] %v8251, 128
        %8468 = vxpose.xlu0.b32.cont [8/16] %v8255, 128
        %8469 = vxpose.xlu0.b32.cont [9/16] %v8294, 128
        %8470 = vxpose.xlu0.b32.cont [10/16] %v8298, 128
        %8471 = vxpose.xlu0.b32.cont [11/16] %v8337, 128
        %8472 = vxpose.xlu0.b32.cont [12/16] %v8341, 128
        %8473 = vxpose.xlu0.b32.cont [13/16] %v8380, 128
        %8474 = vxpose.xlu0.b32.cont [14/16] %v8384, 128
        %8475 = vxpose.xlu0.b32.cont [15/16] %v8423, 128
        %8476 = vxpose.xlu0.b32.end [16/16] %v8427, 128
        %v8477 = vpop.trf.xlu0
        %v8478 = vpop.trf.xlu0
        %v8479 = vpop.trf.xlu0
        %v8480 = vpop.trf.xlu0
        %v8481 = vpop.trf.xlu0
        %v8482 = vpop.trf.xlu0
        %v8483 = vpop.trf.xlu0
        %v8484 = vpop.trf.xlu0
        %v8485 = vpop.trf.xlu0
        %v8486 = vpop.trf.xlu0
        %v8487 = vpop.trf.xlu0
        %v8488 = vpop.trf.xlu0
        %v8489 = vpop.trf.xlu0
        %v8490 = vpop.trf.xlu0
        %v8491 = vpop.trf.xlu0
        %v8492 = vpop.trf.xlu0
        %v8493 = vld [vmem:[%s402] sm:$0xf]
        %v8494 = vld [vmem:[%s402 + $0x4] sm:$0xf]
        %v8495 = vld [vmem:[%s402 + $0x8] sm:$0xf]
        %v8496 = vld [vmem:[%s402 + $0xc] sm:$0xf]
        %v8497 = vld [vmem:[%s402 + $0x10] sm:$0xf]
        %v8498 = vld [vmem:[%s402 + $0x14] sm:$0xf]
        %v8499 = vld [vmem:[%s402 + $0x18] sm:$0xf]
        %v8500 = vld [vmem:[%s402 + $0x1c] sm:$0xf]
        %v8501 = vld [vmem:[%s402 + $0x20] sm:$0xf]
        %v8502 = vld [vmem:[%s402 + $0x24] sm:$0xf]
        %v8503 = vld [vmem:[%s402 + $0x28] sm:$0xf]
        %v8504 = vld [vmem:[%s402 + $0x2c] sm:$0xf]
        %v8505 = vld [vmem:[%s402 + $0x30] sm:$0xf]
        %v8506 = vld [vmem:[%s402 + $0x34] sm:$0xf]
        %v8507 = vld [vmem:[%s402 + $0x38] sm:$0xf]
        %v8508 = vld [vmem:[%s402 + $0x3c] sm:$0xf]
        %v8509 = vpack.c.bf16 %v8446, %v8445
        %v8510 = vpack.c.bf16 %v8448, %v8447
        %v8511 = vpack.c.bf16 %v8450, %v8449
        %v8512 = vpack.c.bf16 %v8452, %v8451
        %v8513 = vpack.c.bf16 %v8454, %v8453
        %v8514 = vpack.c.bf16 %v8456, %v8455
        %v8515 = vpack.c.bf16 %v8458, %v8457
        %v8516 = vpack.c.bf16 %v8460, %v8459
        %v8517 = vpack.c.bf16 %v8478, %v8477
        %v8518 = vpack.c.bf16 %v8480, %v8479
        %v8519 = vpack.c.bf16 %v8482, %v8481
        %v8520 = vpack.c.bf16 %v8484, %v8483
        %v8521 = vpack.c.bf16 %v8486, %v8485
        %v8522 = vpack.c.bf16 %v8488, %v8487
        %v8523 = vpack.c.bf16 %v8490, %v8489
        %v8524 = vpack.c.bf16 %v8492, %v8491
        %v8541 = vunpack.c.l.b16 %v8493
        %v8542 = vunpack.c.l.b16 %v8494
        %v8543 = vunpack.c.l.b16 %v8495
        %v8544 = vunpack.c.l.b16 %v8496
        %v8545 = vunpack.c.l.b16 %v8497
        %v8546 = vunpack.c.l.b16 %v8498
        %v8547 = vunpack.c.l.b16 %v8499
        %v8548 = vunpack.c.l.b16 %v8500
        %v8549 = vunpack.c.l.b16 %v8501
        %v8550 = vunpack.c.l.b16 %v8502
        %v8551 = vunpack.c.l.b16 %v8503
        %v8552 = vunpack.c.l.b16 %v8504
        %v8553 = vunpack.c.l.b16 %v8505
        %v8554 = vunpack.c.l.b16 %v8506
        %v8555 = vunpack.c.l.b16 %v8507
        %v8556 = vunpack.c.l.b16 %v8508
        %v8557 = vpack.c.b16 %v8542, %v8541
        %v8558 = vpack.c.b16 %v8544, %v8543
        %v8559 = vpack.c.b16 %v8546, %v8545
        %v8560 = vpack.c.b16 %v8548, %v8547
        %v8561 = vpack.c.b16 %v8550, %v8549
        %v8562 = vpack.c.b16 %v8552, %v8551
        %v8563 = vpack.c.b16 %v8554, %v8553
        %v8564 = vpack.c.b16 %v8556, %v8555
        %8573 = vmatprep.subr.bf16.mxu0 0
        %8574 = vmatpush1.bf16.msra.mxu0 %v8557
        %8575 = vmatprep.subr.bf16.mxu0 0
        %8576 = vmatpush1.bf16.msra.mxu0 %v8558
        %8577 = vmatprep.subr.bf16.mxu0 0
        %8578 = vmatpush1.bf16.msra.mxu0 %v8559
        %8579 = vmatprep.subr.bf16.mxu0 0
        %8580 = vmatpush1.bf16.msra.mxu0 %v8560
        %8581 = vmatprep.subr.bf16.mxu0 0
        %8582 = vmatpush1.bf16.msra.mxu0 %v8561
        %8583 = vmatprep.subr.bf16.mxu0 0
        %8584 = vmatpush1.bf16.msra.mxu0 %v8562
        %8585 = vmatprep.subr.bf16.mxu0 0
        %8586 = vmatpush1.bf16.msra.mxu0 %v8563
        %8587 = vmatprep.subr.bf16.mxu0 0
        %8588 = vmatpush1.bf16.msra.mxu0 %v8564
        %8589 = vmatprep.subr.bf16.mxu0 0
        %8590 = vmatpush1.bf16.msra.mxu0 0
        %8591 = vmatprep.subr.bf16.mxu0 0
        %8592 = vmatpush1.bf16.msra.mxu0 0
        %8593 = vmatprep.subr.bf16.mxu0 0
        %8594 = vmatpush1.bf16.msra.mxu0 0
        %8595 = vmatprep.subr.bf16.mxu0 0
        %8596 = vmatpush1.bf16.msra.mxu0 0
        %8597 = vmatprep.subr.bf16.mxu0 0
        %8598 = vmatpush1.bf16.msra.mxu0 0
        %8599 = vmatprep.subr.bf16.mxu0 0
        %8600 = vmatpush1.bf16.msra.mxu0 0
        %8601 = vmatprep.subr.bf16.mxu0 0
        %8602 = vmatpush1.bf16.msra.mxu0 0
        %8603 = vmatprep.subr.bf16.mxu0 0
        %8604 = vmatpush1.bf16.msra.mxu0 0
        %8605 = vmatprep.mubr.bf16.mxu0 0
        %8606 = vmatmul.mubr.bf16.gmra.mrb[0].mxu0 %v8509
        %v8607 = vpop.f32.mrb[0].mxu0
        %v8608 = vadd.f32 0.0, %v8607
        %v8609 = vpop.f32.mrb[0].mxu0
        %v8610 = vpop.f32.mrb[0].mxu0
        %v8611 = vadd.f32 0.0, %v8610
        %v8612 = vpop.f32.mrb[0].mxu0
        %8613 = vmatprep.mubr.bf16.mxu0 0
        %8614 = vmatmul.mubr.bf16.gmra.mrb[0].mxu0 %v8510
        %v8615 = vpop.f32.mrb[0].mxu0
        %v8616 = vadd.f32 0.0, %v8615
        %v8617 = vpop.f32.mrb[0].mxu0
        %v8618 = vpop.f32.mrb[0].mxu0
        %v8619 = vadd.f32 0.0, %v8618
        %v8620 = vpop.f32.mrb[0].mxu0
        %8621 = vmatprep.mubr.bf16.mxu0 0
        %8622 = vmatmul.mubr.bf16.gmra.mrb[0].mxu0 %v8511
        %v8623 = vpop.f32.mrb[0].mxu0
        %v8624 = vadd.f32 0.0, %v8623
        %v8625 = vpop.f32.mrb[0].mxu0
        %v8626 = vpop.f32.mrb[0].mxu0
        %v8627 = vadd.f32 0.0, %v8626
        %v8628 = vpop.f32.mrb[0].mxu0
        %8629 = vmatprep.mubr.bf16.mxu0 0
        %8630 = vmatmul.mubr.bf16.gmra.mrb[0].mxu0 %v8512
        %v8631 = vpop.f32.mrb[0].mxu0
        %v8632 = vadd.f32 0.0, %v8631
        %v8633 = vpop.f32.mrb[0].mxu0
        %v8634 = vpop.f32.mrb[0].mxu0
        %v8635 = vadd.f32 0.0, %v8634
        %v8636 = vpop.f32.mrb[0].mxu0
        %8637 = vmatprep.mubr.bf16.mxu0 0
        %8638 = vmatmul.mubr.bf16.gmra.mrb[0].mxu0 %v8513
        %v8639 = vpop.f32.mrb[0].mxu0
        %v8640 = vadd.f32 0.0, %v8639
        %v8641 = vpop.f32.mrb[0].mxu0
        %v8642 = vpop.f32.mrb[0].mxu0
        %v8643 = vadd.f32 0.0, %v8642
        %v8644 = vpop.f32.mrb[0].mxu0
        %8645 = vmatprep.mubr.bf16.mxu0 0
        %8646 = vmatmul.mubr.bf16.gmra.mrb[0].mxu0 %v8514
        %v8647 = vpop.f32.mrb[0].mxu0
        %v8648 = vadd.f32 0.0, %v8647
        %v8649 = vpop.f32.mrb[0].mxu0
        %v8650 = vpop.f32.mrb[0].mxu0
        %v8651 = vadd.f32 0.0, %v8650
        %v8652 = vpop.f32.mrb[0].mxu0
        %8653 = vmatprep.mubr.bf16.mxu0 0
        %8654 = vmatmul.mubr.bf16.gmra.mrb[0].mxu0 %v8515
        %v8655 = vpop.f32.mrb[0].mxu0
        %v8656 = vadd.f32 0.0, %v8655
        %v8657 = vpop.f32.mrb[0].mxu0
        %v8658 = vpop.f32.mrb[0].mxu0
        %v8659 = vadd.f32 0.0, %v8658
        %v8660 = vpop.f32.mrb[0].mxu0
        %8661 = vmatprep.mubr.bf16.mxu0 0
        %8662 = vmatmul.mubr.bf16.gmra.mrb[0].mxu0 %v8516
        %v8663 = vpop.f32.mrb[0].mxu0
        %v8664 = vadd.f32 0.0, %v8663
        %v8665 = vpop.f32.mrb[0].mxu0
        %v8666 = vpop.f32.mrb[0].mxu0
        %v8667 = vadd.f32 0.0, %v8666
        %v8668 = vpop.f32.mrb[0].mxu0
        %8669 = vmatprep.mubr.bf16.mxu0 0
        %8670 = vmatmul.mubr.bf16.gmra.mrb[0].mxu0 %v8517
        %v8671 = vpop.f32.mrb[0].mxu0
        %v8672 = vadd.f32 0.0, %v8671
        %v8673 = vpop.f32.mrb[0].mxu0
        %v8674 = vpop.f32.mrb[0].mxu0
        %v8675 = vadd.f32 0.0, %v8674
        %v8676 = vpop.f32.mrb[0].mxu0
        %8677 = vmatprep.mubr.bf16.mxu0 0
        %8678 = vmatmul.mubr.bf16.gmra.mrb[0].mxu0 %v8518
        %v8679 = vpop.f32.mrb[0].mxu0
        %v8680 = vadd.f32 0.0, %v8679
        %v8681 = vpop.f32.mrb[0].mxu0
        %v8682 = vpop.f32.mrb[0].mxu0
        %v8683 = vadd.f32 0.0, %v8682
        %v8684 = vpop.f32.mrb[0].mxu0
        %8685 = vmatprep.mubr.bf16.mxu0 0
        %8686 = vmatmul.mubr.bf16.gmra.mrb[0].mxu0 %v8519
        %v8687 = vpop.f32.mrb[0].mxu0
        %v8688 = vadd.f32 0.0, %v8687
        %v8689 = vpop.f32.mrb[0].mxu0
        %v8690 = vpop.f32.mrb[0].mxu0
        %v8691 = vadd.f32 0.0, %v8690
        %v8692 = vpop.f32.mrb[0].mxu0
        %8693 = vmatprep.mubr.bf16.mxu0 0
        %8694 = vmatmul.mubr.bf16.gmra.mrb[0].mxu0 %v8520
        %v8695 = vpop.f32.mrb[0].mxu0
        %v8696 = vadd.f32 0.0, %v8695
        %v8697 = vpop.f32.mrb[0].mxu0
        %v8698 = vpop.f32.mrb[0].mxu0
        %v8699 = vadd.f32 0.0, %v8698
        %v8700 = vpop.f32.mrb[0].mxu0
        %8701 = vmatprep.mubr.bf16.mxu0 0
        %8702 = vmatmul.mubr.bf16.gmra.mrb[0].mxu0 %v8521
        %v8703 = vpop.f32.mrb[0].mxu0
        %v8704 = vadd.f32 0.0, %v8703
        %v8705 = vpop.f32.mrb[0].mxu0
        %v8706 = vpop.f32.mrb[0].mxu0
        %v8707 = vadd.f32 0.0, %v8706
        %v8708 = vpop.f32.mrb[0].mxu0
        %8709 = vmatprep.mubr.bf16.mxu0 0
        %8710 = vmatmul.mubr.bf16.gmra.mrb[0].mxu0 %v8522
        %v8711 = vpop.f32.mrb[0].mxu0
        %v8712 = vadd.f32 0.0, %v8711
        %v8713 = vpop.f32.mrb[0].mxu0
        %v8714 = vpop.f32.mrb[0].mxu0
        %v8715 = vadd.f32 0.0, %v8714
        %v8716 = vpop.f32.mrb[0].mxu0
        %8717 = vmatprep.mubr.bf16.mxu0 0
        %8718 = vmatmul.mubr.bf16.gmra.mrb[0].mxu0 %v8523
        %v8719 = vpop.f32.mrb[0].mxu0
        %v8720 = vadd.f32 0.0, %v8719
        %v8721 = vpop.f32.mrb[0].mxu0
        %v8722 = vpop.f32.mrb[0].mxu0
        %v8723 = vadd.f32 0.0, %v8722
        %v8724 = vpop.f32.mrb[0].mxu0
        %8725 = vmatprep.mubr.bf16.mxu0 0
        %8726 = vmatmul.mubr.bf16.gmra.mrb[0].mxu0 %v8524
        %v8727 = vpop.f32.mrb[0].mxu0
        %v8728 = vadd.f32 0.0, %v8727
        %v8729 = vpop.f32.mrb[0].mxu0
        %v8730 = vpop.f32.mrb[0].mxu0
        %v8731 = vadd.f32 0.0, %v8730
        %v8732 = vpop.f32.mrb[0].mxu0
        %8733 = vdwg.mxu0
        %v8734 = vadd.f32 %v610, %v8608
        %v8735 = vadd.f32 %v611, %v8611
        %v8736 = vadd.f32 %v612, %v8616
        %v8737 = vadd.f32 %v613, %v8619
        %v8738 = vadd.f32 %v614, %v8624
        %v8739 = vadd.f32 %v615, %v8627
        %v8740 = vadd.f32 %v616, %v8632
        %v8741 = vadd.f32 %v617, %v8635
        %v8742 = vadd.f32 %v618, %v8640
        %v8743 = vadd.f32 %v619, %v8643
        %v8744 = vadd.f32 %v620, %v8648
        %v8745 = vadd.f32 %v621, %v8651
        %v8746 = vadd.f32 %v622, %v8656
        %v8747 = vadd.f32 %v623, %v8659
        %v8748 = vadd.f32 %v624, %v8664
        %v8749 = vadd.f32 %v625, %v8667
        %v8750 = vadd.f32 %v626, %v8672
        %v8751 = vadd.f32 %v627, %v8675
        %v8752 = vadd.f32 %v628, %v8680
        %v8753 = vadd.f32 %v629, %v8683
        %v8754 = vadd.f32 %v630, %v8688
        %v8755 = vadd.f32 %v631, %v8691
        %v8756 = vadd.f32 %v632, %v8696
        %v8757 = vadd.f32 %v633, %v8699
        %v8758 = vadd.f32 %v634, %v8704
        %v8759 = vadd.f32 %v635, %v8707
        %v8760 = vadd.f32 %v636, %v8712
        %v8761 = vadd.f32 %v637, %v8715
        %v8762 = vadd.f32 %v638, %v8720
        %v8763 = vadd.f32 %v639, %v8723
        %v8764 = vadd.f32 %v640, %v8728
        %v8765 = vadd.f32 %v641, %v8731
        %v8766 = vld [vmem:[%s476] sm:$0x1]
        %8767 = vadd.xlane.f32.xlu0 %v8734
        %v8768 = vpop.xlane.xlu0 %8767
        %8769 = vadd.xlane.f32.xlu0 %v8735
        %v8770 = vpop.xlane.xlu0 %8769
        %8771 = vadd.xlane.f32.xlu0 %v8736
        %v8772 = vpop.xlane.xlu0 %8771
        %8773 = vadd.xlane.f32.xlu0 %v8737
        %v8774 = vpop.xlane.xlu0 %8773
        %8775 = vadd.xlane.f32.xlu0 %v8738
        %v8776 = vpop.xlane.xlu0 %8775
        %8777 = vadd.xlane.f32.xlu0 %v8739
        %v8778 = vpop.xlane.xlu0 %8777
        %8779 = vadd.xlane.f32.xlu0 %v8740
        %v8780 = vpop.xlane.xlu0 %8779
        %8781 = vadd.xlane.f32.xlu0 %v8741
        %v8782 = vpop.xlane.xlu0 %8781
        %8783 = vadd.xlane.f32.xlu0 %v8742
        %v8784 = vpop.xlane.xlu0 %8783
        %8785 = vadd.xlane.f32.xlu0 %v8743
        %v8786 = vpop.xlane.xlu0 %8785
        %8787 = vadd.xlane.f32.xlu0 %v8744
        %v8788 = vpop.xlane.xlu0 %8787
        %8789 = vadd.xlane.f32.xlu0 %v8745
        %v8790 = vpop.xlane.xlu0 %8789
        %8791 = vadd.xlane.f32.xlu0 %v8746
        %v8792 = vpop.xlane.xlu0 %8791
        %8793 = vadd.xlane.f32.xlu0 %v8747
        %v8794 = vpop.xlane.xlu0 %8793
        %8795 = vadd.xlane.f32.xlu0 %v8748
        %v8796 = vpop.xlane.xlu0 %8795
        %8797 = vadd.xlane.f32.xlu0 %v8749
        %v8798 = vpop.xlane.xlu0 %8797
        %8799 = vadd.xlane.f32.xlu0 %v8750
        %v8800 = vpop.xlane.xlu0 %8799
        %8801 = vadd.xlane.f32.xlu0 %v8751
        %v8802 = vpop.xlane.xlu0 %8801
        %8803 = vadd.xlane.f32.xlu0 %v8752
        %v8804 = vpop.xlane.xlu0 %8803
        %8805 = vadd.xlane.f32.xlu0 %v8753
        %v8806 = vpop.xlane.xlu0 %8805
        %8807 = vadd.xlane.f32.xlu0 %v8754
        %v8808 = vpop.xlane.xlu0 %8807
        %8809 = vadd.xlane.f32.xlu0 %v8755
        %v8810 = vpop.xlane.xlu0 %8809
        %8811 = vadd.xlane.f32.xlu0 %v8756
        %v8812 = vpop.xlane.xlu0 %8811
        %8813 = vadd.xlane.f32.xlu0 %v8757
        %v8814 = vpop.xlane.xlu0 %8813
        %8815 = vadd.xlane.f32.xlu0 %v8758
        %v8816 = vpop.xlane.xlu0 %8815
        %8817 = vadd.xlane.f32.xlu0 %v8759
        %v8818 = vpop.xlane.xlu0 %8817
        %8819 = vadd.xlane.f32.xlu0 %v8760
        %v8820 = vpop.xlane.xlu0 %8819
        %8821 = vadd.xlane.f32.xlu0 %v8761
        %v8822 = vpop.xlane.xlu0 %8821
        %8823 = vadd.xlane.f32.xlu0 %v8762
        %v8824 = vpop.xlane.xlu0 %8823
        %8825 = vadd.xlane.f32.xlu0 %v8763
        %v8826 = vpop.xlane.xlu0 %8825
        %8827 = vadd.xlane.f32.xlu0 %v8764
        %v8828 = vpop.xlane.xlu0 %8827
        %8829 = vadd.xlane.f32.xlu0 %v8765
        %v8830 = vpop.xlane.xlu0 %8829
        %v8831 = vmul.f32 %v8768, %v707
        %v8832 = vmul.f32 %v8770, %v707
        %v8833 = vmul.f32 %v8772, %v707
        %v8834 = vmul.f32 %v8774, %v707
        %v8835 = vmul.f32 %v8776, %v707
        %v8836 = vmul.f32 %v8778, %v707
        %v8837 = vmul.f32 %v8780, %v707
        %v8838 = vmul.f32 %v8782, %v707
        %v8839 = vmul.f32 %v8784, %v707
        %v8840 = vmul.f32 %v8786, %v707
        %v8841 = vmul.f32 %v8788, %v707
        %v8842 = vmul.f32 %v8790, %v707
        %v8843 = vmul.f32 %v8792, %v707
        %v8844 = vmul.f32 %v8794, %v707
        %v8845 = vmul.f32 %v8796, %v707
        %v8846 = vmul.f32 %v8798, %v707
        %v8847 = vmul.f32 %v8800, %v707
        %v8848 = vmul.f32 %v8802, %v707
        %v8849 = vmul.f32 %v8804, %v707
        %v8850 = vmul.f32 %v8806, %v707
        %v8851 = vmul.f32 %v8808, %v707
        %v8852 = vmul.f32 %v8810, %v707
        %v8853 = vmul.f32 %v8812, %v707
        %v8854 = vmul.f32 %v8814, %v707
        %v8855 = vmul.f32 %v8816, %v707
        %v8856 = vmul.f32 %v8818, %v707
        %v8857 = vmul.f32 %v8820, %v707
        %v8858 = vmul.f32 %v8822, %v707
        %v8859 = vmul.f32 %v8824, %v707
        %v8860 = vmul.f32 %v8826, %v707
        %v8861 = vmul.f32 %v8828, %v707
        %v8862 = vmul.f32 %v8830, %v707
        %v8863 = vsub.f32 %v8734, %v8831
        %v8864 = vsub.f32 %v8735, %v8832
        %v8865 = vsub.f32 %v8736, %v8833
        %v8866 = vsub.f32 %v8737, %v8834
        %v8867 = vsub.f32 %v8738, %v8835
        %v8868 = vsub.f32 %v8739, %v8836
        %v8869 = vsub.f32 %v8740, %v8837
        %v8870 = vsub.f32 %v8741, %v8838
        %v8871 = vsub.f32 %v8742, %v8839
        %v8872 = vsub.f32 %v8743, %v8840
        %v8873 = vsub.f32 %v8744, %v8841
        %v8874 = vsub.f32 %v8745, %v8842
        %v8875 = vsub.f32 %v8746, %v8843
        %v8876 = vsub.f32 %v8747, %v8844
        %v8877 = vsub.f32 %v8748, %v8845
        %v8878 = vsub.f32 %v8749, %v8846
        %v8879 = vsub.f32 %v8750, %v8847
        %v8880 = vsub.f32 %v8751, %v8848
        %v8881 = vsub.f32 %v8752, %v8849
        %v8882 = vsub.f32 %v8753, %v8850
        %v8883 = vsub.f32 %v8754, %v8851
        %v8884 = vsub.f32 %v8755, %v8852
        %v8885 = vsub.f32 %v8756, %v8853
        %v8886 = vsub.f32 %v8757, %v8854
        %v8887 = vsub.f32 %v8758, %v8855
        %v8888 = vsub.f32 %v8759, %v8856
        %v8889 = vsub.f32 %v8760, %v8857
        %v8890 = vsub.f32 %v8761, %v8858
        %v8891 = vsub.f32 %v8762, %v8859
        %v8892 = vsub.f32 %v8763, %v8860
        %v8893 = vsub.f32 %v8764, %v8861
        %v8894 = vsub.f32 %v8765, %v8862
        %v8895 = vmul.f32 %v8863, %v8863
        %v8896 = vmul.f32 %v8864, %v8864
        %v8897 = vmul.f32 %v8865, %v8865
        %v8898 = vmul.f32 %v8866, %v8866
        %v8899 = vmul.f32 %v8867, %v8867
        %v8900 = vmul.f32 %v8868, %v8868
        %v8901 = vmul.f32 %v8869, %v8869
        %v8902 = vmul.f32 %v8870, %v8870
        %v8903 = vmul.f32 %v8871, %v8871
        %v8904 = vmul.f32 %v8872, %v8872
        %v8905 = vmul.f32 %v8873, %v8873
        %v8906 = vmul.f32 %v8874, %v8874
        %v8907 = vmul.f32 %v8875, %v8875
        %v8908 = vmul.f32 %v8876, %v8876
        %v8909 = vmul.f32 %v8877, %v8877
        %v8910 = vmul.f32 %v8878, %v8878
        %v8911 = vmul.f32 %v8879, %v8879
        %v8912 = vmul.f32 %v8880, %v8880
        %v8913 = vmul.f32 %v8881, %v8881
        %v8914 = vmul.f32 %v8882, %v8882
        %v8915 = vmul.f32 %v8883, %v8883
        %v8916 = vmul.f32 %v8884, %v8884
        %v8917 = vmul.f32 %v8885, %v8885
        %v8918 = vmul.f32 %v8886, %v8886
        %v8919 = vmul.f32 %v8887, %v8887
        %v8920 = vmul.f32 %v8888, %v8888
        %v8921 = vmul.f32 %v8889, %v8889
        %v8922 = vmul.f32 %v8890, %v8890
        %v8923 = vmul.f32 %v8891, %v8891
        %v8924 = vmul.f32 %v8892, %v8892
        %v8925 = vmul.f32 %v8893, %v8893
        %v8926 = vmul.f32 %v8894, %v8894
        %8927 = vadd.xlane.f32.xlu0 %v8895
        %v8928 = vpop.xlane.xlu0 %8927
        %8929 = vadd.xlane.f32.xlu0 %v8896
        %v8930 = vpop.xlane.xlu0 %8929
        %8931 = vadd.xlane.f32.xlu0 %v8897
        %v8932 = vpop.xlane.xlu0 %8931
        %8933 = vadd.xlane.f32.xlu0 %v8898
        %v8934 = vpop.xlane.xlu0 %8933
        %8935 = vadd.xlane.f32.xlu0 %v8899
        %v8936 = vpop.xlane.xlu0 %8935
        %8937 = vadd.xlane.f32.xlu0 %v8900
        %v8938 = vpop.xlane.xlu0 %8937
        %8939 = vadd.xlane.f32.xlu0 %v8901
        %v8940 = vpop.xlane.xlu0 %8939
        %8941 = vadd.xlane.f32.xlu0 %v8902
        %v8942 = vpop.xlane.xlu0 %8941
        %8943 = vadd.xlane.f32.xlu0 %v8903
        %v8944 = vpop.xlane.xlu0 %8943
        %8945 = vadd.xlane.f32.xlu0 %v8904
        %v8946 = vpop.xlane.xlu0 %8945
        %8947 = vadd.xlane.f32.xlu0 %v8905
        %v8948 = vpop.xlane.xlu0 %8947
        %8949 = vadd.xlane.f32.xlu0 %v8906
        %v8950 = vpop.xlane.xlu0 %8949
        %8951 = vadd.xlane.f32.xlu0 %v8907
        %v8952 = vpop.xlane.xlu0 %8951
        %8953 = vadd.xlane.f32.xlu0 %v8908
        %v8954 = vpop.xlane.xlu0 %8953
        %8955 = vadd.xlane.f32.xlu0 %v8909
        %v8956 = vpop.xlane.xlu0 %8955
        %8957 = vadd.xlane.f32.xlu0 %v8910
        %v8958 = vpop.xlane.xlu0 %8957
        %8959 = vadd.xlane.f32.xlu0 %v8911
        %v8960 = vpop.xlane.xlu0 %8959
        %8961 = vadd.xlane.f32.xlu0 %v8912
        %v8962 = vpop.xlane.xlu0 %8961
        %8963 = vadd.xlane.f32.xlu0 %v8913
        %v8964 = vpop.xlane.xlu0 %8963
        %8965 = vadd.xlane.f32.xlu0 %v8914
        %v8966 = vpop.xlane.xlu0 %8965
        %8967 = vadd.xlane.f32.xlu0 %v8915
        %v8968 = vpop.xlane.xlu0 %8967
        %8969 = vadd.xlane.f32.xlu0 %v8916
        %v8970 = vpop.xlane.xlu0 %8969
        %8971 = vadd.xlane.f32.xlu0 %v8917
        %v8972 = vpop.xlane.xlu0 %8971
        %8973 = vadd.xlane.f32.xlu0 %v8918
        %v8974 = vpop.xlane.xlu0 %8973
        %8975 = vadd.xlane.f32.xlu0 %v8919
        %v8976 = vpop.xlane.xlu0 %8975
        %8977 = vadd.xlane.f32.xlu0 %v8920
        %v8978 = vpop.xlane.xlu0 %8977
        %8979 = vadd.xlane.f32.xlu0 %v8921
        %v8980 = vpop.xlane.xlu0 %8979
        %8981 = vadd.xlane.f32.xlu0 %v8922
        %v8982 = vpop.xlane.xlu0 %8981
        %8983 = vadd.xlane.f32.xlu0 %v8923
        %v8984 = vpop.xlane.xlu0 %8983
        %8985 = vadd.xlane.f32.xlu0 %v8924
        %v8986 = vpop.xlane.xlu0 %8985
        %8987 = vadd.xlane.f32.xlu0 %v8925
        %v8988 = vpop.xlane.xlu0 %8987
        %8989 = vadd.xlane.f32.xlu0 %v8926
        %v8990 = vpop.xlane.xlu0 %8989
        %v8991 = vmul.f32 %v8928, %v707
        %v8992 = vmul.f32 %v8930, %v707
        %v8993 = vmul.f32 %v8932, %v707
        %v8994 = vmul.f32 %v8934, %v707
        %v8995 = vmul.f32 %v8936, %v707
        %v8996 = vmul.f32 %v8938, %v707
        %v8997 = vmul.f32 %v8940, %v707
        %v8998 = vmul.f32 %v8942, %v707
        %v8999 = vmul.f32 %v8944, %v707
        %v9000 = vmul.f32 %v8946, %v707
        %v9001 = vmul.f32 %v8948, %v707
        %v9002 = vmul.f32 %v8950, %v707
        %v9003 = vmul.f32 %v8952, %v707
        %v9004 = vmul.f32 %v8954, %v707
        %v9005 = vmul.f32 %v8956, %v707
        %v9006 = vmul.f32 %v8958, %v707
        %v9007 = vmul.f32 %v8960, %v707
        %v9008 = vmul.f32 %v8962, %v707
        %v9009 = vmul.f32 %v8964, %v707
        %v9010 = vmul.f32 %v8966, %v707
        %v9011 = vmul.f32 %v8968, %v707
        %v9012 = vmul.f32 %v8970, %v707
        %v9013 = vmul.f32 %v8972, %v707
        %v9014 = vmul.f32 %v8974, %v707
        %v9015 = vmul.f32 %v8976, %v707
        %v9016 = vmul.f32 %v8978, %v707
        %v9017 = vmul.f32 %v8980, %v707
        %v9018 = vmul.f32 %v8982, %v707
        %v9019 = vmul.f32 %v8984, %v707
        %v9020 = vmul.f32 %v8986, %v707
        %v9021 = vmul.f32 %v8988, %v707
        %v9022 = vmul.f32 %v8990, %v707
        %v9023 = vadd.f32 %v8991, 1e-05
        %v9024 = vadd.f32 %v8992, 1e-05
        %v9025 = vadd.f32 %v8993, 1e-05
        %v9026 = vadd.f32 %v8994, 1e-05
        %v9027 = vadd.f32 %v8995, 1e-05
        %v9028 = vadd.f32 %v8996, 1e-05
        %v9029 = vadd.f32 %v8997, 1e-05
        %v9030 = vadd.f32 %v8998, 1e-05
        %v9031 = vadd.f32 %v8999, 1e-05
        %v9032 = vadd.f32 %v9000, 1e-05
        %v9033 = vadd.f32 %v9001, 1e-05
        %v9034 = vadd.f32 %v9002, 1e-05
        %v9035 = vadd.f32 %v9003, 1e-05
        %v9036 = vadd.f32 %v9004, 1e-05
        %v9037 = vadd.f32 %v9005, 1e-05
        %v9038 = vadd.f32 %v9006, 1e-05
        %v9039 = vadd.f32 %v9007, 1e-05
        %v9040 = vadd.f32 %v9008, 1e-05
        %v9041 = vadd.f32 %v9009, 1e-05
        %v9042 = vadd.f32 %v9010, 1e-05
        %v9043 = vadd.f32 %v9011, 1e-05
        %v9044 = vadd.f32 %v9012, 1e-05
        %v9045 = vadd.f32 %v9013, 1e-05
        %v9046 = vadd.f32 %v9014, 1e-05
        %v9047 = vadd.f32 %v9015, 1e-05
        %v9048 = vadd.f32 %v9016, 1e-05
        %v9049 = vadd.f32 %v9017, 1e-05
        %v9050 = vadd.f32 %v9018, 1e-05
        %v9051 = vadd.f32 %v9019, 1e-05
        %v9052 = vadd.f32 %v9020, 1e-05
        %v9053 = vadd.f32 %v9021, 1e-05
        %v9054 = vadd.f32 %v9022, 1e-05
        %v9055 = vrsqrt.pop %v9023
        %v9056 = vrsqrt.pop %v9024
        %v9057 = vrsqrt.pop %v9025
        %v9058 = vrsqrt.pop %v9026
        %v9059 = vrsqrt.pop %v9027
        %v9060 = vrsqrt.pop %v9028
        %v9061 = vrsqrt.pop %v9029
        %v9062 = vrsqrt.pop %v9030
        %v9063 = vrsqrt.pop %v9031
        %v9064 = vrsqrt.pop %v9032
        %v9065 = vrsqrt.pop %v9033
        %v9066 = vrsqrt.pop %v9034
        %v9067 = vrsqrt.pop %v9035
        %v9068 = vrsqrt.pop %v9036
        %v9069 = vrsqrt.pop %v9037
        %v9070 = vrsqrt.pop %v9038
        %v9071 = vrsqrt.pop %v9039
        %v9072 = vrsqrt.pop %v9040
        %v9073 = vrsqrt.pop %v9041
        %v9074 = vrsqrt.pop %v9042
        %v9075 = vrsqrt.pop %v9043
        %v9076 = vrsqrt.pop %v9044
        %v9077 = vrsqrt.pop %v9045
        %v9078 = vrsqrt.pop %v9046
        %v9079 = vrsqrt.pop %v9047
        %v9080 = vrsqrt.pop %v9048
        %v9081 = vrsqrt.pop %v9049
        %v9082 = vrsqrt.pop %v9050
        %v9083 = vrsqrt.pop %v9051
        %v9084 = vrsqrt.pop %v9052
        %v9085 = vrsqrt.pop %v9053
        %v9086 = vrsqrt.pop %v9054
        %v9087 = vmul.f32 %v8863, %v9055
        %v9088 = vmul.f32 %v8864, %v9056
        %v9089 = vmul.f32 %v8865, %v9057
        %v9090 = vmul.f32 %v8866, %v9058
        %v9091 = vmul.f32 %v8867, %v9059
        %v9092 = vmul.f32 %v8868, %v9060
        %v9093 = vmul.f32 %v8869, %v9061
        %v9094 = vmul.f32 %v8870, %v9062
        %v9095 = vmul.f32 %v8871, %v9063
        %v9096 = vmul.f32 %v8872, %v9064
        %v9097 = vmul.f32 %v8873, %v9065
        %v9098 = vmul.f32 %v8874, %v9066
        %v9099 = vmul.f32 %v8875, %v9067
        %v9100 = vmul.f32 %v8876, %v9068
        %v9101 = vmul.f32 %v8877, %v9069
        %v9102 = vmul.f32 %v8878, %v9070
        %v9103 = vmul.f32 %v8879, %v9071
        %v9104 = vmul.f32 %v8880, %v9072
        %v9105 = vmul.f32 %v8881, %v9073
        %v9106 = vmul.f32 %v8882, %v9074
        %v9107 = vmul.f32 %v8883, %v9075
        %v9108 = vmul.f32 %v8884, %v9076
        %v9109 = vmul.f32 %v8885, %v9077
        %v9110 = vmul.f32 %v8886, %v9078
        %v9111 = vmul.f32 %v8887, %v9079
        %v9112 = vmul.f32 %v8888, %v9080
        %v9113 = vmul.f32 %v8889, %v9081
        %v9114 = vmul.f32 %v8890, %v9082
        %v9115 = vmul.f32 %v8891, %v9083
        %v9116 = vmul.f32 %v8892, %v9084
        %v9117 = vmul.f32 %v8893, %v9085
        %v9118 = vmul.f32 %v8894, %v9086
        %v9120 = vlaneseq
        %v9121 = vshrl.u32 %v9120, 7
        %v9122 = vsub.s32 0, %v9121
        %v9123 = vrot.slane %v8766, %v9122
        %v9125 = vmul.f32 %v9087, %v9123
        %v9126 = vmul.f32 %v9088, %v9123
        %v9127 = vmul.f32 %v9089, %v9123
        %v9128 = vmul.f32 %v9090, %v9123
        %v9129 = vmul.f32 %v9091, %v9123
        %v9130 = vmul.f32 %v9092, %v9123
        %v9131 = vmul.f32 %v9093, %v9123
        %v9132 = vmul.f32 %v9094, %v9123
        %v9133 = vmul.f32 %v9095, %v9123
        %v9134 = vmul.f32 %v9096, %v9123
        %v9135 = vmul.f32 %v9097, %v9123
        %v9136 = vmul.f32 %v9098, %v9123
        %v9137 = vmul.f32 %v9099, %v9123
        %v9138 = vmul.f32 %v9100, %v9123
        %v9139 = vmul.f32 %v9101, %v9123
        %v9140 = vmul.f32 %v9102, %v9123
        %v9141 = vmul.f32 %v9103, %v9123
        %v9142 = vmul.f32 %v9104, %v9123
        %v9143 = vmul.f32 %v9105, %v9123
        %v9144 = vmul.f32 %v9106, %v9123
        %v9145 = vmul.f32 %v9107, %v9123
        %v9146 = vmul.f32 %v9108, %v9123
        %v9147 = vmul.f32 %v9109, %v9123
        %v9148 = vmul.f32 %v9110, %v9123
        %v9149 = vmul.f32 %v9111, %v9123
        %v9150 = vmul.f32 %v9112, %v9123
        %v9151 = vmul.f32 %v9113, %v9123
        %v9152 = vmul.f32 %v9114, %v9123
        %v9153 = vmul.f32 %v9115, %v9123
        %v9154 = vmul.f32 %v9116, %v9123
        %v9155 = vmul.f32 %v9117, %v9123
        %v9156 = vmul.f32 %v9118, %v9123
        %v9157 = vld [vmem:[%s411] sm:$0xff]
        %v9158 = vld [vmem:[%s411 + $0x8] sm:$0xff]
        %v9159 = vld [vmem:[%s411 + $0x10] sm:$0xff]
        %v9160 = vld [vmem:[%s411 + $0x18] sm:$0xff]
        %v9161 = vld [vmem:[%s411 + $0x20] sm:$0xff]
        %v9162 = vld [vmem:[%s411 + $0x28] sm:$0xff]
        %v9163 = vld [vmem:[%s411 + $0x30] sm:$0xff]
        %v9164 = vld [vmem:[%s411 + $0x38] sm:$0xff]
        %v9165 = vld [vmem:[%s411 + $0x40] sm:$0xff]
        %v9166 = vld [vmem:[%s411 + $0x48] sm:$0xff]
        %v9167 = vld [vmem:[%s411 + $0x50] sm:$0xff]
        %v9168 = vld [vmem:[%s411 + $0x58] sm:$0xff]
        %v9169 = vld [vmem:[%s411 + $0x60] sm:$0xff]
        %v9170 = vld [vmem:[%s411 + $0x68] sm:$0xff]
        %v9171 = vld [vmem:[%s411 + $0x70] sm:$0xff]
        %v9172 = vld [vmem:[%s411 + $0x78] sm:$0xff]
        %v9173 = vpack.c.bf16 %v9126, %v9125
        %v9174 = vpack.c.bf16 %v9128, %v9127
        %v9175 = vpack.c.bf16 %v9130, %v9129
        %v9176 = vpack.c.bf16 %v9132, %v9131
        %v9177 = vpack.c.bf16 %v9134, %v9133
        %v9178 = vpack.c.bf16 %v9136, %v9135
        %v9179 = vpack.c.bf16 %v9138, %v9137
        %v9180 = vpack.c.bf16 %v9140, %v9139
        %v9181 = vpack.c.bf16 %v9142, %v9141
        %v9182 = vpack.c.bf16 %v9144, %v9143
        %v9183 = vpack.c.bf16 %v9146, %v9145
        %v9184 = vpack.c.bf16 %v9148, %v9147
        %v9185 = vpack.c.bf16 %v9150, %v9149
        %v9186 = vpack.c.bf16 %v9152, %v9151
        %v9187 = vpack.c.bf16 %v9154, %v9153
        %v9188 = vpack.c.bf16 %v9156, %v9155
        %v9205 = vunpack.c.l.b16 %v9157
        %v9206 = vunpack.c.h.b16 %v9157
        %v9207 = vunpack.c.l.b16 %v9158
        %v9208 = vunpack.c.h.b16 %v9158
        %v9209 = vunpack.c.l.b16 %v9159
        %v9210 = vunpack.c.h.b16 %v9159
        %v9211 = vunpack.c.l.b16 %v9160
        %v9212 = vunpack.c.h.b16 %v9160
        %v9213 = vunpack.c.l.b16 %v9161
        %v9214 = vunpack.c.h.b16 %v9161
        %v9215 = vunpack.c.l.b16 %v9162
        %v9216 = vunpack.c.h.b16 %v9162
        %v9217 = vunpack.c.l.b16 %v9163
        %v9218 = vunpack.c.h.b16 %v9163
        %v9219 = vunpack.c.l.b16 %v9164
        %v9220 = vunpack.c.h.b16 %v9164
        %v9221 = vunpack.c.l.b16 %v9165
        %v9222 = vunpack.c.h.b16 %v9165
        %v9223 = vunpack.c.l.b16 %v9166
        %v9224 = vunpack.c.h.b16 %v9166
        %v9225 = vunpack.c.l.b16 %v9167
        %v9226 = vunpack.c.h.b16 %v9167
        %v9227 = vunpack.c.l.b16 %v9168
        %v9228 = vunpack.c.h.b16 %v9168
        %v9229 = vunpack.c.l.b16 %v9169
        %v9230 = vunpack.c.h.b16 %v9169
        %v9231 = vunpack.c.l.b16 %v9170
        %v9232 = vunpack.c.h.b16 %v9170
        %v9233 = vunpack.c.l.b16 %v9171
        %v9234 = vunpack.c.h.b16 %v9171
        %v9235 = vunpack.c.l.b16 %v9172
        %v9236 = vunpack.c.h.b16 %v9172
        %v9237 = vpack.c.b16 %v9207, %v9205
        %v9238 = vpack.c.b16 %v9208, %v9206
        %v9239 = vpack.c.b16 %v9211, %v9209
        %v9240 = vpack.c.b16 %v9212, %v9210
        %v9241 = vpack.c.b16 %v9215, %v9213
        %v9242 = vpack.c.b16 %v9216, %v9214
        %v9243 = vpack.c.b16 %v9219, %v9217
        %v9244 = vpack.c.b16 %v9220, %v9218
        %v9245 = vpack.c.b16 %v9223, %v9221
        %v9246 = vpack.c.b16 %v9224, %v9222
        %v9247 = vpack.c.b16 %v9227, %v9225
        %v9248 = vpack.c.b16 %v9228, %v9226
        %v9249 = vpack.c.b16 %v9231, %v9229
        %v9250 = vpack.c.b16 %v9232, %v9230
        %v9251 = vpack.c.b16 %v9235, %v9233
        %v9252 = vpack.c.b16 %v9236, %v9234
        %9269 = vmatprep.subr.bf16.mxu0 %v9238
        %9270 = vmatpush1.bf16.msra.mxu0 %v9237
        %9271 = vmatprep.subr.bf16.mxu0 %v9240
        %9272 = vmatpush1.bf16.msra.mxu0 %v9239
        %9273 = vmatprep.subr.bf16.mxu0 %v9242
        %9274 = vmatpush1.bf16.msra.mxu0 %v9241
        %9275 = vmatprep.subr.bf16.mxu0 %v9244
        %9276 = vmatpush1.bf16.msra.mxu0 %v9243
        %9277 = vmatprep.subr.bf16.mxu0 %v9246
        %9278 = vmatpush1.bf16.msra.mxu0 %v9245
        %9279 = vmatprep.subr.bf16.mxu0 %v9248
        %9280 = vmatpush1.bf16.msra.mxu0 %v9247
        %9281 = vmatprep.subr.bf16.mxu0 %v9250
        %9282 = vmatpush1.bf16.msra.mxu0 %v9249
        %9283 = vmatprep.subr.bf16.mxu0 %v9252
        %9284 = vmatpush1.bf16.msra.mxu0 %v9251
        %9285 = vmatprep.subr.bf16.mxu0 0
        %9286 = vmatpush1.bf16.msra.mxu0 0
        %9287 = vmatprep.subr.bf16.mxu0 0
        %9288 = vmatpush1.bf16.msra.mxu0 0
        %9289 = vmatprep.subr.bf16.mxu0 0
        %9290 = vmatpush1.bf16.msra.mxu0 0
        %9291 = vmatprep.subr.bf16.mxu0 0
        %9292 = vmatpush1.bf16.msra.mxu0 0
        %9293 = vmatprep.subr.bf16.mxu0 0
        %9294 = vmatpush1.bf16.msra.mxu0 0
        %9295 = vmatprep.subr.bf16.mxu0 0
        %9296 = vmatpush1.bf16.msra.mxu0 0
        %9297 = vmatprep.subr.bf16.mxu0 0
        %9298 = vmatpush1.bf16.msra.mxu0 0
        %9299 = vmatprep.subr.bf16.mxu0 0
        %9300 = vmatpush1.bf16.msra.mxu0 0
        %9301 = vmatprep.mubr.bf16.mxu0 0
        %9302 = vmatmul.mubr.bf16.gmra.mrb[0].mxu0 %v9173
        %v9303 = vpop.f32.mrb[0].mxu0
        %v9304 = vadd.f32 0.0, %v9303
        %v9305 = vpop.f32.mrb[0].mxu0
        %v9306 = vadd.f32 0.0, %v9305
        %v9307 = vpop.f32.mrb[0].mxu0
        %v9308 = vadd.f32 0.0, %v9307
        %v9309 = vpop.f32.mrb[0].mxu0
        %v9310 = vadd.f32 0.0, %v9309
        %9311 = vmatprep.mubr.bf16.mxu0 0
        %9312 = vmatmul.mubr.bf16.gmra.mrb[0].mxu0 %v9174
        %v9313 = vpop.f32.mrb[0].mxu0
        %v9314 = vadd.f32 0.0, %v9313
        %v9315 = vpop.f32.mrb[0].mxu0
        %v9316 = vadd.f32 0.0, %v9315
        %v9317 = vpop.f32.mrb[0].mxu0
        %v9318 = vadd.f32 0.0, %v9317
        %v9319 = vpop.f32.mrb[0].mxu0
        %v9320 = vadd.f32 0.0, %v9319
        %9321 = vmatprep.mubr.bf16.mxu0 0
        %9322 = vmatmul.mubr.bf16.gmra.mrb[0].mxu0 %v9175
        %v9323 = vpop.f32.mrb[0].mxu0
        %v9324 = vadd.f32 0.0, %v9323
        %v9325 = vpop.f32.mrb[0].mxu0
        %v9326 = vadd.f32 0.0, %v9325
        %v9327 = vpop.f32.mrb[0].mxu0
        %v9328 = vadd.f32 0.0, %v9327
        %v9329 = vpop.f32.mrb[0].mxu0
        %v9330 = vadd.f32 0.0, %v9329
        %9331 = vmatprep.mubr.bf16.mxu0 0
        %9332 = vmatmul.mubr.bf16.gmra.mrb[0].mxu0 %v9176
        %v9333 = vpop.f32.mrb[0].mxu0
        %v9334 = vadd.f32 0.0, %v9333
        %v9335 = vpop.f32.mrb[0].mxu0
        %v9336 = vadd.f32 0.0, %v9335
        %v9337 = vpop.f32.mrb[0].mxu0
        %v9338 = vadd.f32 0.0, %v9337
        %v9339 = vpop.f32.mrb[0].mxu0
        %v9340 = vadd.f32 0.0, %v9339
        %9341 = vmatprep.mubr.bf16.mxu0 0
        %9342 = vmatmul.mubr.bf16.gmra.mrb[0].mxu0 %v9177
        %v9343 = vpop.f32.mrb[0].mxu0
        %v9344 = vadd.f32 0.0, %v9343
        %v9345 = vpop.f32.mrb[0].mxu0
        %v9346 = vadd.f32 0.0, %v9345
        %v9347 = vpop.f32.mrb[0].mxu0
        %v9348 = vadd.f32 0.0, %v9347
        %v9349 = vpop.f32.mrb[0].mxu0
        %v9350 = vadd.f32 0.0, %v9349
        %9351 = vmatprep.mubr.bf16.mxu0 0
        %9352 = vmatmul.mubr.bf16.gmra.mrb[0].mxu0 %v9178
        %v9353 = vpop.f32.mrb[0].mxu0
        %v9354 = vadd.f32 0.0, %v9353
        %v9355 = vpop.f32.mrb[0].mxu0
        %v9356 = vadd.f32 0.0, %v9355
        %v9357 = vpop.f32.mrb[0].mxu0
        %v9358 = vadd.f32 0.0, %v9357
        %v9359 = vpop.f32.mrb[0].mxu0
        %v9360 = vadd.f32 0.0, %v9359
        %9361 = vmatprep.mubr.bf16.mxu0 0
        %9362 = vmatmul.mubr.bf16.gmra.mrb[0].mxu0 %v9179
        %v9363 = vpop.f32.mrb[0].mxu0
        %v9364 = vadd.f32 0.0, %v9363
        %v9365 = vpop.f32.mrb[0].mxu0
        %v9366 = vadd.f32 0.0, %v9365
        %v9367 = vpop.f32.mrb[0].mxu0
        %v9368 = vadd.f32 0.0, %v9367
        %v9369 = vpop.f32.mrb[0].mxu0
        %v9370 = vadd.f32 0.0, %v9369
        %9371 = vmatprep.mubr.bf16.mxu0 0
        %9372 = vmatmul.mubr.bf16.gmra.mrb[0].mxu0 %v9180
        %v9373 = vpop.f32.mrb[0].mxu0
        %v9374 = vadd.f32 0.0, %v9373
        %v9375 = vpop.f32.mrb[0].mxu0
        %v9376 = vadd.f32 0.0, %v9375
        %v9377 = vpop.f32.mrb[0].mxu0
        %v9378 = vadd.f32 0.0, %v9377
        %v9379 = vpop.f32.mrb[0].mxu0
        %v9380 = vadd.f32 0.0, %v9379
        %9381 = vmatprep.mubr.bf16.mxu0 0
        %9382 = vmatmul.mubr.bf16.gmra.mrb[0].mxu0 %v9181
        %v9383 = vpop.f32.mrb[0].mxu0
        %v9384 = vadd.f32 0.0, %v9383
        %v9385 = vpop.f32.mrb[0].mxu0
        %v9386 = vadd.f32 0.0, %v9385
        %v9387 = vpop.f32.mrb[0].mxu0
        %v9388 = vadd.f32 0.0, %v9387
        %v9389 = vpop.f32.mrb[0].mxu0
        %v9390 = vadd.f32 0.0, %v9389
        %9391 = vmatprep.mubr.bf16.mxu0 0
        %9392 = vmatmul.mubr.bf16.gmra.mrb[0].mxu0 %v9182
        %v9393 = vpop.f32.mrb[0].mxu0
        %v9394 = vadd.f32 0.0, %v9393
        %v9395 = vpop.f32.mrb[0].mxu0
        %v9396 = vadd.f32 0.0, %v9395
        %v9397 = vpop.f32.mrb[0].mxu0
        %v9398 = vadd.f32 0.0, %v9397
        %v9399 = vpop.f32.mrb[0].mxu0
        %v9400 = vadd.f32 0.0, %v9399
        %9401 = vmatprep.mubr.bf16.mxu0 0
        %9402 = vmatmul.mubr.bf16.gmra.mrb[0].mxu0 %v9183
        %v9403 = vpop.f32.mrb[0].mxu0
        %v9404 = vadd.f32 0.0, %v9403
        %v9405 = vpop.f32.mrb[0].mxu0
        %v9406 = vadd.f32 0.0, %v9405
        %v9407 = vpop.f32.mrb[0].mxu0
        %v9408 = vadd.f32 0.0, %v9407
        %v9409 = vpop.f32.mrb[0].mxu0
        %v9410 = vadd.f32 0.0, %v9409
        %9411 = vmatprep.mubr.bf16.mxu0 0
        %9412 = vmatmul.mubr.bf16.gmra.mrb[0].mxu0 %v9184
        %v9413 = vpop.f32.mrb[0].mxu0
        %v9414 = vadd.f32 0.0, %v9413
        %v9415 = vpop.f32.mrb[0].mxu0
        %v9416 = vadd.f32 0.0, %v9415
        %v9417 = vpop.f32.mrb[0].mxu0
        %v9418 = vadd.f32 0.0, %v9417
        %v9419 = vpop.f32.mrb[0].mxu0
        %v9420 = vadd.f32 0.0, %v9419
        %9421 = vmatprep.mubr.bf16.mxu0 0
        %9422 = vmatmul.mubr.bf16.gmra.mrb[0].mxu0 %v9185
        %v9423 = vpop.f32.mrb[0].mxu0
        %v9424 = vadd.f32 0.0, %v9423
        %v9425 = vpop.f32.mrb[0].mxu0
        %v9426 = vadd.f32 0.0, %v9425
        %v9427 = vpop.f32.mrb[0].mxu0
        %v9428 = vadd.f32 0.0, %v9427
        %v9429 = vpop.f32.mrb[0].mxu0
        %v9430 = vadd.f32 0.0, %v9429
        %9431 = vmatprep.mubr.bf16.mxu0 0
        %9432 = vmatmul.mubr.bf16.gmra.mrb[0].mxu0 %v9186
        %v9433 = vpop.f32.mrb[0].mxu0
        %v9434 = vadd.f32 0.0, %v9433
        %v9435 = vpop.f32.mrb[0].mxu0
        %v9436 = vadd.f32 0.0, %v9435
        %v9437 = vpop.f32.mrb[0].mxu0
        %v9438 = vadd.f32 0.0, %v9437
        %v9439 = vpop.f32.mrb[0].mxu0
        %v9440 = vadd.f32 0.0, %v9439
        %9441 = vmatprep.mubr.bf16.mxu0 0
        %9442 = vmatmul.mubr.bf16.gmra.mrb[0].mxu0 %v9187
        %v9443 = vpop.f32.mrb[0].mxu0
        %v9444 = vadd.f32 0.0, %v9443
        %v9445 = vpop.f32.mrb[0].mxu0
        %v9446 = vadd.f32 0.0, %v9445
        %v9447 = vpop.f32.mrb[0].mxu0
        %v9448 = vadd.f32 0.0, %v9447
        %v9449 = vpop.f32.mrb[0].mxu0
        %v9450 = vadd.f32 0.0, %v9449
        %9451 = vmatprep.mubr.bf16.mxu0 0
        %9452 = vmatmul.mubr.bf16.gmra.mrb[0].mxu0 %v9188
        %v9453 = vpop.f32.mrb[0].mxu0
        %v9454 = vadd.f32 0.0, %v9453
        %v9455 = vpop.f32.mrb[0].mxu0
        %v9456 = vadd.f32 0.0, %v9455
        %v9457 = vpop.f32.mrb[0].mxu0
        %v9458 = vadd.f32 0.0, %v9457
        %v9459 = vpop.f32.mrb[0].mxu0
        %v9460 = vadd.f32 0.0, %v9459
        %9461 = vdwg.mxu0
        %v9462 = vmul.f32 %v9304, %v9304
        %v9463 = vmul.f32 %v9306, %v9306
        %v9464 = vmul.f32 %v9308, %v9308
        %v9465 = vmul.f32 %v9310, %v9310
        %v9466 = vmul.f32 %v9314, %v9314
        %v9467 = vmul.f32 %v9316, %v9316
        %v9468 = vmul.f32 %v9318, %v9318
        %v9469 = vmul.f32 %v9320, %v9320
        %v9470 = vmul.f32 %v9324, %v9324
        %v9471 = vmul.f32 %v9326, %v9326
        %v9472 = vmul.f32 %v9328, %v9328
        %v9473 = vmul.f32 %v9330, %v9330
        %v9474 = vmul.f32 %v9334, %v9334
        %v9475 = vmul.f32 %v9336, %v9336
        %v9476 = vmul.f32 %v9338, %v9338
        %v9477 = vmul.f32 %v9340, %v9340
        %v9478 = vmul.f32 %v9344, %v9344
        %v9479 = vmul.f32 %v9346, %v9346
        %v9480 = vmul.f32 %v9348, %v9348
        %v9481 = vmul.f32 %v9350, %v9350
        %v9482 = vmul.f32 %v9354, %v9354
        %v9483 = vmul.f32 %v9356, %v9356
        %v9484 = vmul.f32 %v9358, %v9358
        %v9485 = vmul.f32 %v9360, %v9360
        %v9486 = vmul.f32 %v9364, %v9364
        %v9487 = vmul.f32 %v9366, %v9366
        %v9488 = vmul.f32 %v9368, %v9368
        %v9489 = vmul.f32 %v9370, %v9370
        %v9490 = vmul.f32 %v9374, %v9374
        %v9491 = vmul.f32 %v9376, %v9376
        %v9492 = vmul.f32 %v9378, %v9378
        %v9493 = vmul.f32 %v9380, %v9380
        %v9494 = vmul.f32 %v9384, %v9384
        %v9495 = vmul.f32 %v9386, %v9386
        %v9496 = vmul.f32 %v9388, %v9388
        %v9497 = vmul.f32 %v9390, %v9390
        %v9498 = vmul.f32 %v9394, %v9394
        %v9499 = vmul.f32 %v9396, %v9396
        %v9500 = vmul.f32 %v9398, %v9398
        %v9501 = vmul.f32 %v9400, %v9400
        %v9502 = vmul.f32 %v9404, %v9404
        %v9503 = vmul.f32 %v9406, %v9406
        %v9504 = vmul.f32 %v9408, %v9408
        %v9505 = vmul.f32 %v9410, %v9410
        %v9506 = vmul.f32 %v9414, %v9414
        %v9507 = vmul.f32 %v9416, %v9416
        %v9508 = vmul.f32 %v9418, %v9418
        %v9509 = vmul.f32 %v9420, %v9420
        %v9510 = vmul.f32 %v9424, %v9424
        %v9511 = vmul.f32 %v9426, %v9426
        %v9512 = vmul.f32 %v9428, %v9428
        %v9513 = vmul.f32 %v9430, %v9430
        %v9514 = vmul.f32 %v9434, %v9434
        %v9515 = vmul.f32 %v9436, %v9436
        %v9516 = vmul.f32 %v9438, %v9438
        %v9517 = vmul.f32 %v9440, %v9440
        %v9518 = vmul.f32 %v9444, %v9444
        %v9519 = vmul.f32 %v9446, %v9446
        %v9520 = vmul.f32 %v9448, %v9448
        %v9521 = vmul.f32 %v9450, %v9450
        %v9522 = vmul.f32 %v9454, %v9454
        %v9523 = vmul.f32 %v9456, %v9456
        %v9524 = vmul.f32 %v9458, %v9458
        %v9525 = vmul.f32 %v9460, %v9460
        %v9526 = vmul.f32 %v9304, %v9462
        %v9527 = vmul.f32 %v9306, %v9463
        %v9528 = vmul.f32 %v9308, %v9464
        %v9529 = vmul.f32 %v9310, %v9465
        %v9530 = vmul.f32 %v9314, %v9466
        %v9531 = vmul.f32 %v9316, %v9467
        %v9532 = vmul.f32 %v9318, %v9468
        %v9533 = vmul.f32 %v9320, %v9469
        %v9534 = vmul.f32 %v9324, %v9470
        %v9535 = vmul.f32 %v9326, %v9471
        %v9536 = vmul.f32 %v9328, %v9472
        %v9537 = vmul.f32 %v9330, %v9473
        %v9538 = vmul.f32 %v9334, %v9474
        %v9539 = vmul.f32 %v9336, %v9475
        %v9540 = vmul.f32 %v9338, %v9476
        %v9541 = vmul.f32 %v9340, %v9477
        %v9542 = vmul.f32 %v9344, %v9478
        %v9543 = vmul.f32 %v9346, %v9479
        %v9544 = vmul.f32 %v9348, %v9480
        %v9545 = vmul.f32 %v9350, %v9481
        %v9546 = vmul.f32 %v9354, %v9482
        %v9547 = vmul.f32 %v9356, %v9483
        %v9548 = vmul.f32 %v9358, %v9484
        %v9549 = vmul.f32 %v9360, %v9485
        %v9550 = vmul.f32 %v9364, %v9486
        %v9551 = vmul.f32 %v9366, %v9487
        %v9552 = vmul.f32 %v9368, %v9488
        %v9553 = vmul.f32 %v9370, %v9489
        %v9554 = vmul.f32 %v9374, %v9490
        %v9555 = vmul.f32 %v9376, %v9491
        %v9556 = vmul.f32 %v9378, %v9492
        %v9557 = vmul.f32 %v9380, %v9493
        %v9558 = vmul.f32 %v9384, %v9494
        %v9559 = vmul.f32 %v9386, %v9495
        %v9560 = vmul.f32 %v9388, %v9496
        %v9561 = vmul.f32 %v9390, %v9497
        %v9562 = vmul.f32 %v9394, %v9498
        %v9563 = vmul.f32 %v9396, %v9499
        %v9564 = vmul.f32 %v9398, %v9500
        %v9565 = vmul.f32 %v9400, %v9501
        %v9566 = vmul.f32 %v9404, %v9502
        %v9567 = vmul.f32 %v9406, %v9503
        %v9568 = vmul.f32 %v9408, %v9504
        %v9569 = vmul.f32 %v9410, %v9505
        %v9570 = vmul.f32 %v9414, %v9506
        %v9571 = vmul.f32 %v9416, %v9507
        %v9572 = vmul.f32 %v9418, %v9508
        %v9573 = vmul.f32 %v9420, %v9509
        %v9574 = vmul.f32 %v9424, %v9510
        %v9575 = vmul.f32 %v9426, %v9511
        %v9576 = vmul.f32 %v9428, %v9512
        %v9577 = vmul.f32 %v9430, %v9513
        %v9578 = vmul.f32 %v9434, %v9514
        %v9579 = vmul.f32 %v9436, %v9515
        %v9580 = vmul.f32 %v9438, %v9516
        %v9581 = vmul.f32 %v9440, %v9517
        %v9582 = vmul.f32 %v9444, %v9518
        %v9583 = vmul.f32 %v9446, %v9519
        %v9584 = vmul.f32 %v9448, %v9520
        %v9585 = vmul.f32 %v9450, %v9521
        %v9586 = vmul.f32 %v9454, %v9522
        %v9587 = vmul.f32 %v9456, %v9523
        %v9588 = vmul.f32 %v9458, %v9524
        %v9589 = vmul.f32 %v9460, %v9525
        %v9590 = vmul.f32 %v9526, 0.044715
        %v9591 = vmul.f32 %v9527, 0.044715
        %v9592 = vmul.f32 %v9528, 0.044715
        %v9593 = vmul.f32 %v9529, 0.044715
        %v9594 = vmul.f32 %v9530, 0.044715
        %v9595 = vmul.f32 %v9531, 0.044715
        %v9596 = vmul.f32 %v9532, 0.044715
        %v9597 = vmul.f32 %v9533, 0.044715
        %v9598 = vmul.f32 %v9534, 0.044715
        %v9599 = vmul.f32 %v9535, 0.044715
        %v9600 = vmul.f32 %v9536, 0.044715
        %v9601 = vmul.f32 %v9537, 0.044715
        %v9602 = vmul.f32 %v9538, 0.044715
        %v9603 = vmul.f32 %v9539, 0.044715
        %v9604 = vmul.f32 %v9540, 0.044715
        %v9605 = vmul.f32 %v9541, 0.044715
        %v9606 = vmul.f32 %v9542, 0.044715
        %v9607 = vmul.f32 %v9543, 0.044715
        %v9608 = vmul.f32 %v9544, 0.044715
        %v9609 = vmul.f32 %v9545, 0.044715
        %v9610 = vmul.f32 %v9546, 0.044715
        %v9611 = vmul.f32 %v9547, 0.044715
        %v9612 = vmul.f32 %v9548, 0.044715
        %v9613 = vmul.f32 %v9549, 0.044715
        %v9614 = vmul.f32 %v9550, 0.044715
        %v9615 = vmul.f32 %v9551, 0.044715
        %v9616 = vmul.f32 %v9552, 0.044715
        %v9617 = vmul.f32 %v9553, 0.044715
        %v9618 = vmul.f32 %v9554, 0.044715
        %v9619 = vmul.f32 %v9555, 0.044715
        %v9620 = vmul.f32 %v9556, 0.044715
        %v9621 = vmul.f32 %v9557, 0.044715
        %v9622 = vmul.f32 %v9558, 0.044715
        %v9623 = vmul.f32 %v9559, 0.044715
        %v9624 = vmul.f32 %v9560, 0.044715
        %v9625 = vmul.f32 %v9561, 0.044715
        %v9626 = vmul.f32 %v9562, 0.044715
        %v9627 = vmul.f32 %v9563, 0.044715
        %v9628 = vmul.f32 %v9564, 0.044715
        %v9629 = vmul.f32 %v9565, 0.044715
        %v9630 = vmul.f32 %v9566, 0.044715
        %v9631 = vmul.f32 %v9567, 0.044715
        %v9632 = vmul.f32 %v9568, 0.044715
        %v9633 = vmul.f32 %v9569, 0.044715
        %v9634 = vmul.f32 %v9570, 0.044715
        %v9635 = vmul.f32 %v9571, 0.044715
        %v9636 = vmul.f32 %v9572, 0.044715
        %v9637 = vmul.f32 %v9573, 0.044715
        %v9638 = vmul.f32 %v9574, 0.044715
        %v9639 = vmul.f32 %v9575, 0.044715
        %v9640 = vmul.f32 %v9576, 0.044715
        %v9641 = vmul.f32 %v9577, 0.044715
        %v9642 = vmul.f32 %v9578, 0.044715
        %v9643 = vmul.f32 %v9579, 0.044715
        %v9644 = vmul.f32 %v9580, 0.044715
        %v9645 = vmul.f32 %v9581, 0.044715
        %v9646 = vmul.f32 %v9582, 0.044715
        %v9647 = vmul.f32 %v9583, 0.044715
        %v9648 = vmul.f32 %v9584, 0.044715
        %v9649 = vmul.f32 %v9585, 0.044715
        %v9650 = vmul.f32 %v9586, 0.044715
        %v9651 = vmul.f32 %v9587, 0.044715
        %v9652 = vmul.f32 %v9588, 0.044715
        %v9653 = vmul.f32 %v9589, 0.044715
        %v9654 = vadd.f32 %v9304, %v9590
        %v9655 = vadd.f32 %v9306, %v9591
        %v9656 = vadd.f32 %v9308, %v9592
        %v9657 = vadd.f32 %v9310, %v9593
        %v9658 = vadd.f32 %v9314, %v9594
        %v9659 = vadd.f32 %v9316, %v9595
        %v9660 = vadd.f32 %v9318, %v9596
        %v9661 = vadd.f32 %v9320, %v9597
        %v9662 = vadd.f32 %v9324, %v9598
        %v9663 = vadd.f32 %v9326, %v9599
        %v9664 = vadd.f32 %v9328, %v9600
        %v9665 = vadd.f32 %v9330, %v9601
        %v9666 = vadd.f32 %v9334, %v9602
        %v9667 = vadd.f32 %v9336, %v9603
        %v9668 = vadd.f32 %v9338, %v9604
        %v9669 = vadd.f32 %v9340, %v9605
        %v9670 = vadd.f32 %v9344, %v9606
        %v9671 = vadd.f32 %v9346, %v9607
        %v9672 = vadd.f32 %v9348, %v9608
        %v9673 = vadd.f32 %v9350, %v9609
        %v9674 = vadd.f32 %v9354, %v9610
        %v9675 = vadd.f32 %v9356, %v9611
        %v9676 = vadd.f32 %v9358, %v9612
        %v9677 = vadd.f32 %v9360, %v9613
        %v9678 = vadd.f32 %v9364, %v9614
        %v9679 = vadd.f32 %v9366, %v9615
        %v9680 = vadd.f32 %v9368, %v9616
        %v9681 = vadd.f32 %v9370, %v9617
        %v9682 = vadd.f32 %v9374, %v9618
        %v9683 = vadd.f32 %v9376, %v9619
        %v9684 = vadd.f32 %v9378, %v9620
        %v9685 = vadd.f32 %v9380, %v9621
        %v9686 = vadd.f32 %v9384, %v9622
        %v9687 = vadd.f32 %v9386, %v9623
        %v9688 = vadd.f32 %v9388, %v9624
        %v9689 = vadd.f32 %v9390, %v9625
        %v9690 = vadd.f32 %v9394, %v9626
        %v9691 = vadd.f32 %v9396, %v9627
        %v9692 = vadd.f32 %v9398, %v9628
        %v9693 = vadd.f32 %v9400, %v9629
        %v9694 = vadd.f32 %v9404, %v9630
        %v9695 = vadd.f32 %v9406, %v9631
        %v9696 = vadd.f32 %v9408, %v9632
        %v9697 = vadd.f32 %v9410, %v9633
        %v9698 = vadd.f32 %v9414, %v9634
        %v9699 = vadd.f32 %v9416, %v9635
        %v9700 = vadd.f32 %v9418, %v9636
        %v9701 = vadd.f32 %v9420, %v9637
        %v9702 = vadd.f32 %v9424, %v9638
        %v9703 = vadd.f32 %v9426, %v9639
        %v9704 = vadd.f32 %v9428, %v9640
        %v9705 = vadd.f32 %v9430, %v9641
        %v9706 = vadd.f32 %v9434, %v9642
        %v9707 = vadd.f32 %v9436, %v9643
        %v9708 = vadd.f32 %v9438, %v9644
        %v9709 = vadd.f32 %v9440, %v9645
        %v9710 = vadd.f32 %v9444, %v9646
        %v9711 = vadd.f32 %v9446, %v9647
        %v9712 = vadd.f32 %v9448, %v9648
        %v9713 = vadd.f32 %v9450, %v9649
        %v9714 = vadd.f32 %v9454, %v9650
        %v9715 = vadd.f32 %v9456, %v9651
        %v9716 = vadd.f32 %v9458, %v9652
        %v9717 = vadd.f32 %v9460, %v9653
        %v9718 = vmul.f32 %v9654, 0.7978846
        %v9719 = vmul.f32 %v9655, 0.7978846
        %v9720 = vmul.f32 %v9656, 0.7978846
        %v9721 = vmul.f32 %v9657, 0.7978846
        %v9722 = vmul.f32 %v9658, 0.7978846
        %v9723 = vmul.f32 %v9659, 0.7978846
        %v9724 = vmul.f32 %v9660, 0.7978846
        %v9725 = vmul.f32 %v9661, 0.7978846
        %v9726 = vmul.f32 %v9662, 0.7978846
        %v9727 = vmul.f32 %v9663, 0.7978846
        %v9728 = vmul.f32 %v9664, 0.7978846
        %v9729 = vmul.f32 %v9665, 0.7978846
        %v9730 = vmul.f32 %v9666, 0.7978846
        %v9731 = vmul.f32 %v9667, 0.7978846
        %v9732 = vmul.f32 %v9668, 0.7978846
        %v9733 = vmul.f32 %v9669, 0.7978846
        %v9734 = vmul.f32 %v9670, 0.7978846
        %v9735 = vmul.f32 %v9671, 0.7978846
        %v9736 = vmul.f32 %v9672, 0.7978846
        %v9737 = vmul.f32 %v9673, 0.7978846
        %v9738 = vmul.f32 %v9674, 0.7978846
        %v9739 = vmul.f32 %v9675, 0.7978846
        %v9740 = vmul.f32 %v9676, 0.7978846
        %v9741 = vmul.f32 %v9677, 0.7978846
        %v9742 = vmul.f32 %v9678, 0.7978846
        %v9743 = vmul.f32 %v9679, 0.7978846
        %v9744 = vmul.f32 %v9680, 0.7978846
        %v9745 = vmul.f32 %v9681, 0.7978846
        %v9746 = vmul.f32 %v9682, 0.7978846
        %v9747 = vmul.f32 %v9683, 0.7978846
        %v9748 = vmul.f32 %v9684, 0.7978846
        %v9749 = vmul.f32 %v9685, 0.7978846
        %v9750 = vmul.f32 %v9686, 0.7978846
        %v9751 = vmul.f32 %v9687, 0.7978846
        %v9752 = vmul.f32 %v9688, 0.7978846
        %v9753 = vmul.f32 %v9689, 0.7978846
        %v9754 = vmul.f32 %v9690, 0.7978846
        %v9755 = vmul.f32 %v9691, 0.7978846
        %v9756 = vmul.f32 %v9692, 0.7978846
        %v9757 = vmul.f32 %v9693, 0.7978846
        %v9758 = vmul.f32 %v9694, 0.7978846
        %v9759 = vmul.f32 %v9695, 0.7978846
        %v9760 = vmul.f32 %v9696, 0.7978846
        %v9761 = vmul.f32 %v9697, 0.7978846
        %v9762 = vmul.f32 %v9698, 0.7978846
        %v9763 = vmul.f32 %v9699, 0.7978846
        %v9764 = vmul.f32 %v9700, 0.7978846
        %v9765 = vmul.f32 %v9701, 0.7978846
        %v9766 = vmul.f32 %v9702, 0.7978846
        %v9767 = vmul.f32 %v9703, 0.7978846
        %v9768 = vmul.f32 %v9704, 0.7978846
        %v9769 = vmul.f32 %v9705, 0.7978846
        %v9770 = vmul.f32 %v9706, 0.7978846
        %v9771 = vmul.f32 %v9707, 0.7978846
        %v9772 = vmul.f32 %v9708, 0.7978846
        %v9773 = vmul.f32 %v9709, 0.7978846
        %v9774 = vmul.f32 %v9710, 0.7978846
        %v9775 = vmul.f32 %v9711, 0.7978846
        %v9776 = vmul.f32 %v9712, 0.7978846
        %v9777 = vmul.f32 %v9713, 0.7978846
        %v9778 = vmul.f32 %v9714, 0.7978846
        %v9779 = vmul.f32 %v9715, 0.7978846
        %v9780 = vmul.f32 %v9716, 0.7978846
        %v9781 = vmul.f32 %v9717, 0.7978846
        %v9782 = vtanh.pop %v9718
        %v9783 = vtanh.pop %v9719
        %v9784 = vtanh.pop %v9720
        %v9785 = vtanh.pop %v9721
        %v9786 = vtanh.pop %v9722
        %v9787 = vtanh.pop %v9723
        %v9788 = vtanh.pop %v9724
        %v9789 = vtanh.pop %v9725
        %v9790 = vtanh.pop %v9726
        %v9791 = vtanh.pop %v9727
        %v9792 = vtanh.pop %v9728
        %v9793 = vtanh.pop %v9729
        %v9794 = vtanh.pop %v9730
        %v9795 = vtanh.pop %v9731
        %v9796 = vtanh.pop %v9732
        %v9797 = vtanh.pop %v9733
        %v9798 = vtanh.pop %v9734
        %v9799 = vtanh.pop %v9735
        %v9800 = vtanh.pop %v9736
        %v9801 = vtanh.pop %v9737
        %v9802 = vtanh.pop %v9738
        %v9803 = vtanh.pop %v9739
        %v9804 = vtanh.pop %v9740
        %v9805 = vtanh.pop %v9741
        %v9806 = vtanh.pop %v9742
        %v9807 = vtanh.pop %v9743
        %v9808 = vtanh.pop %v9744
        %v9809 = vtanh.pop %v9745
        %v9810 = vtanh.pop %v9746
        %v9811 = vtanh.pop %v9747
        %v9812 = vtanh.pop %v9748
        %v9813 = vtanh.pop %v9749
        %v9814 = vtanh.pop %v9750
        %v9815 = vtanh.pop %v9751
        %v9816 = vtanh.pop %v9752
        %v9817 = vtanh.pop %v9753
        %v9818 = vtanh.pop %v9754
        %v9819 = vtanh.pop %v9755
        %v9820 = vtanh.pop %v9756
        %v9821 = vtanh.pop %v9757
        %v9822 = vtanh.pop %v9758
        %v9823 = vtanh.pop %v9759
        %v9824 = vtanh.pop %v9760
        %v9825 = vtanh.pop %v9761
        %v9826 = vtanh.pop %v9762
        %v9827 = vtanh.pop %v9763
        %v9828 = vtanh.pop %v9764
        %v9829 = vtanh.pop %v9765
        %v9830 = vtanh.pop %v9766
        %v9831 = vtanh.pop %v9767
        %v9832 = vtanh.pop %v9768
        %v9833 = vtanh.pop %v9769
        %v9834 = vtanh.pop %v9770
        %v9835 = vtanh.pop %v9771
        %v9836 = vtanh.pop %v9772
        %v9837 = vtanh.pop %v9773
        %v9838 = vtanh.pop %v9774
        %v9839 = vtanh.pop %v9775
        %v9840 = vtanh.pop %v9776
        %v9841 = vtanh.pop %v9777
        %v9842 = vtanh.pop %v9778
        %v9843 = vtanh.pop %v9779
        %v9844 = vtanh.pop %v9780
        %v9845 = vtanh.pop %v9781
        %v9846 = vadd.f32 %v9782, 1.0
        %v9847 = vadd.f32 %v9783, 1.0
        %v9848 = vadd.f32 %v9784, 1.0
        %v9849 = vadd.f32 %v9785, 1.0
        %v9850 = vadd.f32 %v9786, 1.0
        %v9851 = vadd.f32 %v9787, 1.0
        %v9852 = vadd.f32 %v9788, 1.0
        %v9853 = vadd.f32 %v9789, 1.0
        %v9854 = vadd.f32 %v9790, 1.0
        %v9855 = vadd.f32 %v9791, 1.0
        %v9856 = vadd.f32 %v9792, 1.0
        %v9857 = vadd.f32 %v9793, 1.0
        %v9858 = vadd.f32 %v9794, 1.0
        %v9859 = vadd.f32 %v9795, 1.0
        %v9860 = vadd.f32 %v9796, 1.0
        %v9861 = vadd.f32 %v9797, 1.0
        %v9862 = vadd.f32 %v9798, 1.0
        %v9863 = vadd.f32 %v9799, 1.0
        %v9864 = vadd.f32 %v9800, 1.0
        %v9865 = vadd.f32 %v9801, 1.0
        %v9866 = vadd.f32 %v9802, 1.0
        %v9867 = vadd.f32 %v9803, 1.0
        %v9868 = vadd.f32 %v9804, 1.0
        %v9869 = vadd.f32 %v9805, 1.0
        %v9870 = vadd.f32 %v9806, 1.0
        %v9871 = vadd.f32 %v9807, 1.0
        %v9872 = vadd.f32 %v9808, 1.0
        %v9873 = vadd.f32 %v9809, 1.0
        %v9874 = vadd.f32 %v9810, 1.0
        %v9875 = vadd.f32 %v9811, 1.0
        %v9876 = vadd.f32 %v9812, 1.0
        %v9877 = vadd.f32 %v9813, 1.0
        %v9878 = vadd.f32 %v9814, 1.0
        %v9879 = vadd.f32 %v9815, 1.0
        %v9880 = vadd.f32 %v9816, 1.0
        %v9881 = vadd.f32 %v9817, 1.0
        %v9882 = vadd.f32 %v9818, 1.0
        %v9883 = vadd.f32 %v9819, 1.0
        %v9884 = vadd.f32 %v9820, 1.0
        %v9885 = vadd.f32 %v9821, 1.0
        %v9886 = vadd.f32 %v9822, 1.0
        %v9887 = vadd.f32 %v9823, 1.0
        %v9888 = vadd.f32 %v9824, 1.0
        %v9889 = vadd.f32 %v9825, 1.0
        %v9890 = vadd.f32 %v9826, 1.0
        %v9891 = vadd.f32 %v9827, 1.0
        %v9892 = vadd.f32 %v9828, 1.0
        %v9893 = vadd.f32 %v9829, 1.0
        %v9894 = vadd.f32 %v9830, 1.0
        %v9895 = vadd.f32 %v9831, 1.0
        %v9896 = vadd.f32 %v9832, 1.0
        %v9897 = vadd.f32 %v9833, 1.0
        %v9898 = vadd.f32 %v9834, 1.0
        %v9899 = vadd.f32 %v9835, 1.0
        %v9900 = vadd.f32 %v9836, 1.0
        %v9901 = vadd.f32 %v9837, 1.0
        %v9902 = vadd.f32 %v9838, 1.0
        %v9903 = vadd.f32 %v9839, 1.0
        %v9904 = vadd.f32 %v9840, 1.0
        %v9905 = vadd.f32 %v9841, 1.0
        %v9906 = vadd.f32 %v9842, 1.0
        %v9907 = vadd.f32 %v9843, 1.0
        %v9908 = vadd.f32 %v9844, 1.0
        %v9909 = vadd.f32 %v9845, 1.0
        %v9910 = vmul.f32 %v9846, 0.5
        %v9911 = vmul.f32 %v9847, 0.5
        %v9912 = vmul.f32 %v9848, 0.5
        %v9913 = vmul.f32 %v9849, 0.5
        %v9914 = vmul.f32 %v9850, 0.5
        %v9915 = vmul.f32 %v9851, 0.5
        %v9916 = vmul.f32 %v9852, 0.5
        %v9917 = vmul.f32 %v9853, 0.5
        %v9918 = vmul.f32 %v9854, 0.5
        %v9919 = vmul.f32 %v9855, 0.5
        %v9920 = vmul.f32 %v9856, 0.5
        %v9921 = vmul.f32 %v9857, 0.5
        %v9922 = vmul.f32 %v9858, 0.5
        %v9923 = vmul.f32 %v9859, 0.5
        %v9924 = vmul.f32 %v9860, 0.5
        %v9925 = vmul.f32 %v9861, 0.5
        %v9926 = vmul.f32 %v9862, 0.5
        %v9927 = vmul.f32 %v9863, 0.5
        %v9928 = vmul.f32 %v9864, 0.5
        %v9929 = vmul.f32 %v9865, 0.5
        %v9930 = vmul.f32 %v9866, 0.5
        %v9931 = vmul.f32 %v9867, 0.5
        %v9932 = vmul.f32 %v9868, 0.5
        %v9933 = vmul.f32 %v9869, 0.5
        %v9934 = vmul.f32 %v9870, 0.5
        %v9935 = vmul.f32 %v9871, 0.5
        %v9936 = vmul.f32 %v9872, 0.5
        %v9937 = vmul.f32 %v9873, 0.5
        %v9938 = vmul.f32 %v9874, 0.5
        %v9939 = vmul.f32 %v9875, 0.5
        %v9940 = vmul.f32 %v9876, 0.5
        %v9941 = vmul.f32 %v9877, 0.5
        %v9942 = vmul.f32 %v9878, 0.5
        %v9943 = vmul.f32 %v9879, 0.5
        %v9944 = vmul.f32 %v9880, 0.5
        %v9945 = vmul.f32 %v9881, 0.5
        %v9946 = vmul.f32 %v9882, 0.5
        %v9947 = vmul.f32 %v9883, 0.5
        %v9948 = vmul.f32 %v9884, 0.5
        %v9949 = vmul.f32 %v9885, 0.5
        %v9950 = vmul.f32 %v9886, 0.5
        %v9951 = vmul.f32 %v9887, 0.5
        %v9952 = vmul.f32 %v9888, 0.5
        %v9953 = vmul.f32 %v9889, 0.5
        %v9954 = vmul.f32 %v9890, 0.5
        %v9955 = vmul.f32 %v9891, 0.5
        %v9956 = vmul.f32 %v9892, 0.5
        %v9957 = vmul.f32 %v9893, 0.5
        %v9958 = vmul.f32 %v9894, 0.5
        %v9959 = vmul.f32 %v9895, 0.5
        %v9960 = vmul.f32 %v9896, 0.5
        %v9961 = vmul.f32 %v9897, 0.5
        %v9962 = vmul.f32 %v9898, 0.5
        %v9963 = vmul.f32 %v9899, 0.5
        %v9964 = vmul.f32 %v9900, 0.5
        %v9965 = vmul.f32 %v9901, 0.5
        %v9966 = vmul.f32 %v9902, 0.5
        %v9967 = vmul.f32 %v9903, 0.5
        %v9968 = vmul.f32 %v9904, 0.5
        %v9969 = vmul.f32 %v9905, 0.5
        %v9970 = vmul.f32 %v9906, 0.5
        %v9971 = vmul.f32 %v9907, 0.5
        %v9972 = vmul.f32 %v9908, 0.5
        %v9973 = vmul.f32 %v9909, 0.5
        %v9974 = vmul.f32 %v9304, %v9910
        %v9975 = vmul.f32 %v9306, %v9911
        %v9976 = vmul.f32 %v9308, %v9912
        %v9977 = vmul.f32 %v9310, %v9913
        %v9978 = vmul.f32 %v9314, %v9914
        %v9979 = vmul.f32 %v9316, %v9915
        %v9980 = vmul.f32 %v9318, %v9916
        %v9981 = vmul.f32 %v9320, %v9917
        %v9982 = vmul.f32 %v9324, %v9918
        %v9983 = vmul.f32 %v9326, %v9919
        %v9984 = vmul.f32 %v9328, %v9920
        %v9985 = vmul.f32 %v9330, %v9921
        %v9986 = vmul.f32 %v9334, %v9922
        %v9987 = vmul.f32 %v9336, %v9923
        %v9988 = vmul.f32 %v9338, %v9924
        %v9989 = vmul.f32 %v9340, %v9925
        %v9990 = vmul.f32 %v9344, %v9926
        %v9991 = vmul.f32 %v9346, %v9927
        %v9992 = vmul.f32 %v9348, %v9928
        %v9993 = vmul.f32 %v9350, %v9929
        %v9994 = vmul.f32 %v9354, %v9930
        %v9995 = vmul.f32 %v9356, %v9931
        %v9996 = vmul.f32 %v9358, %v9932
        %v9997 = vmul.f32 %v9360, %v9933
        %v9998 = vmul.f32 %v9364, %v9934
        %v9999 = vmul.f32 %v9366, %v9935
        %v10000 = vmul.f32 %v9368, %v9936
        %v10001 = vmul.f32 %v9370, %v9937
        %v10002 = vmul.f32 %v9374, %v9938
        %v10003 = vmul.f32 %v9376, %v9939
        %v10004 = vmul.f32 %v9378, %v9940
        %v10005 = vmul.f32 %v9380, %v9941
        %v10006 = vmul.f32 %v9384, %v9942
        %v10007 = vmul.f32 %v9386, %v9943
        %v10008 = vmul.f32 %v9388, %v9944
        %v10009 = vmul.f32 %v9390, %v9945
        %v10010 = vmul.f32 %v9394, %v9946
        %v10011 = vmul.f32 %v9396, %v9947
        %v10012 = vmul.f32 %v9398, %v9948
        %v10013 = vmul.f32 %v9400, %v9949
        %v10014 = vmul.f32 %v9404, %v9950
        %v10015 = vmul.f32 %v9406, %v9951
        %v10016 = vmul.f32 %v9408, %v9952
        %v10017 = vmul.f32 %v9410, %v9953
        %v10018 = vmul.f32 %v9414, %v9954
        %v10019 = vmul.f32 %v9416, %v9955
        %v10020 = vmul.f32 %v9418, %v9956
        %v10021 = vmul.f32 %v9420, %v9957
        %v10022 = vmul.f32 %v9424, %v9958
        %v10023 = vmul.f32 %v9426, %v9959
        %v10024 = vmul.f32 %v9428, %v9960
        %v10025 = vmul.f32 %v9430, %v9961
        %v10026 = vmul.f32 %v9434, %v9962
        %v10027 = vmul.f32 %v9436, %v9963
        %v10028 = vmul.f32 %v9438, %v9964
        %v10029 = vmul.f32 %v9440, %v9965
        %v10030 = vmul.f32 %v9444, %v9966
        %v10031 = vmul.f32 %v9446, %v9967
        %v10032 = vmul.f32 %v9448, %v9968
        %v10033 = vmul.f32 %v9450, %v9969
        %v10034 = vmul.f32 %v9454, %v9970
        %v10035 = vmul.f32 %v9456, %v9971
        %v10036 = vmul.f32 %v9458, %v9972
        %v10037 = vmul.f32 %v9460, %v9973
        %v10038 = vld [vmem:[%s420] sm:$0xf]
        %v10039 = vld [vmem:[%s420 + $0x4] sm:$0xf]
        %v10040 = vld [vmem:[%s420 + $0x8] sm:$0xf]
        %v10041 = vld [vmem:[%s420 + $0xc] sm:$0xf]
        %v10042 = vld [vmem:[%s420 + $0x10] sm:$0xf]
        %v10043 = vld [vmem:[%s420 + $0x14] sm:$0xf]
        %v10044 = vld [vmem:[%s420 + $0x18] sm:$0xf]
        %v10045 = vld [vmem:[%s420 + $0x1c] sm:$0xf]
        %v10046 = vld [vmem:[%s420 + $0x20] sm:$0xf]
        %v10047 = vld [vmem:[%s420 + $0x24] sm:$0xf]
        %v10048 = vld [vmem:[%s420 + $0x28] sm:$0xf]
        %v10049 = vld [vmem:[%s420 + $0x2c] sm:$0xf]
        %v10050 = vld [vmem:[%s420 + $0x30] sm:$0xf]
        %v10051 = vld [vmem:[%s420 + $0x34] sm:$0xf]
        %v10052 = vld [vmem:[%s420 + $0x38] sm:$0xf]
        %v10053 = vld [vmem:[%s420 + $0x3c] sm:$0xf]
        %v10054 = vld [vmem:[%s420 + $0x40] sm:$0xf]
        %v10055 = vld [vmem:[%s420 + $0x44] sm:$0xf]
        %v10056 = vld [vmem:[%s420 + $0x48] sm:$0xf]
        %v10057 = vld [vmem:[%s420 + $0x4c] sm:$0xf]
        %v10058 = vld [vmem:[%s420 + $0x50] sm:$0xf]
        %v10059 = vld [vmem:[%s420 + $0x54] sm:$0xf]
        %v10060 = vld [vmem:[%s420 + $0x58] sm:$0xf]
        %v10061 = vld [vmem:[%s420 + $0x5c] sm:$0xf]
        %v10062 = vld [vmem:[%s420 + $0x60] sm:$0xf]
        %v10063 = vld [vmem:[%s420 + $0x64] sm:$0xf]
        %v10064 = vld [vmem:[%s420 + $0x68] sm:$0xf]
        %v10065 = vld [vmem:[%s420 + $0x6c] sm:$0xf]
        %v10066 = vld [vmem:[%s420 + $0x70] sm:$0xf]
        %v10067 = vld [vmem:[%s420 + $0x74] sm:$0xf]
        %v10068 = vld [vmem:[%s420 + $0x78] sm:$0xf]
        %v10069 = vld [vmem:[%s420 + $0x7c] sm:$0xf]
        %v10070 = vpack.c.bf16 %v9976, %v9974
        %v10071 = vpack.c.bf16 %v9977, %v9975
        %v10072 = vpack.c.bf16 %v9980, %v9978
        %v10073 = vpack.c.bf16 %v9981, %v9979
        %v10074 = vpack.c.bf16 %v9984, %v9982
        %v10075 = vpack.c.bf16 %v9985, %v9983
        %v10076 = vpack.c.bf16 %v9988, %v9986
        %v10077 = vpack.c.bf16 %v9989, %v9987
        %v10078 = vpack.c.bf16 %v9992, %v9990
        %v10079 = vpack.c.bf16 %v9993, %v9991
        %v10080 = vpack.c.bf16 %v9996, %v9994
        %v10081 = vpack.c.bf16 %v9997, %v9995
        %v10082 = vpack.c.bf16 %v10000, %v9998
        %v10083 = vpack.c.bf16 %v10001, %v9999
        %v10084 = vpack.c.bf16 %v10004, %v10002
        %v10085 = vpack.c.bf16 %v10005, %v10003
        %v10086 = vpack.c.bf16 %v10008, %v10006
        %v10087 = vpack.c.bf16 %v10009, %v10007
        %v10088 = vpack.c.bf16 %v10012, %v10010
        %v10089 = vpack.c.bf16 %v10013, %v10011
        %v10090 = vpack.c.bf16 %v10016, %v10014
        %v10091 = vpack.c.bf16 %v10017, %v10015
        %v10092 = vpack.c.bf16 %v10020, %v10018
        %v10093 = vpack.c.bf16 %v10021, %v10019
        %v10094 = vpack.c.bf16 %v10024, %v10022
        %v10095 = vpack.c.bf16 %v10025, %v10023
        %v10096 = vpack.c.bf16 %v10028, %v10026
        %v10097 = vpack.c.bf16 %v10029, %v10027
        %v10098 = vpack.c.bf16 %v10032, %v10030
        %v10099 = vpack.c.bf16 %v10033, %v10031
        %v10100 = vpack.c.bf16 %v10036, %v10034
        %v10101 = vpack.c.bf16 %v10037, %v10035
        %v10134 = vunpack.c.l.b16 %v10038
        %v10135 = vunpack.c.l.b16 %v10039
        %v10136 = vunpack.c.l.b16 %v10040
        %v10137 = vunpack.c.l.b16 %v10041
        %v10138 = vunpack.c.l.b16 %v10042
        %v10139 = vunpack.c.l.b16 %v10043
        %v10140 = vunpack.c.l.b16 %v10044
        %v10141 = vunpack.c.l.b16 %v10045
        %v10142 = vunpack.c.l.b16 %v10046
        %v10143 = vunpack.c.l.b16 %v10047
        %v10144 = vunpack.c.l.b16 %v10048
        %v10145 = vunpack.c.l.b16 %v10049
        %v10146 = vunpack.c.l.b16 %v10050
        %v10147 = vunpack.c.l.b16 %v10051
        %v10148 = vunpack.c.l.b16 %v10052
        %v10149 = vunpack.c.l.b16 %v10053
        %v10150 = vunpack.c.l.b16 %v10054
        %v10151 = vunpack.c.l.b16 %v10055
        %v10152 = vunpack.c.l.b16 %v10056
        %v10153 = vunpack.c.l.b16 %v10057
        %v10154 = vunpack.c.l.b16 %v10058
        %v10155 = vunpack.c.l.b16 %v10059
        %v10156 = vunpack.c.l.b16 %v10060
        %v10157 = vunpack.c.l.b16 %v10061
        %v10158 = vunpack.c.l.b16 %v10062
        %v10159 = vunpack.c.l.b16 %v10063
        %v10160 = vunpack.c.l.b16 %v10064
        %v10161 = vunpack.c.l.b16 %v10065
        %v10162 = vunpack.c.l.b16 %v10066
        %v10163 = vunpack.c.l.b16 %v10067
        %v10164 = vunpack.c.l.b16 %v10068
        %v10165 = vunpack.c.l.b16 %v10069
        %v10166 = vpack.c.b16 %v10135, %v10134
        %v10167 = vpack.c.b16 %v10137, %v10136
        %v10168 = vpack.c.b16 %v10139, %v10138
        %v10169 = vpack.c.b16 %v10141, %v10140
        %v10170 = vpack.c.b16 %v10143, %v10142
        %v10171 = vpack.c.b16 %v10145, %v10144
        %v10172 = vpack.c.b16 %v10147, %v10146
        %v10173 = vpack.c.b16 %v10149, %v10148
        %v10174 = vpack.c.b16 %v10151, %v10150
        %v10175 = vpack.c.b16 %v10153, %v10152
        %v10176 = vpack.c.b16 %v10155, %v10154
        %v10177 = vpack.c.b16 %v10157, %v10156
        %v10178 = vpack.c.b16 %v10159, %v10158
        %v10179 = vpack.c.b16 %v10161, %v10160
        %v10180 = vpack.c.b16 %v10163, %v10162
        %v10181 = vpack.c.b16 %v10165, %v10164
        %10198 = vmatprep.subr.bf16.mxu0 0
        %10199 = vmatpush1.bf16.msra.mxu0 %v10166
        %10200 = vmatprep.subr.bf16.mxu0 0
        %10201 = vmatpush1.bf16.msra.mxu0 %v10167
        %10202 = vmatprep.subr.bf16.mxu0 0
        %10203 = vmatpush1.bf16.msra.mxu0 %v10168
        %10204 = vmatprep.subr.bf16.mxu0 0
        %10205 = vmatpush1.bf16.msra.mxu0 %v10169
        %10206 = vmatprep.subr.bf16.mxu0 0
        %10207 = vmatpush1.bf16.msra.mxu0 %v10170
        %10208 = vmatprep.subr.bf16.mxu0 0
        %10209 = vmatpush1.bf16.msra.mxu0 %v10171
        %10210 = vmatprep.subr.bf16.mxu0 0
        %10211 = vmatpush1.bf16.msra.mxu0 %v10172
        %10212 = vmatprep.subr.bf16.mxu0 0
        %10213 = vmatpush1.bf16.msra.mxu0 %v10173
        %10214 = vmatprep.subr.bf16.mxu0 0
        %10215 = vmatpush1.bf16.msra.mxu0 %v10174
        %10216 = vmatprep.subr.bf16.mxu0 0
        %10217 = vmatpush1.bf16.msra.mxu0 %v10175
        %10218 = vmatprep.subr.bf16.mxu0 0
        %10219 = vmatpush1.bf16.msra.mxu0 %v10176
        %10220 = vmatprep.subr.bf16.mxu0 0
        %10221 = vmatpush1.bf16.msra.mxu0 %v10177
        %10222 = vmatprep.subr.bf16.mxu0 0
        %10223 = vmatpush1.bf16.msra.mxu0 %v10178
        %10224 = vmatprep.subr.bf16.mxu0 0
        %10225 = vmatpush1.bf16.msra.mxu0 %v10179
        %10226 = vmatprep.subr.bf16.mxu0 0
        %10227 = vmatpush1.bf16.msra.mxu0 %v10180
        %10228 = vmatprep.subr.bf16.mxu0 0
        %10229 = vmatpush1.bf16.msra.mxu0 %v10181
        %10230 = vmatprep.mubr.bf16.mxu0 %v10071
        %10231 = vmatmul.mubr.bf16.gmra.mrb[0].mxu0 %v10070
        %v10232 = vpop.f32.mrb[0].mxu0
        %v10233 = vadd.f32 0.0, %v10232
        %v10234 = vpop.f32.mrb[0].mxu0
        %v10235 = vpop.f32.mrb[0].mxu0
        %v10236 = vadd.f32 0.0, %v10235
        %v10237 = vpop.f32.mrb[0].mxu0
        %10238 = vmatprep.mubr.bf16.mxu0 %v10073
        %10239 = vmatmul.mubr.bf16.gmra.mrb[0].mxu0 %v10072
        %v10240 = vpop.f32.mrb[0].mxu0
        %v10241 = vadd.f32 0.0, %v10240
        %v10242 = vpop.f32.mrb[0].mxu0
        %v10243 = vpop.f32.mrb[0].mxu0
        %v10244 = vadd.f32 0.0, %v10243
        %v10245 = vpop.f32.mrb[0].mxu0
        %10246 = vmatprep.mubr.bf16.mxu0 %v10075
        %10247 = vmatmul.mubr.bf16.gmra.mrb[0].mxu0 %v10074
        %v10248 = vpop.f32.mrb[0].mxu0
        %v10249 = vadd.f32 0.0, %v10248
        %v10250 = vpop.f32.mrb[0].mxu0
        %v10251 = vpop.f32.mrb[0].mxu0
        %v10252 = vadd.f32 0.0, %v10251
        %v10253 = vpop.f32.mrb[0].mxu0
        %10254 = vmatprep.mubr.bf16.mxu0 %v10077
        %10255 = vmatmul.mubr.bf16.gmra.mrb[0].mxu0 %v10076
        %v10256 = vpop.f32.mrb[0].mxu0
        %v10257 = vadd.f32 0.0, %v10256
        %v10258 = vpop.f32.mrb[0].mxu0
        %v10259 = vpop.f32.mrb[0].mxu0
        %v10260 = vadd.f32 0.0, %v10259
        %v10261 = vpop.f32.mrb[0].mxu0
        %10262 = vmatprep.mubr.bf16.mxu0 %v10079
        %10263 = vmatmul.mubr.bf16.gmra.mrb[0].mxu0 %v10078
        %v10264 = vpop.f32.mrb[0].mxu0
        %v10265 = vadd.f32 0.0, %v10264
        %v10266 = vpop.f32.mrb[0].mxu0
        %v10267 = vpop.f32.mrb[0].mxu0
        %v10268 = vadd.f32 0.0, %v10267
        %v10269 = vpop.f32.mrb[0].mxu0
        %10270 = vmatprep.mubr.bf16.mxu0 %v10081
        %10271 = vmatmul.mubr.bf16.gmra.mrb[0].mxu0 %v10080
        %v10272 = vpop.f32.mrb[0].mxu0
        %v10273 = vadd.f32 0.0, %v10272
        %v10274 = vpop.f32.mrb[0].mxu0
        %v10275 = vpop.f32.mrb[0].mxu0
        %v10276 = vadd.f32 0.0, %v10275
        %v10277 = vpop.f32.mrb[0].mxu0
        %10278 = vmatprep.mubr.bf16.mxu0 %v10083
        %10279 = vmatmul.mubr.bf16.gmra.mrb[0].mxu0 %v10082
        %v10280 = vpop.f32.mrb[0].mxu0
        %v10281 = vadd.f32 0.0, %v10280
        %v10282 = vpop.f32.mrb[0].mxu0
        %v10283 = vpop.f32.mrb[0].mxu0
        %v10284 = vadd.f32 0.0, %v10283
        %v10285 = vpop.f32.mrb[0].mxu0
        %10286 = vmatprep.mubr.bf16.mxu0 %v10085
        %10287 = vmatmul.mubr.bf16.gmra.mrb[0].mxu0 %v10084
        %v10288 = vpop.f32.mrb[0].mxu0
        %v10289 = vadd.f32 0.0, %v10288
        %v10290 = vpop.f32.mrb[0].mxu0
        %v10291 = vpop.f32.mrb[0].mxu0
        %v10292 = vadd.f32 0.0, %v10291
        %v10293 = vpop.f32.mrb[0].mxu0
        %10294 = vmatprep.mubr.bf16.mxu0 %v10087
        %10295 = vmatmul.mubr.bf16.gmra.mrb[0].mxu0 %v10086
        %v10296 = vpop.f32.mrb[0].mxu0
        %v10297 = vadd.f32 0.0, %v10296
        %v10298 = vpop.f32.mrb[0].mxu0
        %v10299 = vpop.f32.mrb[0].mxu0
        %v10300 = vadd.f32 0.0, %v10299
        %v10301 = vpop.f32.mrb[0].mxu0
        %10302 = vmatprep.mubr.bf16.mxu0 %v10089
        %10303 = vmatmul.mubr.bf16.gmra.mrb[0].mxu0 %v10088
        %v10304 = vpop.f32.mrb[0].mxu0
        %v10305 = vadd.f32 0.0, %v10304
        %v10306 = vpop.f32.mrb[0].mxu0
        %v10307 = vpop.f32.mrb[0].mxu0
        %v10308 = vadd.f32 0.0, %v10307
        %v10309 = vpop.f32.mrb[0].mxu0
        %10310 = vmatprep.mubr.bf16.mxu0 %v10091
        %10311 = vmatmul.mubr.bf16.gmra.mrb[0].mxu0 %v10090
        %v10312 = vpop.f32.mrb[0].mxu0
        %v10313 = vadd.f32 0.0, %v10312
        %v10314 = vpop.f32.mrb[0].mxu0
        %v10315 = vpop.f32.mrb[0].mxu0
        %v10316 = vadd.f32 0.0, %v10315
        %v10317 = vpop.f32.mrb[0].mxu0
        %10318 = vmatprep.mubr.bf16.mxu0 %v10093
        %10319 = vmatmul.mubr.bf16.gmra.mrb[0].mxu0 %v10092
        %v10320 = vpop.f32.mrb[0].mxu0
        %v10321 = vadd.f32 0.0, %v10320
        %v10322 = vpop.f32.mrb[0].mxu0
        %v10323 = vpop.f32.mrb[0].mxu0
        %v10324 = vadd.f32 0.0, %v10323
        %v10325 = vpop.f32.mrb[0].mxu0
        %10326 = vmatprep.mubr.bf16.mxu0 %v10095
        %10327 = vmatmul.mubr.bf16.gmra.mrb[0].mxu0 %v10094
        %v10328 = vpop.f32.mrb[0].mxu0
        %v10329 = vadd.f32 0.0, %v10328
        %v10330 = vpop.f32.mrb[0].mxu0
        %v10331 = vpop.f32.mrb[0].mxu0
        %v10332 = vadd.f32 0.0, %v10331
        %v10333 = vpop.f32.mrb[0].mxu0
        %10334 = vmatprep.mubr.bf16.mxu0 %v10097
        %10335 = vmatmul.mubr.bf16.gmra.mrb[0].mxu0 %v10096
        %v10336 = vpop.f32.mrb[0].mxu0
        %v10337 = vadd.f32 0.0, %v10336
        %v10338 = vpop.f32.mrb[0].mxu0
        %v10339 = vpop.f32.mrb[0].mxu0
        %v10340 = vadd.f32 0.0, %v10339
        %v10341 = vpop.f32.mrb[0].mxu0
        %10342 = vmatprep.mubr.bf16.mxu0 %v10099
        %10343 = vmatmul.mubr.bf16.gmra.mrb[0].mxu0 %v10098
        %v10344 = vpop.f32.mrb[0].mxu0
        %v10345 = vadd.f32 0.0, %v10344
        %v10346 = vpop.f32.mrb[0].mxu0
        %v10347 = vpop.f32.mrb[0].mxu0
        %v10348 = vadd.f32 0.0, %v10347
        %v10349 = vpop.f32.mrb[0].mxu0
        %10350 = vmatprep.mubr.bf16.mxu0 %v10101
        %10351 = vmatmul.mubr.bf16.gmra.mrb[0].mxu0 %v10100
        %v10352 = vpop.f32.mrb[0].mxu0
        %v10353 = vadd.f32 0.0, %v10352
        %v10354 = vpop.f32.mrb[0].mxu0
        %v10355 = vpop.f32.mrb[0].mxu0
        %v10356 = vadd.f32 0.0, %v10355
        %v10357 = vpop.f32.mrb[0].mxu0
        %10358 = vdwg.mxu0
        %v10359 = vadd.f32 %v8734, %v10233
        %v10360 = vadd.f32 %v8735, %v10236
        %v10361 = vadd.f32 %v8736, %v10241
        %v10362 = vadd.f32 %v8737, %v10244
        %v10363 = vadd.f32 %v8738, %v10249
        %v10364 = vadd.f32 %v8739, %v10252
        %v10365 = vadd.f32 %v8740, %v10257
        %v10366 = vadd.f32 %v8741, %v10260
        %v10367 = vadd.f32 %v8742, %v10265
        %v10368 = vadd.f32 %v8743, %v10268
        %v10369 = vadd.f32 %v8744, %v10273
        %v10370 = vadd.f32 %v8745, %v10276
        %v10371 = vadd.f32 %v8746, %v10281
        %v10372 = vadd.f32 %v8747, %v10284
        %v10373 = vadd.f32 %v8748, %v10289
        %v10374 = vadd.f32 %v8749, %v10292
        %v10375 = vadd.f32 %v8750, %v10297
        %v10376 = vadd.f32 %v8751, %v10300
        %v10377 = vadd.f32 %v8752, %v10305
        %v10378 = vadd.f32 %v8753, %v10308
        %v10379 = vadd.f32 %v8754, %v10313
        %v10380 = vadd.f32 %v8755, %v10316
        %v10381 = vadd.f32 %v8756, %v10321
        %v10382 = vadd.f32 %v8757, %v10324
        %v10383 = vadd.f32 %v8758, %v10329
        %v10384 = vadd.f32 %v8759, %v10332
        %v10385 = vadd.f32 %v8760, %v10337
        %v10386 = vadd.f32 %v8761, %v10340
        %v10387 = vadd.f32 %v8762, %v10345
        %v10388 = vadd.f32 %v8763, %v10348
        %v10389 = vadd.f32 %v8764, %v10353
        %v10390 = vadd.f32 %v8765, %v10356
        %10391 = vst [vmem:[#allocation2] sm:$0xff] %v10359
        %10392 = vst [vmem:[#allocation2 + $0x8] sm:$0xff] %v10360
        %10393 = vst [vmem:[#allocation2 + $0x10] sm:$0xff] %v10361
        %10394 = vst [vmem:[#allocation2 + $0x18] sm:$0xff] %v10362
        %10395 = vst [vmem:[#allocation2 + $0x20] sm:$0xff] %v10363
        %10396 = vst [vmem:[#allocation2 + $0x28] sm:$0xff] %v10364
        %10397 = vst [vmem:[#allocation2 + $0x30] sm:$0xff] %v10365
        %10398 = vst [vmem:[#allocation2 + $0x38] sm:$0xff] %v10366
        %10399 = vst [vmem:[#allocation2 + $0x40] sm:$0xff] %v10367
        %10400 = vst [vmem:[#allocation2 + $0x48] sm:$0xff] %v10368
        %10401 = vst [vmem:[#allocation2 + $0x50] sm:$0xff] %v10369
        %10402 = vst [vmem:[#allocation2 + $0x58] sm:$0xff] %v10370
        %10403 = vst [vmem:[#allocation2 + $0x60] sm:$0xff] %v10371
        %10404 = vst [vmem:[#allocation2 + $0x68] sm:$0xff] %v10372
        %10405 = vst [vmem:[#allocation2 + $0x70] sm:$0xff] %v10373
        %10406 = vst [vmem:[#allocation2 + $0x78] sm:$0xff] %v10374
        %10407 = vst [vmem:[#allocation2 + $0x80] sm:$0xff] %v10375
        %10408 = vst [vmem:[#allocation2 + $0x88] sm:$0xff] %v10376
        %10409 = vst [vmem:[#allocation2 + $0x90] sm:$0xff] %v10377
        %10410 = vst [vmem:[#allocation2 + $0x98] sm:$0xff] %v10378
        %10411 = vst [vmem:[#allocation2 + $0xa0] sm:$0xff] %v10379
        %10412 = vst [vmem:[#allocation2 + $0xa8] sm:$0xff] %v10380
        %10413 = vst [vmem:[#allocation2 + $0xb0] sm:$0xff] %v10381
        %10414 = vst [vmem:[#allocation2 + $0xb8] sm:$0xff] %v10382
        %10415 = vst [vmem:[#allocation2 + $0xc0] sm:$0xff] %v10383
        %10416 = vst [vmem:[#allocation2 + $0xc8] sm:$0xff] %v10384
        %10417 = vst [vmem:[#allocation2 + $0xd0] sm:$0xff] %v10385
        %10418 = vst [vmem:[#allocation2 + $0xd8] sm:$0xff] %v10386
        %10419 = vst [vmem:[#allocation2 + $0xe0] sm:$0xff] %v10387
        %10420 = vst [vmem:[#allocation2 + $0xe8] sm:$0xff] %v10388
        %10421 = vst [vmem:[#allocation2 + $0xf0] sm:$0xff] %v10389
        %10422 = vst [vmem:[#allocation2 + $0xf8] sm:$0xff] %v10390
        %p10423 = scmp.eq.s32.totalorder %s35, 1
        // Predicated region
        $region73: #{tpu_custom_call.1} parent=47 // pred_check
          %p10424 = pneg %p10423
        $region74: #{tpu_custom_call.1} parent=47 // pred_check_branch
          %10426 = sbr.rel (%p10424) target = $region76
        $region75: #{tpu_custom_call.1} parent=47 // pred_region
          %10427 = vxpose.xlu0.b32.start [1/16] %v10359, 128
          %10428 = vxpose.xlu0.b32.cont [2/16] %v10360, 128
          %10429 = vxpose.xlu0.b32.cont [3/16] %v10361, 128
          %10430 = vxpose.xlu0.b32.cont [4/16] %v10362, 128
          %10431 = vxpose.xlu0.b32.cont [5/16] %v10363, 128
          %10432 = vxpose.xlu0.b32.cont [6/16] %v10364, 128
          %10433 = vxpose.xlu0.b32.cont [7/16] %v10365, 128
          %10434 = vxpose.xlu0.b32.cont [8/16] %v10366, 128
          %10435 = vxpose.xlu0.b32.cont [9/16] %v10367, 128
          %10436 = vxpose.xlu0.b32.cont [10/16] %v10368, 128
          %10437 = vxpose.xlu0.b32.cont [11/16] %v10369, 128
          %10438 = vxpose.xlu0.b32.cont [12/16] %v10370, 128
          %10439 = vxpose.xlu0.b32.cont [13/16] %v10371, 128
          %10440 = vxpose.xlu0.b32.cont [14/16] %v10372, 128
          %10441 = vxpose.xlu0.b32.cont [15/16] %v10373, 128
          %10442 = vxpose.xlu0.b32.end [16/16] %v10374, 128
          %v10443 = vpop.trf.xlu0
          %v10444 = vpop.trf.xlu0
          %v10445 = vpop.trf.xlu0
          %v10446 = vpop.trf.xlu0
          %v10447 = vpop.trf.xlu0
          %v10448 = vpop.trf.xlu0
          %v10449 = vpop.trf.xlu0
          %v10450 = vpop.trf.xlu0
          %v10451 = vpop.trf.xlu0
          %v10452 = vpop.trf.xlu0
          %v10453 = vpop.trf.xlu0
          %v10454 = vpop.trf.xlu0
          %v10455 = vpop.trf.xlu0
          %v10456 = vpop.trf.xlu0
          %v10457 = vpop.trf.xlu0
          %v10458 = vpop.trf.xlu0
          %10459 = vxpose.xlu0.b32.start [1/16] %v10375, 128
          %10460 = vxpose.xlu0.b32.cont [2/16] %v10376, 128
          %10461 = vxpose.xlu0.b32.cont [3/16] %v10377, 128
          %10462 = vxpose.xlu0.b32.cont [4/16] %v10378, 128
          %10463 = vxpose.xlu0.b32.cont [5/16] %v10379, 128
          %10464 = vxpose.xlu0.b32.cont [6/16] %v10380, 128
          %10465 = vxpose.xlu0.b32.cont [7/16] %v10381, 128
          %10466 = vxpose.xlu0.b32.cont [8/16] %v10382, 128
          %10467 = vxpose.xlu0.b32.cont [9/16] %v10383, 128
          %10468 = vxpose.xlu0.b32.cont [10/16] %v10384, 128
          %10469 = vxpose.xlu0.b32.cont [11/16] %v10385, 128
          %10470 = vxpose.xlu0.b32.cont [12/16] %v10386, 128
          %10471 = vxpose.xlu0.b32.cont [13/16] %v10387, 128
          %10472 = vxpose.xlu0.b32.cont [14/16] %v10388, 128
          %10473 = vxpose.xlu0.b32.cont [15/16] %v10389, 128
          %10474 = vxpose.xlu0.b32.end [16/16] %v10390, 128
          %v10475 = vpop.trf.xlu0
          %v10476 = vpop.trf.xlu0
          %v10477 = vpop.trf.xlu0
          %v10478 = vpop.trf.xlu0
          %v10479 = vpop.trf.xlu0
          %v10480 = vpop.trf.xlu0
          %v10481 = vpop.trf.xlu0
          %v10482 = vpop.trf.xlu0
          %v10483 = vpop.trf.xlu0
          %v10484 = vpop.trf.xlu0
          %v10485 = vpop.trf.xlu0
          %v10486 = vpop.trf.xlu0
          %v10487 = vpop.trf.xlu0
          %v10488 = vpop.trf.xlu0
          %v10489 = vpop.trf.xlu0
          %v10490 = vpop.trf.xlu0
          %10491 = vst [vmem:[%s473] sm:$0xff] %v10443
          %10492 = vst [vmem:[%s473 + $0x8] sm:$0xff] %v10475
          %10493 = vst [vmem:[%s473 + $0x10] sm:$0xff] %v10444
          %10494 = vst [vmem:[%s473 + $0x18] sm:$0xff] %v10476
          %10495 = vst [vmem:[%s473 + $0x20] sm:$0xff] %v10445
          %10496 = vst [vmem:[%s473 + $0x28] sm:$0xff] %v10477
          %10497 = vst [vmem:[%s473 + $0x30] sm:$0xff] %v10446
          %10498 = vst [vmem:[%s473 + $0x38] sm:$0xff] %v10478
          %10499 = vst [vmem:[%s473 + $0x40] sm:$0xff] %v10447
          %10500 = vst [vmem:[%s473 + $0x48] sm:$0xff] %v10479
          %10501 = vst [vmem:[%s473 + $0x50] sm:$0xff] %v10448
          %10502 = vst [vmem:[%s473 + $0x58] sm:$0xff] %v10480
          %10503 = vst [vmem:[%s473 + $0x60] sm:$0xff] %v10449
          %10504 = vst [vmem:[%s473 + $0x68] sm:$0xff] %v10481
          %10505 = vst [vmem:[%s473 + $0x70] sm:$0xff] %v10450
          %10506 = vst [vmem:[%s473 + $0x78] sm:$0xff] %v10482
          %10507 = vst [vmem:[%s473 + $0x80] sm:$0xff] %v10451
          %10508 = vst [vmem:[%s473 + $0x88] sm:$0xff] %v10483
          %10509 = vst [vmem:[%s473 + $0x90] sm:$0xff] %v10452
          %10510 = vst [vmem:[%s473 + $0x98] sm:$0xff] %v10484
          %10511 = vst [vmem:[%s473 + $0xa0] sm:$0xff] %v10453
          %10512 = vst [vmem:[%s473 + $0xa8] sm:$0xff] %v10485
          %10513 = vst [vmem:[%s473 + $0xb0] sm:$0xff] %v10454
          %10514 = vst [vmem:[%s473 + $0xb8] sm:$0xff] %v10486
          %10515 = vst [vmem:[%s473 + $0xc0] sm:$0xff] %v10455
          %10516 = vst [vmem:[%s473 + $0xc8] sm:$0xff] %v10487
          %10517 = vst [vmem:[%s473 + $0xd0] sm:$0xff] %v10456
          %10518 = vst [vmem:[%s473 + $0xd8] sm:$0xff] %v10488
          %10519 = vst [vmem:[%s473 + $0xe0] sm:$0xff] %v10457
          %10520 = vst [vmem:[%s473 + $0xe8] sm:$0xff] %v10489
          %10521 = vst [vmem:[%s473 + $0xf0] sm:$0xff] %v10458
          %10522 = vst [vmem:[%s473 + $0xf8] sm:$0xff] %v10490
        $region76: #{tpu_custom_call.1} parent=47 // pred_fallthru
          _
        %s10523 = sand.u32 %s227, 1
        %s10524 = scalar_lea.sflag [#allocation5], %s10523
        %s10525 = sand.u32 %s227, 1
        %s10526 = smul.addr %s10525, 256
        %s10527 = scalar_lea.vmem [#allocation12], %s10526
        // Predicated region
        $region77: #{tpu_custom_call.1} parent=47 // pred_check
          %p10528 = pneg %p237
        $region78: #{tpu_custom_call.1} parent=47 // pred_check_branch
          %10530 = sbr.rel (%p10528) target = $region80
        $region79: #{tpu_custom_call.1} parent=47 // pred_region
          %s10532 = ssub.s32 4096, 4096
          %10533 = vsyncadd %s10524, %s10532
          %s10534 = smul.addr %s34, 32
          %s10535 = smul.addr %s10534, 128
          %s10536 = scalar_lea.hbm %s7, %s10535
          %s10537 = sshll.u32 %s10527, 4
          %s10538 = int_to_ptr.vmem [resolvable:$true] %s10537
          %10543 = dma.vmem_to_hbm [thread:$0]  %s10538, 4096, %s10536, %s10524, 256, 256, 16
        $region80: #{tpu_custom_call.1} parent=47 // pred_fallthru
          _
      $region48: #{tpu_custom_call.1} parent=5 // pred_fallthru
        _
      %p10544 = scmp.le.s32.totalorder 2, %s25
      // Predicated region
      $region81: #{tpu_custom_call.1} parent=5 // pred_check
        %p10545 = pneg %p10544
      $region82: #{tpu_custom_call.1} parent=5 // pred_check_branch
        %10547 = sbr.rel (%p10545) target = $region84
      $region83: #{tpu_custom_call.1} parent=5 // pred_region
        %s10548 = ssub.s32 %s25, 2
        // Predicated region
        $region85: #{tpu_custom_call.1} parent=83 // pred_check
          %p10549 = pneg %p243
        $region86: #{tpu_custom_call.1} parent=83 // pred_check_branch
          %10551 = sbr.rel (%p10549) target = $region88
        $region87: #{tpu_custom_call.1} parent=83 // pred_region
          %s10552 = sand.u32 %s228, 1
          %s10553 = scalar_lea.sflag [#allocation5], %s10552
          %s10554 = sand.u32 %s228, 1
          %s10555 = smul.addr %s10554, 256
          %s10556 = scalar_lea.vmem [#allocation12], %s10555
          %10557 = dma.done %s10553, 4096
        $region88: #{tpu_custom_call.1} parent=83 // pred_fallthru
          _
      $region84: #{tpu_custom_call.1} parent=5 // pred_fallthru
        _
    $region6: #{tpu_custom_call.1} parent=1 // loop_footer
      %s29 = sadd.s32 1, %s25
    $region7: #{tpu_custom_call.1} parent=1 // loop_footer_branch
      %24 = sbr.rel target = $region3
    $region8: #{tpu_custom_call.1} parent=1 // loop_exit
      _
    %10558 = vsyncpa [#allocation4], 1
    %s10559 = scalar_lea.sflag [#allocation4], 1
    %10560 = vsyncpa %s10559, 1
    %10561 = vsyncpa [#allocation7], 1
    %s10562 = scalar_lea.sflag [#allocation7], 1
    %10563 = vsyncpa %s10562, 1
    %10564 = vsyncpa [#allocation10], 1
    %s10565 = scalar_lea.sflag [#allocation10], 1
    %10566 = vsyncpa %s10565, 1
    %10567 = vsyncpa [#allocation5], 1
    %s10568 = scalar_lea.sflag [#allocation5], 1
    %10569 = vsyncpa %s10568, 1

</llo_original>
